<compile_context>
chip_gen: v6e
topology: v6e:2x2x1
jax: 0.10.0
libtpu: 0.0.40
codegen_flags: <defaults>
</compile_context>

<pallas_src>
import functools

import numpy as np
import jax
import jax.numpy as jnp
from jax.experimental import pallas as pl
from jax.experimental.pallas import tpu as pltpu

# ---- kaldi spectrogram constants (defaults of ta_kaldi.spectrogram) ----
SAMPLE_RATE = 16000
WIN_LEN = int(SAMPLE_RATE * 25.0 / 1000)     # frame_length 25 ms -> 400 samples
HOP = int(SAMPLE_RATE * 10.0 / 1000)         # frame_shift  10 ms -> 160 samples
NFFT = 512                                   # round_to_power_of_two(400)
NBINS = NFFT // 2 + 1                        # 257 output bins
NSPEC = NBINS - 1                            # 256 spectral bins emitted (bin 0 dropped)
OUT_PAD = 384                                # 3*128 lane-dense output slab
ENERGY_LANE = 127                            # kaldi column 0 lives at lane 127
PREEMPH = 0.97
EPS = float(np.finfo(np.float32).eps)
LOG_ENERGY_FLOOR = 0.0                       # log(energy_floor=1.0) (kaldi default)
TAIL = WIN_LEN - 2 * HOP                     # 80 samples from the third hop row


def _spectrogram_kernel(frames_ref, basis_ref, out_ref):
    x = frames_ref[...]                                        # [FB, 400] f32

    # remove DC offset (mean over the 400 samples of each frame)
    mean = jnp.sum(x, axis=-1, keepdims=True) * (1.0 / WIN_LEN)
    xc = x - mean

    # raw signal log-energy (after DC removal, before preemphasis/window)
    energy = jnp.sum(xc * xc, axis=-1, keepdims=True)
    log_energy = jnp.maximum(jnp.log(jnp.maximum(energy, EPS)), LOG_ENERGY_FLOOR)

    # preemphasis + povey window + real DFT (bins 1..256) folded into one basis
    # -> a single MXU matmul, precision pinned (no Mosaic-default dependence).
    reim = jnp.dot(xc, basis_ref[...],
                   precision=jax.lax.Precision.HIGHEST,
                   preferred_element_type=jnp.float32)         # [FB, 512]
    re = reim[:, :NSPEC]                                       # static, lane-aligned
    im = reim[:, NSPEC:]
    power = re * re + im * im
    logspec = jnp.log(jnp.maximum(power, EPS))                 # [FB, 256]

    # lanes 0..127   <- log-energy broadcast (lane 127 is kaldi column 0)
    # lanes 128..383 <- log power spectrum of bins 1..256
    out_ref[:, 0:128] = jnp.broadcast_to(log_energy, (x.shape[0], 128))
    out_ref[:, 128:OUT_PAD] = logspec


@functools.cache
def _make_basis():
    """Fused [400, 512] basis = preemphasis @ diag(povey) @ [cos | -sin], bins 1..256."""
    n = np.arange(WIN_LEN, dtype=np.float64)
    povey = (0.5 - 0.5 * np.cos(2.0 * np.pi * n / (WIN_LEN - 1))) ** 0.85

    # preemphasis acting on row vectors: x2 = x1 @ P, x2[j] = x1[j] - 0.97*x1[max(j-1,0)]
    P = np.eye(WIN_LEN, dtype=np.float64) - PREEMPH * np.eye(WIN_LEN, k=1, dtype=np.float64)
    P[0, 0] = 1.0 - PREEMPH
    PW = P * povey[None, :]                  # fold the window: P @ diag(povey)

    # real DFT over N=512 points; zero-padded samples contribute nothing, so K=400.
    kk = np.arange(1, NSPEC + 1, dtype=np.float64)[None, :]    # bins 1..256 only
    ang = 2.0 * np.pi * n[:, None] * kk / NFFT
    basis = np.concatenate([PW @ np.cos(ang), PW @ (-np.sin(ang))], axis=1)  # [400, 512]
    return jnp.asarray(basis.astype(np.float32))


def _choose_frame_block(num_frames):
    # Big tiles amortize the ~0.35us/step pipeline overhead; always keep >=2
    # grid steps for long inputs so v7x's two TensorCores both get work.
    if num_frames >= 2048:
        return 512
    if num_frames >= 512:
        return 256
    return 128


def extract_audio_feature(waveform):
    """waveform: [1, T] float32 -> features [num_frames, 257] float32."""
    wav = jnp.reshape(waveform, (-1,)).astype(jnp.float32)
    t = wav.shape[0]
    assert t >= WIN_LEN, "waveform shorter than one frame"
    num_frames = 1 + (t - WIN_LEN) // HOP            # snip_edges=True

    # framing without gather: hop rows of 160 samples; frame f = rows f, f+1
    # and the first 80 samples of row f+2.
    total = (num_frames + 2) * HOP                   # covers every used sample
    if t >= total:
        wav_fit = wav[:total]
    else:
        wav_fit = jnp.pad(wav, (0, total - t))
    hops = wav_fit.reshape(num_frames + 2, HOP)      # [F+2, 160]
    frames = jnp.concatenate(
        [hops[0:num_frames],
         hops[1:num_frames + 1],
         hops[2:num_frames + 2, :TAIL]],
        axis=1)                                      # [F, 400]

    fb = _choose_frame_block(num_frames)
    f_pad = ((num_frames + fb - 1) // fb) * fb
    frames = jnp.pad(frames, ((0, f_pad - num_frames), (0, 0)))

    basis = _make_basis()

    cost = pl.CostEstimate(
        flops=2 * f_pad * WIN_LEN * (2 * NSPEC),
        transcendentals=f_pad * (NSPEC + 1),
        bytes_accessed=4 * (f_pad * WIN_LEN + WIN_LEN * 2 * NSPEC + f_pad * OUT_PAD),
    )

    out = pl.pallas_call(
        _spectrogram_kernel,
        out_shape=jax.ShapeDtypeStruct((f_pad, OUT_PAD), jnp.float32),
        grid_spec=pltpu.PrefetchScalarGridSpec(
            num_scalar_prefetch=0,
            grid=(f_pad // fb,),
            in_specs=[
                pl.BlockSpec((fb, WIN_LEN), lambda i: (i, 0)),
                # invariant operand: constant index_map, single-buffered
                pl.BlockSpec((WIN_LEN, 2 * NSPEC), lambda i: (0, 0),
                             pipeline_mode=pl.Buffered(1)),
            ],
            out_specs=pl.BlockSpec((fb, OUT_PAD), lambda i: (i, 0)),
        ),
        compiler_params=pltpu.CompilerParams(dimension_semantics=("parallel",)),
        cost_estimate=cost,
    )(frames, basis)

    # lane 127 = log-energy (kaldi column 0), lanes 128..383 = bins 1..256.
    return out[:num_frames, ENERGY_LANE:ENERGY_LANE + NBINS]


if __name__ == "__main__":
    key = jax.random.PRNGKey(0)
    n_frames = 200                                   # ~2 s of audio, 2 grid steps
    T = WIN_LEN + (n_frames - 1) * HOP               # 32240 samples
    waveform = jax.random.normal(key, (1, T), dtype=jnp.float32)

    feats = extract_audio_feature(waveform)
    feats = jax.block_until_ready(feats)

    assert feats.shape == (n_frames, NBINS), feats.shape
    assert bool(jnp.all(jnp.isfinite(feats)))
    print("KERNEL_OK")
</pallas_src>

<mosaic_0001>
module attributes {stable_mosaic.version = 11 : i64} {
  func.func @_spectrogram_kernel(%arg0: i32, %arg1: memref<128x400xf32, #tpu.memory_space<vmem>>, %arg2: memref<400x512xf32, #tpu.memory_space<vmem>>, %arg3: memref<128x384xf32, #tpu.memory_space<vmem>>) attributes {dimension_semantics = [#tpu.dimension_semantics<parallel>], iteration_bounds = array<i64: 2>, scalar_prefetch = 0 : i64, scratch_operands = 0 : i64, tpu.core_type = #tpu.core_type<tc>, window_params = [{transform_indices = @transform_0, window_bounds = array<i64: 128, 400>}, {pipeline_mode = #tpu.pipeline_mode<synchronous>, transform_indices = @transform_1, window_bounds = array<i64: 400, 512>}, {transform_indices = @transform_2, window_bounds = array<i64: 128, 384>}]} {
    %c0 = arith.constant 0 : index
    %c0_0 = arith.constant 0 : index
    %0 = vector.load %arg1[%c0, %c0_0] : memref<128x400xf32, #tpu.memory_space<vmem>>, vector<128x400xf32>
    %cst = arith.constant dense<0.000000e+00> : vector<128xf32>
    %1 = vector.multi_reduction <add>, %0, %cst [1] : vector<128x400xf32> to vector<128xf32>
    %2 = vector.shape_cast %1 : vector<128xf32> to vector<128x1xf32>
    %cst_1 = arith.constant 2.500000e-03 : f32
    %3 = vector.broadcast %cst_1 : f32 to vector<128x1xf32>
    %4 = arith.mulf %2, %3 : vector<128x1xf32>
    %5 = vector.broadcast %4 : vector<128x1xf32> to vector<128x400xf32>
    %6 = arith.subf %0, %5 : vector<128x400xf32>
    %7 = arith.mulf %6, %6 : vector<128x400xf32>
    %cst_2 = arith.constant dense<0.000000e+00> : vector<128xf32>
    %8 = vector.multi_reduction <add>, %7, %cst_2 [1] : vector<128x400xf32> to vector<128xf32>
    %9 = vector.shape_cast %8 : vector<128xf32> to vector<128x1xf32>
    %cst_3 = arith.constant 1.1920929E-7 : f32
    %10 = vector.broadcast %cst_3 : f32 to vector<128x1xf32>
    %11 = arith.maximumf %9, %10 : vector<128x1xf32>
    %12 = math.log %11 : vector<128x1xf32>
    %cst_4 = arith.constant 0.000000e+00 : f32
    %13 = vector.broadcast %cst_4 : f32 to vector<128x1xf32>
    %14 = arith.maximumf %12, %13 : vector<128x1xf32>
    %c0_5 = arith.constant 0 : index
    %c0_6 = arith.constant 0 : index
    %15 = vector.load %arg2[%c0_5, %c0_6] : memref<400x512xf32, #tpu.memory_space<vmem>>, vector<400x512xf32>
    %cst_7 = arith.constant dense<0.000000e+00> : vector<128x512xf32>
    %16 = tpu.matmul %6, %15, %cst_7 {dimension_numbers = #tpu.dot_dimension_numbers<[1], [0], [0], [1], [0, 0, 1, 1], [], []>, precision = #tpu.contract_precision<fp32>} : vector<128x400xf32>, vector<400x512xf32>, vector<128x512xf32> -> vector<128x512xf32>
    %17 = vector.extract_strided_slice %16 {offsets = [0, 0], sizes = [128, 256], strides = [1, 1]} : vector<128x512xf32> to vector<128x256xf32>
    %18 = vector.extract_strided_slice %16 {offsets = [0, 256], sizes = [128, 256], strides = [1, 1]} : vector<128x512xf32> to vector<128x256xf32>
    %19 = arith.mulf %17, %17 : vector<128x256xf32>
    %20 = arith.mulf %18, %18 : vector<128x256xf32>
    %21 = arith.addf %19, %20 : vector<128x256xf32>
    %cst_8 = arith.constant 1.1920929E-7 : f32
    %22 = vector.broadcast %cst_8 : f32 to vector<128x256xf32>
    %23 = arith.maximumf %21, %22 : vector<128x256xf32>
    %24 = math.log %23 : vector<128x256xf32>
    %25 = vector.shape_cast %14 : vector<128x1xf32> to vector<128x1xf32>
    %26 = vector.broadcast %25 : vector<128x1xf32> to vector<128x128xf32>
    %c0_9 = arith.constant 0 : index
    %c0_10 = arith.constant 0 : index
    %27 = vector.load %arg3[%c0_9, %c0_10] : memref<128x384xf32, #tpu.memory_space<vmem>>, vector<128x128xf32>
    tpu.vector_store %arg3[%c0_9, %c0_10], %26 {strides = array<i32>} : memref<128x384xf32, #tpu.memory_space<vmem>>, vector<128x128xf32>,
    %c0_11 = arith.constant 0 : index
    %c128 = arith.constant 128 : index
    %28 = vector.load %arg3[%c0_11, %c128] : memref<128x384xf32, #tpu.memory_space<vmem>>, vector<128x256xf32>
    tpu.vector_store %arg3[%c0_11, %c128], %24 {strides = array<i32>} : memref<128x384xf32, #tpu.memory_space<vmem>>, vector<128x256xf32>,
    return
  }
  func.func @transform_0(%arg0: i32) -> (i32, i32) {
    %c0_i32 = arith.constant 0 : i32
    %c0_i32_0 = arith.constant 0 : i32
    return %arg0, %c0_i32 : i32, i32
  }
  func.func @transform_1(%arg0: i32) -> (i32, i32) {
    %c0_i32 = arith.constant 0 : i32
    %c0_i32_0 = arith.constant 0 : i32
    %c0_i32_1 = arith.constant 0 : i32
    return %c0_i32, %c0_i32_0 : i32, i32
  }
  func.func @transform_2(%arg0: i32) -> (i32, i32) {
    %c0_i32 = arith.constant 0 : i32
    %c0_i32_0 = arith.constant 0 : i32
    return %arg0, %c0_i32 : i32, i32
  }
}

</mosaic_0001>

<llo_original>
// kernel: tpu_custom_call.1
$region0: #{tpu_custom_call.1}
  #allocation0 [shape = 'u32[]', space=smem, size = 0x4, offset = 0x4, fixed_abs, tag = 'smem constant byte address 0x4 - core index']
  #allocation1 [shape = 'u32[144,128]{1,0:T(1,128)}', space=vmem, size = 0x12000, scoped, tag = 'internal scratch']
  %s0 = inlined_call_operand.vmem [shape: f32[256,400], index: 0, kind: input, shape index: {}]
  %s1 = inlined_call_operand.vmem [shape: f32[400,512], index: 1, kind: input, shape index: {}]
  %s2 = inlined_call_operand.hbm [shape: f32[256,384], index: 2, kind: output, shape index: {}]
  %s3 = sld [smem:[#allocation0]]
  $region41: #{tpu_custom_call.1} parent=0
    _
  %s5 = ssub.s32 1, %s3
  %s6 = scalar_select 0, %s5, %s3
  $region1: #{tpu_custom_call.1} parent=0
    #allocation2 [shape = 'u8[393216]{0}', space=vmem, size = 0x60000, scoped, tag = 'output window, operand 0']
    #allocation3 [shape = 's32[2]{0}', space=sflag, size = 0x8, scoped, tag = 'scoped memory for tpu_custom_call.1']
    %7 = vsyncpa [#allocation3], 0
    %s8 = scalar_lea.sflag [#allocation3], 1
    %9 = vsyncpa %s8, 0
    loop: start=0, step=1, limit=4
    $region2: #{tpu_custom_call.1} parent=1 // loop_pre_header
      _
    $region3: #{tpu_custom_call.1} parent=1 // loop_header
      %s11 = sphi 0, %s15
      %p12 = scmp.ge.s32.totalorder %s11, 4
      %s21 = sphi 0, %s23
      %s24 = sphi 0, %s21
      %s25 = sphi 0, %s24
      %s41 = sphi 0, %s25
      %s45 = sphi 0, %s45
      %s47 = sphi 0, %s45
      %s48 = sphi 0, %s47
      %s62 = sphi 0, %s48
      %s68 = sphi 0, %s70
      %s71 = sphi 0, %s68
      %s72 = sphi 0, %s71
      %s88 = sphi 0, %s72
    $region4: #{tpu_custom_call.1} parent=1 // loop_header_branch
      %14 = sbr.rel (%p12) target = $region8
    $region5: #{tpu_custom_call.1} parent=1 // loop_body
      %s16 = ssub.s32 %s11, 1
      %s17 = ssub.s32 %s11, 2
      %s18 = sadd.s32 %s11, 1
      %s19 = ssub.s32 %s11, %s18
      %p20 = scmp.eq.s32.totalorder %s19, 0
      %s22 = sadd.s32 %s21, 1
      %s23 = scalar_select %p20, %s21, %s22
      %p26 = pneg %p20
      %p27 = scmp.eq.s32.totalorder %s11, 1
      %p28 = por %p26, %p27
      %p29 = scmp.ne.s32.totalorder %s21, %s24
      %p30 = scmp.eq.s32.totalorder %s11, 0
      %p31 = por %p29, %p30
      %p32 = scmp.ne.s32.totalorder %s21, %s24
      %p33 = scmp.eq.s32.totalorder %s16, 1
      %p34 = por %p32, %p33
      %p35 = scmp.ne.s32.totalorder %s24, %s25
      %p36 = scmp.eq.s32.totalorder %s16, 0
      %p37 = por %p35, %p36
      %p38 = scmp.ne.s32.totalorder %s24, %s25
      %p39 = scmp.eq.s32.totalorder %s17, 1
      %p40 = por %p38, %p39
      %p42 = scmp.ne.s32.totalorder %s25, %s41
      %p43 = scmp.eq.s32.totalorder %s17, 0
      %p44 = por %p42, %p43
      %s46 = sadd.s32 %s45, 1
      %p49 = scmp.eq.s32.totalorder %s11, 1
      %p50 = scmp.ne.s32.totalorder %s45, %s47
      %p51 = scmp.eq.s32.totalorder %s11, 0
      %p52 = por %p50, %p51
      %p53 = scmp.ne.s32.totalorder %s45, %s47
      %p54 = scmp.eq.s32.totalorder %s16, 1
      %p55 = por %p53, %p54
      %p56 = scmp.ne.s32.totalorder %s47, %s48
      %p57 = scmp.eq.s32.totalorder %s16, 0
      %p58 = por %p56, %p57
      %p59 = scmp.ne.s32.totalorder %s47, %s48
      %p60 = scmp.eq.s32.totalorder %s17, 1
      %p61 = por %p59, %p60
      %p63 = scmp.ne.s32.totalorder %s48, %s62
      %p64 = scmp.eq.s32.totalorder %s17, 0
      %p65 = por %p63, %p64
      %s66 = ssub.s32 %s11, %s18
      %p67 = scmp.eq.s32.totalorder %s66, 0
      %s69 = sadd.s32 %s68, 1
      %s70 = scalar_select %p67, %s68, %s69
      %p73 = pneg %p67
      %p74 = scmp.eq.s32.totalorder %s11, 1
      %p75 = por %p73, %p74
      %p76 = scmp.ne.s32.totalorder %s68, %s71
      %p77 = scmp.eq.s32.totalorder %s11, 0
      %p78 = por %p76, %p77
      %p79 = scmp.ne.s32.totalorder %s68, %s71
      %p80 = scmp.eq.s32.totalorder %s16, 1
      %p81 = por %p79, %p80
      %p82 = scmp.ne.s32.totalorder %s71, %s72
      %p83 = scmp.eq.s32.totalorder %s16, 0
      %p84 = por %p82, %p83
      %p85 = scmp.ne.s32.totalorder %s71, %s72
      %p86 = scmp.eq.s32.totalorder %s17, 1
      %p87 = por %p85, %p86
      %p89 = scmp.ne.s32.totalorder %s72, %s88
      %p90 = scmp.eq.s32.totalorder %s17, 0
      %p91 = por %p89, %p90
      %p92 = scmp.le.s32.totalorder 1, %s11
      %p93 = scmp.lt.s32.totalorder %s11, 3
      %p94 = pnand %p92, %p93
      %p95 = pneg %p94
      // Predicated region
      $region9: #{tpu_custom_call.1} parent=5 // pred_check
        _
      $region10: #{tpu_custom_call.1} parent=5 // pred_check_branch
        %97 = sbr.rel (%p94) target = $region12
      $region11: #{tpu_custom_call.1} parent=5 // pred_region
        %s98 = ssub.s32 %s11, 1
        // Predicated region
        $region13: #{tpu_custom_call.1} parent=11 // pred_check
          %p99 = pneg %p58
        $region14: #{tpu_custom_call.1} parent=11 // pred_check_branch
          %101 = sbr.rel (%p99) target = $region16
        $region15: #{tpu_custom_call.1} parent=11 // pred_region
          _
        $region16: #{tpu_custom_call.1} parent=11 // pred_fallthru
          _
      $region12: #{tpu_custom_call.1} parent=5 // pred_fallthru
        _
      %p102 = scmp.lt.s32.totalorder %s11, 2
      // Predicated region
      $region17: #{tpu_custom_call.1} parent=5 // pred_check
        %p103 = pneg %p102
      $region18: #{tpu_custom_call.1} parent=5 // pred_check_branch
        %105 = sbr.rel (%p103) target = $region20
      $region19: #{tpu_custom_call.1} parent=5 // pred_region
        // Predicated region
        $region21: #{tpu_custom_call.1} parent=19 // pred_check
          %p106 = pneg %p31
        $region22: #{tpu_custom_call.1} parent=19 // pred_check_branch
          %108 = sbr.rel (%p106) target = $region24
        $region23: #{tpu_custom_call.1} parent=19 // pred_region
          %s109 = smul.u32 16, %s11
          %p110 = scmp.lt.s32.totalorder %s109, 31
          %s111 = scalar_select %p110, %s109, 31
          %s112 = smul.addr %s111, 4
          %s113 = smul.addr %s112, 8
          %s114 = scalar_lea.vmem %s0, %s113
          %s115 = smul.u32 16, %s11
        $region24: #{tpu_custom_call.1} parent=19 // pred_fallthru
          _
      $region20: #{tpu_custom_call.1} parent=5 // pred_fallthru
        _
      %p116 = scmp.le.s32.totalorder 1, %s11
      %p117 = scmp.lt.s32.totalorder %s11, 3
      %p118 = pnand %p116, %p117
      %p119 = pneg %p118
      // Predicated region
      $region25: #{tpu_custom_call.1} parent=5 // pred_check
        _
      $region26: #{tpu_custom_call.1} parent=5 // pred_check_branch
        %121 = sbr.rel (%p118) target = $region28
      $region27: #{tpu_custom_call.1} parent=5 // pred_region
        %s122 = ssub.s32 %s11, 1
        %s123 = smul.u32 16, %s16
        %p124 = scmp.lt.s32.totalorder %s123, 31
        %s125 = scalar_select %p124, %s123, 31
        %s126 = smul.addr %s125, 4
        %s127 = smul.addr %s126, 8
        %s128 = scalar_lea.vmem %s0, %s127
        %p129 = pneg %p37
        %p130 = pneg %p34
        %p131 = pneg %p58
        %p132 = pneg %p55
        %p133 = pneg %p84
        %p134 = pneg %p81
        %s135 = sand.u32 %s71, 1
        %s136 = scalar_lea.sflag [#allocation3], %s135
        %s137 = sand.u32 %s71, 1
        %s138 = smul.addr %s137, 384
        %s139 = scalar_lea.vmem [#allocation2], %s138
        %s140 = smul.u32 16, %s16
        %p141 = scmp.lt.s32.totalorder %s140, 31
        %s142 = scalar_select %p141, %s140, 31
        %s143 = smul.addr %s142, 4
        %s144 = smul.addr %s143, 8
        %s145 = scalar_lea.vmem %s0, %s144
        %s146 = smul.u32 16, %s16
        %s147 = smul.u32 16, %s16
        %v148 = vld [vmem:[%s145] sm:$0xff]
        %v149 = vld [vmem:[%s145 + $0x8] sm:$0xff]
        %v150 = vld [vmem:[%s145 + $0x10] sm:$0xff]
        %v151 = vld [vmem:[%s145 + $0x18] sm:$0xff]
        %v152 = vld [vmem:[%s145 + $0x20] sm:$0xff]
        %v153 = vld [vmem:[%s145 + $0x28] sm:$0xff]
        %v154 = vld [vmem:[%s145 + $0x30] sm:$0xff]
        %v155 = vld [vmem:[%s145 + $0x38] sm:$0xff]
        %v156 = vld [vmem:[%s145 + $0x40] sm:$0xff]
        %v157 = vld [vmem:[%s145 + $0x48] sm:$0xff]
        %v158 = vld [vmem:[%s145 + $0x50] sm:$0xff]
        %v159 = vld [vmem:[%s145 + $0x58] sm:$0xff]
        %v160 = vld [vmem:[%s145 + $0x60] sm:$0xff]
        %v161 = vld [vmem:[%s145 + $0x68] sm:$0xff]
        %v162 = vld [vmem:[%s145 + $0x70] sm:$0xff]
        %v163 = vld [vmem:[%s145 + $0x78] sm:$0xff]
        %v164 = vld [vmem:[%s145 + $0x80] sm:$0xff]
        %v165 = vld [vmem:[%s145 + $0x88] sm:$0xff]
        %v166 = vld [vmem:[%s145 + $0x90] sm:$0xff]
        %v167 = vld [vmem:[%s145 + $0x98] sm:$0xff]
        %v168 = vld [vmem:[%s145 + $0xa0] sm:$0xff]
        %v169 = vld [vmem:[%s145 + $0xa8] sm:$0xff]
        %v170 = vld [vmem:[%s145 + $0xb0] sm:$0xff]
        %v171 = vld [vmem:[%s145 + $0xb8] sm:$0xff]
        %v172 = vld [vmem:[%s145 + $0xc0] sm:$0xff]
        %v173 = vld [vmem:[%s145 + $0xc8] sm:$0xff]
        %v174 = vld [vmem:[%s145 + $0xd0] sm:$0xff]
        %v175 = vld [vmem:[%s145 + $0xd8] sm:$0xff]
        %v176 = vld [vmem:[%s145 + $0xe0] sm:$0xff]
        %v177 = vld [vmem:[%s145 + $0xe8] sm:$0xff]
        %v178 = vld [vmem:[%s145 + $0xf0] sm:$0xff]
        %v179 = vld [vmem:[%s145 + $0xf8] sm:$0xff]
        %v180 = vld [vmem:[%s145 + $0x100] sm:$0xff]
        %v181 = vld [vmem:[%s145 + $0x108] sm:$0xff]
        %v182 = vld [vmem:[%s145 + $0x110] sm:$0xff]
        %v183 = vld [vmem:[%s145 + $0x118] sm:$0xff]
        %v184 = vld [vmem:[%s145 + $0x120] sm:$0xff]
        %v185 = vld [vmem:[%s145 + $0x128] sm:$0xff]
        %v186 = vld [vmem:[%s145 + $0x130] sm:$0xff]
        %v187 = vld [vmem:[%s145 + $0x138] sm:$0xff]
        %v188 = vld [vmem:[%s145 + $0x140] sm:$0xff]
        %v189 = vld [vmem:[%s145 + $0x148] sm:$0xff]
        %v190 = vld [vmem:[%s145 + $0x150] sm:$0xff]
        %v191 = vld [vmem:[%s145 + $0x158] sm:$0xff]
        %v192 = vld [vmem:[%s145 + $0x160] sm:$0xff]
        %v193 = vld [vmem:[%s145 + $0x168] sm:$0xff]
        %v194 = vld [vmem:[%s145 + $0x170] sm:$0xff]
        %v195 = vld [vmem:[%s145 + $0x178] sm:$0xff]
        %v196 = vld [vmem:[%s145 + $0x180] sm:$0xff]
        %v197 = vld [vmem:[%s145 + $0x188] sm:$0xff]
        %v198 = vld [vmem:[%s145 + $0x190] sm:$0xff]
        %v199 = vld [vmem:[%s145 + $0x198] sm:$0xff]
        %v200 = vld [vmem:[%s145 + $0x1a0] sm:$0xff]
        %v201 = vld [vmem:[%s145 + $0x1a8] sm:$0xff]
        %v202 = vld [vmem:[%s145 + $0x1b0] sm:$0xff]
        %v203 = vld [vmem:[%s145 + $0x1b8] sm:$0xff]
        %v204 = vld [vmem:[%s145 + $0x1c0] sm:$0xff]
        %v205 = vld [vmem:[%s145 + $0x1c8] sm:$0xff]
        %v206 = vld [vmem:[%s145 + $0x1d0] sm:$0xff]
        %v207 = vld [vmem:[%s145 + $0x1d8] sm:$0xff]
        %v208 = vld [vmem:[%s145 + $0x1e0] sm:$0xff]
        %v209 = vld [vmem:[%s145 + $0x1e8] sm:$0xff]
        %v210 = vld [vmem:[%s145 + $0x1f0] sm:$0xff]
        %v211 = vld [vmem:[%s145 + $0x1f8] sm:$0xff]
        %v212 = vadd.f32 %v148, %v149
        %v213 = vadd.f32 %v212, %v150
        %vm214 = vcmask 130048
        %v215 = vsel %vm214, %v151, 0.0
        %v216 = vadd.f32 %v213, %v215
        %217 = vadd.xlane.f32.xlu0 %v216
        %v218 = vpop.xlane.xlu0 %217
        %v219 = vadd.f32 %v152, %v153
        %v220 = vadd.f32 %v219, %v154
        %v221 = vsel %vm214, %v155, 0.0
        %v222 = vadd.f32 %v220, %v221
        %223 = vadd.xlane.f32.xlu0 %v222
        %v224 = vpop.xlane.xlu0 %223
        %v225 = vadd.f32 %v156, %v157
        %v226 = vadd.f32 %v225, %v158
        %v227 = vsel %vm214, %v159, 0.0
        %v228 = vadd.f32 %v226, %v227
        %229 = vadd.xlane.f32.xlu0 %v228
        %v230 = vpop.xlane.xlu0 %229
        %v231 = vadd.f32 %v160, %v161
        %v232 = vadd.f32 %v231, %v162
        %v233 = vsel %vm214, %v163, 0.0
        %v234 = vadd.f32 %v232, %v233
        %235 = vadd.xlane.f32.xlu0 %v234
        %v236 = vpop.xlane.xlu0 %235
        %v237 = vadd.f32 %v164, %v165
        %v238 = vadd.f32 %v237, %v166
        %v239 = vsel %vm214, %v167, 0.0
        %v240 = vadd.f32 %v238, %v239
        %241 = vadd.xlane.f32.xlu0 %v240
        %v242 = vpop.xlane.xlu0 %241
        %v243 = vadd.f32 %v168, %v169
        %v244 = vadd.f32 %v243, %v170
        %v245 = vsel %vm214, %v171, 0.0
        %v246 = vadd.f32 %v244, %v245
        %247 = vadd.xlane.f32.xlu0 %v246
        %v248 = vpop.xlane.xlu0 %247
        %v249 = vadd.f32 %v172, %v173
        %v250 = vadd.f32 %v249, %v174
        %v251 = vsel %vm214, %v175, 0.0
        %v252 = vadd.f32 %v250, %v251
        %253 = vadd.xlane.f32.xlu0 %v252
        %v254 = vpop.xlane.xlu0 %253
        %v255 = vadd.f32 %v176, %v177
        %v256 = vadd.f32 %v255, %v178
        %v257 = vsel %vm214, %v179, 0.0
        %v258 = vadd.f32 %v256, %v257
        %259 = vadd.xlane.f32.xlu0 %v258
        %v260 = vpop.xlane.xlu0 %259
        %v261 = vadd.f32 %v180, %v181
        %v262 = vadd.f32 %v261, %v182
        %v263 = vsel %vm214, %v183, 0.0
        %v264 = vadd.f32 %v262, %v263
        %265 = vadd.xlane.f32.xlu0 %v264
        %v266 = vpop.xlane.xlu0 %265
        %v267 = vadd.f32 %v184, %v185
        %v268 = vadd.f32 %v267, %v186
        %v269 = vsel %vm214, %v187, 0.0
        %v270 = vadd.f32 %v268, %v269
        %271 = vadd.xlane.f32.xlu0 %v270
        %v272 = vpop.xlane.xlu0 %271
        %v273 = vadd.f32 %v188, %v189
        %v274 = vadd.f32 %v273, %v190
        %v275 = vsel %vm214, %v191, 0.0
        %v276 = vadd.f32 %v274, %v275
        %277 = vadd.xlane.f32.xlu0 %v276
        %v278 = vpop.xlane.xlu0 %277
        %v279 = vadd.f32 %v192, %v193
        %v280 = vadd.f32 %v279, %v194
        %v281 = vsel %vm214, %v195, 0.0
        %v282 = vadd.f32 %v280, %v281
        %283 = vadd.xlane.f32.xlu0 %v282
        %v284 = vpop.xlane.xlu0 %283
        %v285 = vadd.f32 %v196, %v197
        %v286 = vadd.f32 %v285, %v198
        %v287 = vsel %vm214, %v199, 0.0
        %v288 = vadd.f32 %v286, %v287
        %289 = vadd.xlane.f32.xlu0 %v288
        %v290 = vpop.xlane.xlu0 %289
        %v291 = vadd.f32 %v200, %v201
        %v292 = vadd.f32 %v291, %v202
        %v293 = vsel %vm214, %v203, 0.0
        %v294 = vadd.f32 %v292, %v293
        %295 = vadd.xlane.f32.xlu0 %v294
        %v296 = vpop.xlane.xlu0 %295
        %v297 = vadd.f32 %v204, %v205
        %v298 = vadd.f32 %v297, %v206
        %v299 = vsel %vm214, %v207, 0.0
        %v300 = vadd.f32 %v298, %v299
        %301 = vadd.xlane.f32.xlu0 %v300
        %v302 = vpop.xlane.xlu0 %301
        %v303 = vadd.f32 %v208, %v209
        %v304 = vadd.f32 %v303, %v210
        %v305 = vsel %vm214, %v211, 0.0
        %v306 = vadd.f32 %v304, %v305
        %307 = vadd.xlane.f32.xlu0 %v306
        %v308 = vpop.xlane.xlu0 %307
        %v309 = vmul.f32 %v218, 0.0025
        %v310 = vmul.f32 %v224, 0.0025
        %v311 = vmul.f32 %v230, 0.0025
        %v312 = vmul.f32 %v236, 0.0025
        %v313 = vmul.f32 %v242, 0.0025
        %v314 = vmul.f32 %v248, 0.0025
        %v315 = vmul.f32 %v254, 0.0025
        %v316 = vmul.f32 %v260, 0.0025
        %v317 = vmul.f32 %v266, 0.0025
        %v318 = vmul.f32 %v272, 0.0025
        %v319 = vmul.f32 %v278, 0.0025
        %v320 = vmul.f32 %v284, 0.0025
        %v321 = vmul.f32 %v290, 0.0025
        %v322 = vmul.f32 %v296, 0.0025
        %v323 = vmul.f32 %v302, 0.0025
        %v324 = vmul.f32 %v308, 0.0025
        %v325 = vsub.f32 %v148, %v309
        %v326 = vsub.f32 %v149, %v309
        %v327 = vsub.f32 %v150, %v309
        %v328 = vsub.f32 %v151, %v309
        %v329 = vsub.f32 %v152, %v310
        %v330 = vsub.f32 %v153, %v310
        %v331 = vsub.f32 %v154, %v310
        %v332 = vsub.f32 %v155, %v310
        %v333 = vsub.f32 %v156, %v311
        %v334 = vsub.f32 %v157, %v311
        %v335 = vsub.f32 %v158, %v311
        %v336 = vsub.f32 %v159, %v311
        %v337 = vsub.f32 %v160, %v312
        %v338 = vsub.f32 %v161, %v312
        %v339 = vsub.f32 %v162, %v312
        %v340 = vsub.f32 %v163, %v312
        %v341 = vsub.f32 %v164, %v313
        %v342 = vsub.f32 %v165, %v313
        %v343 = vsub.f32 %v166, %v313
        %v344 = vsub.f32 %v167, %v313
        %v345 = vsub.f32 %v168, %v314
        %v346 = vsub.f32 %v169, %v314
        %v347 = vsub.f32 %v170, %v314
        %v348 = vsub.f32 %v171, %v314
        %v349 = vsub.f32 %v172, %v315
        %v350 = vsub.f32 %v173, %v315
        %v351 = vsub.f32 %v174, %v315
        %v352 = vsub.f32 %v175, %v315
        %v353 = vsub.f32 %v176, %v316
        %v354 = vsub.f32 %v177, %v316
        %v355 = vsub.f32 %v178, %v316
        %v356 = vsub.f32 %v179, %v316
        %v357 = vsub.f32 %v180, %v317
        %v358 = vsub.f32 %v181, %v317
        %v359 = vsub.f32 %v182, %v317
        %v360 = vsub.f32 %v183, %v317
        %v361 = vsub.f32 %v184, %v318
        %v362 = vsub.f32 %v185, %v318
        %v363 = vsub.f32 %v186, %v318
        %v364 = vsub.f32 %v187, %v318
        %v365 = vsub.f32 %v188, %v319
        %v366 = vsub.f32 %v189, %v319
        %v367 = vsub.f32 %v190, %v319
        %v368 = vsub.f32 %v191, %v319
        %v369 = vsub.f32 %v192, %v320
        %v370 = vsub.f32 %v193, %v320
        %v371 = vsub.f32 %v194, %v320
        %v372 = vsub.f32 %v195, %v320
        %v373 = vsub.f32 %v196, %v321
        %v374 = vsub.f32 %v197, %v321
        %v375 = vsub.f32 %v198, %v321
        %v376 = vsub.f32 %v199, %v321
        %v377 = vsub.f32 %v200, %v322
        %v378 = vsub.f32 %v201, %v322
        %v379 = vsub.f32 %v202, %v322
        %v380 = vsub.f32 %v203, %v322
        %v381 = vsub.f32 %v204, %v323
        %v382 = vsub.f32 %v205, %v323
        %v383 = vsub.f32 %v206, %v323
        %v384 = vsub.f32 %v207, %v323
        %v385 = vsub.f32 %v208, %v324
        %v386 = vsub.f32 %v209, %v324
        %v387 = vsub.f32 %v210, %v324
        %v388 = vsub.f32 %v211, %v324
        %v389 = vmul.f32 %v325, %v325
        %v390 = vmul.f32 %v326, %v326
        %v391 = vmul.f32 %v327, %v327
        %v392 = vmul.f32 %v328, %v328
        %v393 = vmul.f32 %v329, %v329
        %v394 = vmul.f32 %v330, %v330
        %v395 = vmul.f32 %v331, %v331
        %v396 = vmul.f32 %v332, %v332
        %v397 = vmul.f32 %v333, %v333
        %v398 = vmul.f32 %v334, %v334
        %v399 = vmul.f32 %v335, %v335
        %v400 = vmul.f32 %v336, %v336
        %v401 = vmul.f32 %v337, %v337
        %v402 = vmul.f32 %v338, %v338
        %v403 = vmul.f32 %v339, %v339
        %v404 = vmul.f32 %v340, %v340
        %v405 = vmul.f32 %v341, %v341
        %v406 = vmul.f32 %v342, %v342
        %v407 = vmul.f32 %v343, %v343
        %v408 = vmul.f32 %v344, %v344
        %v409 = vmul.f32 %v345, %v345
        %v410 = vmul.f32 %v346, %v346
        %v411 = vmul.f32 %v347, %v347
        %v412 = vmul.f32 %v348, %v348
        %v413 = vmul.f32 %v349, %v349
        %v414 = vmul.f32 %v350, %v350
        %v415 = vmul.f32 %v351, %v351
        %v416 = vmul.f32 %v352, %v352
        %v417 = vmul.f32 %v353, %v353
        %v418 = vmul.f32 %v354, %v354
        %v419 = vmul.f32 %v355, %v355
        %v420 = vmul.f32 %v356, %v356
        %v421 = vmul.f32 %v357, %v357
        %v422 = vmul.f32 %v358, %v358
        %v423 = vmul.f32 %v359, %v359
        %v424 = vmul.f32 %v360, %v360
        %v425 = vmul.f32 %v361, %v361
        %v426 = vmul.f32 %v362, %v362
        %v427 = vmul.f32 %v363, %v363
        %v428 = vmul.f32 %v364, %v364
        %v429 = vmul.f32 %v365, %v365
        %v430 = vmul.f32 %v366, %v366
        %v431 = vmul.f32 %v367, %v367
        %v432 = vmul.f32 %v368, %v368
        %v433 = vmul.f32 %v369, %v369
        %v434 = vmul.f32 %v370, %v370
        %v435 = vmul.f32 %v371, %v371
        %v436 = vmul.f32 %v372, %v372
        %v437 = vmul.f32 %v373, %v373
        %v438 = vmul.f32 %v374, %v374
        %v439 = vmul.f32 %v375, %v375
        %v440 = vmul.f32 %v376, %v376
        %v441 = vmul.f32 %v377, %v377
        %v442 = vmul.f32 %v378, %v378
        %v443 = vmul.f32 %v379, %v379
        %v444 = vmul.f32 %v380, %v380
        %v445 = vmul.f32 %v381, %v381
        %v446 = vmul.f32 %v382, %v382
        %v447 = vmul.f32 %v383, %v383
        %v448 = vmul.f32 %v384, %v384
        %v449 = vmul.f32 %v385, %v385
        %v450 = vmul.f32 %v386, %v386
        %v451 = vmul.f32 %v387, %v387
        %v452 = vmul.f32 %v388, %v388
        %v453 = vadd.f32 %v389, %v390
        %v454 = vadd.f32 %v453, %v391
        %v455 = vsel %vm214, %v392, 0.0
        %v456 = vadd.f32 %v454, %v455
        %457 = vadd.xlane.f32.xlu0 %v456
        %v458 = vpop.xlane.xlu0 %457
        %v459 = vadd.f32 %v393, %v394
        %v460 = vadd.f32 %v459, %v395
        %v461 = vsel %vm214, %v396, 0.0
        %v462 = vadd.f32 %v460, %v461
        %463 = vadd.xlane.f32.xlu0 %v462
        %v464 = vpop.xlane.xlu0 %463
        %v465 = vadd.f32 %v397, %v398
        %v466 = vadd.f32 %v465, %v399
        %v467 = vsel %vm214, %v400, 0.0
        %v468 = vadd.f32 %v466, %v467
        %469 = vadd.xlane.f32.xlu0 %v468
        %v470 = vpop.xlane.xlu0 %469
        %v471 = vadd.f32 %v401, %v402
        %v472 = vadd.f32 %v471, %v403
        %v473 = vsel %vm214, %v404, 0.0
        %v474 = vadd.f32 %v472, %v473
        %475 = vadd.xlane.f32.xlu0 %v474
        %v476 = vpop.xlane.xlu0 %475
        %v477 = vadd.f32 %v405, %v406
        %v478 = vadd.f32 %v477, %v407
        %v479 = vsel %vm214, %v408, 0.0
        %v480 = vadd.f32 %v478, %v479
        %481 = vadd.xlane.f32.xlu0 %v480
        %v482 = vpop.xlane.xlu0 %481
        %v483 = vadd.f32 %v409, %v410
        %v484 = vadd.f32 %v483, %v411
        %v485 = vsel %vm214, %v412, 0.0
        %v486 = vadd.f32 %v484, %v485
        %487 = vadd.xlane.f32.xlu0 %v486
        %v488 = vpop.xlane.xlu0 %487
        %v489 = vadd.f32 %v413, %v414
        %v490 = vadd.f32 %v489, %v415
        %v491 = vsel %vm214, %v416, 0.0
        %v492 = vadd.f32 %v490, %v491
        %493 = vadd.xlane.f32.xlu0 %v492
        %v494 = vpop.xlane.xlu0 %493
        %v495 = vadd.f32 %v417, %v418
        %v496 = vadd.f32 %v495, %v419
        %v497 = vsel %vm214, %v420, 0.0
        %v498 = vadd.f32 %v496, %v497
        %499 = vadd.xlane.f32.xlu0 %v498
        %v500 = vpop.xlane.xlu0 %499
        %v501 = vadd.f32 %v421, %v422
        %v502 = vadd.f32 %v501, %v423
        %v503 = vsel %vm214, %v424, 0.0
        %v504 = vadd.f32 %v502, %v503
        %505 = vadd.xlane.f32.xlu0 %v504
        %v506 = vpop.xlane.xlu0 %505
        %v507 = vadd.f32 %v425, %v426
        %v508 = vadd.f32 %v507, %v427
        %v509 = vsel %vm214, %v428, 0.0
        %v510 = vadd.f32 %v508, %v509
        %511 = vadd.xlane.f32.xlu0 %v510
        %v512 = vpop.xlane.xlu0 %511
        %v513 = vadd.f32 %v429, %v430
        %v514 = vadd.f32 %v513, %v431
        %v515 = vsel %vm214, %v432, 0.0
        %v516 = vadd.f32 %v514, %v515
        %517 = vadd.xlane.f32.xlu0 %v516
        %v518 = vpop.xlane.xlu0 %517
        %v519 = vadd.f32 %v433, %v434
        %v520 = vadd.f32 %v519, %v435
        %v521 = vsel %vm214, %v436, 0.0
        %v522 = vadd.f32 %v520, %v521
        %523 = vadd.xlane.f32.xlu0 %v522
        %v524 = vpop.xlane.xlu0 %523
        %v525 = vadd.f32 %v437, %v438
        %v526 = vadd.f32 %v525, %v439
        %v527 = vsel %vm214, %v440, 0.0
        %v528 = vadd.f32 %v526, %v527
        %529 = vadd.xlane.f32.xlu0 %v528
        %v530 = vpop.xlane.xlu0 %529
        %v531 = vadd.f32 %v441, %v442
        %v532 = vadd.f32 %v531, %v443
        %v533 = vsel %vm214, %v444, 0.0
        %v534 = vadd.f32 %v532, %v533
        %535 = vadd.xlane.f32.xlu0 %v534
        %v536 = vpop.xlane.xlu0 %535
        %v537 = vadd.f32 %v445, %v446
        %v538 = vadd.f32 %v537, %v447
        %v539 = vsel %vm214, %v448, 0.0
        %v540 = vadd.f32 %v538, %v539
        %541 = vadd.xlane.f32.xlu0 %v540
        %v542 = vpop.xlane.xlu0 %541
        %v543 = vadd.f32 %v449, %v450
        %v544 = vadd.f32 %v543, %v451
        %v545 = vsel %vm214, %v452, 0.0
        %v546 = vadd.f32 %v544, %v545
        %547 = vadd.xlane.f32.xlu0 %v546
        %v548 = vpop.xlane.xlu0 %547
        %v549 = vmax.f32 %v458, 1.1920929e-07
        %v550 = vmax.f32 %v464, 1.1920929e-07
        %v551 = vmax.f32 %v470, 1.1920929e-07
        %v552 = vmax.f32 %v476, 1.1920929e-07
        %v553 = vmax.f32 %v482, 1.1920929e-07
        %v554 = vmax.f32 %v488, 1.1920929e-07
        %v555 = vmax.f32 %v494, 1.1920929e-07
        %v556 = vmax.f32 %v500, 1.1920929e-07
        %v557 = vmax.f32 %v506, 1.1920929e-07
        %v558 = vmax.f32 %v512, 1.1920929e-07
        %v559 = vmax.f32 %v518, 1.1920929e-07
        %v560 = vmax.f32 %v524, 1.1920929e-07
        %v561 = vmax.f32 %v530, 1.1920929e-07
        %v562 = vmax.f32 %v536, 1.1920929e-07
        %v563 = vmax.f32 %v542, 1.1920929e-07
        %v564 = vmax.f32 %v548, 1.1920929e-07
        %v565 = vlog2.pop %v549
        %v566 = vmul.f32 %v565, 0.6931472
        %v567 = vlog2.pop %v550
        %v568 = vmul.f32 %v567, 0.6931472
        %v569 = vlog2.pop %v551
        %v570 = vmul.f32 %v569, 0.6931472
        %v571 = vlog2.pop %v552
        %v572 = vmul.f32 %v571, 0.6931472
        %v573 = vlog2.pop %v553
        %v574 = vmul.f32 %v573, 0.6931472
        %v575 = vlog2.pop %v554
        %v576 = vmul.f32 %v575, 0.6931472
        %v577 = vlog2.pop %v555
        %v578 = vmul.f32 %v577, 0.6931472
        %v579 = vlog2.pop %v556
        %v580 = vmul.f32 %v579, 0.6931472
        %v581 = vlog2.pop %v557
        %v582 = vmul.f32 %v581, 0.6931472
        %v583 = vlog2.pop %v558
        %v584 = vmul.f32 %v583, 0.6931472
        %v585 = vlog2.pop %v559
        %v586 = vmul.f32 %v585, 0.6931472
        %v587 = vlog2.pop %v560
        %v588 = vmul.f32 %v587, 0.6931472
        %v589 = vlog2.pop %v561
        %v590 = vmul.f32 %v589, 0.6931472
        %v591 = vlog2.pop %v562
        %v592 = vmul.f32 %v591, 0.6931472
        %v593 = vlog2.pop %v563
        %v594 = vmul.f32 %v593, 0.6931472
        %v595 = vlog2.pop %v564
        %v596 = vmul.f32 %v595, 0.6931472
        %v597 = vmax.f32 %v566, 0.0
        %v598 = vmax.f32 %v568, 0.0
        %v599 = vmax.f32 %v570, 0.0
        %v600 = vmax.f32 %v572, 0.0
        %v601 = vmax.f32 %v574, 0.0
        %v602 = vmax.f32 %v576, 0.0
        %v603 = vmax.f32 %v578, 0.0
        %v604 = vmax.f32 %v580, 0.0
        %v605 = vmax.f32 %v582, 0.0
        %v606 = vmax.f32 %v584, 0.0
        %v607 = vmax.f32 %v586, 0.0
        %v608 = vmax.f32 %v588, 0.0
        %v609 = vmax.f32 %v590, 0.0
        %v610 = vmax.f32 %v592, 0.0
        %v611 = vmax.f32 %v594, 0.0
        %v612 = vmax.f32 %v596, 0.0
        %v613 = vld [vmem:[%s1] sm:$0xff]
        %v614 = vld [vmem:[%s1 + $0x8] sm:$0xff]
        %v615 = vld [vmem:[%s1 + $0x10] sm:$0xff]
        %v616 = vld [vmem:[%s1 + $0x18] sm:$0xff]
        %v617 = vld [vmem:[%s1 + $0x20] sm:$0xff]
        %v618 = vld [vmem:[%s1 + $0x28] sm:$0xff]
        %v619 = vld [vmem:[%s1 + $0x30] sm:$0xff]
        %v620 = vld [vmem:[%s1 + $0x38] sm:$0xff]
        %v621 = vld [vmem:[%s1 + $0x40] sm:$0xff]
        %v622 = vld [vmem:[%s1 + $0x48] sm:$0xff]
        %v623 = vld [vmem:[%s1 + $0x50] sm:$0xff]
        %v624 = vld [vmem:[%s1 + $0x58] sm:$0xff]
        %v625 = vld [vmem:[%s1 + $0x60] sm:$0xff]
        %v626 = vld [vmem:[%s1 + $0x68] sm:$0xff]
        %v627 = vld [vmem:[%s1 + $0x70] sm:$0xff]
        %v628 = vld [vmem:[%s1 + $0x78] sm:$0xff]
        %v629 = vld [vmem:[%s1 + $0x80] sm:$0xff]
        %v630 = vld [vmem:[%s1 + $0x88] sm:$0xff]
        %v631 = vld [vmem:[%s1 + $0x90] sm:$0xff]
        %v632 = vld [vmem:[%s1 + $0x98] sm:$0xff]
        %v633 = vld [vmem:[%s1 + $0xa0] sm:$0xff]
        %v634 = vld [vmem:[%s1 + $0xa8] sm:$0xff]
        %v635 = vld [vmem:[%s1 + $0xb0] sm:$0xff]
        %v636 = vld [vmem:[%s1 + $0xb8] sm:$0xff]
        %v637 = vld [vmem:[%s1 + $0xc0] sm:$0xff]
        %v638 = vld [vmem:[%s1 + $0xc8] sm:$0xff]
        %v639 = vld [vmem:[%s1 + $0xd0] sm:$0xff]
        %v640 = vld [vmem:[%s1 + $0xd8] sm:$0xff]
        %v641 = vld [vmem:[%s1 + $0xe0] sm:$0xff]
        %v642 = vld [vmem:[%s1 + $0xe8] sm:$0xff]
        %v643 = vld [vmem:[%s1 + $0xf0] sm:$0xff]
        %v644 = vld [vmem:[%s1 + $0xf8] sm:$0xff]
        %v645 = vld [vmem:[%s1 + $0x100] sm:$0xff]
        %v646 = vld [vmem:[%s1 + $0x108] sm:$0xff]
        %v647 = vld [vmem:[%s1 + $0x110] sm:$0xff]
        %v648 = vld [vmem:[%s1 + $0x118] sm:$0xff]
        %v649 = vld [vmem:[%s1 + $0x120] sm:$0xff]
        %v650 = vld [vmem:[%s1 + $0x128] sm:$0xff]
        %v651 = vld [vmem:[%s1 + $0x130] sm:$0xff]
        %v652 = vld [vmem:[%s1 + $0x138] sm:$0xff]
        %v653 = vld [vmem:[%s1 + $0x140] sm:$0xff]
        %v654 = vld [vmem:[%s1 + $0x148] sm:$0xff]
        %v655 = vld [vmem:[%s1 + $0x150] sm:$0xff]
        %v656 = vld [vmem:[%s1 + $0x158] sm:$0xff]
        %v657 = vld [vmem:[%s1 + $0x160] sm:$0xff]
        %v658 = vld [vmem:[%s1 + $0x168] sm:$0xff]
        %v659 = vld [vmem:[%s1 + $0x170] sm:$0xff]
        %v660 = vld [vmem:[%s1 + $0x178] sm:$0xff]
        %v661 = vld [vmem:[%s1 + $0x180] sm:$0xff]
        %v662 = vld [vmem:[%s1 + $0x188] sm:$0xff]
        %v663 = vld [vmem:[%s1 + $0x190] sm:$0xff]
        %v664 = vld [vmem:[%s1 + $0x198] sm:$0xff]
        %v665 = vld [vmem:[%s1 + $0x1a0] sm:$0xff]
        %v666 = vld [vmem:[%s1 + $0x1a8] sm:$0xff]
        %v667 = vld [vmem:[%s1 + $0x1b0] sm:$0xff]
        %v668 = vld [vmem:[%s1 + $0x1b8] sm:$0xff]
        %v669 = vld [vmem:[%s1 + $0x1c0] sm:$0xff]
        %v670 = vld [vmem:[%s1 + $0x1c8] sm:$0xff]
        %v671 = vld [vmem:[%s1 + $0x1d0] sm:$0xff]
        %v672 = vld [vmem:[%s1 + $0x1d8] sm:$0xff]
        %v673 = vld [vmem:[%s1 + $0x1e0] sm:$0xff]
        %v674 = vld [vmem:[%s1 + $0x1e8] sm:$0xff]
        %v675 = vld [vmem:[%s1 + $0x1f0] sm:$0xff]
        %v676 = vld [vmem:[%s1 + $0x1f8] sm:$0xff]
        %v677 = vld [vmem:[%s1 + $0x200] sm:$0xff]
        %v678 = vld [vmem:[%s1 + $0x208] sm:$0xff]
        %v679 = vld [vmem:[%s1 + $0x210] sm:$0xff]
        %v680 = vld [vmem:[%s1 + $0x218] sm:$0xff]
        %v681 = vld [vmem:[%s1 + $0x220] sm:$0xff]
        %v682 = vld [vmem:[%s1 + $0x228] sm:$0xff]
        %v683 = vld [vmem:[%s1 + $0x230] sm:$0xff]
        %v684 = vld [vmem:[%s1 + $0x238] sm:$0xff]
        %v685 = vld [vmem:[%s1 + $0x240] sm:$0xff]
        %v686 = vld [vmem:[%s1 + $0x248] sm:$0xff]
        %v687 = vld [vmem:[%s1 + $0x250] sm:$0xff]
        %v688 = vld [vmem:[%s1 + $0x258] sm:$0xff]
        %v689 = vld [vmem:[%s1 + $0x260] sm:$0xff]
        %v690 = vld [vmem:[%s1 + $0x268] sm:$0xff]
        %v691 = vld [vmem:[%s1 + $0x270] sm:$0xff]
        %v692 = vld [vmem:[%s1 + $0x278] sm:$0xff]
        %v693 = vld [vmem:[%s1 + $0x280] sm:$0xff]
        %v694 = vld [vmem:[%s1 + $0x288] sm:$0xff]
        %v695 = vld [vmem:[%s1 + $0x290] sm:$0xff]
        %v696 = vld [vmem:[%s1 + $0x298] sm:$0xff]
        %v697 = vld [vmem:[%s1 + $0x2a0] sm:$0xff]
        %v698 = vld [vmem:[%s1 + $0x2a8] sm:$0xff]
        %v699 = vld [vmem:[%s1 + $0x2b0] sm:$0xff]
        %v700 = vld [vmem:[%s1 + $0x2b8] sm:$0xff]
        %v701 = vld [vmem:[%s1 + $0x2c0] sm:$0xff]
        %v702 = vld [vmem:[%s1 + $0x2c8] sm:$0xff]
        %v703 = vld [vmem:[%s1 + $0x2d0] sm:$0xff]
        %v704 = vld [vmem:[%s1 + $0x2d8] sm:$0xff]
        %v705 = vld [vmem:[%s1 + $0x2e0] sm:$0xff]
        %v706 = vld [vmem:[%s1 + $0x2e8] sm:$0xff]
        %v707 = vld [vmem:[%s1 + $0x2f0] sm:$0xff]
        %v708 = vld [vmem:[%s1 + $0x2f8] sm:$0xff]
        %v709 = vld [vmem:[%s1 + $0x300] sm:$0xff]
        %v710 = vld [vmem:[%s1 + $0x308] sm:$0xff]
        %v711 = vld [vmem:[%s1 + $0x310] sm:$0xff]
        %v712 = vld [vmem:[%s1 + $0x318] sm:$0xff]
        %v713 = vld [vmem:[%s1 + $0x320] sm:$0xff]
        %v714 = vld [vmem:[%s1 + $0x328] sm:$0xff]
        %v715 = vld [vmem:[%s1 + $0x330] sm:$0xff]
        %v716 = vld [vmem:[%s1 + $0x338] sm:$0xff]
        %v717 = vld [vmem:[%s1 + $0x340] sm:$0xff]
        %v718 = vld [vmem:[%s1 + $0x348] sm:$0xff]
        %v719 = vld [vmem:[%s1 + $0x350] sm:$0xff]
        %v720 = vld [vmem:[%s1 + $0x358] sm:$0xff]
        %v721 = vld [vmem:[%s1 + $0x360] sm:$0xff]
        %v722 = vld [vmem:[%s1 + $0x368] sm:$0xff]
        %v723 = vld [vmem:[%s1 + $0x370] sm:$0xff]
        %v724 = vld [vmem:[%s1 + $0x378] sm:$0xff]
        %v725 = vld [vmem:[%s1 + $0x380] sm:$0xff]
        %v726 = vld [vmem:[%s1 + $0x388] sm:$0xff]
        %v727 = vld [vmem:[%s1 + $0x390] sm:$0xff]
        %v728 = vld [vmem:[%s1 + $0x398] sm:$0xff]
        %v729 = vld [vmem:[%s1 + $0x3a0] sm:$0xff]
        %v730 = vld [vmem:[%s1 + $0x3a8] sm:$0xff]
        %v731 = vld [vmem:[%s1 + $0x3b0] sm:$0xff]
        %v732 = vld [vmem:[%s1 + $0x3b8] sm:$0xff]
        %v733 = vld [vmem:[%s1 + $0x3c0] sm:$0xff]
        %v734 = vld [vmem:[%s1 + $0x3c8] sm:$0xff]
        %v735 = vld [vmem:[%s1 + $0x3d0] sm:$0xff]
        %v736 = vld [vmem:[%s1 + $0x3d8] sm:$0xff]
        %v737 = vld [vmem:[%s1 + $0x3e0] sm:$0xff]
        %v738 = vld [vmem:[%s1 + $0x3e8] sm:$0xff]
        %v739 = vld [vmem:[%s1 + $0x3f0] sm:$0xff]
        %v740 = vld [vmem:[%s1 + $0x3f8] sm:$0xff]
        %v741 = vld [vmem:[%s1 + $0x400] sm:$0xff]
        %v742 = vld [vmem:[%s1 + $0x408] sm:$0xff]
        %v743 = vld [vmem:[%s1 + $0x410] sm:$0xff]
        %v744 = vld [vmem:[%s1 + $0x418] sm:$0xff]
        %v745 = vld [vmem:[%s1 + $0x420] sm:$0xff]
        %v746 = vld [vmem:[%s1 + $0x428] sm:$0xff]
        %v747 = vld [vmem:[%s1 + $0x430] sm:$0xff]
        %v748 = vld [vmem:[%s1 + $0x438] sm:$0xff]
        %v749 = vld [vmem:[%s1 + $0x440] sm:$0xff]
        %v750 = vld [vmem:[%s1 + $0x448] sm:$0xff]
        %v751 = vld [vmem:[%s1 + $0x450] sm:$0xff]
        %v752 = vld [vmem:[%s1 + $0x458] sm:$0xff]
        %v753 = vld [vmem:[%s1 + $0x460] sm:$0xff]
        %v754 = vld [vmem:[%s1 + $0x468] sm:$0xff]
        %v755 = vld [vmem:[%s1 + $0x470] sm:$0xff]
        %v756 = vld [vmem:[%s1 + $0x478] sm:$0xff]
        %v757 = vld [vmem:[%s1 + $0x480] sm:$0xff]
        %v758 = vld [vmem:[%s1 + $0x488] sm:$0xff]
        %v759 = vld [vmem:[%s1 + $0x490] sm:$0xff]
        %v760 = vld [vmem:[%s1 + $0x498] sm:$0xff]
        %v761 = vld [vmem:[%s1 + $0x4a0] sm:$0xff]
        %v762 = vld [vmem:[%s1 + $0x4a8] sm:$0xff]
        %v763 = vld [vmem:[%s1 + $0x4b0] sm:$0xff]
        %v764 = vld [vmem:[%s1 + $0x4b8] sm:$0xff]
        %v765 = vld [vmem:[%s1 + $0x4c0] sm:$0xff]
        %v766 = vld [vmem:[%s1 + $0x4c8] sm:$0xff]
        %v767 = vld [vmem:[%s1 + $0x4d0] sm:$0xff]
        %v768 = vld [vmem:[%s1 + $0x4d8] sm:$0xff]
        %v769 = vld [vmem:[%s1 + $0x4e0] sm:$0xff]
        %v770 = vld [vmem:[%s1 + $0x4e8] sm:$0xff]
        %v771 = vld [vmem:[%s1 + $0x4f0] sm:$0xff]
        %v772 = vld [vmem:[%s1 + $0x4f8] sm:$0xff]
        %v773 = vld [vmem:[%s1 + $0x500] sm:$0xff]
        %v774 = vld [vmem:[%s1 + $0x508] sm:$0xff]
        %v775 = vld [vmem:[%s1 + $0x510] sm:$0xff]
        %v776 = vld [vmem:[%s1 + $0x518] sm:$0xff]
        %v777 = vld [vmem:[%s1 + $0x520] sm:$0xff]
        %v778 = vld [vmem:[%s1 + $0x528] sm:$0xff]
        %v779 = vld [vmem:[%s1 + $0x530] sm:$0xff]
        %v780 = vld [vmem:[%s1 + $0x538] sm:$0xff]
        %v781 = vld [vmem:[%s1 + $0x540] sm:$0xff]
        %v782 = vld [vmem:[%s1 + $0x548] sm:$0xff]
        %v783 = vld [vmem:[%s1 + $0x550] sm:$0xff]
        %v784 = vld [vmem:[%s1 + $0x558] sm:$0xff]
        %v785 = vld [vmem:[%s1 + $0x560] sm:$0xff]
        %v786 = vld [vmem:[%s1 + $0x568] sm:$0xff]
        %v787 = vld [vmem:[%s1 + $0x570] sm:$0xff]
        %v788 = vld [vmem:[%s1 + $0x578] sm:$0xff]
        %v789 = vld [vmem:[%s1 + $0x580] sm:$0xff]
        %v790 = vld [vmem:[%s1 + $0x588] sm:$0xff]
        %v791 = vld [vmem:[%s1 + $0x590] sm:$0xff]
        %v792 = vld [vmem:[%s1 + $0x598] sm:$0xff]
        %v793 = vld [vmem:[%s1 + $0x5a0] sm:$0xff]
        %v794 = vld [vmem:[%s1 + $0x5a8] sm:$0xff]
        %v795 = vld [vmem:[%s1 + $0x5b0] sm:$0xff]
        %v796 = vld [vmem:[%s1 + $0x5b8] sm:$0xff]
        %v797 = vld [vmem:[%s1 + $0x5c0] sm:$0xff]
        %v798 = vld [vmem:[%s1 + $0x5c8] sm:$0xff]
        %v799 = vld [vmem:[%s1 + $0x5d0] sm:$0xff]
        %v800 = vld [vmem:[%s1 + $0x5d8] sm:$0xff]
        %v801 = vld [vmem:[%s1 + $0x5e0] sm:$0xff]
        %v802 = vld [vmem:[%s1 + $0x5e8] sm:$0xff]
        %v803 = vld [vmem:[%s1 + $0x5f0] sm:$0xff]
        %v804 = vld [vmem:[%s1 + $0x5f8] sm:$0xff]
        %v805 = vld [vmem:[%s1 + $0x600] sm:$0xff]
        %v806 = vld [vmem:[%s1 + $0x608] sm:$0xff]
        %v807 = vld [vmem:[%s1 + $0x610] sm:$0xff]
        %v808 = vld [vmem:[%s1 + $0x618] sm:$0xff]
        %v809 = vld [vmem:[%s1 + $0x620] sm:$0xff]
        %v810 = vld [vmem:[%s1 + $0x628] sm:$0xff]
        %v811 = vld [vmem:[%s1 + $0x630] sm:$0xff]
        %v812 = vld [vmem:[%s1 + $0x638] sm:$0xff]
        %v814 = vsel %vm214, %v328, 0
        %v817 = vsel %vm214, %v332, 0
        %v820 = vsel %vm214, %v336, 0
        %v823 = vsel %vm214, %v340, 0
        %v826 = vsel %vm214, %v344, 0
        %v829 = vsel %vm214, %v348, 0
        %v832 = vsel %vm214, %v352, 0
        %v835 = vsel %vm214, %v356, 0
        %v838 = vsel %vm214, %v360, 0
        %v841 = vsel %vm214, %v364, 0
        %v844 = vsel %vm214, %v368, 0
        %v847 = vsel %vm214, %v372, 0
        %v850 = vsel %vm214, %v376, 0
        %v853 = vsel %vm214, %v380, 0
        %v856 = vsel %vm214, %v384, 0
        %v859 = vsel %vm214, %v388, 0
        %v861 = vand.u32 %v674, 4294901760
        %862 = vmatprep.subr.mxu0 %v861
        %v863 = vand.u32 %v673, 4294901760
        %864 = vmatpush1.msra.mxu0 %v863
        %v865 = vand.u32 %v670, 4294901760
        %866 = vmatprep.subr.mxu0 %v865
        %v867 = vand.u32 %v669, 4294901760
        %868 = vmatpush1.msra.mxu0 %v867
        %v869 = vand.u32 %v666, 4294901760
        %870 = vmatprep.subr.mxu0 %v869
        %v871 = vand.u32 %v665, 4294901760
        %872 = vmatpush1.msra.mxu0 %v871
        %v873 = vand.u32 %v662, 4294901760
        %874 = vmatprep.subr.mxu0 %v873
        %v875 = vand.u32 %v661, 4294901760
        %876 = vmatpush1.msra.mxu0 %v875
        %v877 = vand.u32 %v658, 4294901760
        %878 = vmatprep.subr.mxu0 %v877
        %v879 = vand.u32 %v657, 4294901760
        %880 = vmatpush1.msra.mxu0 %v879
        %v881 = vand.u32 %v654, 4294901760
        %882 = vmatprep.subr.mxu0 %v881
        %v883 = vand.u32 %v653, 4294901760
        %884 = vmatpush1.msra.mxu0 %v883
        %v885 = vand.u32 %v650, 4294901760
        %886 = vmatprep.subr.mxu0 %v885
        %v887 = vand.u32 %v649, 4294901760
        %888 = vmatpush1.msra.mxu0 %v887
        %v889 = vand.u32 %v646, 4294901760
        %890 = vmatprep.subr.mxu0 %v889
        %v891 = vand.u32 %v645, 4294901760
        %892 = vmatpush1.msra.mxu0 %v891
        %v893 = vand.u32 %v642, 4294901760
        %894 = vmatprep.subr.mxu0 %v893
        %v895 = vand.u32 %v641, 4294901760
        %896 = vmatpush1.msra.mxu0 %v895
        %v897 = vand.u32 %v638, 4294901760
        %898 = vmatprep.subr.mxu0 %v897
        %v899 = vand.u32 %v637, 4294901760
        %900 = vmatpush1.msra.mxu0 %v899
        %v901 = vand.u32 %v634, 4294901760
        %902 = vmatprep.subr.mxu0 %v901
        %v903 = vand.u32 %v633, 4294901760
        %904 = vmatpush1.msra.mxu0 %v903
        %v905 = vand.u32 %v630, 4294901760
        %906 = vmatprep.subr.mxu0 %v905
        %v907 = vand.u32 %v629, 4294901760
        %908 = vmatpush1.msra.mxu0 %v907
        %v909 = vand.u32 %v626, 4294901760
        %910 = vmatprep.subr.mxu0 %v909
        %v911 = vand.u32 %v625, 4294901760
        %912 = vmatpush1.msra.mxu0 %v911
        %v913 = vand.u32 %v622, 4294901760
        %914 = vmatprep.subr.mxu0 %v913
        %v915 = vand.u32 %v621, 4294901760
        %916 = vmatpush1.msra.mxu0 %v915
        %v917 = vand.u32 %v618, 4294901760
        %918 = vmatprep.subr.mxu0 %v917
        %v919 = vand.u32 %v617, 4294901760
        %920 = vmatpush1.msra.mxu0 %v919
        %v921 = vand.u32 %v614, 4294901760
        %922 = vmatprep.subr.mxu0 %v921
        %v923 = vand.u32 %v613, 4294901760
        %924 = vmatpush1.msra.mxu0 %v923
        %v925 = vand.u32 %v738, 4294901760
        %926 = vmatprep.subr.mxu0 %v925
        %v927 = vand.u32 %v737, 4294901760
        %928 = vmatpush2.msra.mxu0 %v927
        %v929 = vand.u32 %v734, 4294901760
        %930 = vmatprep.subr.mxu0 %v929
        %v931 = vand.u32 %v733, 4294901760
        %932 = vmatpush2.msra.mxu0 %v931
        %v933 = vand.u32 %v730, 4294901760
        %934 = vmatprep.subr.mxu0 %v933
        %v935 = vand.u32 %v729, 4294901760
        %936 = vmatpush2.msra.mxu0 %v935
        %v937 = vand.u32 %v726, 4294901760
        %938 = vmatprep.subr.mxu0 %v937
        %v939 = vand.u32 %v725, 4294901760
        %940 = vmatpush2.msra.mxu0 %v939
        %v941 = vand.u32 %v722, 4294901760
        %942 = vmatprep.subr.mxu0 %v941
        %v943 = vand.u32 %v721, 4294901760
        %944 = vmatpush2.msra.mxu0 %v943
        %v945 = vand.u32 %v718, 4294901760
        %946 = vmatprep.subr.mxu0 %v945
        %v947 = vand.u32 %v717, 4294901760
        %948 = vmatpush2.msra.mxu0 %v947
        %v949 = vand.u32 %v714, 4294901760
        %950 = vmatprep.subr.mxu0 %v949
        %v951 = vand.u32 %v713, 4294901760
        %952 = vmatpush2.msra.mxu0 %v951
        %v953 = vand.u32 %v710, 4294901760
        %954 = vmatprep.subr.mxu0 %v953
        %v955 = vand.u32 %v709, 4294901760
        %956 = vmatpush2.msra.mxu0 %v955
        %v957 = vand.u32 %v706, 4294901760
        %958 = vmatprep.subr.mxu0 %v957
        %v959 = vand.u32 %v705, 4294901760
        %960 = vmatpush2.msra.mxu0 %v959
        %v961 = vand.u32 %v702, 4294901760
        %962 = vmatprep.subr.mxu0 %v961
        %v963 = vand.u32 %v701, 4294901760
        %964 = vmatpush2.msra.mxu0 %v963
        %v965 = vand.u32 %v698, 4294901760
        %966 = vmatprep.subr.mxu0 %v965
        %v967 = vand.u32 %v697, 4294901760
        %968 = vmatpush2.msra.mxu0 %v967
        %v969 = vand.u32 %v694, 4294901760
        %970 = vmatprep.subr.mxu0 %v969
        %v971 = vand.u32 %v693, 4294901760
        %972 = vmatpush2.msra.mxu0 %v971
        %v973 = vand.u32 %v690, 4294901760
        %974 = vmatprep.subr.mxu0 %v973
        %v975 = vand.u32 %v689, 4294901760
        %976 = vmatpush2.msra.mxu0 %v975
        %v977 = vand.u32 %v686, 4294901760
        %978 = vmatprep.subr.mxu0 %v977
        %v979 = vand.u32 %v685, 4294901760
        %980 = vmatpush2.msra.mxu0 %v979
        %v981 = vand.u32 %v682, 4294901760
        %982 = vmatprep.subr.mxu0 %v981
        %v983 = vand.u32 %v681, 4294901760
        %984 = vmatpush2.msra.mxu0 %v983
        %v985 = vand.u32 %v678, 4294901760
        %986 = vmatprep.subr.mxu0 %v985
        %v987 = vand.u32 %v677, 4294901760
        %988 = vmatpush2.msra.mxu0 %v987
        %v989 = vand.u32 %v326, 4294901760
        %v990 = vsub.f32 %v326, %v989
        %v991 = vand.u32 %v990, 4294901760
        %v992 = vsub.f32 %v990, %v991
        %v993 = vand.u32 %v992, 4294901760
        %994 = vmatprep.mubr.f32.mxu0 %v993
        %v995 = vand.u32 %v325, 4294901760
        %v996 = vsub.f32 %v325, %v995
        %v997 = vand.u32 %v996, 4294901760
        %v998 = vsub.f32 %v996, %v997
        %v999 = vand.u32 %v998, 4294901760
        %1000 = vmatmul.mubr.f32.gmra.mxu0 %v999
        %v1001 = vpop.f32.mrf.mxu0
        %v1002 = vadd.f32 0.0, %v1001
        %v1003 = vpop.f32.mrf.mxu0
        %v1004 = vadd.f32 0.0, %v1003
        %v1005 = vand.u32 %v330, 4294901760
        %v1006 = vsub.f32 %v330, %v1005
        %v1007 = vand.u32 %v1006, 4294901760
        %v1008 = vsub.f32 %v1006, %v1007
        %v1009 = vand.u32 %v1008, 4294901760
        %1010 = vmatprep.mubr.f32.mxu0 %v1009
        %v1011 = vand.u32 %v329, 4294901760
        %v1012 = vsub.f32 %v329, %v1011
        %v1013 = vand.u32 %v1012, 4294901760
        %v1014 = vsub.f32 %v1012, %v1013
        %v1015 = vand.u32 %v1014, 4294901760
        %1016 = vmatmul.mubr.f32.gmra.mxu0 %v1015
        %v1017 = vpop.f32.mrf.mxu0
        %v1018 = vadd.f32 0.0, %v1017
        %v1019 = vpop.f32.mrf.mxu0
        %v1020 = vadd.f32 0.0, %v1019
        %v1021 = vand.u32 %v334, 4294901760
        %v1022 = vsub.f32 %v334, %v1021
        %v1023 = vand.u32 %v1022, 4294901760
        %v1024 = vsub.f32 %v1022, %v1023
        %v1025 = vand.u32 %v1024, 4294901760
        %1026 = vmatprep.mubr.f32.mxu0 %v1025
        %v1027 = vand.u32 %v333, 4294901760
        %v1028 = vsub.f32 %v333, %v1027
        %v1029 = vand.u32 %v1028, 4294901760
        %v1030 = vsub.f32 %v1028, %v1029
        %v1031 = vand.u32 %v1030, 4294901760
        %1032 = vmatmul.mubr.f32.gmra.mxu0 %v1031
        %v1033 = vpop.f32.mrf.mxu0
        %v1034 = vadd.f32 0.0, %v1033
        %v1035 = vpop.f32.mrf.mxu0
        %v1036 = vadd.f32 0.0, %v1035
        %v1037 = vand.u32 %v338, 4294901760
        %v1038 = vsub.f32 %v338, %v1037
        %v1039 = vand.u32 %v1038, 4294901760
        %v1040 = vsub.f32 %v1038, %v1039
        %v1041 = vand.u32 %v1040, 4294901760
        %1042 = vmatprep.mubr.f32.mxu0 %v1041
        %v1043 = vand.u32 %v337, 4294901760
        %v1044 = vsub.f32 %v337, %v1043
        %v1045 = vand.u32 %v1044, 4294901760
        %v1046 = vsub.f32 %v1044, %v1045
        %v1047 = vand.u32 %v1046, 4294901760
        %1048 = vmatmul.mubr.f32.gmra.mxu0 %v1047
        %v1049 = vpop.f32.mrf.mxu0
        %v1050 = vadd.f32 0.0, %v1049
        %v1051 = vpop.f32.mrf.mxu0
        %v1052 = vadd.f32 0.0, %v1051
        %v1053 = vand.u32 %v342, 4294901760
        %v1054 = vsub.f32 %v342, %v1053
        %v1055 = vand.u32 %v1054, 4294901760
        %v1056 = vsub.f32 %v1054, %v1055
        %v1057 = vand.u32 %v1056, 4294901760
        %1058 = vmatprep.mubr.f32.mxu0 %v1057
        %v1059 = vand.u32 %v341, 4294901760
        %v1060 = vsub.f32 %v341, %v1059
        %v1061 = vand.u32 %v1060, 4294901760
        %v1062 = vsub.f32 %v1060, %v1061
        %v1063 = vand.u32 %v1062, 4294901760
        %1064 = vmatmul.mubr.f32.gmra.mxu0 %v1063
        %v1065 = vpop.f32.mrf.mxu0
        %v1066 = vadd.f32 0.0, %v1065
        %v1067 = vpop.f32.mrf.mxu0
        %v1068 = vadd.f32 0.0, %v1067
        %v1069 = vand.u32 %v346, 4294901760
        %v1070 = vsub.f32 %v346, %v1069
        %v1071 = vand.u32 %v1070, 4294901760
        %v1072 = vsub.f32 %v1070, %v1071
        %v1073 = vand.u32 %v1072, 4294901760
        %1074 = vmatprep.mubr.f32.mxu0 %v1073
        %v1075 = vand.u32 %v345, 4294901760
        %v1076 = vsub.f32 %v345, %v1075
        %v1077 = vand.u32 %v1076, 4294901760
        %v1078 = vsub.f32 %v1076, %v1077
        %v1079 = vand.u32 %v1078, 4294901760
        %1080 = vmatmul.mubr.f32.gmra.mxu0 %v1079
        %v1081 = vpop.f32.mrf.mxu0
        %v1082 = vadd.f32 0.0, %v1081
        %v1083 = vpop.f32.mrf.mxu0
        %v1084 = vadd.f32 0.0, %v1083
        %v1085 = vand.u32 %v350, 4294901760
        %v1086 = vsub.f32 %v350, %v1085
        %v1087 = vand.u32 %v1086, 4294901760
        %v1088 = vsub.f32 %v1086, %v1087
        %v1089 = vand.u32 %v1088, 4294901760
        %1090 = vmatprep.mubr.f32.mxu0 %v1089
        %v1091 = vand.u32 %v349, 4294901760
        %v1092 = vsub.f32 %v349, %v1091
        %v1093 = vand.u32 %v1092, 4294901760
        %v1094 = vsub.f32 %v1092, %v1093
        %v1095 = vand.u32 %v1094, 4294901760
        %1096 = vmatmul.mubr.f32.gmra.mxu0 %v1095
        %v1097 = vpop.f32.mrf.mxu0
        %v1098 = vadd.f32 0.0, %v1097
        %v1099 = vpop.f32.mrf.mxu0
        %v1100 = vadd.f32 0.0, %v1099
        %v1101 = vand.u32 %v354, 4294901760
        %v1102 = vsub.f32 %v354, %v1101
        %v1103 = vand.u32 %v1102, 4294901760
        %v1104 = vsub.f32 %v1102, %v1103
        %v1105 = vand.u32 %v1104, 4294901760
        %1106 = vmatprep.mubr.f32.mxu0 %v1105
        %v1107 = vand.u32 %v353, 4294901760
        %v1108 = vsub.f32 %v353, %v1107
        %v1109 = vand.u32 %v1108, 4294901760
        %v1110 = vsub.f32 %v1108, %v1109
        %v1111 = vand.u32 %v1110, 4294901760
        %1112 = vmatmul.mubr.f32.gmra.mxu0 %v1111
        %v1113 = vpop.f32.mrf.mxu0
        %v1114 = vadd.f32 0.0, %v1113
        %v1115 = vpop.f32.mrf.mxu0
        %v1116 = vadd.f32 0.0, %v1115
        %v1117 = vand.u32 %v358, 4294901760
        %v1118 = vsub.f32 %v358, %v1117
        %v1119 = vand.u32 %v1118, 4294901760
        %v1120 = vsub.f32 %v1118, %v1119
        %v1121 = vand.u32 %v1120, 4294901760
        %1122 = vmatprep.mubr.f32.mxu0 %v1121
        %v1123 = vand.u32 %v357, 4294901760
        %v1124 = vsub.f32 %v357, %v1123
        %v1125 = vand.u32 %v1124, 4294901760
        %v1126 = vsub.f32 %v1124, %v1125
        %v1127 = vand.u32 %v1126, 4294901760
        %1128 = vmatmul.mubr.f32.gmra.mxu0 %v1127
        %v1129 = vpop.f32.mrf.mxu0
        %v1130 = vadd.f32 0.0, %v1129
        %v1131 = vpop.f32.mrf.mxu0
        %v1132 = vadd.f32 0.0, %v1131
        %v1133 = vand.u32 %v362, 4294901760
        %v1134 = vsub.f32 %v362, %v1133
        %v1135 = vand.u32 %v1134, 4294901760
        %v1136 = vsub.f32 %v1134, %v1135
        %v1137 = vand.u32 %v1136, 4294901760
        %1138 = vmatprep.mubr.f32.mxu0 %v1137
        %v1139 = vand.u32 %v361, 4294901760
        %v1140 = vsub.f32 %v361, %v1139
        %v1141 = vand.u32 %v1140, 4294901760
        %v1142 = vsub.f32 %v1140, %v1141
        %v1143 = vand.u32 %v1142, 4294901760
        %1144 = vmatmul.mubr.f32.gmra.mxu0 %v1143
        %v1145 = vpop.f32.mrf.mxu0
        %v1146 = vadd.f32 0.0, %v1145
        %v1147 = vpop.f32.mrf.mxu0
        %v1148 = vadd.f32 0.0, %v1147
        %v1149 = vand.u32 %v366, 4294901760
        %v1150 = vsub.f32 %v366, %v1149
        %v1151 = vand.u32 %v1150, 4294901760
        %v1152 = vsub.f32 %v1150, %v1151
        %v1153 = vand.u32 %v1152, 4294901760
        %1154 = vmatprep.mubr.f32.mxu0 %v1153
        %v1155 = vand.u32 %v365, 4294901760
        %v1156 = vsub.f32 %v365, %v1155
        %v1157 = vand.u32 %v1156, 4294901760
        %v1158 = vsub.f32 %v1156, %v1157
        %v1159 = vand.u32 %v1158, 4294901760
        %1160 = vmatmul.mubr.f32.gmra.mxu0 %v1159
        %v1161 = vpop.f32.mrf.mxu0
        %v1162 = vadd.f32 0.0, %v1161
        %v1163 = vpop.f32.mrf.mxu0
        %v1164 = vadd.f32 0.0, %v1163
        %v1165 = vand.u32 %v370, 4294901760
        %v1166 = vsub.f32 %v370, %v1165
        %v1167 = vand.u32 %v1166, 4294901760
        %v1168 = vsub.f32 %v1166, %v1167
        %v1169 = vand.u32 %v1168, 4294901760
        %1170 = vmatprep.mubr.f32.mxu0 %v1169
        %v1171 = vand.u32 %v369, 4294901760
        %v1172 = vsub.f32 %v369, %v1171
        %v1173 = vand.u32 %v1172, 4294901760
        %v1174 = vsub.f32 %v1172, %v1173
        %v1175 = vand.u32 %v1174, 4294901760
        %1176 = vmatmul.mubr.f32.gmra.mxu0 %v1175
        %v1177 = vpop.f32.mrf.mxu0
        %v1178 = vadd.f32 0.0, %v1177
        %v1179 = vpop.f32.mrf.mxu0
        %v1180 = vadd.f32 0.0, %v1179
        %v1181 = vand.u32 %v374, 4294901760
        %v1182 = vsub.f32 %v374, %v1181
        %v1183 = vand.u32 %v1182, 4294901760
        %v1184 = vsub.f32 %v1182, %v1183
        %v1185 = vand.u32 %v1184, 4294901760
        %1186 = vmatprep.mubr.f32.mxu0 %v1185
        %v1187 = vand.u32 %v373, 4294901760
        %v1188 = vsub.f32 %v373, %v1187
        %v1189 = vand.u32 %v1188, 4294901760
        %v1190 = vsub.f32 %v1188, %v1189
        %v1191 = vand.u32 %v1190, 4294901760
        %1192 = vmatmul.mubr.f32.gmra.mxu0 %v1191
        %v1193 = vpop.f32.mrf.mxu0
        %v1194 = vadd.f32 0.0, %v1193
        %v1195 = vpop.f32.mrf.mxu0
        %v1196 = vadd.f32 0.0, %v1195
        %v1197 = vand.u32 %v378, 4294901760
        %v1198 = vsub.f32 %v378, %v1197
        %v1199 = vand.u32 %v1198, 4294901760
        %v1200 = vsub.f32 %v1198, %v1199
        %v1201 = vand.u32 %v1200, 4294901760
        %1202 = vmatprep.mubr.f32.mxu0 %v1201
        %v1203 = vand.u32 %v377, 4294901760
        %v1204 = vsub.f32 %v377, %v1203
        %v1205 = vand.u32 %v1204, 4294901760
        %v1206 = vsub.f32 %v1204, %v1205
        %v1207 = vand.u32 %v1206, 4294901760
        %1208 = vmatmul.mubr.f32.gmra.mxu0 %v1207
        %v1209 = vpop.f32.mrf.mxu0
        %v1210 = vadd.f32 0.0, %v1209
        %v1211 = vpop.f32.mrf.mxu0
        %v1212 = vadd.f32 0.0, %v1211
        %v1213 = vand.u32 %v382, 4294901760
        %v1214 = vsub.f32 %v382, %v1213
        %v1215 = vand.u32 %v1214, 4294901760
        %v1216 = vsub.f32 %v1214, %v1215
        %v1217 = vand.u32 %v1216, 4294901760
        %1218 = vmatprep.mubr.f32.mxu0 %v1217
        %v1219 = vand.u32 %v381, 4294901760
        %v1220 = vsub.f32 %v381, %v1219
        %v1221 = vand.u32 %v1220, 4294901760
        %v1222 = vsub.f32 %v1220, %v1221
        %v1223 = vand.u32 %v1222, 4294901760
        %1224 = vmatmul.mubr.f32.gmra.mxu0 %v1223
        %v1225 = vpop.f32.mrf.mxu0
        %v1226 = vadd.f32 0.0, %v1225
        %v1227 = vpop.f32.mrf.mxu0
        %v1228 = vadd.f32 0.0, %v1227
        %v1229 = vand.u32 %v386, 4294901760
        %v1230 = vsub.f32 %v386, %v1229
        %v1231 = vand.u32 %v1230, 4294901760
        %v1232 = vsub.f32 %v1230, %v1231
        %v1233 = vand.u32 %v1232, 4294901760
        %1234 = vmatprep.mubr.f32.mxu0 %v1233
        %v1235 = vand.u32 %v385, 4294901760
        %v1236 = vsub.f32 %v385, %v1235
        %v1237 = vand.u32 %v1236, 4294901760
        %v1238 = vsub.f32 %v1236, %v1237
        %v1239 = vand.u32 %v1238, 4294901760
        %1240 = vmatmul.mubr.f32.gmra.mxu0 %v1239
        %v1241 = vpop.f32.mrf.mxu0
        %v1242 = vadd.f32 0.0, %v1241
        %v1243 = vpop.f32.mrf.mxu0
        %v1244 = vadd.f32 0.0, %v1243
        %1245 = vdwg.mxu0
        %v1246 = vand.u32 %v674, 4294901760
        %v1247 = vsub.f32 %v674, %v1246
        %v1248 = vand.u32 %v1247, 4294901760
        %v1249 = vsub.f32 %v1247, %v1248
        %v1250 = vand.u32 %v1249, 4294901760
        %1251 = vmatprep.subr.mxu0 %v1250
        %v1252 = vand.u32 %v673, 4294901760
        %v1253 = vsub.f32 %v673, %v1252
        %v1254 = vand.u32 %v1253, 4294901760
        %v1255 = vsub.f32 %v1253, %v1254
        %v1256 = vand.u32 %v1255, 4294901760
        %1257 = vmatpush1.msra.mxu0 %v1256
        %v1258 = vand.u32 %v670, 4294901760
        %v1259 = vsub.f32 %v670, %v1258
        %v1260 = vand.u32 %v1259, 4294901760
        %v1261 = vsub.f32 %v1259, %v1260
        %v1262 = vand.u32 %v1261, 4294901760
        %1263 = vmatprep.subr.mxu0 %v1262
        %v1264 = vand.u32 %v669, 4294901760
        %v1265 = vsub.f32 %v669, %v1264
        %v1266 = vand.u32 %v1265, 4294901760
        %v1267 = vsub.f32 %v1265, %v1266
        %v1268 = vand.u32 %v1267, 4294901760
        %1269 = vmatpush1.msra.mxu0 %v1268
        %v1270 = vand.u32 %v666, 4294901760
        %v1271 = vsub.f32 %v666, %v1270
        %v1272 = vand.u32 %v1271, 4294901760
        %v1273 = vsub.f32 %v1271, %v1272
        %v1274 = vand.u32 %v1273, 4294901760
        %1275 = vmatprep.subr.mxu0 %v1274
        %v1276 = vand.u32 %v665, 4294901760
        %v1277 = vsub.f32 %v665, %v1276
        %v1278 = vand.u32 %v1277, 4294901760
        %v1279 = vsub.f32 %v1277, %v1278
        %v1280 = vand.u32 %v1279, 4294901760
        %1281 = vmatpush1.msra.mxu0 %v1280
        %v1282 = vand.u32 %v662, 4294901760
        %v1283 = vsub.f32 %v662, %v1282
        %v1284 = vand.u32 %v1283, 4294901760
        %v1285 = vsub.f32 %v1283, %v1284
        %v1286 = vand.u32 %v1285, 4294901760
        %1287 = vmatprep.subr.mxu0 %v1286
        %v1288 = vand.u32 %v661, 4294901760
        %v1289 = vsub.f32 %v661, %v1288
        %v1290 = vand.u32 %v1289, 4294901760
        %v1291 = vsub.f32 %v1289, %v1290
        %v1292 = vand.u32 %v1291, 4294901760
        %1293 = vmatpush1.msra.mxu0 %v1292
        %v1294 = vand.u32 %v658, 4294901760
        %v1295 = vsub.f32 %v658, %v1294
        %v1296 = vand.u32 %v1295, 4294901760
        %v1297 = vsub.f32 %v1295, %v1296
        %v1298 = vand.u32 %v1297, 4294901760
        %1299 = vmatprep.subr.mxu0 %v1298
        %v1300 = vand.u32 %v657, 4294901760
        %v1301 = vsub.f32 %v657, %v1300
        %v1302 = vand.u32 %v1301, 4294901760
        %v1303 = vsub.f32 %v1301, %v1302
        %v1304 = vand.u32 %v1303, 4294901760
        %1305 = vmatpush1.msra.mxu0 %v1304
        %v1306 = vand.u32 %v654, 4294901760
        %v1307 = vsub.f32 %v654, %v1306
        %v1308 = vand.u32 %v1307, 4294901760
        %v1309 = vsub.f32 %v1307, %v1308
        %v1310 = vand.u32 %v1309, 4294901760
        %1311 = vmatprep.subr.mxu0 %v1310
        %v1312 = vand.u32 %v653, 4294901760
        %v1313 = vsub.f32 %v653, %v1312
        %v1314 = vand.u32 %v1313, 4294901760
        %v1315 = vsub.f32 %v1313, %v1314
        %v1316 = vand.u32 %v1315, 4294901760
        %1317 = vmatpush1.msra.mxu0 %v1316
        %v1318 = vand.u32 %v650, 4294901760
        %v1319 = vsub.f32 %v650, %v1318
        %v1320 = vand.u32 %v1319, 4294901760
        %v1321 = vsub.f32 %v1319, %v1320
        %v1322 = vand.u32 %v1321, 4294901760
        %1323 = vmatprep.subr.mxu0 %v1322
        %v1324 = vand.u32 %v649, 4294901760
        %v1325 = vsub.f32 %v649, %v1324
        %v1326 = vand.u32 %v1325, 4294901760
        %v1327 = vsub.f32 %v1325, %v1326
        %v1328 = vand.u32 %v1327, 4294901760
        %1329 = vmatpush1.msra.mxu0 %v1328
        %v1330 = vand.u32 %v646, 4294901760
        %v1331 = vsub.f32 %v646, %v1330
        %v1332 = vand.u32 %v1331, 4294901760
        %v1333 = vsub.f32 %v1331, %v1332
        %v1334 = vand.u32 %v1333, 4294901760
        %1335 = vmatprep.subr.mxu0 %v1334
        %v1336 = vand.u32 %v645, 4294901760
        %v1337 = vsub.f32 %v645, %v1336
        %v1338 = vand.u32 %v1337, 4294901760
        %v1339 = vsub.f32 %v1337, %v1338
        %v1340 = vand.u32 %v1339, 4294901760
        %1341 = vmatpush1.msra.mxu0 %v1340
        %v1342 = vand.u32 %v642, 4294901760
        %v1343 = vsub.f32 %v642, %v1342
        %v1344 = vand.u32 %v1343, 4294901760
        %v1345 = vsub.f32 %v1343, %v1344
        %v1346 = vand.u32 %v1345, 4294901760
        %1347 = vmatprep.subr.mxu0 %v1346
        %v1348 = vand.u32 %v641, 4294901760
        %v1349 = vsub.f32 %v641, %v1348
        %v1350 = vand.u32 %v1349, 4294901760
        %v1351 = vsub.f32 %v1349, %v1350
        %v1352 = vand.u32 %v1351, 4294901760
        %1353 = vmatpush1.msra.mxu0 %v1352
        %v1354 = vand.u32 %v638, 4294901760
        %v1355 = vsub.f32 %v638, %v1354
        %v1356 = vand.u32 %v1355, 4294901760
        %v1357 = vsub.f32 %v1355, %v1356
        %v1358 = vand.u32 %v1357, 4294901760
        %1359 = vmatprep.subr.mxu0 %v1358
        %v1360 = vand.u32 %v637, 4294901760
        %v1361 = vsub.f32 %v637, %v1360
        %v1362 = vand.u32 %v1361, 4294901760
        %v1363 = vsub.f32 %v1361, %v1362
        %v1364 = vand.u32 %v1363, 4294901760
        %1365 = vmatpush1.msra.mxu0 %v1364
        %v1366 = vand.u32 %v634, 4294901760
        %v1367 = vsub.f32 %v634, %v1366
        %v1368 = vand.u32 %v1367, 4294901760
        %v1369 = vsub.f32 %v1367, %v1368
        %v1370 = vand.u32 %v1369, 4294901760
        %1371 = vmatprep.subr.mxu0 %v1370
        %v1372 = vand.u32 %v633, 4294901760
        %v1373 = vsub.f32 %v633, %v1372
        %v1374 = vand.u32 %v1373, 4294901760
        %v1375 = vsub.f32 %v1373, %v1374
        %v1376 = vand.u32 %v1375, 4294901760
        %1377 = vmatpush1.msra.mxu0 %v1376
        %v1378 = vand.u32 %v630, 4294901760
        %v1379 = vsub.f32 %v630, %v1378
        %v1380 = vand.u32 %v1379, 4294901760
        %v1381 = vsub.f32 %v1379, %v1380
        %v1382 = vand.u32 %v1381, 4294901760
        %1383 = vmatprep.subr.mxu0 %v1382
        %v1384 = vand.u32 %v629, 4294901760
        %v1385 = vsub.f32 %v629, %v1384
        %v1386 = vand.u32 %v1385, 4294901760
        %v1387 = vsub.f32 %v1385, %v1386
        %v1388 = vand.u32 %v1387, 4294901760
        %1389 = vmatpush1.msra.mxu0 %v1388
        %v1390 = vand.u32 %v626, 4294901760
        %v1391 = vsub.f32 %v626, %v1390
        %v1392 = vand.u32 %v1391, 4294901760
        %v1393 = vsub.f32 %v1391, %v1392
        %v1394 = vand.u32 %v1393, 4294901760
        %1395 = vmatprep.subr.mxu0 %v1394
        %v1396 = vand.u32 %v625, 4294901760
        %v1397 = vsub.f32 %v625, %v1396
        %v1398 = vand.u32 %v1397, 4294901760
        %v1399 = vsub.f32 %v1397, %v1398
        %v1400 = vand.u32 %v1399, 4294901760
        %1401 = vmatpush1.msra.mxu0 %v1400
        %v1402 = vand.u32 %v622, 4294901760
        %v1403 = vsub.f32 %v622, %v1402
        %v1404 = vand.u32 %v1403, 4294901760
        %v1405 = vsub.f32 %v1403, %v1404
        %v1406 = vand.u32 %v1405, 4294901760
        %1407 = vmatprep.subr.mxu0 %v1406
        %v1408 = vand.u32 %v621, 4294901760
        %v1409 = vsub.f32 %v621, %v1408
        %v1410 = vand.u32 %v1409, 4294901760
        %v1411 = vsub.f32 %v1409, %v1410
        %v1412 = vand.u32 %v1411, 4294901760
        %1413 = vmatpush1.msra.mxu0 %v1412
        %v1414 = vand.u32 %v618, 4294901760
        %v1415 = vsub.f32 %v618, %v1414
        %v1416 = vand.u32 %v1415, 4294901760
        %v1417 = vsub.f32 %v1415, %v1416
        %v1418 = vand.u32 %v1417, 4294901760
        %1419 = vmatprep.subr.mxu0 %v1418
        %v1420 = vand.u32 %v617, 4294901760
        %v1421 = vsub.f32 %v617, %v1420
        %v1422 = vand.u32 %v1421, 4294901760
        %v1423 = vsub.f32 %v1421, %v1422
        %v1424 = vand.u32 %v1423, 4294901760
        %1425 = vmatpush1.msra.mxu0 %v1424
        %v1426 = vand.u32 %v614, 4294901760
        %v1427 = vsub.f32 %v614, %v1426
        %v1428 = vand.u32 %v1427, 4294901760
        %v1429 = vsub.f32 %v1427, %v1428
        %v1430 = vand.u32 %v1429, 4294901760
        %1431 = vmatprep.subr.mxu0 %v1430
        %v1432 = vand.u32 %v613, 4294901760
        %v1433 = vsub.f32 %v613, %v1432
        %v1434 = vand.u32 %v1433, 4294901760
        %v1435 = vsub.f32 %v1433, %v1434
        %v1436 = vand.u32 %v1435, 4294901760
        %1437 = vmatpush1.msra.mxu0 %v1436
        %v1438 = vand.u32 %v738, 4294901760
        %v1439 = vsub.f32 %v738, %v1438
        %v1440 = vand.u32 %v1439, 4294901760
        %v1441 = vsub.f32 %v1439, %v1440
        %v1442 = vand.u32 %v1441, 4294901760
        %1443 = vmatprep.subr.mxu0 %v1442
        %v1444 = vand.u32 %v737, 4294901760
        %v1445 = vsub.f32 %v737, %v1444
        %v1446 = vand.u32 %v1445, 4294901760
        %v1447 = vsub.f32 %v1445, %v1446
        %v1448 = vand.u32 %v1447, 4294901760
        %1449 = vmatpush2.msra.mxu0 %v1448
        %v1450 = vand.u32 %v734, 4294901760
        %v1451 = vsub.f32 %v734, %v1450
        %v1452 = vand.u32 %v1451, 4294901760
        %v1453 = vsub.f32 %v1451, %v1452
        %v1454 = vand.u32 %v1453, 4294901760
        %1455 = vmatprep.subr.mxu0 %v1454
        %v1456 = vand.u32 %v733, 4294901760
        %v1457 = vsub.f32 %v733, %v1456
        %v1458 = vand.u32 %v1457, 4294901760
        %v1459 = vsub.f32 %v1457, %v1458
        %v1460 = vand.u32 %v1459, 4294901760
        %1461 = vmatpush2.msra.mxu0 %v1460
        %v1462 = vand.u32 %v730, 4294901760
        %v1463 = vsub.f32 %v730, %v1462
        %v1464 = vand.u32 %v1463, 4294901760
        %v1465 = vsub.f32 %v1463, %v1464
        %v1466 = vand.u32 %v1465, 4294901760
        %1467 = vmatprep.subr.mxu0 %v1466
        %v1468 = vand.u32 %v729, 4294901760
        %v1469 = vsub.f32 %v729, %v1468
        %v1470 = vand.u32 %v1469, 4294901760
        %v1471 = vsub.f32 %v1469, %v1470
        %v1472 = vand.u32 %v1471, 4294901760
        %1473 = vmatpush2.msra.mxu0 %v1472
        %v1474 = vand.u32 %v726, 4294901760
        %v1475 = vsub.f32 %v726, %v1474
        %v1476 = vand.u32 %v1475, 4294901760
        %v1477 = vsub.f32 %v1475, %v1476
        %v1478 = vand.u32 %v1477, 4294901760
        %1479 = vmatprep.subr.mxu0 %v1478
        %v1480 = vand.u32 %v725, 4294901760
        %v1481 = vsub.f32 %v725, %v1480
        %v1482 = vand.u32 %v1481, 4294901760
        %v1483 = vsub.f32 %v1481, %v1482
        %v1484 = vand.u32 %v1483, 4294901760
        %1485 = vmatpush2.msra.mxu0 %v1484
        %v1486 = vand.u32 %v722, 4294901760
        %v1487 = vsub.f32 %v722, %v1486
        %v1488 = vand.u32 %v1487, 4294901760
        %v1489 = vsub.f32 %v1487, %v1488
        %v1490 = vand.u32 %v1489, 4294901760
        %1491 = vmatprep.subr.mxu0 %v1490
        %v1492 = vand.u32 %v721, 4294901760
        %v1493 = vsub.f32 %v721, %v1492
        %v1494 = vand.u32 %v1493, 4294901760
        %v1495 = vsub.f32 %v1493, %v1494
        %v1496 = vand.u32 %v1495, 4294901760
        %1497 = vmatpush2.msra.mxu0 %v1496
        %v1498 = vand.u32 %v718, 4294901760
        %v1499 = vsub.f32 %v718, %v1498
        %v1500 = vand.u32 %v1499, 4294901760
        %v1501 = vsub.f32 %v1499, %v1500
        %v1502 = vand.u32 %v1501, 4294901760
        %1503 = vmatprep.subr.mxu0 %v1502
        %v1504 = vand.u32 %v717, 4294901760
        %v1505 = vsub.f32 %v717, %v1504
        %v1506 = vand.u32 %v1505, 4294901760
        %v1507 = vsub.f32 %v1505, %v1506
        %v1508 = vand.u32 %v1507, 4294901760
        %1509 = vmatpush2.msra.mxu0 %v1508
        %v1510 = vand.u32 %v714, 4294901760
        %v1511 = vsub.f32 %v714, %v1510
        %v1512 = vand.u32 %v1511, 4294901760
        %v1513 = vsub.f32 %v1511, %v1512
        %v1514 = vand.u32 %v1513, 4294901760
        %1515 = vmatprep.subr.mxu0 %v1514
        %v1516 = vand.u32 %v713, 4294901760
        %v1517 = vsub.f32 %v713, %v1516
        %v1518 = vand.u32 %v1517, 4294901760
        %v1519 = vsub.f32 %v1517, %v1518
        %v1520 = vand.u32 %v1519, 4294901760
        %1521 = vmatpush2.msra.mxu0 %v1520
        %v1522 = vand.u32 %v710, 4294901760
        %v1523 = vsub.f32 %v710, %v1522
        %v1524 = vand.u32 %v1523, 4294901760
        %v1525 = vsub.f32 %v1523, %v1524
        %v1526 = vand.u32 %v1525, 4294901760
        %1527 = vmatprep.subr.mxu0 %v1526
        %v1528 = vand.u32 %v709, 4294901760
        %v1529 = vsub.f32 %v709, %v1528
        %v1530 = vand.u32 %v1529, 4294901760
        %v1531 = vsub.f32 %v1529, %v1530
        %v1532 = vand.u32 %v1531, 4294901760
        %1533 = vmatpush2.msra.mxu0 %v1532
        %v1534 = vand.u32 %v706, 4294901760
        %v1535 = vsub.f32 %v706, %v1534
        %v1536 = vand.u32 %v1535, 4294901760
        %v1537 = vsub.f32 %v1535, %v1536
        %v1538 = vand.u32 %v1537, 4294901760
        %1539 = vmatprep.subr.mxu0 %v1538
        %v1540 = vand.u32 %v705, 4294901760
        %v1541 = vsub.f32 %v705, %v1540
        %v1542 = vand.u32 %v1541, 4294901760
        %v1543 = vsub.f32 %v1541, %v1542
        %v1544 = vand.u32 %v1543, 4294901760
        %1545 = vmatpush2.msra.mxu0 %v1544
        %v1546 = vand.u32 %v702, 4294901760
        %v1547 = vsub.f32 %v702, %v1546
        %v1548 = vand.u32 %v1547, 4294901760
        %v1549 = vsub.f32 %v1547, %v1548
        %v1550 = vand.u32 %v1549, 4294901760
        %1551 = vmatprep.subr.mxu0 %v1550
        %v1552 = vand.u32 %v701, 4294901760
        %v1553 = vsub.f32 %v701, %v1552
        %v1554 = vand.u32 %v1553, 4294901760
        %v1555 = vsub.f32 %v1553, %v1554
        %v1556 = vand.u32 %v1555, 4294901760
        %1557 = vmatpush2.msra.mxu0 %v1556
        %v1558 = vand.u32 %v698, 4294901760
        %v1559 = vsub.f32 %v698, %v1558
        %v1560 = vand.u32 %v1559, 4294901760
        %v1561 = vsub.f32 %v1559, %v1560
        %v1562 = vand.u32 %v1561, 4294901760
        %1563 = vmatprep.subr.mxu0 %v1562
        %v1564 = vand.u32 %v697, 4294901760
        %v1565 = vsub.f32 %v697, %v1564
        %v1566 = vand.u32 %v1565, 4294901760
        %v1567 = vsub.f32 %v1565, %v1566
        %v1568 = vand.u32 %v1567, 4294901760
        %1569 = vmatpush2.msra.mxu0 %v1568
        %v1570 = vand.u32 %v694, 4294901760
        %v1571 = vsub.f32 %v694, %v1570
        %v1572 = vand.u32 %v1571, 4294901760
        %v1573 = vsub.f32 %v1571, %v1572
        %v1574 = vand.u32 %v1573, 4294901760
        %1575 = vmatprep.subr.mxu0 %v1574
        %v1576 = vand.u32 %v693, 4294901760
        %v1577 = vsub.f32 %v693, %v1576
        %v1578 = vand.u32 %v1577, 4294901760
        %v1579 = vsub.f32 %v1577, %v1578
        %v1580 = vand.u32 %v1579, 4294901760
        %1581 = vmatpush2.msra.mxu0 %v1580
        %v1582 = vand.u32 %v690, 4294901760
        %v1583 = vsub.f32 %v690, %v1582
        %v1584 = vand.u32 %v1583, 4294901760
        %v1585 = vsub.f32 %v1583, %v1584
        %v1586 = vand.u32 %v1585, 4294901760
        %1587 = vmatprep.subr.mxu0 %v1586
        %v1588 = vand.u32 %v689, 4294901760
        %v1589 = vsub.f32 %v689, %v1588
        %v1590 = vand.u32 %v1589, 4294901760
        %v1591 = vsub.f32 %v1589, %v1590
        %v1592 = vand.u32 %v1591, 4294901760
        %1593 = vmatpush2.msra.mxu0 %v1592
        %v1594 = vand.u32 %v686, 4294901760
        %v1595 = vsub.f32 %v686, %v1594
        %v1596 = vand.u32 %v1595, 4294901760
        %v1597 = vsub.f32 %v1595, %v1596
        %v1598 = vand.u32 %v1597, 4294901760
        %1599 = vmatprep.subr.mxu0 %v1598
        %v1600 = vand.u32 %v685, 4294901760
        %v1601 = vsub.f32 %v685, %v1600
        %v1602 = vand.u32 %v1601, 4294901760
        %v1603 = vsub.f32 %v1601, %v1602
        %v1604 = vand.u32 %v1603, 4294901760
        %1605 = vmatpush2.msra.mxu0 %v1604
        %v1606 = vand.u32 %v682, 4294901760
        %v1607 = vsub.f32 %v682, %v1606
        %v1608 = vand.u32 %v1607, 4294901760
        %v1609 = vsub.f32 %v1607, %v1608
        %v1610 = vand.u32 %v1609, 4294901760
        %1611 = vmatprep.subr.mxu0 %v1610
        %v1612 = vand.u32 %v681, 4294901760
        %v1613 = vsub.f32 %v681, %v1612
        %v1614 = vand.u32 %v1613, 4294901760
        %v1615 = vsub.f32 %v1613, %v1614
        %v1616 = vand.u32 %v1615, 4294901760
        %1617 = vmatpush2.msra.mxu0 %v1616
        %v1618 = vand.u32 %v678, 4294901760
        %v1619 = vsub.f32 %v678, %v1618
        %v1620 = vand.u32 %v1619, 4294901760
        %v1621 = vsub.f32 %v1619, %v1620
        %v1622 = vand.u32 %v1621, 4294901760
        %1623 = vmatprep.subr.mxu0 %v1622
        %v1624 = vand.u32 %v677, 4294901760
        %v1625 = vsub.f32 %v677, %v1624
        %v1626 = vand.u32 %v1625, 4294901760
        %v1627 = vsub.f32 %v1625, %v1626
        %v1628 = vand.u32 %v1627, 4294901760
        %1629 = vmatpush2.msra.mxu0 %v1628
        %v1630 = vand.u32 %v326, 4294901760
        %1631 = vmatprep.mubr.f32.mxu0 %v1630
        %v1632 = vand.u32 %v325, 4294901760
        %1633 = vmatmul.mubr.f32.gmra.mxu0 %v1632
        %v1634 = vpop.f32.mrf.mxu0
        %v1635 = vadd.f32 %v1002, %v1634
        %v1636 = vpop.f32.mrf.mxu0
        %v1637 = vadd.f32 %v1004, %v1636
        %v1638 = vand.u32 %v330, 4294901760
        %1639 = vmatprep.mubr.f32.mxu0 %v1638
        %v1640 = vand.u32 %v329, 4294901760
        %1641 = vmatmul.mubr.f32.gmra.mxu0 %v1640
        %v1642 = vpop.f32.mrf.mxu0
        %v1643 = vadd.f32 %v1018, %v1642
        %v1644 = vpop.f32.mrf.mxu0
        %v1645 = vadd.f32 %v1020, %v1644
        %v1646 = vand.u32 %v334, 4294901760
        %1647 = vmatprep.mubr.f32.mxu0 %v1646
        %v1648 = vand.u32 %v333, 4294901760
        %1649 = vmatmul.mubr.f32.gmra.mxu0 %v1648
        %v1650 = vpop.f32.mrf.mxu0
        %v1651 = vadd.f32 %v1034, %v1650
        %v1652 = vpop.f32.mrf.mxu0
        %v1653 = vadd.f32 %v1036, %v1652
        %v1654 = vand.u32 %v338, 4294901760
        %1655 = vmatprep.mubr.f32.mxu0 %v1654
        %v1656 = vand.u32 %v337, 4294901760
        %1657 = vmatmul.mubr.f32.gmra.mxu0 %v1656
        %v1658 = vpop.f32.mrf.mxu0
        %v1659 = vadd.f32 %v1050, %v1658
        %v1660 = vpop.f32.mrf.mxu0
        %v1661 = vadd.f32 %v1052, %v1660
        %v1662 = vand.u32 %v342, 4294901760
        %1663 = vmatprep.mubr.f32.mxu0 %v1662
        %v1664 = vand.u32 %v341, 4294901760
        %1665 = vmatmul.mubr.f32.gmra.mxu0 %v1664
        %v1666 = vpop.f32.mrf.mxu0
        %v1667 = vadd.f32 %v1066, %v1666
        %v1668 = vpop.f32.mrf.mxu0
        %v1669 = vadd.f32 %v1068, %v1668
        %v1670 = vand.u32 %v346, 4294901760
        %1671 = vmatprep.mubr.f32.mxu0 %v1670
        %v1672 = vand.u32 %v345, 4294901760
        %1673 = vmatmul.mubr.f32.gmra.mxu0 %v1672
        %v1674 = vpop.f32.mrf.mxu0
        %v1675 = vadd.f32 %v1082, %v1674
        %v1676 = vpop.f32.mrf.mxu0
        %v1677 = vadd.f32 %v1084, %v1676
        %v1678 = vand.u32 %v350, 4294901760
        %1679 = vmatprep.mubr.f32.mxu0 %v1678
        %v1680 = vand.u32 %v349, 4294901760
        %1681 = vmatmul.mubr.f32.gmra.mxu0 %v1680
        %v1682 = vpop.f32.mrf.mxu0
        %v1683 = vadd.f32 %v1098, %v1682
        %v1684 = vpop.f32.mrf.mxu0
        %v1685 = vadd.f32 %v1100, %v1684
        %v1686 = vand.u32 %v354, 4294901760
        %1687 = vmatprep.mubr.f32.mxu0 %v1686
        %v1688 = vand.u32 %v353, 4294901760
        %1689 = vmatmul.mubr.f32.gmra.mxu0 %v1688
        %v1690 = vpop.f32.mrf.mxu0
        %v1691 = vadd.f32 %v1114, %v1690
        %v1692 = vpop.f32.mrf.mxu0
        %v1693 = vadd.f32 %v1116, %v1692
        %v1694 = vand.u32 %v358, 4294901760
        %1695 = vmatprep.mubr.f32.mxu0 %v1694
        %v1696 = vand.u32 %v357, 4294901760
        %1697 = vmatmul.mubr.f32.gmra.mxu0 %v1696
        %v1698 = vpop.f32.mrf.mxu0
        %v1699 = vadd.f32 %v1130, %v1698
        %v1700 = vpop.f32.mrf.mxu0
        %v1701 = vadd.f32 %v1132, %v1700
        %v1702 = vand.u32 %v362, 4294901760
        %1703 = vmatprep.mubr.f32.mxu0 %v1702
        %v1704 = vand.u32 %v361, 4294901760
        %1705 = vmatmul.mubr.f32.gmra.mxu0 %v1704
        %v1706 = vpop.f32.mrf.mxu0
        %v1707 = vadd.f32 %v1146, %v1706
        %v1708 = vpop.f32.mrf.mxu0
        %v1709 = vadd.f32 %v1148, %v1708
        %v1710 = vand.u32 %v366, 4294901760
        %1711 = vmatprep.mubr.f32.mxu0 %v1710
        %v1712 = vand.u32 %v365, 4294901760
        %1713 = vmatmul.mubr.f32.gmra.mxu0 %v1712
        %v1714 = vpop.f32.mrf.mxu0
        %v1715 = vadd.f32 %v1162, %v1714
        %v1716 = vpop.f32.mrf.mxu0
        %v1717 = vadd.f32 %v1164, %v1716
        %v1718 = vand.u32 %v370, 4294901760
        %1719 = vmatprep.mubr.f32.mxu0 %v1718
        %v1720 = vand.u32 %v369, 4294901760
        %1721 = vmatmul.mubr.f32.gmra.mxu0 %v1720
        %v1722 = vpop.f32.mrf.mxu0
        %v1723 = vadd.f32 %v1178, %v1722
        %v1724 = vpop.f32.mrf.mxu0
        %v1725 = vadd.f32 %v1180, %v1724
        %v1726 = vand.u32 %v374, 4294901760
        %1727 = vmatprep.mubr.f32.mxu0 %v1726
        %v1728 = vand.u32 %v373, 4294901760
        %1729 = vmatmul.mubr.f32.gmra.mxu0 %v1728
        %v1730 = vpop.f32.mrf.mxu0
        %v1731 = vadd.f32 %v1194, %v1730
        %v1732 = vpop.f32.mrf.mxu0
        %v1733 = vadd.f32 %v1196, %v1732
        %v1734 = vand.u32 %v378, 4294901760
        %1735 = vmatprep.mubr.f32.mxu0 %v1734
        %v1736 = vand.u32 %v377, 4294901760
        %1737 = vmatmul.mubr.f32.gmra.mxu0 %v1736
        %v1738 = vpop.f32.mrf.mxu0
        %v1739 = vadd.f32 %v1210, %v1738
        %v1740 = vpop.f32.mrf.mxu0
        %v1741 = vadd.f32 %v1212, %v1740
        %v1742 = vand.u32 %v382, 4294901760
        %1743 = vmatprep.mubr.f32.mxu0 %v1742
        %v1744 = vand.u32 %v381, 4294901760
        %1745 = vmatmul.mubr.f32.gmra.mxu0 %v1744
        %v1746 = vpop.f32.mrf.mxu0
        %v1747 = vadd.f32 %v1226, %v1746
        %v1748 = vpop.f32.mrf.mxu0
        %v1749 = vadd.f32 %v1228, %v1748
        %v1750 = vand.u32 %v386, 4294901760
        %1751 = vmatprep.mubr.f32.mxu0 %v1750
        %v1752 = vand.u32 %v385, 4294901760
        %1753 = vmatmul.mubr.f32.gmra.mxu0 %v1752
        %v1754 = vpop.f32.mrf.mxu0
        %v1755 = vadd.f32 %v1242, %v1754
        %v1756 = vpop.f32.mrf.mxu0
        %v1757 = vadd.f32 %v1244, %v1756
        %1758 = vdwg.mxu0
        %v1759 = vand.u32 %v674, 4294901760
        %v1760 = vsub.f32 %v674, %v1759
        %1761 = vmatprep.subr.mxu0 %v1760
        %v1762 = vand.u32 %v673, 4294901760
        %v1763 = vsub.f32 %v673, %v1762
        %1764 = vmatpush1.msra.mxu0 %v1763
        %v1765 = vand.u32 %v670, 4294901760
        %v1766 = vsub.f32 %v670, %v1765
        %1767 = vmatprep.subr.mxu0 %v1766
        %v1768 = vand.u32 %v669, 4294901760
        %v1769 = vsub.f32 %v669, %v1768
        %1770 = vmatpush1.msra.mxu0 %v1769
        %v1771 = vand.u32 %v666, 4294901760
        %v1772 = vsub.f32 %v666, %v1771
        %1773 = vmatprep.subr.mxu0 %v1772
        %v1774 = vand.u32 %v665, 4294901760
        %v1775 = vsub.f32 %v665, %v1774
        %1776 = vmatpush1.msra.mxu0 %v1775
        %v1777 = vand.u32 %v662, 4294901760
        %v1778 = vsub.f32 %v662, %v1777
        %1779 = vmatprep.subr.mxu0 %v1778
        %v1780 = vand.u32 %v661, 4294901760
        %v1781 = vsub.f32 %v661, %v1780
        %1782 = vmatpush1.msra.mxu0 %v1781
        %v1783 = vand.u32 %v658, 4294901760
        %v1784 = vsub.f32 %v658, %v1783
        %1785 = vmatprep.subr.mxu0 %v1784
        %v1786 = vand.u32 %v657, 4294901760
        %v1787 = vsub.f32 %v657, %v1786
        %1788 = vmatpush1.msra.mxu0 %v1787
        %v1789 = vand.u32 %v654, 4294901760
        %v1790 = vsub.f32 %v654, %v1789
        %1791 = vmatprep.subr.mxu0 %v1790
        %v1792 = vand.u32 %v653, 4294901760
        %v1793 = vsub.f32 %v653, %v1792
        %1794 = vmatpush1.msra.mxu0 %v1793
        %v1795 = vand.u32 %v650, 4294901760
        %v1796 = vsub.f32 %v650, %v1795
        %1797 = vmatprep.subr.mxu0 %v1796
        %v1798 = vand.u32 %v649, 4294901760
        %v1799 = vsub.f32 %v649, %v1798
        %1800 = vmatpush1.msra.mxu0 %v1799
        %v1801 = vand.u32 %v646, 4294901760
        %v1802 = vsub.f32 %v646, %v1801
        %1803 = vmatprep.subr.mxu0 %v1802
        %v1804 = vand.u32 %v645, 4294901760
        %v1805 = vsub.f32 %v645, %v1804
        %1806 = vmatpush1.msra.mxu0 %v1805
        %v1807 = vand.u32 %v642, 4294901760
        %v1808 = vsub.f32 %v642, %v1807
        %1809 = vmatprep.subr.mxu0 %v1808
        %v1810 = vand.u32 %v641, 4294901760
        %v1811 = vsub.f32 %v641, %v1810
        %1812 = vmatpush1.msra.mxu0 %v1811
        %v1813 = vand.u32 %v638, 4294901760
        %v1814 = vsub.f32 %v638, %v1813
        %1815 = vmatprep.subr.mxu0 %v1814
        %v1816 = vand.u32 %v637, 4294901760
        %v1817 = vsub.f32 %v637, %v1816
        %1818 = vmatpush1.msra.mxu0 %v1817
        %v1819 = vand.u32 %v634, 4294901760
        %v1820 = vsub.f32 %v634, %v1819
        %1821 = vmatprep.subr.mxu0 %v1820
        %v1822 = vand.u32 %v633, 4294901760
        %v1823 = vsub.f32 %v633, %v1822
        %1824 = vmatpush1.msra.mxu0 %v1823
        %v1825 = vand.u32 %v630, 4294901760
        %v1826 = vsub.f32 %v630, %v1825
        %1827 = vmatprep.subr.mxu0 %v1826
        %v1828 = vand.u32 %v629, 4294901760
        %v1829 = vsub.f32 %v629, %v1828
        %1830 = vmatpush1.msra.mxu0 %v1829
        %v1831 = vand.u32 %v626, 4294901760
        %v1832 = vsub.f32 %v626, %v1831
        %1833 = vmatprep.subr.mxu0 %v1832
        %v1834 = vand.u32 %v625, 4294901760
        %v1835 = vsub.f32 %v625, %v1834
        %1836 = vmatpush1.msra.mxu0 %v1835
        %v1837 = vand.u32 %v622, 4294901760
        %v1838 = vsub.f32 %v622, %v1837
        %1839 = vmatprep.subr.mxu0 %v1838
        %v1840 = vand.u32 %v621, 4294901760
        %v1841 = vsub.f32 %v621, %v1840
        %1842 = vmatpush1.msra.mxu0 %v1841
        %v1843 = vand.u32 %v618, 4294901760
        %v1844 = vsub.f32 %v618, %v1843
        %1845 = vmatprep.subr.mxu0 %v1844
        %v1846 = vand.u32 %v617, 4294901760
        %v1847 = vsub.f32 %v617, %v1846
        %1848 = vmatpush1.msra.mxu0 %v1847
        %v1849 = vand.u32 %v614, 4294901760
        %v1850 = vsub.f32 %v614, %v1849
        %1851 = vmatprep.subr.mxu0 %v1850
        %v1852 = vand.u32 %v613, 4294901760
        %v1853 = vsub.f32 %v613, %v1852
        %1854 = vmatpush1.msra.mxu0 %v1853
        %v1855 = vand.u32 %v738, 4294901760
        %v1856 = vsub.f32 %v738, %v1855
        %1857 = vmatprep.subr.mxu0 %v1856
        %v1858 = vand.u32 %v737, 4294901760
        %v1859 = vsub.f32 %v737, %v1858
        %1860 = vmatpush2.msra.mxu0 %v1859
        %v1861 = vand.u32 %v734, 4294901760
        %v1862 = vsub.f32 %v734, %v1861
        %1863 = vmatprep.subr.mxu0 %v1862
        %v1864 = vand.u32 %v733, 4294901760
        %v1865 = vsub.f32 %v733, %v1864
        %1866 = vmatpush2.msra.mxu0 %v1865
        %v1867 = vand.u32 %v730, 4294901760
        %v1868 = vsub.f32 %v730, %v1867
        %1869 = vmatprep.subr.mxu0 %v1868
        %v1870 = vand.u32 %v729, 4294901760
        %v1871 = vsub.f32 %v729, %v1870
        %1872 = vmatpush2.msra.mxu0 %v1871
        %v1873 = vand.u32 %v726, 4294901760
        %v1874 = vsub.f32 %v726, %v1873
        %1875 = vmatprep.subr.mxu0 %v1874
        %v1876 = vand.u32 %v725, 4294901760
        %v1877 = vsub.f32 %v725, %v1876
        %1878 = vmatpush2.msra.mxu0 %v1877
        %v1879 = vand.u32 %v722, 4294901760
        %v1880 = vsub.f32 %v722, %v1879
        %1881 = vmatprep.subr.mxu0 %v1880
        %v1882 = vand.u32 %v721, 4294901760
        %v1883 = vsub.f32 %v721, %v1882
        %1884 = vmatpush2.msra.mxu0 %v1883
        %v1885 = vand.u32 %v718, 4294901760
        %v1886 = vsub.f32 %v718, %v1885
        %1887 = vmatprep.subr.mxu0 %v1886
        %v1888 = vand.u32 %v717, 4294901760
        %v1889 = vsub.f32 %v717, %v1888
        %1890 = vmatpush2.msra.mxu0 %v1889
        %v1891 = vand.u32 %v714, 4294901760
        %v1892 = vsub.f32 %v714, %v1891
        %1893 = vmatprep.subr.mxu0 %v1892
        %v1894 = vand.u32 %v713, 4294901760
        %v1895 = vsub.f32 %v713, %v1894
        %1896 = vmatpush2.msra.mxu0 %v1895
        %v1897 = vand.u32 %v710, 4294901760
        %v1898 = vsub.f32 %v710, %v1897
        %1899 = vmatprep.subr.mxu0 %v1898
        %v1900 = vand.u32 %v709, 4294901760
        %v1901 = vsub.f32 %v709, %v1900
        %1902 = vmatpush2.msra.mxu0 %v1901
        %v1903 = vand.u32 %v706, 4294901760
        %v1904 = vsub.f32 %v706, %v1903
        %1905 = vmatprep.subr.mxu0 %v1904
        %v1906 = vand.u32 %v705, 4294901760
        %v1907 = vsub.f32 %v705, %v1906
        %1908 = vmatpush2.msra.mxu0 %v1907
        %v1909 = vand.u32 %v702, 4294901760
        %v1910 = vsub.f32 %v702, %v1909
        %1911 = vmatprep.subr.mxu0 %v1910
        %v1912 = vand.u32 %v701, 4294901760
        %v1913 = vsub.f32 %v701, %v1912
        %1914 = vmatpush2.msra.mxu0 %v1913
        %v1915 = vand.u32 %v698, 4294901760
        %v1916 = vsub.f32 %v698, %v1915
        %1917 = vmatprep.subr.mxu0 %v1916
        %v1918 = vand.u32 %v697, 4294901760
        %v1919 = vsub.f32 %v697, %v1918
        %1920 = vmatpush2.msra.mxu0 %v1919
        %v1921 = vand.u32 %v694, 4294901760
        %v1922 = vsub.f32 %v694, %v1921
        %1923 = vmatprep.subr.mxu0 %v1922
        %v1924 = vand.u32 %v693, 4294901760
        %v1925 = vsub.f32 %v693, %v1924
        %1926 = vmatpush2.msra.mxu0 %v1925
        %v1927 = vand.u32 %v690, 4294901760
        %v1928 = vsub.f32 %v690, %v1927
        %1929 = vmatprep.subr.mxu0 %v1928
        %v1930 = vand.u32 %v689, 4294901760
        %v1931 = vsub.f32 %v689, %v1930
        %1932 = vmatpush2.msra.mxu0 %v1931
        %v1933 = vand.u32 %v686, 4294901760
        %v1934 = vsub.f32 %v686, %v1933
        %1935 = vmatprep.subr.mxu0 %v1934
        %v1936 = vand.u32 %v685, 4294901760
        %v1937 = vsub.f32 %v685, %v1936
        %1938 = vmatpush2.msra.mxu0 %v1937
        %v1939 = vand.u32 %v682, 4294901760
        %v1940 = vsub.f32 %v682, %v1939
        %1941 = vmatprep.subr.mxu0 %v1940
        %v1942 = vand.u32 %v681, 4294901760
        %v1943 = vsub.f32 %v681, %v1942
        %1944 = vmatpush2.msra.mxu0 %v1943
        %v1945 = vand.u32 %v678, 4294901760
        %v1946 = vsub.f32 %v678, %v1945
        %1947 = vmatprep.subr.mxu0 %v1946
        %v1948 = vand.u32 %v677, 4294901760
        %v1949 = vsub.f32 %v677, %v1948
        %1950 = vmatpush2.msra.mxu0 %v1949
        %v1951 = vand.u32 %v326, 4294901760
        %v1952 = vsub.f32 %v326, %v1951
        %1953 = vmatprep.mubr.f32.mxu0 %v1952
        %v1954 = vand.u32 %v325, 4294901760
        %v1955 = vsub.f32 %v325, %v1954
        %1956 = vmatmul.mubr.f32.gmra.mxu0 %v1955
        %v1957 = vpop.f32.mrf.mxu0
        %v1958 = vadd.f32 %v1635, %v1957
        %v1959 = vpop.f32.mrf.mxu0
        %v1960 = vadd.f32 %v1637, %v1959
        %v1961 = vand.u32 %v330, 4294901760
        %v1962 = vsub.f32 %v330, %v1961
        %1963 = vmatprep.mubr.f32.mxu0 %v1962
        %v1964 = vand.u32 %v329, 4294901760
        %v1965 = vsub.f32 %v329, %v1964
        %1966 = vmatmul.mubr.f32.gmra.mxu0 %v1965
        %v1967 = vpop.f32.mrf.mxu0
        %v1968 = vadd.f32 %v1643, %v1967
        %v1969 = vpop.f32.mrf.mxu0
        %v1970 = vadd.f32 %v1645, %v1969
        %v1971 = vand.u32 %v334, 4294901760
        %v1972 = vsub.f32 %v334, %v1971
        %1973 = vmatprep.mubr.f32.mxu0 %v1972
        %v1974 = vand.u32 %v333, 4294901760
        %v1975 = vsub.f32 %v333, %v1974
        %1976 = vmatmul.mubr.f32.gmra.mxu0 %v1975
        %v1977 = vpop.f32.mrf.mxu0
        %v1978 = vadd.f32 %v1651, %v1977
        %v1979 = vpop.f32.mrf.mxu0
        %v1980 = vadd.f32 %v1653, %v1979
        %v1981 = vand.u32 %v338, 4294901760
        %v1982 = vsub.f32 %v338, %v1981
        %1983 = vmatprep.mubr.f32.mxu0 %v1982
        %v1984 = vand.u32 %v337, 4294901760
        %v1985 = vsub.f32 %v337, %v1984
        %1986 = vmatmul.mubr.f32.gmra.mxu0 %v1985
        %v1987 = vpop.f32.mrf.mxu0
        %v1988 = vadd.f32 %v1659, %v1987
        %v1989 = vpop.f32.mrf.mxu0
        %v1990 = vadd.f32 %v1661, %v1989
        %v1991 = vand.u32 %v342, 4294901760
        %v1992 = vsub.f32 %v342, %v1991
        %1993 = vmatprep.mubr.f32.mxu0 %v1992
        %v1994 = vand.u32 %v341, 4294901760
        %v1995 = vsub.f32 %v341, %v1994
        %1996 = vmatmul.mubr.f32.gmra.mxu0 %v1995
        %v1997 = vpop.f32.mrf.mxu0
        %v1998 = vadd.f32 %v1667, %v1997
        %v1999 = vpop.f32.mrf.mxu0
        %v2000 = vadd.f32 %v1669, %v1999
        %v2001 = vand.u32 %v346, 4294901760
        %v2002 = vsub.f32 %v346, %v2001
        %2003 = vmatprep.mubr.f32.mxu0 %v2002
        %v2004 = vand.u32 %v345, 4294901760
        %v2005 = vsub.f32 %v345, %v2004
        %2006 = vmatmul.mubr.f32.gmra.mxu0 %v2005
        %v2007 = vpop.f32.mrf.mxu0
        %v2008 = vadd.f32 %v1675, %v2007
        %v2009 = vpop.f32.mrf.mxu0
        %v2010 = vadd.f32 %v1677, %v2009
        %v2011 = vand.u32 %v350, 4294901760
        %v2012 = vsub.f32 %v350, %v2011
        %2013 = vmatprep.mubr.f32.mxu0 %v2012
        %v2014 = vand.u32 %v349, 4294901760
        %v2015 = vsub.f32 %v349, %v2014
        %2016 = vmatmul.mubr.f32.gmra.mxu0 %v2015
        %v2017 = vpop.f32.mrf.mxu0
        %v2018 = vadd.f32 %v1683, %v2017
        %v2019 = vpop.f32.mrf.mxu0
        %v2020 = vadd.f32 %v1685, %v2019
        %v2021 = vand.u32 %v354, 4294901760
        %v2022 = vsub.f32 %v354, %v2021
        %2023 = vmatprep.mubr.f32.mxu0 %v2022
        %v2024 = vand.u32 %v353, 4294901760
        %v2025 = vsub.f32 %v353, %v2024
        %2026 = vmatmul.mubr.f32.gmra.mxu0 %v2025
        %v2027 = vpop.f32.mrf.mxu0
        %v2028 = vadd.f32 %v1691, %v2027
        %v2029 = vpop.f32.mrf.mxu0
        %v2030 = vadd.f32 %v1693, %v2029
        %v2031 = vand.u32 %v358, 4294901760
        %v2032 = vsub.f32 %v358, %v2031
        %2033 = vmatprep.mubr.f32.mxu0 %v2032
        %v2034 = vand.u32 %v357, 4294901760
        %v2035 = vsub.f32 %v357, %v2034
        %2036 = vmatmul.mubr.f32.gmra.mxu0 %v2035
        %v2037 = vpop.f32.mrf.mxu0
        %v2038 = vadd.f32 %v1699, %v2037
        %v2039 = vpop.f32.mrf.mxu0
        %v2040 = vadd.f32 %v1701, %v2039
        %v2041 = vand.u32 %v362, 4294901760
        %v2042 = vsub.f32 %v362, %v2041
        %2043 = vmatprep.mubr.f32.mxu0 %v2042
        %v2044 = vand.u32 %v361, 4294901760
        %v2045 = vsub.f32 %v361, %v2044
        %2046 = vmatmul.mubr.f32.gmra.mxu0 %v2045
        %v2047 = vpop.f32.mrf.mxu0
        %v2048 = vadd.f32 %v1707, %v2047
        %v2049 = vpop.f32.mrf.mxu0
        %v2050 = vadd.f32 %v1709, %v2049
        %v2051 = vand.u32 %v366, 4294901760
        %v2052 = vsub.f32 %v366, %v2051
        %2053 = vmatprep.mubr.f32.mxu0 %v2052
        %v2054 = vand.u32 %v365, 4294901760
        %v2055 = vsub.f32 %v365, %v2054
        %2056 = vmatmul.mubr.f32.gmra.mxu0 %v2055
        %v2057 = vpop.f32.mrf.mxu0
        %v2058 = vadd.f32 %v1715, %v2057
        %v2059 = vpop.f32.mrf.mxu0
        %v2060 = vadd.f32 %v1717, %v2059
        %v2061 = vand.u32 %v370, 4294901760
        %v2062 = vsub.f32 %v370, %v2061
        %2063 = vmatprep.mubr.f32.mxu0 %v2062
        %v2064 = vand.u32 %v369, 4294901760
        %v2065 = vsub.f32 %v369, %v2064
        %2066 = vmatmul.mubr.f32.gmra.mxu0 %v2065
        %v2067 = vpop.f32.mrf.mxu0
        %v2068 = vadd.f32 %v1723, %v2067
        %v2069 = vpop.f32.mrf.mxu0
        %v2070 = vadd.f32 %v1725, %v2069
        %v2071 = vand.u32 %v374, 4294901760
        %v2072 = vsub.f32 %v374, %v2071
        %2073 = vmatprep.mubr.f32.mxu0 %v2072
        %v2074 = vand.u32 %v373, 4294901760
        %v2075 = vsub.f32 %v373, %v2074
        %2076 = vmatmul.mubr.f32.gmra.mxu0 %v2075
        %v2077 = vpop.f32.mrf.mxu0
        %v2078 = vadd.f32 %v1731, %v2077
        %v2079 = vpop.f32.mrf.mxu0
        %v2080 = vadd.f32 %v1733, %v2079
        %v2081 = vand.u32 %v378, 4294901760
        %v2082 = vsub.f32 %v378, %v2081
        %2083 = vmatprep.mubr.f32.mxu0 %v2082
        %v2084 = vand.u32 %v377, 4294901760
        %v2085 = vsub.f32 %v377, %v2084
        %2086 = vmatmul.mubr.f32.gmra.mxu0 %v2085
        %v2087 = vpop.f32.mrf.mxu0
        %v2088 = vadd.f32 %v1739, %v2087
        %v2089 = vpop.f32.mrf.mxu0
        %v2090 = vadd.f32 %v1741, %v2089
        %v2091 = vand.u32 %v382, 4294901760
        %v2092 = vsub.f32 %v382, %v2091
        %2093 = vmatprep.mubr.f32.mxu0 %v2092
        %v2094 = vand.u32 %v381, 4294901760
        %v2095 = vsub.f32 %v381, %v2094
        %2096 = vmatmul.mubr.f32.gmra.mxu0 %v2095
        %v2097 = vpop.f32.mrf.mxu0
        %v2098 = vadd.f32 %v1747, %v2097
        %v2099 = vpop.f32.mrf.mxu0
        %v2100 = vadd.f32 %v1749, %v2099
        %v2101 = vand.u32 %v386, 4294901760
        %v2102 = vsub.f32 %v386, %v2101
        %2103 = vmatprep.mubr.f32.mxu0 %v2102
        %v2104 = vand.u32 %v385, 4294901760
        %v2105 = vsub.f32 %v385, %v2104
        %2106 = vmatmul.mubr.f32.gmra.mxu0 %v2105
        %v2107 = vpop.f32.mrf.mxu0
        %v2108 = vadd.f32 %v1755, %v2107
        %v2109 = vpop.f32.mrf.mxu0
        %v2110 = vadd.f32 %v1757, %v2109
        %2111 = vdwg.mxu0
        %v2112 = vand.u32 %v674, 4294901760
        %2113 = vmatprep.subr.mxu0 %v2112
        %v2114 = vand.u32 %v673, 4294901760
        %2115 = vmatpush1.msra.mxu0 %v2114
        %v2116 = vand.u32 %v670, 4294901760
        %2117 = vmatprep.subr.mxu0 %v2116
        %v2118 = vand.u32 %v669, 4294901760
        %2119 = vmatpush1.msra.mxu0 %v2118
        %v2120 = vand.u32 %v666, 4294901760
        %2121 = vmatprep.subr.mxu0 %v2120
        %v2122 = vand.u32 %v665, 4294901760
        %2123 = vmatpush1.msra.mxu0 %v2122
        %v2124 = vand.u32 %v662, 4294901760
        %2125 = vmatprep.subr.mxu0 %v2124
        %v2126 = vand.u32 %v661, 4294901760
        %2127 = vmatpush1.msra.mxu0 %v2126
        %v2128 = vand.u32 %v658, 4294901760
        %2129 = vmatprep.subr.mxu0 %v2128
        %v2130 = vand.u32 %v657, 4294901760
        %2131 = vmatpush1.msra.mxu0 %v2130
        %v2132 = vand.u32 %v654, 4294901760
        %2133 = vmatprep.subr.mxu0 %v2132
        %v2134 = vand.u32 %v653, 4294901760
        %2135 = vmatpush1.msra.mxu0 %v2134
        %v2136 = vand.u32 %v650, 4294901760
        %2137 = vmatprep.subr.mxu0 %v2136
        %v2138 = vand.u32 %v649, 4294901760
        %2139 = vmatpush1.msra.mxu0 %v2138
        %v2140 = vand.u32 %v646, 4294901760
        %2141 = vmatprep.subr.mxu0 %v2140
        %v2142 = vand.u32 %v645, 4294901760
        %2143 = vmatpush1.msra.mxu0 %v2142
        %v2144 = vand.u32 %v642, 4294901760
        %2145 = vmatprep.subr.mxu0 %v2144
        %v2146 = vand.u32 %v641, 4294901760
        %2147 = vmatpush1.msra.mxu0 %v2146
        %v2148 = vand.u32 %v638, 4294901760
        %2149 = vmatprep.subr.mxu0 %v2148
        %v2150 = vand.u32 %v637, 4294901760
        %2151 = vmatpush1.msra.mxu0 %v2150
        %v2152 = vand.u32 %v634, 4294901760
        %2153 = vmatprep.subr.mxu0 %v2152
        %v2154 = vand.u32 %v633, 4294901760
        %2155 = vmatpush1.msra.mxu0 %v2154
        %v2156 = vand.u32 %v630, 4294901760
        %2157 = vmatprep.subr.mxu0 %v2156
        %v2158 = vand.u32 %v629, 4294901760
        %2159 = vmatpush1.msra.mxu0 %v2158
        %v2160 = vand.u32 %v626, 4294901760
        %2161 = vmatprep.subr.mxu0 %v2160
        %v2162 = vand.u32 %v625, 4294901760
        %2163 = vmatpush1.msra.mxu0 %v2162
        %v2164 = vand.u32 %v622, 4294901760
        %2165 = vmatprep.subr.mxu0 %v2164
        %v2166 = vand.u32 %v621, 4294901760
        %2167 = vmatpush1.msra.mxu0 %v2166
        %v2168 = vand.u32 %v618, 4294901760
        %2169 = vmatprep.subr.mxu0 %v2168
        %v2170 = vand.u32 %v617, 4294901760
        %2171 = vmatpush1.msra.mxu0 %v2170
        %v2172 = vand.u32 %v614, 4294901760
        %2173 = vmatprep.subr.mxu0 %v2172
        %v2174 = vand.u32 %v613, 4294901760
        %2175 = vmatpush1.msra.mxu0 %v2174
        %v2176 = vand.u32 %v738, 4294901760
        %2177 = vmatprep.subr.mxu0 %v2176
        %v2178 = vand.u32 %v737, 4294901760
        %2179 = vmatpush2.msra.mxu0 %v2178
        %v2180 = vand.u32 %v734, 4294901760
        %2181 = vmatprep.subr.mxu0 %v2180
        %v2182 = vand.u32 %v733, 4294901760
        %2183 = vmatpush2.msra.mxu0 %v2182
        %v2184 = vand.u32 %v730, 4294901760
        %2185 = vmatprep.subr.mxu0 %v2184
        %v2186 = vand.u32 %v729, 4294901760
        %2187 = vmatpush2.msra.mxu0 %v2186
        %v2188 = vand.u32 %v726, 4294901760
        %2189 = vmatprep.subr.mxu0 %v2188
        %v2190 = vand.u32 %v725, 4294901760
        %2191 = vmatpush2.msra.mxu0 %v2190
        %v2192 = vand.u32 %v722, 4294901760
        %2193 = vmatprep.subr.mxu0 %v2192
        %v2194 = vand.u32 %v721, 4294901760
        %2195 = vmatpush2.msra.mxu0 %v2194
        %v2196 = vand.u32 %v718, 4294901760
        %2197 = vmatprep.subr.mxu0 %v2196
        %v2198 = vand.u32 %v717, 4294901760
        %2199 = vmatpush2.msra.mxu0 %v2198
        %v2200 = vand.u32 %v714, 4294901760
        %2201 = vmatprep.subr.mxu0 %v2200
        %v2202 = vand.u32 %v713, 4294901760
        %2203 = vmatpush2.msra.mxu0 %v2202
        %v2204 = vand.u32 %v710, 4294901760
        %2205 = vmatprep.subr.mxu0 %v2204
        %v2206 = vand.u32 %v709, 4294901760
        %2207 = vmatpush2.msra.mxu0 %v2206
        %v2208 = vand.u32 %v706, 4294901760
        %2209 = vmatprep.subr.mxu0 %v2208
        %v2210 = vand.u32 %v705, 4294901760
        %2211 = vmatpush2.msra.mxu0 %v2210
        %v2212 = vand.u32 %v702, 4294901760
        %2213 = vmatprep.subr.mxu0 %v2212
        %v2214 = vand.u32 %v701, 4294901760
        %2215 = vmatpush2.msra.mxu0 %v2214
        %v2216 = vand.u32 %v698, 4294901760
        %2217 = vmatprep.subr.mxu0 %v2216
        %v2218 = vand.u32 %v697, 4294901760
        %2219 = vmatpush2.msra.mxu0 %v2218
        %v2220 = vand.u32 %v694, 4294901760
        %2221 = vmatprep.subr.mxu0 %v2220
        %v2222 = vand.u32 %v693, 4294901760
        %2223 = vmatpush2.msra.mxu0 %v2222
        %v2224 = vand.u32 %v690, 4294901760
        %2225 = vmatprep.subr.mxu0 %v2224
        %v2226 = vand.u32 %v689, 4294901760
        %2227 = vmatpush2.msra.mxu0 %v2226
        %v2228 = vand.u32 %v686, 4294901760
        %2229 = vmatprep.subr.mxu0 %v2228
        %v2230 = vand.u32 %v685, 4294901760
        %2231 = vmatpush2.msra.mxu0 %v2230
        %v2232 = vand.u32 %v682, 4294901760
        %2233 = vmatprep.subr.mxu0 %v2232
        %v2234 = vand.u32 %v681, 4294901760
        %2235 = vmatpush2.msra.mxu0 %v2234
        %v2236 = vand.u32 %v678, 4294901760
        %2237 = vmatprep.subr.mxu0 %v2236
        %v2238 = vand.u32 %v677, 4294901760
        %2239 = vmatpush2.msra.mxu0 %v2238
        %v2240 = vand.u32 %v326, 4294901760
        %v2241 = vsub.f32 %v326, %v2240
        %v2242 = vand.u32 %v2241, 4294901760
        %2243 = vmatprep.mubr.f32.mxu0 %v2242
        %v2244 = vand.u32 %v325, 4294901760
        %v2245 = vsub.f32 %v325, %v2244
        %v2246 = vand.u32 %v2245, 4294901760
        %2247 = vmatmul.mubr.f32.gmra.mxu0 %v2246
        %v2248 = vpop.f32.mrf.mxu0
        %v2249 = vadd.f32 %v1958, %v2248
        %v2250 = vpop.f32.mrf.mxu0
        %v2251 = vadd.f32 %v1960, %v2250
        %v2252 = vand.u32 %v330, 4294901760
        %v2253 = vsub.f32 %v330, %v2252
        %v2254 = vand.u32 %v2253, 4294901760
        %2255 = vmatprep.mubr.f32.mxu0 %v2254
        %v2256 = vand.u32 %v329, 4294901760
        %v2257 = vsub.f32 %v329, %v2256
        %v2258 = vand.u32 %v2257, 4294901760
        %2259 = vmatmul.mubr.f32.gmra.mxu0 %v2258
        %v2260 = vpop.f32.mrf.mxu0
        %v2261 = vadd.f32 %v1968, %v2260
        %v2262 = vpop.f32.mrf.mxu0
        %v2263 = vadd.f32 %v1970, %v2262
        %v2264 = vand.u32 %v334, 4294901760
        %v2265 = vsub.f32 %v334, %v2264
        %v2266 = vand.u32 %v2265, 4294901760
        %2267 = vmatprep.mubr.f32.mxu0 %v2266
        %v2268 = vand.u32 %v333, 4294901760
        %v2269 = vsub.f32 %v333, %v2268
        %v2270 = vand.u32 %v2269, 4294901760
        %2271 = vmatmul.mubr.f32.gmra.mxu0 %v2270
        %v2272 = vpop.f32.mrf.mxu0
        %v2273 = vadd.f32 %v1978, %v2272
        %v2274 = vpop.f32.mrf.mxu0
        %v2275 = vadd.f32 %v1980, %v2274
        %v2276 = vand.u32 %v338, 4294901760
        %v2277 = vsub.f32 %v338, %v2276
        %v2278 = vand.u32 %v2277, 4294901760
        %2279 = vmatprep.mubr.f32.mxu0 %v2278
        %v2280 = vand.u32 %v337, 4294901760
        %v2281 = vsub.f32 %v337, %v2280
        %v2282 = vand.u32 %v2281, 4294901760
        %2283 = vmatmul.mubr.f32.gmra.mxu0 %v2282
        %v2284 = vpop.f32.mrf.mxu0
        %v2285 = vadd.f32 %v1988, %v2284
        %v2286 = vpop.f32.mrf.mxu0
        %v2287 = vadd.f32 %v1990, %v2286
        %v2288 = vand.u32 %v342, 4294901760
        %v2289 = vsub.f32 %v342, %v2288
        %v2290 = vand.u32 %v2289, 4294901760
        %2291 = vmatprep.mubr.f32.mxu0 %v2290
        %v2292 = vand.u32 %v341, 4294901760
        %v2293 = vsub.f32 %v341, %v2292
        %v2294 = vand.u32 %v2293, 4294901760
        %2295 = vmatmul.mubr.f32.gmra.mxu0 %v2294
        %v2296 = vpop.f32.mrf.mxu0
        %v2297 = vadd.f32 %v1998, %v2296
        %v2298 = vpop.f32.mrf.mxu0
        %v2299 = vadd.f32 %v2000, %v2298
        %v2300 = vand.u32 %v346, 4294901760
        %v2301 = vsub.f32 %v346, %v2300
        %v2302 = vand.u32 %v2301, 4294901760
        %2303 = vmatprep.mubr.f32.mxu0 %v2302
        %v2304 = vand.u32 %v345, 4294901760
        %v2305 = vsub.f32 %v345, %v2304
        %v2306 = vand.u32 %v2305, 4294901760
        %2307 = vmatmul.mubr.f32.gmra.mxu0 %v2306
        %v2308 = vpop.f32.mrf.mxu0
        %v2309 = vadd.f32 %v2008, %v2308
        %v2310 = vpop.f32.mrf.mxu0
        %v2311 = vadd.f32 %v2010, %v2310
        %v2312 = vand.u32 %v350, 4294901760
        %v2313 = vsub.f32 %v350, %v2312
        %v2314 = vand.u32 %v2313, 4294901760
        %2315 = vmatprep.mubr.f32.mxu0 %v2314
        %v2316 = vand.u32 %v349, 4294901760
        %v2317 = vsub.f32 %v349, %v2316
        %v2318 = vand.u32 %v2317, 4294901760
        %2319 = vmatmul.mubr.f32.gmra.mxu0 %v2318
        %v2320 = vpop.f32.mrf.mxu0
        %v2321 = vadd.f32 %v2018, %v2320
        %v2322 = vpop.f32.mrf.mxu0
        %v2323 = vadd.f32 %v2020, %v2322
        %v2324 = vand.u32 %v354, 4294901760
        %v2325 = vsub.f32 %v354, %v2324
        %v2326 = vand.u32 %v2325, 4294901760
        %2327 = vmatprep.mubr.f32.mxu0 %v2326
        %v2328 = vand.u32 %v353, 4294901760
        %v2329 = vsub.f32 %v353, %v2328
        %v2330 = vand.u32 %v2329, 4294901760
        %2331 = vmatmul.mubr.f32.gmra.mxu0 %v2330
        %v2332 = vpop.f32.mrf.mxu0
        %v2333 = vadd.f32 %v2028, %v2332
        %v2334 = vpop.f32.mrf.mxu0
        %v2335 = vadd.f32 %v2030, %v2334
        %v2336 = vand.u32 %v358, 4294901760
        %v2337 = vsub.f32 %v358, %v2336
        %v2338 = vand.u32 %v2337, 4294901760
        %2339 = vmatprep.mubr.f32.mxu0 %v2338
        %v2340 = vand.u32 %v357, 4294901760
        %v2341 = vsub.f32 %v357, %v2340
        %v2342 = vand.u32 %v2341, 4294901760
        %2343 = vmatmul.mubr.f32.gmra.mxu0 %v2342
        %v2344 = vpop.f32.mrf.mxu0
        %v2345 = vadd.f32 %v2038, %v2344
        %v2346 = vpop.f32.mrf.mxu0
        %v2347 = vadd.f32 %v2040, %v2346
        %v2348 = vand.u32 %v362, 4294901760
        %v2349 = vsub.f32 %v362, %v2348
        %v2350 = vand.u32 %v2349, 4294901760
        %2351 = vmatprep.mubr.f32.mxu0 %v2350
        %v2352 = vand.u32 %v361, 4294901760
        %v2353 = vsub.f32 %v361, %v2352
        %v2354 = vand.u32 %v2353, 4294901760
        %2355 = vmatmul.mubr.f32.gmra.mxu0 %v2354
        %v2356 = vpop.f32.mrf.mxu0
        %v2357 = vadd.f32 %v2048, %v2356
        %v2358 = vpop.f32.mrf.mxu0
        %v2359 = vadd.f32 %v2050, %v2358
        %v2360 = vand.u32 %v366, 4294901760
        %v2361 = vsub.f32 %v366, %v2360
        %v2362 = vand.u32 %v2361, 4294901760
        %2363 = vmatprep.mubr.f32.mxu0 %v2362
        %v2364 = vand.u32 %v365, 4294901760
        %v2365 = vsub.f32 %v365, %v2364
        %v2366 = vand.u32 %v2365, 4294901760
        %2367 = vmatmul.mubr.f32.gmra.mxu0 %v2366
        %v2368 = vpop.f32.mrf.mxu0
        %v2369 = vadd.f32 %v2058, %v2368
        %v2370 = vpop.f32.mrf.mxu0
        %v2371 = vadd.f32 %v2060, %v2370
        %v2372 = vand.u32 %v370, 4294901760
        %v2373 = vsub.f32 %v370, %v2372
        %v2374 = vand.u32 %v2373, 4294901760
        %2375 = vmatprep.mubr.f32.mxu0 %v2374
        %v2376 = vand.u32 %v369, 4294901760
        %v2377 = vsub.f32 %v369, %v2376
        %v2378 = vand.u32 %v2377, 4294901760
        %2379 = vmatmul.mubr.f32.gmra.mxu0 %v2378
        %v2380 = vpop.f32.mrf.mxu0
        %v2381 = vadd.f32 %v2068, %v2380
        %v2382 = vpop.f32.mrf.mxu0
        %v2383 = vadd.f32 %v2070, %v2382
        %v2384 = vand.u32 %v374, 4294901760
        %v2385 = vsub.f32 %v374, %v2384
        %v2386 = vand.u32 %v2385, 4294901760
        %2387 = vmatprep.mubr.f32.mxu0 %v2386
        %v2388 = vand.u32 %v373, 4294901760
        %v2389 = vsub.f32 %v373, %v2388
        %v2390 = vand.u32 %v2389, 4294901760
        %2391 = vmatmul.mubr.f32.gmra.mxu0 %v2390
        %v2392 = vpop.f32.mrf.mxu0
        %v2393 = vadd.f32 %v2078, %v2392
        %v2394 = vpop.f32.mrf.mxu0
        %v2395 = vadd.f32 %v2080, %v2394
        %v2396 = vand.u32 %v378, 4294901760
        %v2397 = vsub.f32 %v378, %v2396
        %v2398 = vand.u32 %v2397, 4294901760
        %2399 = vmatprep.mubr.f32.mxu0 %v2398
        %v2400 = vand.u32 %v377, 4294901760
        %v2401 = vsub.f32 %v377, %v2400
        %v2402 = vand.u32 %v2401, 4294901760
        %2403 = vmatmul.mubr.f32.gmra.mxu0 %v2402
        %v2404 = vpop.f32.mrf.mxu0
        %v2405 = vadd.f32 %v2088, %v2404
        %v2406 = vpop.f32.mrf.mxu0
        %v2407 = vadd.f32 %v2090, %v2406
        %v2408 = vand.u32 %v382, 4294901760
        %v2409 = vsub.f32 %v382, %v2408
        %v2410 = vand.u32 %v2409, 4294901760
        %2411 = vmatprep.mubr.f32.mxu0 %v2410
        %v2412 = vand.u32 %v381, 4294901760
        %v2413 = vsub.f32 %v381, %v2412
        %v2414 = vand.u32 %v2413, 4294901760
        %2415 = vmatmul.mubr.f32.gmra.mxu0 %v2414
        %v2416 = vpop.f32.mrf.mxu0
        %v2417 = vadd.f32 %v2098, %v2416
        %v2418 = vpop.f32.mrf.mxu0
        %v2419 = vadd.f32 %v2100, %v2418
        %v2420 = vand.u32 %v386, 4294901760
        %v2421 = vsub.f32 %v386, %v2420
        %v2422 = vand.u32 %v2421, 4294901760
        %2423 = vmatprep.mubr.f32.mxu0 %v2422
        %v2424 = vand.u32 %v385, 4294901760
        %v2425 = vsub.f32 %v385, %v2424
        %v2426 = vand.u32 %v2425, 4294901760
        %2427 = vmatmul.mubr.f32.gmra.mxu0 %v2426
        %v2428 = vpop.f32.mrf.mxu0
        %v2429 = vadd.f32 %v2108, %v2428
        %v2430 = vpop.f32.mrf.mxu0
        %v2431 = vadd.f32 %v2110, %v2430
        %2432 = vdwg.mxu0
        %v2433 = vand.u32 %v674, 4294901760
        %v2434 = vsub.f32 %v674, %v2433
        %v2435 = vand.u32 %v2434, 4294901760
        %2436 = vmatprep.subr.mxu0 %v2435
        %v2437 = vand.u32 %v673, 4294901760
        %v2438 = vsub.f32 %v673, %v2437
        %v2439 = vand.u32 %v2438, 4294901760
        %2440 = vmatpush1.msra.mxu0 %v2439
        %v2441 = vand.u32 %v670, 4294901760
        %v2442 = vsub.f32 %v670, %v2441
        %v2443 = vand.u32 %v2442, 4294901760
        %2444 = vmatprep.subr.mxu0 %v2443
        %v2445 = vand.u32 %v669, 4294901760
        %v2446 = vsub.f32 %v669, %v2445
        %v2447 = vand.u32 %v2446, 4294901760
        %2448 = vmatpush1.msra.mxu0 %v2447
        %v2449 = vand.u32 %v666, 4294901760
        %v2450 = vsub.f32 %v666, %v2449
        %v2451 = vand.u32 %v2450, 4294901760
        %2452 = vmatprep.subr.mxu0 %v2451
        %v2453 = vand.u32 %v665, 4294901760
        %v2454 = vsub.f32 %v665, %v2453
        %v2455 = vand.u32 %v2454, 4294901760
        %2456 = vmatpush1.msra.mxu0 %v2455
        %v2457 = vand.u32 %v662, 4294901760
        %v2458 = vsub.f32 %v662, %v2457
        %v2459 = vand.u32 %v2458, 4294901760
        %2460 = vmatprep.subr.mxu0 %v2459
        %v2461 = vand.u32 %v661, 4294901760
        %v2462 = vsub.f32 %v661, %v2461
        %v2463 = vand.u32 %v2462, 4294901760
        %2464 = vmatpush1.msra.mxu0 %v2463
        %v2465 = vand.u32 %v658, 4294901760
        %v2466 = vsub.f32 %v658, %v2465
        %v2467 = vand.u32 %v2466, 4294901760
        %2468 = vmatprep.subr.mxu0 %v2467
        %v2469 = vand.u32 %v657, 4294901760
        %v2470 = vsub.f32 %v657, %v2469
        %v2471 = vand.u32 %v2470, 4294901760
        %2472 = vmatpush1.msra.mxu0 %v2471
        %v2473 = vand.u32 %v654, 4294901760
        %v2474 = vsub.f32 %v654, %v2473
        %v2475 = vand.u32 %v2474, 4294901760
        %2476 = vmatprep.subr.mxu0 %v2475
        %v2477 = vand.u32 %v653, 4294901760
        %v2478 = vsub.f32 %v653, %v2477
        %v2479 = vand.u32 %v2478, 4294901760
        %2480 = vmatpush1.msra.mxu0 %v2479
        %v2481 = vand.u32 %v650, 4294901760
        %v2482 = vsub.f32 %v650, %v2481
        %v2483 = vand.u32 %v2482, 4294901760
        %2484 = vmatprep.subr.mxu0 %v2483
        %v2485 = vand.u32 %v649, 4294901760
        %v2486 = vsub.f32 %v649, %v2485
        %v2487 = vand.u32 %v2486, 4294901760
        %2488 = vmatpush1.msra.mxu0 %v2487
        %v2489 = vand.u32 %v646, 4294901760
        %v2490 = vsub.f32 %v646, %v2489
        %v2491 = vand.u32 %v2490, 4294901760
        %2492 = vmatprep.subr.mxu0 %v2491
        %v2493 = vand.u32 %v645, 4294901760
        %v2494 = vsub.f32 %v645, %v2493
        %v2495 = vand.u32 %v2494, 4294901760
        %2496 = vmatpush1.msra.mxu0 %v2495
        %v2497 = vand.u32 %v642, 4294901760
        %v2498 = vsub.f32 %v642, %v2497
        %v2499 = vand.u32 %v2498, 4294901760
        %2500 = vmatprep.subr.mxu0 %v2499
        %v2501 = vand.u32 %v641, 4294901760
        %v2502 = vsub.f32 %v641, %v2501
        %v2503 = vand.u32 %v2502, 4294901760
        %2504 = vmatpush1.msra.mxu0 %v2503
        %v2505 = vand.u32 %v638, 4294901760
        %v2506 = vsub.f32 %v638, %v2505
        %v2507 = vand.u32 %v2506, 4294901760
        %2508 = vmatprep.subr.mxu0 %v2507
        %v2509 = vand.u32 %v637, 4294901760
        %v2510 = vsub.f32 %v637, %v2509
        %v2511 = vand.u32 %v2510, 4294901760
        %2512 = vmatpush1.msra.mxu0 %v2511
        %v2513 = vand.u32 %v634, 4294901760
        %v2514 = vsub.f32 %v634, %v2513
        %v2515 = vand.u32 %v2514, 4294901760
        %2516 = vmatprep.subr.mxu0 %v2515
        %v2517 = vand.u32 %v633, 4294901760
        %v2518 = vsub.f32 %v633, %v2517
        %v2519 = vand.u32 %v2518, 4294901760
        %2520 = vmatpush1.msra.mxu0 %v2519
        %v2521 = vand.u32 %v630, 4294901760
        %v2522 = vsub.f32 %v630, %v2521
        %v2523 = vand.u32 %v2522, 4294901760
        %2524 = vmatprep.subr.mxu0 %v2523
        %v2525 = vand.u32 %v629, 4294901760
        %v2526 = vsub.f32 %v629, %v2525
        %v2527 = vand.u32 %v2526, 4294901760
        %2528 = vmatpush1.msra.mxu0 %v2527
        %v2529 = vand.u32 %v626, 4294901760
        %v2530 = vsub.f32 %v626, %v2529
        %v2531 = vand.u32 %v2530, 4294901760
        %2532 = vmatprep.subr.mxu0 %v2531
        %v2533 = vand.u32 %v625, 4294901760
        %v2534 = vsub.f32 %v625, %v2533
        %v2535 = vand.u32 %v2534, 4294901760
        %2536 = vmatpush1.msra.mxu0 %v2535
        %v2537 = vand.u32 %v622, 4294901760
        %v2538 = vsub.f32 %v622, %v2537
        %v2539 = vand.u32 %v2538, 4294901760
        %2540 = vmatprep.subr.mxu0 %v2539
        %v2541 = vand.u32 %v621, 4294901760
        %v2542 = vsub.f32 %v621, %v2541
        %v2543 = vand.u32 %v2542, 4294901760
        %2544 = vmatpush1.msra.mxu0 %v2543
        %v2545 = vand.u32 %v618, 4294901760
        %v2546 = vsub.f32 %v618, %v2545
        %v2547 = vand.u32 %v2546, 4294901760
        %2548 = vmatprep.subr.mxu0 %v2547
        %v2549 = vand.u32 %v617, 4294901760
        %v2550 = vsub.f32 %v617, %v2549
        %v2551 = vand.u32 %v2550, 4294901760
        %2552 = vmatpush1.msra.mxu0 %v2551
        %v2553 = vand.u32 %v614, 4294901760
        %v2554 = vsub.f32 %v614, %v2553
        %v2555 = vand.u32 %v2554, 4294901760
        %2556 = vmatprep.subr.mxu0 %v2555
        %v2557 = vand.u32 %v613, 4294901760
        %v2558 = vsub.f32 %v613, %v2557
        %v2559 = vand.u32 %v2558, 4294901760
        %2560 = vmatpush1.msra.mxu0 %v2559
        %v2561 = vand.u32 %v738, 4294901760
        %v2562 = vsub.f32 %v738, %v2561
        %v2563 = vand.u32 %v2562, 4294901760
        %2564 = vmatprep.subr.mxu0 %v2563
        %v2565 = vand.u32 %v737, 4294901760
        %v2566 = vsub.f32 %v737, %v2565
        %v2567 = vand.u32 %v2566, 4294901760
        %2568 = vmatpush2.msra.mxu0 %v2567
        %v2569 = vand.u32 %v734, 4294901760
        %v2570 = vsub.f32 %v734, %v2569
        %v2571 = vand.u32 %v2570, 4294901760
        %2572 = vmatprep.subr.mxu0 %v2571
        %v2573 = vand.u32 %v733, 4294901760
        %v2574 = vsub.f32 %v733, %v2573
        %v2575 = vand.u32 %v2574, 4294901760
        %2576 = vmatpush2.msra.mxu0 %v2575
        %v2577 = vand.u32 %v730, 4294901760
        %v2578 = vsub.f32 %v730, %v2577
        %v2579 = vand.u32 %v2578, 4294901760
        %2580 = vmatprep.subr.mxu0 %v2579
        %v2581 = vand.u32 %v729, 4294901760
        %v2582 = vsub.f32 %v729, %v2581
        %v2583 = vand.u32 %v2582, 4294901760
        %2584 = vmatpush2.msra.mxu0 %v2583
        %v2585 = vand.u32 %v726, 4294901760
        %v2586 = vsub.f32 %v726, %v2585
        %v2587 = vand.u32 %v2586, 4294901760
        %2588 = vmatprep.subr.mxu0 %v2587
        %v2589 = vand.u32 %v725, 4294901760
        %v2590 = vsub.f32 %v725, %v2589
        %v2591 = vand.u32 %v2590, 4294901760
        %2592 = vmatpush2.msra.mxu0 %v2591
        %v2593 = vand.u32 %v722, 4294901760
        %v2594 = vsub.f32 %v722, %v2593
        %v2595 = vand.u32 %v2594, 4294901760
        %2596 = vmatprep.subr.mxu0 %v2595
        %v2597 = vand.u32 %v721, 4294901760
        %v2598 = vsub.f32 %v721, %v2597
        %v2599 = vand.u32 %v2598, 4294901760
        %2600 = vmatpush2.msra.mxu0 %v2599
        %v2601 = vand.u32 %v718, 4294901760
        %v2602 = vsub.f32 %v718, %v2601
        %v2603 = vand.u32 %v2602, 4294901760
        %2604 = vmatprep.subr.mxu0 %v2603
        %v2605 = vand.u32 %v717, 4294901760
        %v2606 = vsub.f32 %v717, %v2605
        %v2607 = vand.u32 %v2606, 4294901760
        %2608 = vmatpush2.msra.mxu0 %v2607
        %v2609 = vand.u32 %v714, 4294901760
        %v2610 = vsub.f32 %v714, %v2609
        %v2611 = vand.u32 %v2610, 4294901760
        %2612 = vmatprep.subr.mxu0 %v2611
        %v2613 = vand.u32 %v713, 4294901760
        %v2614 = vsub.f32 %v713, %v2613
        %v2615 = vand.u32 %v2614, 4294901760
        %2616 = vmatpush2.msra.mxu0 %v2615
        %v2617 = vand.u32 %v710, 4294901760
        %v2618 = vsub.f32 %v710, %v2617
        %v2619 = vand.u32 %v2618, 4294901760
        %2620 = vmatprep.subr.mxu0 %v2619
        %v2621 = vand.u32 %v709, 4294901760
        %v2622 = vsub.f32 %v709, %v2621
        %v2623 = vand.u32 %v2622, 4294901760
        %2624 = vmatpush2.msra.mxu0 %v2623
        %v2625 = vand.u32 %v706, 4294901760
        %v2626 = vsub.f32 %v706, %v2625
        %v2627 = vand.u32 %v2626, 4294901760
        %2628 = vmatprep.subr.mxu0 %v2627
        %v2629 = vand.u32 %v705, 4294901760
        %v2630 = vsub.f32 %v705, %v2629
        %v2631 = vand.u32 %v2630, 4294901760
        %2632 = vmatpush2.msra.mxu0 %v2631
        %v2633 = vand.u32 %v702, 4294901760
        %v2634 = vsub.f32 %v702, %v2633
        %v2635 = vand.u32 %v2634, 4294901760
        %2636 = vmatprep.subr.mxu0 %v2635
        %v2637 = vand.u32 %v701, 4294901760
        %v2638 = vsub.f32 %v701, %v2637
        %v2639 = vand.u32 %v2638, 4294901760
        %2640 = vmatpush2.msra.mxu0 %v2639
        %v2641 = vand.u32 %v698, 4294901760
        %v2642 = vsub.f32 %v698, %v2641
        %v2643 = vand.u32 %v2642, 4294901760
        %2644 = vmatprep.subr.mxu0 %v2643
        %v2645 = vand.u32 %v697, 4294901760
        %v2646 = vsub.f32 %v697, %v2645
        %v2647 = vand.u32 %v2646, 4294901760
        %2648 = vmatpush2.msra.mxu0 %v2647
        %v2649 = vand.u32 %v694, 4294901760
        %v2650 = vsub.f32 %v694, %v2649
        %v2651 = vand.u32 %v2650, 4294901760
        %2652 = vmatprep.subr.mxu0 %v2651
        %v2653 = vand.u32 %v693, 4294901760
        %v2654 = vsub.f32 %v693, %v2653
        %v2655 = vand.u32 %v2654, 4294901760
        %2656 = vmatpush2.msra.mxu0 %v2655
        %v2657 = vand.u32 %v690, 4294901760
        %v2658 = vsub.f32 %v690, %v2657
        %v2659 = vand.u32 %v2658, 4294901760
        %2660 = vmatprep.subr.mxu0 %v2659
        %v2661 = vand.u32 %v689, 4294901760
        %v2662 = vsub.f32 %v689, %v2661
        %v2663 = vand.u32 %v2662, 4294901760
        %2664 = vmatpush2.msra.mxu0 %v2663
        %v2665 = vand.u32 %v686, 4294901760
        %v2666 = vsub.f32 %v686, %v2665
        %v2667 = vand.u32 %v2666, 4294901760
        %2668 = vmatprep.subr.mxu0 %v2667
        %v2669 = vand.u32 %v685, 4294901760
        %v2670 = vsub.f32 %v685, %v2669
        %v2671 = vand.u32 %v2670, 4294901760
        %2672 = vmatpush2.msra.mxu0 %v2671
        %v2673 = vand.u32 %v682, 4294901760
        %v2674 = vsub.f32 %v682, %v2673
        %v2675 = vand.u32 %v2674, 4294901760
        %2676 = vmatprep.subr.mxu0 %v2675
        %v2677 = vand.u32 %v681, 4294901760
        %v2678 = vsub.f32 %v681, %v2677
        %v2679 = vand.u32 %v2678, 4294901760
        %2680 = vmatpush2.msra.mxu0 %v2679
        %v2681 = vand.u32 %v678, 4294901760
        %v2682 = vsub.f32 %v678, %v2681
        %v2683 = vand.u32 %v2682, 4294901760
        %2684 = vmatprep.subr.mxu0 %v2683
        %v2685 = vand.u32 %v677, 4294901760
        %v2686 = vsub.f32 %v677, %v2685
        %v2687 = vand.u32 %v2686, 4294901760
        %2688 = vmatpush2.msra.mxu0 %v2687
        %v2689 = vand.u32 %v326, 4294901760
        %2690 = vmatprep.mubr.f32.mxu0 %v2689
        %v2691 = vand.u32 %v325, 4294901760
        %2692 = vmatmul.mubr.f32.gmra.mxu0 %v2691
        %v2693 = vpop.f32.mrf.mxu0
        %v2694 = vadd.f32 %v2249, %v2693
        %v2695 = vpop.f32.mrf.mxu0
        %v2696 = vadd.f32 %v2251, %v2695
        %v2697 = vand.u32 %v330, 4294901760
        %2698 = vmatprep.mubr.f32.mxu0 %v2697
        %v2699 = vand.u32 %v329, 4294901760
        %2700 = vmatmul.mubr.f32.gmra.mxu0 %v2699
        %v2701 = vpop.f32.mrf.mxu0
        %v2702 = vadd.f32 %v2261, %v2701
        %v2703 = vpop.f32.mrf.mxu0
        %v2704 = vadd.f32 %v2263, %v2703
        %v2705 = vand.u32 %v334, 4294901760
        %2706 = vmatprep.mubr.f32.mxu0 %v2705
        %v2707 = vand.u32 %v333, 4294901760
        %2708 = vmatmul.mubr.f32.gmra.mxu0 %v2707
        %v2709 = vpop.f32.mrf.mxu0
        %v2710 = vadd.f32 %v2273, %v2709
        %v2711 = vpop.f32.mrf.mxu0
        %v2712 = vadd.f32 %v2275, %v2711
        %v2713 = vand.u32 %v338, 4294901760
        %2714 = vmatprep.mubr.f32.mxu0 %v2713
        %v2715 = vand.u32 %v337, 4294901760
        %2716 = vmatmul.mubr.f32.gmra.mxu0 %v2715
        %v2717 = vpop.f32.mrf.mxu0
        %v2718 = vadd.f32 %v2285, %v2717
        %v2719 = vpop.f32.mrf.mxu0
        %v2720 = vadd.f32 %v2287, %v2719
        %v2721 = vand.u32 %v342, 4294901760
        %2722 = vmatprep.mubr.f32.mxu0 %v2721
        %v2723 = vand.u32 %v341, 4294901760
        %2724 = vmatmul.mubr.f32.gmra.mxu0 %v2723
        %v2725 = vpop.f32.mrf.mxu0
        %v2726 = vadd.f32 %v2297, %v2725
        %v2727 = vpop.f32.mrf.mxu0
        %v2728 = vadd.f32 %v2299, %v2727
        %v2729 = vand.u32 %v346, 4294901760
        %2730 = vmatprep.mubr.f32.mxu0 %v2729
        %v2731 = vand.u32 %v345, 4294901760
        %2732 = vmatmul.mubr.f32.gmra.mxu0 %v2731
        %v2733 = vpop.f32.mrf.mxu0
        %v2734 = vadd.f32 %v2309, %v2733
        %v2735 = vpop.f32.mrf.mxu0
        %v2736 = vadd.f32 %v2311, %v2735
        %v2737 = vand.u32 %v350, 4294901760
        %2738 = vmatprep.mubr.f32.mxu0 %v2737
        %v2739 = vand.u32 %v349, 4294901760
        %2740 = vmatmul.mubr.f32.gmra.mxu0 %v2739
        %v2741 = vpop.f32.mrf.mxu0
        %v2742 = vadd.f32 %v2321, %v2741
        %v2743 = vpop.f32.mrf.mxu0
        %v2744 = vadd.f32 %v2323, %v2743
        %v2745 = vand.u32 %v354, 4294901760
        %2746 = vmatprep.mubr.f32.mxu0 %v2745
        %v2747 = vand.u32 %v353, 4294901760
        %2748 = vmatmul.mubr.f32.gmra.mxu0 %v2747
        %v2749 = vpop.f32.mrf.mxu0
        %v2750 = vadd.f32 %v2333, %v2749
        %v2751 = vpop.f32.mrf.mxu0
        %v2752 = vadd.f32 %v2335, %v2751
        %v2753 = vand.u32 %v358, 4294901760
        %2754 = vmatprep.mubr.f32.mxu0 %v2753
        %v2755 = vand.u32 %v357, 4294901760
        %2756 = vmatmul.mubr.f32.gmra.mxu0 %v2755
        %v2757 = vpop.f32.mrf.mxu0
        %v2758 = vadd.f32 %v2345, %v2757
        %v2759 = vpop.f32.mrf.mxu0
        %v2760 = vadd.f32 %v2347, %v2759
        %v2761 = vand.u32 %v362, 4294901760
        %2762 = vmatprep.mubr.f32.mxu0 %v2761
        %v2763 = vand.u32 %v361, 4294901760
        %2764 = vmatmul.mubr.f32.gmra.mxu0 %v2763
        %v2765 = vpop.f32.mrf.mxu0
        %v2766 = vadd.f32 %v2357, %v2765
        %v2767 = vpop.f32.mrf.mxu0
        %v2768 = vadd.f32 %v2359, %v2767
        %v2769 = vand.u32 %v366, 4294901760
        %2770 = vmatprep.mubr.f32.mxu0 %v2769
        %v2771 = vand.u32 %v365, 4294901760
        %2772 = vmatmul.mubr.f32.gmra.mxu0 %v2771
        %v2773 = vpop.f32.mrf.mxu0
        %v2774 = vadd.f32 %v2369, %v2773
        %v2775 = vpop.f32.mrf.mxu0
        %v2776 = vadd.f32 %v2371, %v2775
        %v2777 = vand.u32 %v370, 4294901760
        %2778 = vmatprep.mubr.f32.mxu0 %v2777
        %v2779 = vand.u32 %v369, 4294901760
        %2780 = vmatmul.mubr.f32.gmra.mxu0 %v2779
        %v2781 = vpop.f32.mrf.mxu0
        %v2782 = vadd.f32 %v2381, %v2781
        %v2783 = vpop.f32.mrf.mxu0
        %v2784 = vadd.f32 %v2383, %v2783
        %v2785 = vand.u32 %v374, 4294901760
        %2786 = vmatprep.mubr.f32.mxu0 %v2785
        %v2787 = vand.u32 %v373, 4294901760
        %2788 = vmatmul.mubr.f32.gmra.mxu0 %v2787
        %v2789 = vpop.f32.mrf.mxu0
        %v2790 = vadd.f32 %v2393, %v2789
        %v2791 = vpop.f32.mrf.mxu0
        %v2792 = vadd.f32 %v2395, %v2791
        %v2793 = vand.u32 %v378, 4294901760
        %2794 = vmatprep.mubr.f32.mxu0 %v2793
        %v2795 = vand.u32 %v377, 4294901760
        %2796 = vmatmul.mubr.f32.gmra.mxu0 %v2795
        %v2797 = vpop.f32.mrf.mxu0
        %v2798 = vadd.f32 %v2405, %v2797
        %v2799 = vpop.f32.mrf.mxu0
        %v2800 = vadd.f32 %v2407, %v2799
        %v2801 = vand.u32 %v382, 4294901760
        %2802 = vmatprep.mubr.f32.mxu0 %v2801
        %v2803 = vand.u32 %v381, 4294901760
        %2804 = vmatmul.mubr.f32.gmra.mxu0 %v2803
        %v2805 = vpop.f32.mrf.mxu0
        %v2806 = vadd.f32 %v2417, %v2805
        %v2807 = vpop.f32.mrf.mxu0
        %v2808 = vadd.f32 %v2419, %v2807
        %v2809 = vand.u32 %v386, 4294901760
        %2810 = vmatprep.mubr.f32.mxu0 %v2809
        %v2811 = vand.u32 %v385, 4294901760
        %2812 = vmatmul.mubr.f32.gmra.mxu0 %v2811
        %v2813 = vpop.f32.mrf.mxu0
        %v2814 = vadd.f32 %v2429, %v2813
        %v2815 = vpop.f32.mrf.mxu0
        %v2816 = vadd.f32 %v2431, %v2815
        %2817 = vdwg.mxu0
        %v2818 = vand.u32 %v674, 4294901760
        %2819 = vmatprep.subr.mxu0 %v2818
        %v2820 = vand.u32 %v673, 4294901760
        %2821 = vmatpush1.msra.mxu0 %v2820
        %v2822 = vand.u32 %v670, 4294901760
        %2823 = vmatprep.subr.mxu0 %v2822
        %v2824 = vand.u32 %v669, 4294901760
        %2825 = vmatpush1.msra.mxu0 %v2824
        %v2826 = vand.u32 %v666, 4294901760
        %2827 = vmatprep.subr.mxu0 %v2826
        %v2828 = vand.u32 %v665, 4294901760
        %2829 = vmatpush1.msra.mxu0 %v2828
        %v2830 = vand.u32 %v662, 4294901760
        %2831 = vmatprep.subr.mxu0 %v2830
        %v2832 = vand.u32 %v661, 4294901760
        %2833 = vmatpush1.msra.mxu0 %v2832
        %v2834 = vand.u32 %v658, 4294901760
        %2835 = vmatprep.subr.mxu0 %v2834
        %v2836 = vand.u32 %v657, 4294901760
        %2837 = vmatpush1.msra.mxu0 %v2836
        %v2838 = vand.u32 %v654, 4294901760
        %2839 = vmatprep.subr.mxu0 %v2838
        %v2840 = vand.u32 %v653, 4294901760
        %2841 = vmatpush1.msra.mxu0 %v2840
        %v2842 = vand.u32 %v650, 4294901760
        %2843 = vmatprep.subr.mxu0 %v2842
        %v2844 = vand.u32 %v649, 4294901760
        %2845 = vmatpush1.msra.mxu0 %v2844
        %v2846 = vand.u32 %v646, 4294901760
        %2847 = vmatprep.subr.mxu0 %v2846
        %v2848 = vand.u32 %v645, 4294901760
        %2849 = vmatpush1.msra.mxu0 %v2848
        %v2850 = vand.u32 %v642, 4294901760
        %2851 = vmatprep.subr.mxu0 %v2850
        %v2852 = vand.u32 %v641, 4294901760
        %2853 = vmatpush1.msra.mxu0 %v2852
        %v2854 = vand.u32 %v638, 4294901760
        %2855 = vmatprep.subr.mxu0 %v2854
        %v2856 = vand.u32 %v637, 4294901760
        %2857 = vmatpush1.msra.mxu0 %v2856
        %v2858 = vand.u32 %v634, 4294901760
        %2859 = vmatprep.subr.mxu0 %v2858
        %v2860 = vand.u32 %v633, 4294901760
        %2861 = vmatpush1.msra.mxu0 %v2860
        %v2862 = vand.u32 %v630, 4294901760
        %2863 = vmatprep.subr.mxu0 %v2862
        %v2864 = vand.u32 %v629, 4294901760
        %2865 = vmatpush1.msra.mxu0 %v2864
        %v2866 = vand.u32 %v626, 4294901760
        %2867 = vmatprep.subr.mxu0 %v2866
        %v2868 = vand.u32 %v625, 4294901760
        %2869 = vmatpush1.msra.mxu0 %v2868
        %v2870 = vand.u32 %v622, 4294901760
        %2871 = vmatprep.subr.mxu0 %v2870
        %v2872 = vand.u32 %v621, 4294901760
        %2873 = vmatpush1.msra.mxu0 %v2872
        %v2874 = vand.u32 %v618, 4294901760
        %2875 = vmatprep.subr.mxu0 %v2874
        %v2876 = vand.u32 %v617, 4294901760
        %2877 = vmatpush1.msra.mxu0 %v2876
        %v2878 = vand.u32 %v614, 4294901760
        %2879 = vmatprep.subr.mxu0 %v2878
        %v2880 = vand.u32 %v613, 4294901760
        %2881 = vmatpush1.msra.mxu0 %v2880
        %v2882 = vand.u32 %v738, 4294901760
        %2883 = vmatprep.subr.mxu0 %v2882
        %v2884 = vand.u32 %v737, 4294901760
        %2885 = vmatpush2.msra.mxu0 %v2884
        %v2886 = vand.u32 %v734, 4294901760
        %2887 = vmatprep.subr.mxu0 %v2886
        %v2888 = vand.u32 %v733, 4294901760
        %2889 = vmatpush2.msra.mxu0 %v2888
        %v2890 = vand.u32 %v730, 4294901760
        %2891 = vmatprep.subr.mxu0 %v2890
        %v2892 = vand.u32 %v729, 4294901760
        %2893 = vmatpush2.msra.mxu0 %v2892
        %v2894 = vand.u32 %v726, 4294901760
        %2895 = vmatprep.subr.mxu0 %v2894
        %v2896 = vand.u32 %v725, 4294901760
        %2897 = vmatpush2.msra.mxu0 %v2896
        %v2898 = vand.u32 %v722, 4294901760
        %2899 = vmatprep.subr.mxu0 %v2898
        %v2900 = vand.u32 %v721, 4294901760
        %2901 = vmatpush2.msra.mxu0 %v2900
        %v2902 = vand.u32 %v718, 4294901760
        %2903 = vmatprep.subr.mxu0 %v2902
        %v2904 = vand.u32 %v717, 4294901760
        %2905 = vmatpush2.msra.mxu0 %v2904
        %v2906 = vand.u32 %v714, 4294901760
        %2907 = vmatprep.subr.mxu0 %v2906
        %v2908 = vand.u32 %v713, 4294901760
        %2909 = vmatpush2.msra.mxu0 %v2908
        %v2910 = vand.u32 %v710, 4294901760
        %2911 = vmatprep.subr.mxu0 %v2910
        %v2912 = vand.u32 %v709, 4294901760
        %2913 = vmatpush2.msra.mxu0 %v2912
        %v2914 = vand.u32 %v706, 4294901760
        %2915 = vmatprep.subr.mxu0 %v2914
        %v2916 = vand.u32 %v705, 4294901760
        %2917 = vmatpush2.msra.mxu0 %v2916
        %v2918 = vand.u32 %v702, 4294901760
        %2919 = vmatprep.subr.mxu0 %v2918
        %v2920 = vand.u32 %v701, 4294901760
        %2921 = vmatpush2.msra.mxu0 %v2920
        %v2922 = vand.u32 %v698, 4294901760
        %2923 = vmatprep.subr.mxu0 %v2922
        %v2924 = vand.u32 %v697, 4294901760
        %2925 = vmatpush2.msra.mxu0 %v2924
        %v2926 = vand.u32 %v694, 4294901760
        %2927 = vmatprep.subr.mxu0 %v2926
        %v2928 = vand.u32 %v693, 4294901760
        %2929 = vmatpush2.msra.mxu0 %v2928
        %v2930 = vand.u32 %v690, 4294901760
        %2931 = vmatprep.subr.mxu0 %v2930
        %v2932 = vand.u32 %v689, 4294901760
        %2933 = vmatpush2.msra.mxu0 %v2932
        %v2934 = vand.u32 %v686, 4294901760
        %2935 = vmatprep.subr.mxu0 %v2934
        %v2936 = vand.u32 %v685, 4294901760
        %2937 = vmatpush2.msra.mxu0 %v2936
        %v2938 = vand.u32 %v682, 4294901760
        %2939 = vmatprep.subr.mxu0 %v2938
        %v2940 = vand.u32 %v681, 4294901760
        %2941 = vmatpush2.msra.mxu0 %v2940
        %v2942 = vand.u32 %v678, 4294901760
        %2943 = vmatprep.subr.mxu0 %v2942
        %v2944 = vand.u32 %v677, 4294901760
        %2945 = vmatpush2.msra.mxu0 %v2944
        %v2946 = vand.u32 %v326, 4294901760
        %2947 = vmatprep.mubr.f32.mxu0 %v2946
        %v2948 = vand.u32 %v325, 4294901760
        %2949 = vmatmul.mubr.f32.gmra.mxu0 %v2948
        %v2950 = vpop.f32.mrf.mxu0
        %v2951 = vadd.f32 %v2694, %v2950
        %v2952 = vpop.f32.mrf.mxu0
        %v2953 = vadd.f32 %v2696, %v2952
        %v2954 = vand.u32 %v330, 4294901760
        %2955 = vmatprep.mubr.f32.mxu0 %v2954
        %v2956 = vand.u32 %v329, 4294901760
        %2957 = vmatmul.mubr.f32.gmra.mxu0 %v2956
        %v2958 = vpop.f32.mrf.mxu0
        %v2959 = vadd.f32 %v2702, %v2958
        %v2960 = vpop.f32.mrf.mxu0
        %v2961 = vadd.f32 %v2704, %v2960
        %v2962 = vand.u32 %v334, 4294901760
        %2963 = vmatprep.mubr.f32.mxu0 %v2962
        %v2964 = vand.u32 %v333, 4294901760
        %2965 = vmatmul.mubr.f32.gmra.mxu0 %v2964
        %v2966 = vpop.f32.mrf.mxu0
        %v2967 = vadd.f32 %v2710, %v2966
        %v2968 = vpop.f32.mrf.mxu0
        %v2969 = vadd.f32 %v2712, %v2968
        %v2970 = vand.u32 %v338, 4294901760
        %2971 = vmatprep.mubr.f32.mxu0 %v2970
        %v2972 = vand.u32 %v337, 4294901760
        %2973 = vmatmul.mubr.f32.gmra.mxu0 %v2972
        %v2974 = vpop.f32.mrf.mxu0
        %v2975 = vadd.f32 %v2718, %v2974
        %v2976 = vpop.f32.mrf.mxu0
        %v2977 = vadd.f32 %v2720, %v2976
        %v2978 = vand.u32 %v342, 4294901760
        %2979 = vmatprep.mubr.f32.mxu0 %v2978
        %v2980 = vand.u32 %v341, 4294901760
        %2981 = vmatmul.mubr.f32.gmra.mxu0 %v2980
        %v2982 = vpop.f32.mrf.mxu0
        %v2983 = vadd.f32 %v2726, %v2982
        %v2984 = vpop.f32.mrf.mxu0
        %v2985 = vadd.f32 %v2728, %v2984
        %v2986 = vand.u32 %v346, 4294901760
        %2987 = vmatprep.mubr.f32.mxu0 %v2986
        %v2988 = vand.u32 %v345, 4294901760
        %2989 = vmatmul.mubr.f32.gmra.mxu0 %v2988
        %v2990 = vpop.f32.mrf.mxu0
        %v2991 = vadd.f32 %v2734, %v2990
        %v2992 = vpop.f32.mrf.mxu0
        %v2993 = vadd.f32 %v2736, %v2992
        %v2994 = vand.u32 %v350, 4294901760
        %2995 = vmatprep.mubr.f32.mxu0 %v2994
        %v2996 = vand.u32 %v349, 4294901760
        %2997 = vmatmul.mubr.f32.gmra.mxu0 %v2996
        %v2998 = vpop.f32.mrf.mxu0
        %v2999 = vadd.f32 %v2742, %v2998
        %v3000 = vpop.f32.mrf.mxu0
        %v3001 = vadd.f32 %v2744, %v3000
        %v3002 = vand.u32 %v354, 4294901760
        %3003 = vmatprep.mubr.f32.mxu0 %v3002
        %v3004 = vand.u32 %v353, 4294901760
        %3005 = vmatmul.mubr.f32.gmra.mxu0 %v3004
        %v3006 = vpop.f32.mrf.mxu0
        %v3007 = vadd.f32 %v2750, %v3006
        %v3008 = vpop.f32.mrf.mxu0
        %v3009 = vadd.f32 %v2752, %v3008
        %v3010 = vand.u32 %v358, 4294901760
        %3011 = vmatprep.mubr.f32.mxu0 %v3010
        %v3012 = vand.u32 %v357, 4294901760
        %3013 = vmatmul.mubr.f32.gmra.mxu0 %v3012
        %v3014 = vpop.f32.mrf.mxu0
        %v3015 = vadd.f32 %v2758, %v3014
        %v3016 = vpop.f32.mrf.mxu0
        %v3017 = vadd.f32 %v2760, %v3016
        %v3018 = vand.u32 %v362, 4294901760
        %3019 = vmatprep.mubr.f32.mxu0 %v3018
        %v3020 = vand.u32 %v361, 4294901760
        %3021 = vmatmul.mubr.f32.gmra.mxu0 %v3020
        %v3022 = vpop.f32.mrf.mxu0
        %v3023 = vadd.f32 %v2766, %v3022
        %v3024 = vpop.f32.mrf.mxu0
        %v3025 = vadd.f32 %v2768, %v3024
        %v3026 = vand.u32 %v366, 4294901760
        %3027 = vmatprep.mubr.f32.mxu0 %v3026
        %v3028 = vand.u32 %v365, 4294901760
        %3029 = vmatmul.mubr.f32.gmra.mxu0 %v3028
        %v3030 = vpop.f32.mrf.mxu0
        %v3031 = vadd.f32 %v2774, %v3030
        %v3032 = vpop.f32.mrf.mxu0
        %v3033 = vadd.f32 %v2776, %v3032
        %v3034 = vand.u32 %v370, 4294901760
        %3035 = vmatprep.mubr.f32.mxu0 %v3034
        %v3036 = vand.u32 %v369, 4294901760
        %3037 = vmatmul.mubr.f32.gmra.mxu0 %v3036
        %v3038 = vpop.f32.mrf.mxu0
        %v3039 = vadd.f32 %v2782, %v3038
        %v3040 = vpop.f32.mrf.mxu0
        %v3041 = vadd.f32 %v2784, %v3040
        %v3042 = vand.u32 %v374, 4294901760
        %3043 = vmatprep.mubr.f32.mxu0 %v3042
        %v3044 = vand.u32 %v373, 4294901760
        %3045 = vmatmul.mubr.f32.gmra.mxu0 %v3044
        %v3046 = vpop.f32.mrf.mxu0
        %v3047 = vadd.f32 %v2790, %v3046
        %v3048 = vpop.f32.mrf.mxu0
        %v3049 = vadd.f32 %v2792, %v3048
        %v3050 = vand.u32 %v378, 4294901760
        %3051 = vmatprep.mubr.f32.mxu0 %v3050
        %v3052 = vand.u32 %v377, 4294901760
        %3053 = vmatmul.mubr.f32.gmra.mxu0 %v3052
        %v3054 = vpop.f32.mrf.mxu0
        %v3055 = vadd.f32 %v2798, %v3054
        %v3056 = vpop.f32.mrf.mxu0
        %v3057 = vadd.f32 %v2800, %v3056
        %v3058 = vand.u32 %v382, 4294901760
        %3059 = vmatprep.mubr.f32.mxu0 %v3058
        %v3060 = vand.u32 %v381, 4294901760
        %3061 = vmatmul.mubr.f32.gmra.mxu0 %v3060
        %v3062 = vpop.f32.mrf.mxu0
        %v3063 = vadd.f32 %v2806, %v3062
        %v3064 = vpop.f32.mrf.mxu0
        %v3065 = vadd.f32 %v2808, %v3064
        %v3066 = vand.u32 %v386, 4294901760
        %3067 = vmatprep.mubr.f32.mxu0 %v3066
        %v3068 = vand.u32 %v385, 4294901760
        %3069 = vmatmul.mubr.f32.gmra.mxu0 %v3068
        %v3070 = vpop.f32.mrf.mxu0
        %v3071 = vadd.f32 %v2814, %v3070
        %v3072 = vpop.f32.mrf.mxu0
        %v3073 = vadd.f32 %v2816, %v3072
        %3074 = vdwg.mxu0
        %v3075 = vand.u32 %v802, 4294901760
        %3076 = vmatprep.subr.mxu0 %v3075
        %v3077 = vand.u32 %v801, 4294901760
        %3078 = vmatpush1.msra.mxu0 %v3077
        %v3079 = vand.u32 %v798, 4294901760
        %3080 = vmatprep.subr.mxu0 %v3079
        %v3081 = vand.u32 %v797, 4294901760
        %3082 = vmatpush1.msra.mxu0 %v3081
        %v3083 = vand.u32 %v794, 4294901760
        %3084 = vmatprep.subr.mxu0 %v3083
        %v3085 = vand.u32 %v793, 4294901760
        %3086 = vmatpush1.msra.mxu0 %v3085
        %v3087 = vand.u32 %v790, 4294901760
        %3088 = vmatprep.subr.mxu0 %v3087
        %v3089 = vand.u32 %v789, 4294901760
        %3090 = vmatpush1.msra.mxu0 %v3089
        %v3091 = vand.u32 %v786, 4294901760
        %3092 = vmatprep.subr.mxu0 %v3091
        %v3093 = vand.u32 %v785, 4294901760
        %3094 = vmatpush1.msra.mxu0 %v3093
        %v3095 = vand.u32 %v782, 4294901760
        %3096 = vmatprep.subr.mxu0 %v3095
        %v3097 = vand.u32 %v781, 4294901760
        %3098 = vmatpush1.msra.mxu0 %v3097
        %v3099 = vand.u32 %v778, 4294901760
        %3100 = vmatprep.subr.mxu0 %v3099
        %v3101 = vand.u32 %v777, 4294901760
        %3102 = vmatpush1.msra.mxu0 %v3101
        %v3103 = vand.u32 %v774, 4294901760
        %3104 = vmatprep.subr.mxu0 %v3103
        %v3105 = vand.u32 %v773, 4294901760
        %3106 = vmatpush1.msra.mxu0 %v3105
        %v3107 = vand.u32 %v770, 4294901760
        %3108 = vmatprep.subr.mxu0 %v3107
        %v3109 = vand.u32 %v769, 4294901760
        %3110 = vmatpush1.msra.mxu0 %v3109
        %v3111 = vand.u32 %v766, 4294901760
        %3112 = vmatprep.subr.mxu0 %v3111
        %v3113 = vand.u32 %v765, 4294901760
        %3114 = vmatpush1.msra.mxu0 %v3113
        %v3115 = vand.u32 %v762, 4294901760
        %3116 = vmatprep.subr.mxu0 %v3115
        %v3117 = vand.u32 %v761, 4294901760
        %3118 = vmatpush1.msra.mxu0 %v3117
        %v3119 = vand.u32 %v758, 4294901760
        %3120 = vmatprep.subr.mxu0 %v3119
        %v3121 = vand.u32 %v757, 4294901760
        %3122 = vmatpush1.msra.mxu0 %v3121
        %v3123 = vand.u32 %v754, 4294901760
        %3124 = vmatprep.subr.mxu0 %v3123
        %v3125 = vand.u32 %v753, 4294901760
        %3126 = vmatpush1.msra.mxu0 %v3125
        %v3127 = vand.u32 %v750, 4294901760
        %3128 = vmatprep.subr.mxu0 %v3127
        %v3129 = vand.u32 %v749, 4294901760
        %3130 = vmatpush1.msra.mxu0 %v3129
        %v3131 = vand.u32 %v746, 4294901760
        %3132 = vmatprep.subr.mxu0 %v3131
        %v3133 = vand.u32 %v745, 4294901760
        %3134 = vmatpush1.msra.mxu0 %v3133
        %v3135 = vand.u32 %v742, 4294901760
        %3136 = vmatprep.subr.mxu0 %v3135
        %v3137 = vand.u32 %v741, 4294901760
        %3138 = vmatpush1.msra.mxu0 %v3137
        %3139 = vmatprep.subr.mxu0 0.0
        %3140 = vmatpush2.msra.mxu0 0.0
        %3141 = vmatprep.subr.mxu0 0.0
        %3142 = vmatpush2.msra.mxu0 0.0
        %3143 = vmatprep.subr.mxu0 0.0
        %3144 = vmatpush2.msra.mxu0 0.0
        %3145 = vmatprep.subr.mxu0 0.0
        %3146 = vmatpush2.msra.mxu0 0.0
        %3147 = vmatprep.subr.mxu0 0.0
        %3148 = vmatpush2.msra.mxu0 0.0
        %3149 = vmatprep.subr.mxu0 0.0
        %3150 = vmatpush2.msra.mxu0 0.0
        %3151 = vmatprep.subr.mxu0 0.0
        %3152 = vmatpush2.msra.mxu0 0.0
        %3153 = vmatprep.subr.mxu0 0.0
        %3154 = vmatpush2.msra.mxu0 0.0
        %3155 = vmatprep.subr.mxu0 0.0
        %3156 = vmatpush2.msra.mxu0 0.0
        %3157 = vmatprep.subr.mxu0 0.0
        %3158 = vmatpush2.msra.mxu0 0.0
        %3159 = vmatprep.subr.mxu0 0.0
        %3160 = vmatpush2.msra.mxu0 0.0
        %3161 = vmatprep.subr.mxu0 0.0
        %3162 = vmatpush2.msra.mxu0 0.0
        %3163 = vmatprep.subr.mxu0 0.0
        %3164 = vmatpush2.msra.mxu0 0.0
        %3165 = vmatprep.subr.mxu0 0.0
        %3166 = vmatpush2.msra.mxu0 0.0
        %v3167 = vand.u32 %v810, 4294901760
        %3168 = vmatprep.subr.mxu0 %v3167
        %v3169 = vand.u32 %v809, 4294901760
        %3170 = vmatpush2.msra.mxu0 %v3169
        %v3171 = vand.u32 %v806, 4294901760
        %3172 = vmatprep.subr.mxu0 %v3171
        %v3173 = vand.u32 %v805, 4294901760
        %3174 = vmatpush2.msra.mxu0 %v3173
        %v3175 = vand.u32 %v814, 4294901760
        %v3176 = vsub.f32 %v814, %v3175
        %v3177 = vand.u32 %v3176, 4294901760
        %v3178 = vsub.f32 %v3176, %v3177
        %v3179 = vand.u32 %v3178, 4294901760
        %3180 = vmatprep.mubr.f32.mxu0 %v3179
        %v3181 = vand.u32 %v327, 4294901760
        %v3182 = vsub.f32 %v327, %v3181
        %v3183 = vand.u32 %v3182, 4294901760
        %v3184 = vsub.f32 %v3182, %v3183
        %v3185 = vand.u32 %v3184, 4294901760
        %3186 = vmatmul.mubr.f32.gmra.mxu0 %v3185
        %v3187 = vpop.f32.mrf.mxu0
        %v3188 = vadd.f32 %v2951, %v3187
        %v3189 = vpop.f32.mrf.mxu0
        %v3190 = vadd.f32 %v2953, %v3189
        %v3191 = vand.u32 %v817, 4294901760
        %v3192 = vsub.f32 %v817, %v3191
        %v3193 = vand.u32 %v3192, 4294901760
        %v3194 = vsub.f32 %v3192, %v3193
        %v3195 = vand.u32 %v3194, 4294901760
        %3196 = vmatprep.mubr.f32.mxu0 %v3195
        %v3197 = vand.u32 %v331, 4294901760
        %v3198 = vsub.f32 %v331, %v3197
        %v3199 = vand.u32 %v3198, 4294901760
        %v3200 = vsub.f32 %v3198, %v3199
        %v3201 = vand.u32 %v3200, 4294901760
        %3202 = vmatmul.mubr.f32.gmra.mxu0 %v3201
        %v3203 = vpop.f32.mrf.mxu0
        %v3204 = vadd.f32 %v2959, %v3203
        %v3205 = vpop.f32.mrf.mxu0
        %v3206 = vadd.f32 %v2961, %v3205
        %v3207 = vand.u32 %v820, 4294901760
        %v3208 = vsub.f32 %v820, %v3207
        %v3209 = vand.u32 %v3208, 4294901760
        %v3210 = vsub.f32 %v3208, %v3209
        %v3211 = vand.u32 %v3210, 4294901760
        %3212 = vmatprep.mubr.f32.mxu0 %v3211
        %v3213 = vand.u32 %v335, 4294901760
        %v3214 = vsub.f32 %v335, %v3213
        %v3215 = vand.u32 %v3214, 4294901760
        %v3216 = vsub.f32 %v3214, %v3215
        %v3217 = vand.u32 %v3216, 4294901760
        %3218 = vmatmul.mubr.f32.gmra.mxu0 %v3217
        %v3219 = vpop.f32.mrf.mxu0
        %v3220 = vadd.f32 %v2967, %v3219
        %v3221 = vpop.f32.mrf.mxu0
        %v3222 = vadd.f32 %v2969, %v3221
        %v3223 = vand.u32 %v823, 4294901760
        %v3224 = vsub.f32 %v823, %v3223
        %v3225 = vand.u32 %v3224, 4294901760
        %v3226 = vsub.f32 %v3224, %v3225
        %v3227 = vand.u32 %v3226, 4294901760
        %3228 = vmatprep.mubr.f32.mxu0 %v3227
        %v3229 = vand.u32 %v339, 4294901760
        %v3230 = vsub.f32 %v339, %v3229
        %v3231 = vand.u32 %v3230, 4294901760
        %v3232 = vsub.f32 %v3230, %v3231
        %v3233 = vand.u32 %v3232, 4294901760
        %3234 = vmatmul.mubr.f32.gmra.mxu0 %v3233
        %v3235 = vpop.f32.mrf.mxu0
        %v3236 = vadd.f32 %v2975, %v3235
        %v3237 = vpop.f32.mrf.mxu0
        %v3238 = vadd.f32 %v2977, %v3237
        %v3239 = vand.u32 %v826, 4294901760
        %v3240 = vsub.f32 %v826, %v3239
        %v3241 = vand.u32 %v3240, 4294901760
        %v3242 = vsub.f32 %v3240, %v3241
        %v3243 = vand.u32 %v3242, 4294901760
        %3244 = vmatprep.mubr.f32.mxu0 %v3243
        %v3245 = vand.u32 %v343, 4294901760
        %v3246 = vsub.f32 %v343, %v3245
        %v3247 = vand.u32 %v3246, 4294901760
        %v3248 = vsub.f32 %v3246, %v3247
        %v3249 = vand.u32 %v3248, 4294901760
        %3250 = vmatmul.mubr.f32.gmra.mxu0 %v3249
        %v3251 = vpop.f32.mrf.mxu0
        %v3252 = vadd.f32 %v2983, %v3251
        %v3253 = vpop.f32.mrf.mxu0
        %v3254 = vadd.f32 %v2985, %v3253
        %v3255 = vand.u32 %v829, 4294901760
        %v3256 = vsub.f32 %v829, %v3255
        %v3257 = vand.u32 %v3256, 4294901760
        %v3258 = vsub.f32 %v3256, %v3257
        %v3259 = vand.u32 %v3258, 4294901760
        %3260 = vmatprep.mubr.f32.mxu0 %v3259
        %v3261 = vand.u32 %v347, 4294901760
        %v3262 = vsub.f32 %v347, %v3261
        %v3263 = vand.u32 %v3262, 4294901760
        %v3264 = vsub.f32 %v3262, %v3263
        %v3265 = vand.u32 %v3264, 4294901760
        %3266 = vmatmul.mubr.f32.gmra.mxu0 %v3265
        %v3267 = vpop.f32.mrf.mxu0
        %v3268 = vadd.f32 %v2991, %v3267
        %v3269 = vpop.f32.mrf.mxu0
        %v3270 = vadd.f32 %v2993, %v3269
        %v3271 = vand.u32 %v832, 4294901760
        %v3272 = vsub.f32 %v832, %v3271
        %v3273 = vand.u32 %v3272, 4294901760
        %v3274 = vsub.f32 %v3272, %v3273
        %v3275 = vand.u32 %v3274, 4294901760
        %3276 = vmatprep.mubr.f32.mxu0 %v3275
        %v3277 = vand.u32 %v351, 4294901760
        %v3278 = vsub.f32 %v351, %v3277
        %v3279 = vand.u32 %v3278, 4294901760
        %v3280 = vsub.f32 %v3278, %v3279
        %v3281 = vand.u32 %v3280, 4294901760
        %3282 = vmatmul.mubr.f32.gmra.mxu0 %v3281
        %v3283 = vpop.f32.mrf.mxu0
        %v3284 = vadd.f32 %v2999, %v3283
        %v3285 = vpop.f32.mrf.mxu0
        %v3286 = vadd.f32 %v3001, %v3285
        %v3287 = vand.u32 %v835, 4294901760
        %v3288 = vsub.f32 %v835, %v3287
        %v3289 = vand.u32 %v3288, 4294901760
        %v3290 = vsub.f32 %v3288, %v3289
        %v3291 = vand.u32 %v3290, 4294901760
        %3292 = vmatprep.mubr.f32.mxu0 %v3291
        %v3293 = vand.u32 %v355, 4294901760
        %v3294 = vsub.f32 %v355, %v3293
        %v3295 = vand.u32 %v3294, 4294901760
        %v3296 = vsub.f32 %v3294, %v3295
        %v3297 = vand.u32 %v3296, 4294901760
        %3298 = vmatmul.mubr.f32.gmra.mxu0 %v3297
        %v3299 = vpop.f32.mrf.mxu0
        %v3300 = vadd.f32 %v3007, %v3299
        %v3301 = vpop.f32.mrf.mxu0
        %v3302 = vadd.f32 %v3009, %v3301
        %v3303 = vand.u32 %v838, 4294901760
        %v3304 = vsub.f32 %v838, %v3303
        %v3305 = vand.u32 %v3304, 4294901760
        %v3306 = vsub.f32 %v3304, %v3305
        %v3307 = vand.u32 %v3306, 4294901760
        %3308 = vmatprep.mubr.f32.mxu0 %v3307
        %v3309 = vand.u32 %v359, 4294901760
        %v3310 = vsub.f32 %v359, %v3309
        %v3311 = vand.u32 %v3310, 4294901760
        %v3312 = vsub.f32 %v3310, %v3311
        %v3313 = vand.u32 %v3312, 4294901760
        %3314 = vmatmul.mubr.f32.gmra.mxu0 %v3313
        %v3315 = vpop.f32.mrf.mxu0
        %v3316 = vadd.f32 %v3015, %v3315
        %v3317 = vpop.f32.mrf.mxu0
        %v3318 = vadd.f32 %v3017, %v3317
        %v3319 = vand.u32 %v841, 4294901760
        %v3320 = vsub.f32 %v841, %v3319
        %v3321 = vand.u32 %v3320, 4294901760
        %v3322 = vsub.f32 %v3320, %v3321
        %v3323 = vand.u32 %v3322, 4294901760
        %3324 = vmatprep.mubr.f32.mxu0 %v3323
        %v3325 = vand.u32 %v363, 4294901760
        %v3326 = vsub.f32 %v363, %v3325
        %v3327 = vand.u32 %v3326, 4294901760
        %v3328 = vsub.f32 %v3326, %v3327
        %v3329 = vand.u32 %v3328, 4294901760
        %3330 = vmatmul.mubr.f32.gmra.mxu0 %v3329
        %v3331 = vpop.f32.mrf.mxu0
        %v3332 = vadd.f32 %v3023, %v3331
        %v3333 = vpop.f32.mrf.mxu0
        %v3334 = vadd.f32 %v3025, %v3333
        %v3335 = vand.u32 %v844, 4294901760
        %v3336 = vsub.f32 %v844, %v3335
        %v3337 = vand.u32 %v3336, 4294901760
        %v3338 = vsub.f32 %v3336, %v3337
        %v3339 = vand.u32 %v3338, 4294901760
        %3340 = vmatprep.mubr.f32.mxu0 %v3339
        %v3341 = vand.u32 %v367, 4294901760
        %v3342 = vsub.f32 %v367, %v3341
        %v3343 = vand.u32 %v3342, 4294901760
        %v3344 = vsub.f32 %v3342, %v3343
        %v3345 = vand.u32 %v3344, 4294901760
        %3346 = vmatmul.mubr.f32.gmra.mxu0 %v3345
        %v3347 = vpop.f32.mrf.mxu0
        %v3348 = vadd.f32 %v3031, %v3347
        %v3349 = vpop.f32.mrf.mxu0
        %v3350 = vadd.f32 %v3033, %v3349
        %v3351 = vand.u32 %v847, 4294901760
        %v3352 = vsub.f32 %v847, %v3351
        %v3353 = vand.u32 %v3352, 4294901760
        %v3354 = vsub.f32 %v3352, %v3353
        %v3355 = vand.u32 %v3354, 4294901760
        %3356 = vmatprep.mubr.f32.mxu0 %v3355
        %v3357 = vand.u32 %v371, 4294901760
        %v3358 = vsub.f32 %v371, %v3357
        %v3359 = vand.u32 %v3358, 4294901760
        %v3360 = vsub.f32 %v3358, %v3359
        %v3361 = vand.u32 %v3360, 4294901760
        %3362 = vmatmul.mubr.f32.gmra.mxu0 %v3361
        %v3363 = vpop.f32.mrf.mxu0
        %v3364 = vadd.f32 %v3039, %v3363
        %v3365 = vpop.f32.mrf.mxu0
        %v3366 = vadd.f32 %v3041, %v3365
        %v3367 = vand.u32 %v850, 4294901760
        %v3368 = vsub.f32 %v850, %v3367
        %v3369 = vand.u32 %v3368, 4294901760
        %v3370 = vsub.f32 %v3368, %v3369
        %v3371 = vand.u32 %v3370, 4294901760
        %3372 = vmatprep.mubr.f32.mxu0 %v3371
        %v3373 = vand.u32 %v375, 4294901760
        %v3374 = vsub.f32 %v375, %v3373
        %v3375 = vand.u32 %v3374, 4294901760
        %v3376 = vsub.f32 %v3374, %v3375
        %v3377 = vand.u32 %v3376, 4294901760
        %3378 = vmatmul.mubr.f32.gmra.mxu0 %v3377
        %v3379 = vpop.f32.mrf.mxu0
        %v3380 = vadd.f32 %v3047, %v3379
        %v3381 = vpop.f32.mrf.mxu0
        %v3382 = vadd.f32 %v3049, %v3381
        %v3383 = vand.u32 %v853, 4294901760
        %v3384 = vsub.f32 %v853, %v3383
        %v3385 = vand.u32 %v3384, 4294901760
        %v3386 = vsub.f32 %v3384, %v3385
        %v3387 = vand.u32 %v3386, 4294901760
        %3388 = vmatprep.mubr.f32.mxu0 %v3387
        %v3389 = vand.u32 %v379, 4294901760
        %v3390 = vsub.f32 %v379, %v3389
        %v3391 = vand.u32 %v3390, 4294901760
        %v3392 = vsub.f32 %v3390, %v3391
        %v3393 = vand.u32 %v3392, 4294901760
        %3394 = vmatmul.mubr.f32.gmra.mxu0 %v3393
        %v3395 = vpop.f32.mrf.mxu0
        %v3396 = vadd.f32 %v3055, %v3395
        %v3397 = vpop.f32.mrf.mxu0
        %v3398 = vadd.f32 %v3057, %v3397
        %v3399 = vand.u32 %v856, 4294901760
        %v3400 = vsub.f32 %v856, %v3399
        %v3401 = vand.u32 %v3400, 4294901760
        %v3402 = vsub.f32 %v3400, %v3401
        %v3403 = vand.u32 %v3402, 4294901760
        %3404 = vmatprep.mubr.f32.mxu0 %v3403
        %v3405 = vand.u32 %v383, 4294901760
        %v3406 = vsub.f32 %v383, %v3405
        %v3407 = vand.u32 %v3406, 4294901760
        %v3408 = vsub.f32 %v3406, %v3407
        %v3409 = vand.u32 %v3408, 4294901760
        %3410 = vmatmul.mubr.f32.gmra.mxu0 %v3409
        %v3411 = vpop.f32.mrf.mxu0
        %v3412 = vadd.f32 %v3063, %v3411
        %v3413 = vpop.f32.mrf.mxu0
        %v3414 = vadd.f32 %v3065, %v3413
        %v3415 = vand.u32 %v859, 4294901760
        %v3416 = vsub.f32 %v859, %v3415
        %v3417 = vand.u32 %v3416, 4294901760
        %v3418 = vsub.f32 %v3416, %v3417
        %v3419 = vand.u32 %v3418, 4294901760
        %3420 = vmatprep.mubr.f32.mxu0 %v3419
        %v3421 = vand.u32 %v387, 4294901760
        %v3422 = vsub.f32 %v387, %v3421
        %v3423 = vand.u32 %v3422, 4294901760
        %v3424 = vsub.f32 %v3422, %v3423
        %v3425 = vand.u32 %v3424, 4294901760
        %3426 = vmatmul.mubr.f32.gmra.mxu0 %v3425
        %v3427 = vpop.f32.mrf.mxu0
        %v3428 = vadd.f32 %v3071, %v3427
        %v3429 = vpop.f32.mrf.mxu0
        %v3430 = vadd.f32 %v3073, %v3429
        %3431 = vdwg.mxu0
        %v3432 = vand.u32 %v802, 4294901760
        %v3433 = vsub.f32 %v802, %v3432
        %v3434 = vand.u32 %v3433, 4294901760
        %v3435 = vsub.f32 %v3433, %v3434
        %v3436 = vand.u32 %v3435, 4294901760
        %3437 = vmatprep.subr.mxu0 %v3436
        %v3438 = vand.u32 %v801, 4294901760
        %v3439 = vsub.f32 %v801, %v3438
        %v3440 = vand.u32 %v3439, 4294901760
        %v3441 = vsub.f32 %v3439, %v3440
        %v3442 = vand.u32 %v3441, 4294901760
        %3443 = vmatpush1.msra.mxu0 %v3442
        %v3444 = vand.u32 %v798, 4294901760
        %v3445 = vsub.f32 %v798, %v3444
        %v3446 = vand.u32 %v3445, 4294901760
        %v3447 = vsub.f32 %v3445, %v3446
        %v3448 = vand.u32 %v3447, 4294901760
        %3449 = vmatprep.subr.mxu0 %v3448
        %v3450 = vand.u32 %v797, 4294901760
        %v3451 = vsub.f32 %v797, %v3450
        %v3452 = vand.u32 %v3451, 4294901760
        %v3453 = vsub.f32 %v3451, %v3452
        %v3454 = vand.u32 %v3453, 4294901760
        %3455 = vmatpush1.msra.mxu0 %v3454
        %v3456 = vand.u32 %v794, 4294901760
        %v3457 = vsub.f32 %v794, %v3456
        %v3458 = vand.u32 %v3457, 4294901760
        %v3459 = vsub.f32 %v3457, %v3458
        %v3460 = vand.u32 %v3459, 4294901760
        %3461 = vmatprep.subr.mxu0 %v3460
        %v3462 = vand.u32 %v793, 4294901760
        %v3463 = vsub.f32 %v793, %v3462
        %v3464 = vand.u32 %v3463, 4294901760
        %v3465 = vsub.f32 %v3463, %v3464
        %v3466 = vand.u32 %v3465, 4294901760
        %3467 = vmatpush1.msra.mxu0 %v3466
        %v3468 = vand.u32 %v790, 4294901760
        %v3469 = vsub.f32 %v790, %v3468
        %v3470 = vand.u32 %v3469, 4294901760
        %v3471 = vsub.f32 %v3469, %v3470
        %v3472 = vand.u32 %v3471, 4294901760
        %3473 = vmatprep.subr.mxu0 %v3472
        %v3474 = vand.u32 %v789, 4294901760
        %v3475 = vsub.f32 %v789, %v3474
        %v3476 = vand.u32 %v3475, 4294901760
        %v3477 = vsub.f32 %v3475, %v3476
        %v3478 = vand.u32 %v3477, 4294901760
        %3479 = vmatpush1.msra.mxu0 %v3478
        %v3480 = vand.u32 %v786, 4294901760
        %v3481 = vsub.f32 %v786, %v3480
        %v3482 = vand.u32 %v3481, 4294901760
        %v3483 = vsub.f32 %v3481, %v3482
        %v3484 = vand.u32 %v3483, 4294901760
        %3485 = vmatprep.subr.mxu0 %v3484
        %v3486 = vand.u32 %v785, 4294901760
        %v3487 = vsub.f32 %v785, %v3486
        %v3488 = vand.u32 %v3487, 4294901760
        %v3489 = vsub.f32 %v3487, %v3488
        %v3490 = vand.u32 %v3489, 4294901760
        %3491 = vmatpush1.msra.mxu0 %v3490
        %v3492 = vand.u32 %v782, 4294901760
        %v3493 = vsub.f32 %v782, %v3492
        %v3494 = vand.u32 %v3493, 4294901760
        %v3495 = vsub.f32 %v3493, %v3494
        %v3496 = vand.u32 %v3495, 4294901760
        %3497 = vmatprep.subr.mxu0 %v3496
        %v3498 = vand.u32 %v781, 4294901760
        %v3499 = vsub.f32 %v781, %v3498
        %v3500 = vand.u32 %v3499, 4294901760
        %v3501 = vsub.f32 %v3499, %v3500
        %v3502 = vand.u32 %v3501, 4294901760
        %3503 = vmatpush1.msra.mxu0 %v3502
        %v3504 = vand.u32 %v778, 4294901760
        %v3505 = vsub.f32 %v778, %v3504
        %v3506 = vand.u32 %v3505, 4294901760
        %v3507 = vsub.f32 %v3505, %v3506
        %v3508 = vand.u32 %v3507, 4294901760
        %3509 = vmatprep.subr.mxu0 %v3508
        %v3510 = vand.u32 %v777, 4294901760
        %v3511 = vsub.f32 %v777, %v3510
        %v3512 = vand.u32 %v3511, 4294901760
        %v3513 = vsub.f32 %v3511, %v3512
        %v3514 = vand.u32 %v3513, 4294901760
        %3515 = vmatpush1.msra.mxu0 %v3514
        %v3516 = vand.u32 %v774, 4294901760
        %v3517 = vsub.f32 %v774, %v3516
        %v3518 = vand.u32 %v3517, 4294901760
        %v3519 = vsub.f32 %v3517, %v3518
        %v3520 = vand.u32 %v3519, 4294901760
        %3521 = vmatprep.subr.mxu0 %v3520
        %v3522 = vand.u32 %v773, 4294901760
        %v3523 = vsub.f32 %v773, %v3522
        %v3524 = vand.u32 %v3523, 4294901760
        %v3525 = vsub.f32 %v3523, %v3524
        %v3526 = vand.u32 %v3525, 4294901760
        %3527 = vmatpush1.msra.mxu0 %v3526
        %v3528 = vand.u32 %v770, 4294901760
        %v3529 = vsub.f32 %v770, %v3528
        %v3530 = vand.u32 %v3529, 4294901760
        %v3531 = vsub.f32 %v3529, %v3530
        %v3532 = vand.u32 %v3531, 4294901760
        %3533 = vmatprep.subr.mxu0 %v3532
        %v3534 = vand.u32 %v769, 4294901760
        %v3535 = vsub.f32 %v769, %v3534
        %v3536 = vand.u32 %v3535, 4294901760
        %v3537 = vsub.f32 %v3535, %v3536
        %v3538 = vand.u32 %v3537, 4294901760
        %3539 = vmatpush1.msra.mxu0 %v3538
        %v3540 = vand.u32 %v766, 4294901760
        %v3541 = vsub.f32 %v766, %v3540
        %v3542 = vand.u32 %v3541, 4294901760
        %v3543 = vsub.f32 %v3541, %v3542
        %v3544 = vand.u32 %v3543, 4294901760
        %3545 = vmatprep.subr.mxu0 %v3544
        %v3546 = vand.u32 %v765, 4294901760
        %v3547 = vsub.f32 %v765, %v3546
        %v3548 = vand.u32 %v3547, 4294901760
        %v3549 = vsub.f32 %v3547, %v3548
        %v3550 = vand.u32 %v3549, 4294901760
        %3551 = vmatpush1.msra.mxu0 %v3550
        %v3552 = vand.u32 %v762, 4294901760
        %v3553 = vsub.f32 %v762, %v3552
        %v3554 = vand.u32 %v3553, 4294901760
        %v3555 = vsub.f32 %v3553, %v3554
        %v3556 = vand.u32 %v3555, 4294901760
        %3557 = vmatprep.subr.mxu0 %v3556
        %v3558 = vand.u32 %v761, 4294901760
        %v3559 = vsub.f32 %v761, %v3558
        %v3560 = vand.u32 %v3559, 4294901760
        %v3561 = vsub.f32 %v3559, %v3560
        %v3562 = vand.u32 %v3561, 4294901760
        %3563 = vmatpush1.msra.mxu0 %v3562
        %v3564 = vand.u32 %v758, 4294901760
        %v3565 = vsub.f32 %v758, %v3564
        %v3566 = vand.u32 %v3565, 4294901760
        %v3567 = vsub.f32 %v3565, %v3566
        %v3568 = vand.u32 %v3567, 4294901760
        %3569 = vmatprep.subr.mxu0 %v3568
        %v3570 = vand.u32 %v757, 4294901760
        %v3571 = vsub.f32 %v757, %v3570
        %v3572 = vand.u32 %v3571, 4294901760
        %v3573 = vsub.f32 %v3571, %v3572
        %v3574 = vand.u32 %v3573, 4294901760
        %3575 = vmatpush1.msra.mxu0 %v3574
        %v3576 = vand.u32 %v754, 4294901760
        %v3577 = vsub.f32 %v754, %v3576
        %v3578 = vand.u32 %v3577, 4294901760
        %v3579 = vsub.f32 %v3577, %v3578
        %v3580 = vand.u32 %v3579, 4294901760
        %3581 = vmatprep.subr.mxu0 %v3580
        %v3582 = vand.u32 %v753, 4294901760
        %v3583 = vsub.f32 %v753, %v3582
        %v3584 = vand.u32 %v3583, 4294901760
        %v3585 = vsub.f32 %v3583, %v3584
        %v3586 = vand.u32 %v3585, 4294901760
        %3587 = vmatpush1.msra.mxu0 %v3586
        %v3588 = vand.u32 %v750, 4294901760
        %v3589 = vsub.f32 %v750, %v3588
        %v3590 = vand.u32 %v3589, 4294901760
        %v3591 = vsub.f32 %v3589, %v3590
        %v3592 = vand.u32 %v3591, 4294901760
        %3593 = vmatprep.subr.mxu0 %v3592
        %v3594 = vand.u32 %v749, 4294901760
        %v3595 = vsub.f32 %v749, %v3594
        %v3596 = vand.u32 %v3595, 4294901760
        %v3597 = vsub.f32 %v3595, %v3596
        %v3598 = vand.u32 %v3597, 4294901760
        %3599 = vmatpush1.msra.mxu0 %v3598
        %v3600 = vand.u32 %v746, 4294901760
        %v3601 = vsub.f32 %v746, %v3600
        %v3602 = vand.u32 %v3601, 4294901760
        %v3603 = vsub.f32 %v3601, %v3602
        %v3604 = vand.u32 %v3603, 4294901760
        %3605 = vmatprep.subr.mxu0 %v3604
        %v3606 = vand.u32 %v745, 4294901760
        %v3607 = vsub.f32 %v745, %v3606
        %v3608 = vand.u32 %v3607, 4294901760
        %v3609 = vsub.f32 %v3607, %v3608
        %v3610 = vand.u32 %v3609, 4294901760
        %3611 = vmatpush1.msra.mxu0 %v3610
        %v3612 = vand.u32 %v742, 4294901760
        %v3613 = vsub.f32 %v742, %v3612
        %v3614 = vand.u32 %v3613, 4294901760
        %v3615 = vsub.f32 %v3613, %v3614
        %v3616 = vand.u32 %v3615, 4294901760
        %3617 = vmatprep.subr.mxu0 %v3616
        %v3618 = vand.u32 %v741, 4294901760
        %v3619 = vsub.f32 %v741, %v3618
        %v3620 = vand.u32 %v3619, 4294901760
        %v3621 = vsub.f32 %v3619, %v3620
        %v3622 = vand.u32 %v3621, 4294901760
        %3623 = vmatpush1.msra.mxu0 %v3622
        %3624 = vmatprep.subr.mxu0 0.0
        %3625 = vmatpush2.msra.mxu0 0.0
        %3626 = vmatprep.subr.mxu0 0.0
        %3627 = vmatpush2.msra.mxu0 0.0
        %3628 = vmatprep.subr.mxu0 0.0
        %3629 = vmatpush2.msra.mxu0 0.0
        %3630 = vmatprep.subr.mxu0 0.0
        %3631 = vmatpush2.msra.mxu0 0.0
        %3632 = vmatprep.subr.mxu0 0.0
        %3633 = vmatpush2.msra.mxu0 0.0
        %3634 = vmatprep.subr.mxu0 0.0
        %3635 = vmatpush2.msra.mxu0 0.0
        %3636 = vmatprep.subr.mxu0 0.0
        %3637 = vmatpush2.msra.mxu0 0.0
        %3638 = vmatprep.subr.mxu0 0.0
        %3639 = vmatpush2.msra.mxu0 0.0
        %3640 = vmatprep.subr.mxu0 0.0
        %3641 = vmatpush2.msra.mxu0 0.0
        %3642 = vmatprep.subr.mxu0 0.0
        %3643 = vmatpush2.msra.mxu0 0.0
        %3644 = vmatprep.subr.mxu0 0.0
        %3645 = vmatpush2.msra.mxu0 0.0
        %3646 = vmatprep.subr.mxu0 0.0
        %3647 = vmatpush2.msra.mxu0 0.0
        %3648 = vmatprep.subr.mxu0 0.0
        %3649 = vmatpush2.msra.mxu0 0.0
        %3650 = vmatprep.subr.mxu0 0.0
        %3651 = vmatpush2.msra.mxu0 0.0
        %v3652 = vand.u32 %v810, 4294901760
        %v3653 = vsub.f32 %v810, %v3652
        %v3654 = vand.u32 %v3653, 4294901760
        %v3655 = vsub.f32 %v3653, %v3654
        %v3656 = vand.u32 %v3655, 4294901760
        %3657 = vmatprep.subr.mxu0 %v3656
        %v3658 = vand.u32 %v809, 4294901760
        %v3659 = vsub.f32 %v809, %v3658
        %v3660 = vand.u32 %v3659, 4294901760
        %v3661 = vsub.f32 %v3659, %v3660
        %v3662 = vand.u32 %v3661, 4294901760
        %3663 = vmatpush2.msra.mxu0 %v3662
        %v3664 = vand.u32 %v806, 4294901760
        %v3665 = vsub.f32 %v806, %v3664
        %v3666 = vand.u32 %v3665, 4294901760
        %v3667 = vsub.f32 %v3665, %v3666
        %v3668 = vand.u32 %v3667, 4294901760
        %3669 = vmatprep.subr.mxu0 %v3668
        %v3670 = vand.u32 %v805, 4294901760
        %v3671 = vsub.f32 %v805, %v3670
        %v3672 = vand.u32 %v3671, 4294901760
        %v3673 = vsub.f32 %v3671, %v3672
        %v3674 = vand.u32 %v3673, 4294901760
        %3675 = vmatpush2.msra.mxu0 %v3674
        %v3676 = vand.u32 %v814, 4294901760
        %3677 = vmatprep.mubr.f32.mxu0 %v3676
        %v3678 = vand.u32 %v327, 4294901760
        %3679 = vmatmul.mubr.f32.gmra.mxu0 %v3678
        %v3680 = vpop.f32.mrf.mxu0
        %v3681 = vadd.f32 %v3188, %v3680
        %v3682 = vpop.f32.mrf.mxu0
        %v3683 = vadd.f32 %v3190, %v3682
        %v3684 = vand.u32 %v817, 4294901760
        %3685 = vmatprep.mubr.f32.mxu0 %v3684
        %v3686 = vand.u32 %v331, 4294901760
        %3687 = vmatmul.mubr.f32.gmra.mxu0 %v3686
        %v3688 = vpop.f32.mrf.mxu0
        %v3689 = vadd.f32 %v3204, %v3688
        %v3690 = vpop.f32.mrf.mxu0
        %v3691 = vadd.f32 %v3206, %v3690
        %v3692 = vand.u32 %v820, 4294901760
        %3693 = vmatprep.mubr.f32.mxu0 %v3692
        %v3694 = vand.u32 %v335, 4294901760
        %3695 = vmatmul.mubr.f32.gmra.mxu0 %v3694
        %v3696 = vpop.f32.mrf.mxu0
        %v3697 = vadd.f32 %v3220, %v3696
        %v3698 = vpop.f32.mrf.mxu0
        %v3699 = vadd.f32 %v3222, %v3698
        %v3700 = vand.u32 %v823, 4294901760
        %3701 = vmatprep.mubr.f32.mxu0 %v3700
        %v3702 = vand.u32 %v339, 4294901760
        %3703 = vmatmul.mubr.f32.gmra.mxu0 %v3702
        %v3704 = vpop.f32.mrf.mxu0
        %v3705 = vadd.f32 %v3236, %v3704
        %v3706 = vpop.f32.mrf.mxu0
        %v3707 = vadd.f32 %v3238, %v3706
        %v3708 = vand.u32 %v826, 4294901760
        %3709 = vmatprep.mubr.f32.mxu0 %v3708
        %v3710 = vand.u32 %v343, 4294901760
        %3711 = vmatmul.mubr.f32.gmra.mxu0 %v3710
        %v3712 = vpop.f32.mrf.mxu0
        %v3713 = vadd.f32 %v3252, %v3712
        %v3714 = vpop.f32.mrf.mxu0
        %v3715 = vadd.f32 %v3254, %v3714
        %v3716 = vand.u32 %v829, 4294901760
        %3717 = vmatprep.mubr.f32.mxu0 %v3716
        %v3718 = vand.u32 %v347, 4294901760
        %3719 = vmatmul.mubr.f32.gmra.mxu0 %v3718
        %v3720 = vpop.f32.mrf.mxu0
        %v3721 = vadd.f32 %v3268, %v3720
        %v3722 = vpop.f32.mrf.mxu0
        %v3723 = vadd.f32 %v3270, %v3722
        %v3724 = vand.u32 %v832, 4294901760
        %3725 = vmatprep.mubr.f32.mxu0 %v3724
        %v3726 = vand.u32 %v351, 4294901760
        %3727 = vmatmul.mubr.f32.gmra.mxu0 %v3726
        %v3728 = vpop.f32.mrf.mxu0
        %v3729 = vadd.f32 %v3284, %v3728
        %v3730 = vpop.f32.mrf.mxu0
        %v3731 = vadd.f32 %v3286, %v3730
        %v3732 = vand.u32 %v835, 4294901760
        %3733 = vmatprep.mubr.f32.mxu0 %v3732
        %v3734 = vand.u32 %v355, 4294901760
        %3735 = vmatmul.mubr.f32.gmra.mxu0 %v3734
        %v3736 = vpop.f32.mrf.mxu0
        %v3737 = vadd.f32 %v3300, %v3736
        %v3738 = vpop.f32.mrf.mxu0
        %v3739 = vadd.f32 %v3302, %v3738
        %v3740 = vand.u32 %v838, 4294901760
        %3741 = vmatprep.mubr.f32.mxu0 %v3740
        %v3742 = vand.u32 %v359, 4294901760
        %3743 = vmatmul.mubr.f32.gmra.mxu0 %v3742
        %v3744 = vpop.f32.mrf.mxu0
        %v3745 = vadd.f32 %v3316, %v3744
        %v3746 = vpop.f32.mrf.mxu0
        %v3747 = vadd.f32 %v3318, %v3746
        %v3748 = vand.u32 %v841, 4294901760
        %3749 = vmatprep.mubr.f32.mxu0 %v3748
        %v3750 = vand.u32 %v363, 4294901760
        %3751 = vmatmul.mubr.f32.gmra.mxu0 %v3750
        %v3752 = vpop.f32.mrf.mxu0
        %v3753 = vadd.f32 %v3332, %v3752
        %v3754 = vpop.f32.mrf.mxu0
        %v3755 = vadd.f32 %v3334, %v3754
        %v3756 = vand.u32 %v844, 4294901760
        %3757 = vmatprep.mubr.f32.mxu0 %v3756
        %v3758 = vand.u32 %v367, 4294901760
        %3759 = vmatmul.mubr.f32.gmra.mxu0 %v3758
        %v3760 = vpop.f32.mrf.mxu0
        %v3761 = vadd.f32 %v3348, %v3760
        %v3762 = vpop.f32.mrf.mxu0
        %v3763 = vadd.f32 %v3350, %v3762
        %v3764 = vand.u32 %v847, 4294901760
        %3765 = vmatprep.mubr.f32.mxu0 %v3764
        %v3766 = vand.u32 %v371, 4294901760
        %3767 = vmatmul.mubr.f32.gmra.mxu0 %v3766
        %v3768 = vpop.f32.mrf.mxu0
        %v3769 = vadd.f32 %v3364, %v3768
        %v3770 = vpop.f32.mrf.mxu0
        %v3771 = vadd.f32 %v3366, %v3770
        %v3772 = vand.u32 %v850, 4294901760
        %3773 = vmatprep.mubr.f32.mxu0 %v3772
        %v3774 = vand.u32 %v375, 4294901760
        %3775 = vmatmul.mubr.f32.gmra.mxu0 %v3774
        %v3776 = vpop.f32.mrf.mxu0
        %v3777 = vadd.f32 %v3380, %v3776
        %v3778 = vpop.f32.mrf.mxu0
        %v3779 = vadd.f32 %v3382, %v3778
        %v3780 = vand.u32 %v853, 4294901760
        %3781 = vmatprep.mubr.f32.mxu0 %v3780
        %v3782 = vand.u32 %v379, 4294901760
        %3783 = vmatmul.mubr.f32.gmra.mxu0 %v3782
        %v3784 = vpop.f32.mrf.mxu0
        %v3785 = vadd.f32 %v3396, %v3784
        %v3786 = vpop.f32.mrf.mxu0
        %v3787 = vadd.f32 %v3398, %v3786
        %v3788 = vand.u32 %v856, 4294901760
        %3789 = vmatprep.mubr.f32.mxu0 %v3788
        %v3790 = vand.u32 %v383, 4294901760
        %3791 = vmatmul.mubr.f32.gmra.mxu0 %v3790
        %v3792 = vpop.f32.mrf.mxu0
        %v3793 = vadd.f32 %v3412, %v3792
        %v3794 = vpop.f32.mrf.mxu0
        %v3795 = vadd.f32 %v3414, %v3794
        %v3796 = vand.u32 %v859, 4294901760
        %3797 = vmatprep.mubr.f32.mxu0 %v3796
        %v3798 = vand.u32 %v387, 4294901760
        %3799 = vmatmul.mubr.f32.gmra.mxu0 %v3798
        %v3800 = vpop.f32.mrf.mxu0
        %v3801 = vadd.f32 %v3428, %v3800
        %v3802 = vpop.f32.mrf.mxu0
        %v3803 = vadd.f32 %v3430, %v3802
        %3804 = vdwg.mxu0
        %v3805 = vand.u32 %v802, 4294901760
        %v3806 = vsub.f32 %v802, %v3805
        %3807 = vmatprep.subr.mxu0 %v3806
        %v3808 = vand.u32 %v801, 4294901760
        %v3809 = vsub.f32 %v801, %v3808
        %3810 = vmatpush1.msra.mxu0 %v3809
        %v3811 = vand.u32 %v798, 4294901760
        %v3812 = vsub.f32 %v798, %v3811
        %3813 = vmatprep.subr.mxu0 %v3812
        %v3814 = vand.u32 %v797, 4294901760
        %v3815 = vsub.f32 %v797, %v3814
        %3816 = vmatpush1.msra.mxu0 %v3815
        %v3817 = vand.u32 %v794, 4294901760
        %v3818 = vsub.f32 %v794, %v3817
        %3819 = vmatprep.subr.mxu0 %v3818
        %v3820 = vand.u32 %v793, 4294901760
        %v3821 = vsub.f32 %v793, %v3820
        %3822 = vmatpush1.msra.mxu0 %v3821
        %v3823 = vand.u32 %v790, 4294901760
        %v3824 = vsub.f32 %v790, %v3823
        %3825 = vmatprep.subr.mxu0 %v3824
        %v3826 = vand.u32 %v789, 4294901760
        %v3827 = vsub.f32 %v789, %v3826
        %3828 = vmatpush1.msra.mxu0 %v3827
        %v3829 = vand.u32 %v786, 4294901760
        %v3830 = vsub.f32 %v786, %v3829
        %3831 = vmatprep.subr.mxu0 %v3830
        %v3832 = vand.u32 %v785, 4294901760
        %v3833 = vsub.f32 %v785, %v3832
        %3834 = vmatpush1.msra.mxu0 %v3833
        %v3835 = vand.u32 %v782, 4294901760
        %v3836 = vsub.f32 %v782, %v3835
        %3837 = vmatprep.subr.mxu0 %v3836
        %v3838 = vand.u32 %v781, 4294901760
        %v3839 = vsub.f32 %v781, %v3838
        %3840 = vmatpush1.msra.mxu0 %v3839
        %v3841 = vand.u32 %v778, 4294901760
        %v3842 = vsub.f32 %v778, %v3841
        %3843 = vmatprep.subr.mxu0 %v3842
        %v3844 = vand.u32 %v777, 4294901760
        %v3845 = vsub.f32 %v777, %v3844
        %3846 = vmatpush1.msra.mxu0 %v3845
        %v3847 = vand.u32 %v774, 4294901760
        %v3848 = vsub.f32 %v774, %v3847
        %3849 = vmatprep.subr.mxu0 %v3848
        %v3850 = vand.u32 %v773, 4294901760
        %v3851 = vsub.f32 %v773, %v3850
        %3852 = vmatpush1.msra.mxu0 %v3851
        %v3853 = vand.u32 %v770, 4294901760
        %v3854 = vsub.f32 %v770, %v3853
        %3855 = vmatprep.subr.mxu0 %v3854
        %v3856 = vand.u32 %v769, 4294901760
        %v3857 = vsub.f32 %v769, %v3856
        %3858 = vmatpush1.msra.mxu0 %v3857
        %v3859 = vand.u32 %v766, 4294901760
        %v3860 = vsub.f32 %v766, %v3859
        %3861 = vmatprep.subr.mxu0 %v3860
        %v3862 = vand.u32 %v765, 4294901760
        %v3863 = vsub.f32 %v765, %v3862
        %3864 = vmatpush1.msra.mxu0 %v3863
        %v3865 = vand.u32 %v762, 4294901760
        %v3866 = vsub.f32 %v762, %v3865
        %3867 = vmatprep.subr.mxu0 %v3866
        %v3868 = vand.u32 %v761, 4294901760
        %v3869 = vsub.f32 %v761, %v3868
        %3870 = vmatpush1.msra.mxu0 %v3869
        %v3871 = vand.u32 %v758, 4294901760
        %v3872 = vsub.f32 %v758, %v3871
        %3873 = vmatprep.subr.mxu0 %v3872
        %v3874 = vand.u32 %v757, 4294901760
        %v3875 = vsub.f32 %v757, %v3874
        %3876 = vmatpush1.msra.mxu0 %v3875
        %v3877 = vand.u32 %v754, 4294901760
        %v3878 = vsub.f32 %v754, %v3877
        %3879 = vmatprep.subr.mxu0 %v3878
        %v3880 = vand.u32 %v753, 4294901760
        %v3881 = vsub.f32 %v753, %v3880
        %3882 = vmatpush1.msra.mxu0 %v3881
        %v3883 = vand.u32 %v750, 4294901760
        %v3884 = vsub.f32 %v750, %v3883
        %3885 = vmatprep.subr.mxu0 %v3884
        %v3886 = vand.u32 %v749, 4294901760
        %v3887 = vsub.f32 %v749, %v3886
        %3888 = vmatpush1.msra.mxu0 %v3887
        %v3889 = vand.u32 %v746, 4294901760
        %v3890 = vsub.f32 %v746, %v3889
        %3891 = vmatprep.subr.mxu0 %v3890
        %v3892 = vand.u32 %v745, 4294901760
        %v3893 = vsub.f32 %v745, %v3892
        %3894 = vmatpush1.msra.mxu0 %v3893
        %v3895 = vand.u32 %v742, 4294901760
        %v3896 = vsub.f32 %v742, %v3895
        %3897 = vmatprep.subr.mxu0 %v3896
        %v3898 = vand.u32 %v741, 4294901760
        %v3899 = vsub.f32 %v741, %v3898
        %3900 = vmatpush1.msra.mxu0 %v3899
        %3901 = vmatprep.subr.mxu0 0.0
        %3902 = vmatpush2.msra.mxu0 0.0
        %3903 = vmatprep.subr.mxu0 0.0
        %3904 = vmatpush2.msra.mxu0 0.0
        %3905 = vmatprep.subr.mxu0 0.0
        %3906 = vmatpush2.msra.mxu0 0.0
        %3907 = vmatprep.subr.mxu0 0.0
        %3908 = vmatpush2.msra.mxu0 0.0
        %3909 = vmatprep.subr.mxu0 0.0
        %3910 = vmatpush2.msra.mxu0 0.0
        %3911 = vmatprep.subr.mxu0 0.0
        %3912 = vmatpush2.msra.mxu0 0.0
        %3913 = vmatprep.subr.mxu0 0.0
        %3914 = vmatpush2.msra.mxu0 0.0
        %3915 = vmatprep.subr.mxu0 0.0
        %3916 = vmatpush2.msra.mxu0 0.0
        %3917 = vmatprep.subr.mxu0 0.0
        %3918 = vmatpush2.msra.mxu0 0.0
        %3919 = vmatprep.subr.mxu0 0.0
        %3920 = vmatpush2.msra.mxu0 0.0
        %3921 = vmatprep.subr.mxu0 0.0
        %3922 = vmatpush2.msra.mxu0 0.0
        %3923 = vmatprep.subr.mxu0 0.0
        %3924 = vmatpush2.msra.mxu0 0.0
        %3925 = vmatprep.subr.mxu0 0.0
        %3926 = vmatpush2.msra.mxu0 0.0
        %3927 = vmatprep.subr.mxu0 0.0
        %3928 = vmatpush2.msra.mxu0 0.0
        %v3929 = vand.u32 %v810, 4294901760
        %v3930 = vsub.f32 %v810, %v3929
        %3931 = vmatprep.subr.mxu0 %v3930
        %v3932 = vand.u32 %v809, 4294901760
        %v3933 = vsub.f32 %v809, %v3932
        %3934 = vmatpush2.msra.mxu0 %v3933
        %v3935 = vand.u32 %v806, 4294901760
        %v3936 = vsub.f32 %v806, %v3935
        %3937 = vmatprep.subr.mxu0 %v3936
        %v3938 = vand.u32 %v805, 4294901760
        %v3939 = vsub.f32 %v805, %v3938
        %3940 = vmatpush2.msra.mxu0 %v3939
        %v3941 = vand.u32 %v814, 4294901760
        %v3942 = vsub.f32 %v814, %v3941
        %3943 = vmatprep.mubr.f32.mxu0 %v3942
        %v3944 = vand.u32 %v327, 4294901760
        %v3945 = vsub.f32 %v327, %v3944
        %3946 = vmatmul.mubr.f32.gmra.mxu0 %v3945
        %v3947 = vpop.f32.mrf.mxu0
        %v3948 = vadd.f32 %v3681, %v3947
        %v3949 = vpop.f32.mrf.mxu0
        %v3950 = vadd.f32 %v3683, %v3949
        %v3951 = vand.u32 %v817, 4294901760
        %v3952 = vsub.f32 %v817, %v3951
        %3953 = vmatprep.mubr.f32.mxu0 %v3952
        %v3954 = vand.u32 %v331, 4294901760
        %v3955 = vsub.f32 %v331, %v3954
        %3956 = vmatmul.mubr.f32.gmra.mxu0 %v3955
        %v3957 = vpop.f32.mrf.mxu0
        %v3958 = vadd.f32 %v3689, %v3957
        %v3959 = vpop.f32.mrf.mxu0
        %v3960 = vadd.f32 %v3691, %v3959
        %v3961 = vand.u32 %v820, 4294901760
        %v3962 = vsub.f32 %v820, %v3961
        %3963 = vmatprep.mubr.f32.mxu0 %v3962
        %v3964 = vand.u32 %v335, 4294901760
        %v3965 = vsub.f32 %v335, %v3964
        %3966 = vmatmul.mubr.f32.gmra.mxu0 %v3965
        %v3967 = vpop.f32.mrf.mxu0
        %v3968 = vadd.f32 %v3697, %v3967
        %v3969 = vpop.f32.mrf.mxu0
        %v3970 = vadd.f32 %v3699, %v3969
        %v3971 = vand.u32 %v823, 4294901760
        %v3972 = vsub.f32 %v823, %v3971
        %3973 = vmatprep.mubr.f32.mxu0 %v3972
        %v3974 = vand.u32 %v339, 4294901760
        %v3975 = vsub.f32 %v339, %v3974
        %3976 = vmatmul.mubr.f32.gmra.mxu0 %v3975
        %v3977 = vpop.f32.mrf.mxu0
        %v3978 = vadd.f32 %v3705, %v3977
        %v3979 = vpop.f32.mrf.mxu0
        %v3980 = vadd.f32 %v3707, %v3979
        %v3981 = vand.u32 %v826, 4294901760
        %v3982 = vsub.f32 %v826, %v3981
        %3983 = vmatprep.mubr.f32.mxu0 %v3982
        %v3984 = vand.u32 %v343, 4294901760
        %v3985 = vsub.f32 %v343, %v3984
        %3986 = vmatmul.mubr.f32.gmra.mxu0 %v3985
        %v3987 = vpop.f32.mrf.mxu0
        %v3988 = vadd.f32 %v3713, %v3987
        %v3989 = vpop.f32.mrf.mxu0
        %v3990 = vadd.f32 %v3715, %v3989
        %v3991 = vand.u32 %v829, 4294901760
        %v3992 = vsub.f32 %v829, %v3991
        %3993 = vmatprep.mubr.f32.mxu0 %v3992
        %v3994 = vand.u32 %v347, 4294901760
        %v3995 = vsub.f32 %v347, %v3994
        %3996 = vmatmul.mubr.f32.gmra.mxu0 %v3995
        %v3997 = vpop.f32.mrf.mxu0
        %v3998 = vadd.f32 %v3721, %v3997
        %v3999 = vpop.f32.mrf.mxu0
        %v4000 = vadd.f32 %v3723, %v3999
        %v4001 = vand.u32 %v832, 4294901760
        %v4002 = vsub.f32 %v832, %v4001
        %4003 = vmatprep.mubr.f32.mxu0 %v4002
        %v4004 = vand.u32 %v351, 4294901760
        %v4005 = vsub.f32 %v351, %v4004
        %4006 = vmatmul.mubr.f32.gmra.mxu0 %v4005
        %v4007 = vpop.f32.mrf.mxu0
        %v4008 = vadd.f32 %v3729, %v4007
        %v4009 = vpop.f32.mrf.mxu0
        %v4010 = vadd.f32 %v3731, %v4009
        %v4011 = vand.u32 %v835, 4294901760
        %v4012 = vsub.f32 %v835, %v4011
        %4013 = vmatprep.mubr.f32.mxu0 %v4012
        %v4014 = vand.u32 %v355, 4294901760
        %v4015 = vsub.f32 %v355, %v4014
        %4016 = vmatmul.mubr.f32.gmra.mxu0 %v4015
        %v4017 = vpop.f32.mrf.mxu0
        %v4018 = vadd.f32 %v3737, %v4017
        %v4019 = vpop.f32.mrf.mxu0
        %v4020 = vadd.f32 %v3739, %v4019
        %v4021 = vand.u32 %v838, 4294901760
        %v4022 = vsub.f32 %v838, %v4021
        %4023 = vmatprep.mubr.f32.mxu0 %v4022
        %v4024 = vand.u32 %v359, 4294901760
        %v4025 = vsub.f32 %v359, %v4024
        %4026 = vmatmul.mubr.f32.gmra.mxu0 %v4025
        %v4027 = vpop.f32.mrf.mxu0
        %v4028 = vadd.f32 %v3745, %v4027
        %v4029 = vpop.f32.mrf.mxu0
        %v4030 = vadd.f32 %v3747, %v4029
        %v4031 = vand.u32 %v841, 4294901760
        %v4032 = vsub.f32 %v841, %v4031
        %4033 = vmatprep.mubr.f32.mxu0 %v4032
        %v4034 = vand.u32 %v363, 4294901760
        %v4035 = vsub.f32 %v363, %v4034
        %4036 = vmatmul.mubr.f32.gmra.mxu0 %v4035
        %v4037 = vpop.f32.mrf.mxu0
        %v4038 = vadd.f32 %v3753, %v4037
        %v4039 = vpop.f32.mrf.mxu0
        %v4040 = vadd.f32 %v3755, %v4039
        %v4041 = vand.u32 %v844, 4294901760
        %v4042 = vsub.f32 %v844, %v4041
        %4043 = vmatprep.mubr.f32.mxu0 %v4042
        %v4044 = vand.u32 %v367, 4294901760
        %v4045 = vsub.f32 %v367, %v4044
        %4046 = vmatmul.mubr.f32.gmra.mxu0 %v4045
        %v4047 = vpop.f32.mrf.mxu0
        %v4048 = vadd.f32 %v3761, %v4047
        %v4049 = vpop.f32.mrf.mxu0
        %v4050 = vadd.f32 %v3763, %v4049
        %v4051 = vand.u32 %v847, 4294901760
        %v4052 = vsub.f32 %v847, %v4051
        %4053 = vmatprep.mubr.f32.mxu0 %v4052
        %v4054 = vand.u32 %v371, 4294901760
        %v4055 = vsub.f32 %v371, %v4054
        %4056 = vmatmul.mubr.f32.gmra.mxu0 %v4055
        %v4057 = vpop.f32.mrf.mxu0
        %v4058 = vadd.f32 %v3769, %v4057
        %v4059 = vpop.f32.mrf.mxu0
        %v4060 = vadd.f32 %v3771, %v4059
        %v4061 = vand.u32 %v850, 4294901760
        %v4062 = vsub.f32 %v850, %v4061
        %4063 = vmatprep.mubr.f32.mxu0 %v4062
        %v4064 = vand.u32 %v375, 4294901760
        %v4065 = vsub.f32 %v375, %v4064
        %4066 = vmatmul.mubr.f32.gmra.mxu0 %v4065
        %v4067 = vpop.f32.mrf.mxu0
        %v4068 = vadd.f32 %v3777, %v4067
        %v4069 = vpop.f32.mrf.mxu0
        %v4070 = vadd.f32 %v3779, %v4069
        %v4071 = vand.u32 %v853, 4294901760
        %v4072 = vsub.f32 %v853, %v4071
        %4073 = vmatprep.mubr.f32.mxu0 %v4072
        %v4074 = vand.u32 %v379, 4294901760
        %v4075 = vsub.f32 %v379, %v4074
        %4076 = vmatmul.mubr.f32.gmra.mxu0 %v4075
        %v4077 = vpop.f32.mrf.mxu0
        %v4078 = vadd.f32 %v3785, %v4077
        %v4079 = vpop.f32.mrf.mxu0
        %v4080 = vadd.f32 %v3787, %v4079
        %v4081 = vand.u32 %v856, 4294901760
        %v4082 = vsub.f32 %v856, %v4081
        %4083 = vmatprep.mubr.f32.mxu0 %v4082
        %v4084 = vand.u32 %v383, 4294901760
        %v4085 = vsub.f32 %v383, %v4084
        %4086 = vmatmul.mubr.f32.gmra.mxu0 %v4085
        %v4087 = vpop.f32.mrf.mxu0
        %v4088 = vadd.f32 %v3793, %v4087
        %v4089 = vpop.f32.mrf.mxu0
        %v4090 = vadd.f32 %v3795, %v4089
        %v4091 = vand.u32 %v859, 4294901760
        %v4092 = vsub.f32 %v859, %v4091
        %4093 = vmatprep.mubr.f32.mxu0 %v4092
        %v4094 = vand.u32 %v387, 4294901760
        %v4095 = vsub.f32 %v387, %v4094
        %4096 = vmatmul.mubr.f32.gmra.mxu0 %v4095
        %v4097 = vpop.f32.mrf.mxu0
        %v4098 = vadd.f32 %v3801, %v4097
        %v4099 = vpop.f32.mrf.mxu0
        %v4100 = vadd.f32 %v3803, %v4099
        %4101 = vdwg.mxu0
        %v4102 = vand.u32 %v802, 4294901760
        %4103 = vmatprep.subr.mxu0 %v4102
        %v4104 = vand.u32 %v801, 4294901760
        %4105 = vmatpush1.msra.mxu0 %v4104
        %v4106 = vand.u32 %v798, 4294901760
        %4107 = vmatprep.subr.mxu0 %v4106
        %v4108 = vand.u32 %v797, 4294901760
        %4109 = vmatpush1.msra.mxu0 %v4108
        %v4110 = vand.u32 %v794, 4294901760
        %4111 = vmatprep.subr.mxu0 %v4110
        %v4112 = vand.u32 %v793, 4294901760
        %4113 = vmatpush1.msra.mxu0 %v4112
        %v4114 = vand.u32 %v790, 4294901760
        %4115 = vmatprep.subr.mxu0 %v4114
        %v4116 = vand.u32 %v789, 4294901760
        %4117 = vmatpush1.msra.mxu0 %v4116
        %v4118 = vand.u32 %v786, 4294901760
        %4119 = vmatprep.subr.mxu0 %v4118
        %v4120 = vand.u32 %v785, 4294901760
        %4121 = vmatpush1.msra.mxu0 %v4120
        %v4122 = vand.u32 %v782, 4294901760
        %4123 = vmatprep.subr.mxu0 %v4122
        %v4124 = vand.u32 %v781, 4294901760
        %4125 = vmatpush1.msra.mxu0 %v4124
        %v4126 = vand.u32 %v778, 4294901760
        %4127 = vmatprep.subr.mxu0 %v4126
        %v4128 = vand.u32 %v777, 4294901760
        %4129 = vmatpush1.msra.mxu0 %v4128
        %v4130 = vand.u32 %v774, 4294901760
        %4131 = vmatprep.subr.mxu0 %v4130
        %v4132 = vand.u32 %v773, 4294901760
        %4133 = vmatpush1.msra.mxu0 %v4132
        %v4134 = vand.u32 %v770, 4294901760
        %4135 = vmatprep.subr.mxu0 %v4134
        %v4136 = vand.u32 %v769, 4294901760
        %4137 = vmatpush1.msra.mxu0 %v4136
        %v4138 = vand.u32 %v766, 4294901760
        %4139 = vmatprep.subr.mxu0 %v4138
        %v4140 = vand.u32 %v765, 4294901760
        %4141 = vmatpush1.msra.mxu0 %v4140
        %v4142 = vand.u32 %v762, 4294901760
        %4143 = vmatprep.subr.mxu0 %v4142
        %v4144 = vand.u32 %v761, 4294901760
        %4145 = vmatpush1.msra.mxu0 %v4144
        %v4146 = vand.u32 %v758, 4294901760
        %4147 = vmatprep.subr.mxu0 %v4146
        %v4148 = vand.u32 %v757, 4294901760
        %4149 = vmatpush1.msra.mxu0 %v4148
        %v4150 = vand.u32 %v754, 4294901760
        %4151 = vmatprep.subr.mxu0 %v4150
        %v4152 = vand.u32 %v753, 4294901760
        %4153 = vmatpush1.msra.mxu0 %v4152
        %v4154 = vand.u32 %v750, 4294901760
        %4155 = vmatprep.subr.mxu0 %v4154
        %v4156 = vand.u32 %v749, 4294901760
        %4157 = vmatpush1.msra.mxu0 %v4156
        %v4158 = vand.u32 %v746, 4294901760
        %4159 = vmatprep.subr.mxu0 %v4158
        %v4160 = vand.u32 %v745, 4294901760
        %4161 = vmatpush1.msra.mxu0 %v4160
        %v4162 = vand.u32 %v742, 4294901760
        %4163 = vmatprep.subr.mxu0 %v4162
        %v4164 = vand.u32 %v741, 4294901760
        %4165 = vmatpush1.msra.mxu0 %v4164
        %4166 = vmatprep.subr.mxu0 0.0
        %4167 = vmatpush2.msra.mxu0 0.0
        %4168 = vmatprep.subr.mxu0 0.0
        %4169 = vmatpush2.msra.mxu0 0.0
        %4170 = vmatprep.subr.mxu0 0.0
        %4171 = vmatpush2.msra.mxu0 0.0
        %4172 = vmatprep.subr.mxu0 0.0
        %4173 = vmatpush2.msra.mxu0 0.0
        %4174 = vmatprep.subr.mxu0 0.0
        %4175 = vmatpush2.msra.mxu0 0.0
        %4176 = vmatprep.subr.mxu0 0.0
        %4177 = vmatpush2.msra.mxu0 0.0
        %4178 = vmatprep.subr.mxu0 0.0
        %4179 = vmatpush2.msra.mxu0 0.0
        %4180 = vmatprep.subr.mxu0 0.0
        %4181 = vmatpush2.msra.mxu0 0.0
        %4182 = vmatprep.subr.mxu0 0.0
        %4183 = vmatpush2.msra.mxu0 0.0
        %4184 = vmatprep.subr.mxu0 0.0
        %4185 = vmatpush2.msra.mxu0 0.0
        %4186 = vmatprep.subr.mxu0 0.0
        %4187 = vmatpush2.msra.mxu0 0.0
        %4188 = vmatprep.subr.mxu0 0.0
        %4189 = vmatpush2.msra.mxu0 0.0
        %4190 = vmatprep.subr.mxu0 0.0
        %4191 = vmatpush2.msra.mxu0 0.0
        %4192 = vmatprep.subr.mxu0 0.0
        %4193 = vmatpush2.msra.mxu0 0.0
        %v4194 = vand.u32 %v810, 4294901760
        %4195 = vmatprep.subr.mxu0 %v4194
        %v4196 = vand.u32 %v809, 4294901760
        %4197 = vmatpush2.msra.mxu0 %v4196
        %v4198 = vand.u32 %v806, 4294901760
        %4199 = vmatprep.subr.mxu0 %v4198
        %v4200 = vand.u32 %v805, 4294901760
        %4201 = vmatpush2.msra.mxu0 %v4200
        %v4202 = vand.u32 %v814, 4294901760
        %v4203 = vsub.f32 %v814, %v4202
        %v4204 = vand.u32 %v4203, 4294901760
        %4205 = vmatprep.mubr.f32.mxu0 %v4204
        %v4206 = vand.u32 %v327, 4294901760
        %v4207 = vsub.f32 %v327, %v4206
        %v4208 = vand.u32 %v4207, 4294901760
        %4209 = vmatmul.mubr.f32.gmra.mxu0 %v4208
        %v4210 = vpop.f32.mrf.mxu0
        %v4211 = vadd.f32 %v3948, %v4210
        %v4212 = vpop.f32.mrf.mxu0
        %v4213 = vadd.f32 %v3950, %v4212
        %v4214 = vand.u32 %v817, 4294901760
        %v4215 = vsub.f32 %v817, %v4214
        %v4216 = vand.u32 %v4215, 4294901760
        %4217 = vmatprep.mubr.f32.mxu0 %v4216
        %v4218 = vand.u32 %v331, 4294901760
        %v4219 = vsub.f32 %v331, %v4218
        %v4220 = vand.u32 %v4219, 4294901760
        %4221 = vmatmul.mubr.f32.gmra.mxu0 %v4220
        %v4222 = vpop.f32.mrf.mxu0
        %v4223 = vadd.f32 %v3958, %v4222
        %v4224 = vpop.f32.mrf.mxu0
        %v4225 = vadd.f32 %v3960, %v4224
        %v4226 = vand.u32 %v820, 4294901760
        %v4227 = vsub.f32 %v820, %v4226
        %v4228 = vand.u32 %v4227, 4294901760
        %4229 = vmatprep.mubr.f32.mxu0 %v4228
        %v4230 = vand.u32 %v335, 4294901760
        %v4231 = vsub.f32 %v335, %v4230
        %v4232 = vand.u32 %v4231, 4294901760
        %4233 = vmatmul.mubr.f32.gmra.mxu0 %v4232
        %v4234 = vpop.f32.mrf.mxu0
        %v4235 = vadd.f32 %v3968, %v4234
        %v4236 = vpop.f32.mrf.mxu0
        %v4237 = vadd.f32 %v3970, %v4236
        %v4238 = vand.u32 %v823, 4294901760
        %v4239 = vsub.f32 %v823, %v4238
        %v4240 = vand.u32 %v4239, 4294901760
        %4241 = vmatprep.mubr.f32.mxu0 %v4240
        %v4242 = vand.u32 %v339, 4294901760
        %v4243 = vsub.f32 %v339, %v4242
        %v4244 = vand.u32 %v4243, 4294901760
        %4245 = vmatmul.mubr.f32.gmra.mxu0 %v4244
        %v4246 = vpop.f32.mrf.mxu0
        %v4247 = vadd.f32 %v3978, %v4246
        %v4248 = vpop.f32.mrf.mxu0
        %v4249 = vadd.f32 %v3980, %v4248
        %v4250 = vand.u32 %v826, 4294901760
        %v4251 = vsub.f32 %v826, %v4250
        %v4252 = vand.u32 %v4251, 4294901760
        %4253 = vmatprep.mubr.f32.mxu0 %v4252
        %v4254 = vand.u32 %v343, 4294901760
        %v4255 = vsub.f32 %v343, %v4254
        %v4256 = vand.u32 %v4255, 4294901760
        %4257 = vmatmul.mubr.f32.gmra.mxu0 %v4256
        %v4258 = vpop.f32.mrf.mxu0
        %v4259 = vadd.f32 %v3988, %v4258
        %v4260 = vpop.f32.mrf.mxu0
        %v4261 = vadd.f32 %v3990, %v4260
        %v4262 = vand.u32 %v829, 4294901760
        %v4263 = vsub.f32 %v829, %v4262
        %v4264 = vand.u32 %v4263, 4294901760
        %4265 = vmatprep.mubr.f32.mxu0 %v4264
        %v4266 = vand.u32 %v347, 4294901760
        %v4267 = vsub.f32 %v347, %v4266
        %v4268 = vand.u32 %v4267, 4294901760
        %4269 = vmatmul.mubr.f32.gmra.mxu0 %v4268
        %v4270 = vpop.f32.mrf.mxu0
        %v4271 = vadd.f32 %v3998, %v4270
        %v4272 = vpop.f32.mrf.mxu0
        %v4273 = vadd.f32 %v4000, %v4272
        %v4274 = vand.u32 %v832, 4294901760
        %v4275 = vsub.f32 %v832, %v4274
        %v4276 = vand.u32 %v4275, 4294901760
        %4277 = vmatprep.mubr.f32.mxu0 %v4276
        %v4278 = vand.u32 %v351, 4294901760
        %v4279 = vsub.f32 %v351, %v4278
        %v4280 = vand.u32 %v4279, 4294901760
        %4281 = vmatmul.mubr.f32.gmra.mxu0 %v4280
        %v4282 = vpop.f32.mrf.mxu0
        %v4283 = vadd.f32 %v4008, %v4282
        %v4284 = vpop.f32.mrf.mxu0
        %v4285 = vadd.f32 %v4010, %v4284
        %v4286 = vand.u32 %v835, 4294901760
        %v4287 = vsub.f32 %v835, %v4286
        %v4288 = vand.u32 %v4287, 4294901760
        %4289 = vmatprep.mubr.f32.mxu0 %v4288
        %v4290 = vand.u32 %v355, 4294901760
        %v4291 = vsub.f32 %v355, %v4290
        %v4292 = vand.u32 %v4291, 4294901760
        %4293 = vmatmul.mubr.f32.gmra.mxu0 %v4292
        %v4294 = vpop.f32.mrf.mxu0
        %v4295 = vadd.f32 %v4018, %v4294
        %v4296 = vpop.f32.mrf.mxu0
        %v4297 = vadd.f32 %v4020, %v4296
        %v4298 = vand.u32 %v838, 4294901760
        %v4299 = vsub.f32 %v838, %v4298
        %v4300 = vand.u32 %v4299, 4294901760
        %4301 = vmatprep.mubr.f32.mxu0 %v4300
        %v4302 = vand.u32 %v359, 4294901760
        %v4303 = vsub.f32 %v359, %v4302
        %v4304 = vand.u32 %v4303, 4294901760
        %4305 = vmatmul.mubr.f32.gmra.mxu0 %v4304
        %v4306 = vpop.f32.mrf.mxu0
        %v4307 = vadd.f32 %v4028, %v4306
        %v4308 = vpop.f32.mrf.mxu0
        %v4309 = vadd.f32 %v4030, %v4308
        %v4310 = vand.u32 %v841, 4294901760
        %v4311 = vsub.f32 %v841, %v4310
        %v4312 = vand.u32 %v4311, 4294901760
        %4313 = vmatprep.mubr.f32.mxu0 %v4312
        %v4314 = vand.u32 %v363, 4294901760
        %v4315 = vsub.f32 %v363, %v4314
        %v4316 = vand.u32 %v4315, 4294901760
        %4317 = vmatmul.mubr.f32.gmra.mxu0 %v4316
        %v4318 = vpop.f32.mrf.mxu0
        %v4319 = vadd.f32 %v4038, %v4318
        %v4320 = vpop.f32.mrf.mxu0
        %v4321 = vadd.f32 %v4040, %v4320
        %v4322 = vand.u32 %v844, 4294901760
        %v4323 = vsub.f32 %v844, %v4322
        %v4324 = vand.u32 %v4323, 4294901760
        %4325 = vmatprep.mubr.f32.mxu0 %v4324
        %v4326 = vand.u32 %v367, 4294901760
        %v4327 = vsub.f32 %v367, %v4326
        %v4328 = vand.u32 %v4327, 4294901760
        %4329 = vmatmul.mubr.f32.gmra.mxu0 %v4328
        %v4330 = vpop.f32.mrf.mxu0
        %v4331 = vadd.f32 %v4048, %v4330
        %v4332 = vpop.f32.mrf.mxu0
        %v4333 = vadd.f32 %v4050, %v4332
        %v4334 = vand.u32 %v847, 4294901760
        %v4335 = vsub.f32 %v847, %v4334
        %v4336 = vand.u32 %v4335, 4294901760
        %4337 = vmatprep.mubr.f32.mxu0 %v4336
        %v4338 = vand.u32 %v371, 4294901760
        %v4339 = vsub.f32 %v371, %v4338
        %v4340 = vand.u32 %v4339, 4294901760
        %4341 = vmatmul.mubr.f32.gmra.mxu0 %v4340
        %v4342 = vpop.f32.mrf.mxu0
        %v4343 = vadd.f32 %v4058, %v4342
        %v4344 = vpop.f32.mrf.mxu0
        %v4345 = vadd.f32 %v4060, %v4344
        %v4346 = vand.u32 %v850, 4294901760
        %v4347 = vsub.f32 %v850, %v4346
        %v4348 = vand.u32 %v4347, 4294901760
        %4349 = vmatprep.mubr.f32.mxu0 %v4348
        %v4350 = vand.u32 %v375, 4294901760
        %v4351 = vsub.f32 %v375, %v4350
        %v4352 = vand.u32 %v4351, 4294901760
        %4353 = vmatmul.mubr.f32.gmra.mxu0 %v4352
        %v4354 = vpop.f32.mrf.mxu0
        %v4355 = vadd.f32 %v4068, %v4354
        %v4356 = vpop.f32.mrf.mxu0
        %v4357 = vadd.f32 %v4070, %v4356
        %v4358 = vand.u32 %v853, 4294901760
        %v4359 = vsub.f32 %v853, %v4358
        %v4360 = vand.u32 %v4359, 4294901760
        %4361 = vmatprep.mubr.f32.mxu0 %v4360
        %v4362 = vand.u32 %v379, 4294901760
        %v4363 = vsub.f32 %v379, %v4362
        %v4364 = vand.u32 %v4363, 4294901760
        %4365 = vmatmul.mubr.f32.gmra.mxu0 %v4364
        %v4366 = vpop.f32.mrf.mxu0
        %v4367 = vadd.f32 %v4078, %v4366
        %v4368 = vpop.f32.mrf.mxu0
        %v4369 = vadd.f32 %v4080, %v4368
        %v4370 = vand.u32 %v856, 4294901760
        %v4371 = vsub.f32 %v856, %v4370
        %v4372 = vand.u32 %v4371, 4294901760
        %4373 = vmatprep.mubr.f32.mxu0 %v4372
        %v4374 = vand.u32 %v383, 4294901760
        %v4375 = vsub.f32 %v383, %v4374
        %v4376 = vand.u32 %v4375, 4294901760
        %4377 = vmatmul.mubr.f32.gmra.mxu0 %v4376
        %v4378 = vpop.f32.mrf.mxu0
        %v4379 = vadd.f32 %v4088, %v4378
        %v4380 = vpop.f32.mrf.mxu0
        %v4381 = vadd.f32 %v4090, %v4380
        %v4382 = vand.u32 %v859, 4294901760
        %v4383 = vsub.f32 %v859, %v4382
        %v4384 = vand.u32 %v4383, 4294901760
        %4385 = vmatprep.mubr.f32.mxu0 %v4384
        %v4386 = vand.u32 %v387, 4294901760
        %v4387 = vsub.f32 %v387, %v4386
        %v4388 = vand.u32 %v4387, 4294901760
        %4389 = vmatmul.mubr.f32.gmra.mxu0 %v4388
        %v4390 = vpop.f32.mrf.mxu0
        %v4391 = vadd.f32 %v4098, %v4390
        %v4392 = vpop.f32.mrf.mxu0
        %v4393 = vadd.f32 %v4100, %v4392
        %4394 = vdwg.mxu0
        %v4395 = vand.u32 %v802, 4294901760
        %v4396 = vsub.f32 %v802, %v4395
        %v4397 = vand.u32 %v4396, 4294901760
        %4398 = vmatprep.subr.mxu0 %v4397
        %v4399 = vand.u32 %v801, 4294901760
        %v4400 = vsub.f32 %v801, %v4399
        %v4401 = vand.u32 %v4400, 4294901760
        %4402 = vmatpush1.msra.mxu0 %v4401
        %v4403 = vand.u32 %v798, 4294901760
        %v4404 = vsub.f32 %v798, %v4403
        %v4405 = vand.u32 %v4404, 4294901760
        %4406 = vmatprep.subr.mxu0 %v4405
        %v4407 = vand.u32 %v797, 4294901760
        %v4408 = vsub.f32 %v797, %v4407
        %v4409 = vand.u32 %v4408, 4294901760
        %4410 = vmatpush1.msra.mxu0 %v4409
        %v4411 = vand.u32 %v794, 4294901760
        %v4412 = vsub.f32 %v794, %v4411
        %v4413 = vand.u32 %v4412, 4294901760
        %4414 = vmatprep.subr.mxu0 %v4413
        %v4415 = vand.u32 %v793, 4294901760
        %v4416 = vsub.f32 %v793, %v4415
        %v4417 = vand.u32 %v4416, 4294901760
        %4418 = vmatpush1.msra.mxu0 %v4417
        %v4419 = vand.u32 %v790, 4294901760
        %v4420 = vsub.f32 %v790, %v4419
        %v4421 = vand.u32 %v4420, 4294901760
        %4422 = vmatprep.subr.mxu0 %v4421
        %v4423 = vand.u32 %v789, 4294901760
        %v4424 = vsub.f32 %v789, %v4423
        %v4425 = vand.u32 %v4424, 4294901760
        %4426 = vmatpush1.msra.mxu0 %v4425
        %v4427 = vand.u32 %v786, 4294901760
        %v4428 = vsub.f32 %v786, %v4427
        %v4429 = vand.u32 %v4428, 4294901760
        %4430 = vmatprep.subr.mxu0 %v4429
        %v4431 = vand.u32 %v785, 4294901760
        %v4432 = vsub.f32 %v785, %v4431
        %v4433 = vand.u32 %v4432, 4294901760
        %4434 = vmatpush1.msra.mxu0 %v4433
        %v4435 = vand.u32 %v782, 4294901760
        %v4436 = vsub.f32 %v782, %v4435
        %v4437 = vand.u32 %v4436, 4294901760
        %4438 = vmatprep.subr.mxu0 %v4437
        %v4439 = vand.u32 %v781, 4294901760
        %v4440 = vsub.f32 %v781, %v4439
        %v4441 = vand.u32 %v4440, 4294901760
        %4442 = vmatpush1.msra.mxu0 %v4441
        %v4443 = vand.u32 %v778, 4294901760
        %v4444 = vsub.f32 %v778, %v4443
        %v4445 = vand.u32 %v4444, 4294901760
        %4446 = vmatprep.subr.mxu0 %v4445
        %v4447 = vand.u32 %v777, 4294901760
        %v4448 = vsub.f32 %v777, %v4447
        %v4449 = vand.u32 %v4448, 4294901760
        %4450 = vmatpush1.msra.mxu0 %v4449
        %v4451 = vand.u32 %v774, 4294901760
        %v4452 = vsub.f32 %v774, %v4451
        %v4453 = vand.u32 %v4452, 4294901760
        %4454 = vmatprep.subr.mxu0 %v4453
        %v4455 = vand.u32 %v773, 4294901760
        %v4456 = vsub.f32 %v773, %v4455
        %v4457 = vand.u32 %v4456, 4294901760
        %4458 = vmatpush1.msra.mxu0 %v4457
        %v4459 = vand.u32 %v770, 4294901760
        %v4460 = vsub.f32 %v770, %v4459
        %v4461 = vand.u32 %v4460, 4294901760
        %4462 = vmatprep.subr.mxu0 %v4461
        %v4463 = vand.u32 %v769, 4294901760
        %v4464 = vsub.f32 %v769, %v4463
        %v4465 = vand.u32 %v4464, 4294901760
        %4466 = vmatpush1.msra.mxu0 %v4465
        %v4467 = vand.u32 %v766, 4294901760
        %v4468 = vsub.f32 %v766, %v4467
        %v4469 = vand.u32 %v4468, 4294901760
        %4470 = vmatprep.subr.mxu0 %v4469
        %v4471 = vand.u32 %v765, 4294901760
        %v4472 = vsub.f32 %v765, %v4471
        %v4473 = vand.u32 %v4472, 4294901760
        %4474 = vmatpush1.msra.mxu0 %v4473
        %v4475 = vand.u32 %v762, 4294901760
        %v4476 = vsub.f32 %v762, %v4475
        %v4477 = vand.u32 %v4476, 4294901760
        %4478 = vmatprep.subr.mxu0 %v4477
        %v4479 = vand.u32 %v761, 4294901760
        %v4480 = vsub.f32 %v761, %v4479
        %v4481 = vand.u32 %v4480, 4294901760
        %4482 = vmatpush1.msra.mxu0 %v4481
        %v4483 = vand.u32 %v758, 4294901760
        %v4484 = vsub.f32 %v758, %v4483
        %v4485 = vand.u32 %v4484, 4294901760
        %4486 = vmatprep.subr.mxu0 %v4485
        %v4487 = vand.u32 %v757, 4294901760
        %v4488 = vsub.f32 %v757, %v4487
        %v4489 = vand.u32 %v4488, 4294901760
        %4490 = vmatpush1.msra.mxu0 %v4489
        %v4491 = vand.u32 %v754, 4294901760
        %v4492 = vsub.f32 %v754, %v4491
        %v4493 = vand.u32 %v4492, 4294901760
        %4494 = vmatprep.subr.mxu0 %v4493
        %v4495 = vand.u32 %v753, 4294901760
        %v4496 = vsub.f32 %v753, %v4495
        %v4497 = vand.u32 %v4496, 4294901760
        %4498 = vmatpush1.msra.mxu0 %v4497
        %v4499 = vand.u32 %v750, 4294901760
        %v4500 = vsub.f32 %v750, %v4499
        %v4501 = vand.u32 %v4500, 4294901760
        %4502 = vmatprep.subr.mxu0 %v4501
        %v4503 = vand.u32 %v749, 4294901760
        %v4504 = vsub.f32 %v749, %v4503
        %v4505 = vand.u32 %v4504, 4294901760
        %4506 = vmatpush1.msra.mxu0 %v4505
        %v4507 = vand.u32 %v746, 4294901760
        %v4508 = vsub.f32 %v746, %v4507
        %v4509 = vand.u32 %v4508, 4294901760
        %4510 = vmatprep.subr.mxu0 %v4509
        %v4511 = vand.u32 %v745, 4294901760
        %v4512 = vsub.f32 %v745, %v4511
        %v4513 = vand.u32 %v4512, 4294901760
        %4514 = vmatpush1.msra.mxu0 %v4513
        %v4515 = vand.u32 %v742, 4294901760
        %v4516 = vsub.f32 %v742, %v4515
        %v4517 = vand.u32 %v4516, 4294901760
        %4518 = vmatprep.subr.mxu0 %v4517
        %v4519 = vand.u32 %v741, 4294901760
        %v4520 = vsub.f32 %v741, %v4519
        %v4521 = vand.u32 %v4520, 4294901760
        %4522 = vmatpush1.msra.mxu0 %v4521
        %4523 = vmatprep.subr.mxu0 0.0
        %4524 = vmatpush2.msra.mxu0 0.0
        %4525 = vmatprep.subr.mxu0 0.0
        %4526 = vmatpush2.msra.mxu0 0.0
        %4527 = vmatprep.subr.mxu0 0.0
        %4528 = vmatpush2.msra.mxu0 0.0
        %4529 = vmatprep.subr.mxu0 0.0
        %4530 = vmatpush2.msra.mxu0 0.0
        %4531 = vmatprep.subr.mxu0 0.0
        %4532 = vmatpush2.msra.mxu0 0.0
        %4533 = vmatprep.subr.mxu0 0.0
        %4534 = vmatpush2.msra.mxu0 0.0
        %4535 = vmatprep.subr.mxu0 0.0
        %4536 = vmatpush2.msra.mxu0 0.0
        %4537 = vmatprep.subr.mxu0 0.0
        %4538 = vmatpush2.msra.mxu0 0.0
        %4539 = vmatprep.subr.mxu0 0.0
        %4540 = vmatpush2.msra.mxu0 0.0
        %4541 = vmatprep.subr.mxu0 0.0
        %4542 = vmatpush2.msra.mxu0 0.0
        %4543 = vmatprep.subr.mxu0 0.0
        %4544 = vmatpush2.msra.mxu0 0.0
        %4545 = vmatprep.subr.mxu0 0.0
        %4546 = vmatpush2.msra.mxu0 0.0
        %4547 = vmatprep.subr.mxu0 0.0
        %4548 = vmatpush2.msra.mxu0 0.0
        %4549 = vmatprep.subr.mxu0 0.0
        %4550 = vmatpush2.msra.mxu0 0.0
        %v4551 = vand.u32 %v810, 4294901760
        %v4552 = vsub.f32 %v810, %v4551
        %v4553 = vand.u32 %v4552, 4294901760
        %4554 = vmatprep.subr.mxu0 %v4553
        %v4555 = vand.u32 %v809, 4294901760
        %v4556 = vsub.f32 %v809, %v4555
        %v4557 = vand.u32 %v4556, 4294901760
        %4558 = vmatpush2.msra.mxu0 %v4557
        %v4559 = vand.u32 %v806, 4294901760
        %v4560 = vsub.f32 %v806, %v4559
        %v4561 = vand.u32 %v4560, 4294901760
        %4562 = vmatprep.subr.mxu0 %v4561
        %v4563 = vand.u32 %v805, 4294901760
        %v4564 = vsub.f32 %v805, %v4563
        %v4565 = vand.u32 %v4564, 4294901760
        %4566 = vmatpush2.msra.mxu0 %v4565
        %v4567 = vand.u32 %v814, 4294901760
        %4568 = vmatprep.mubr.f32.mxu0 %v4567
        %v4569 = vand.u32 %v327, 4294901760
        %4570 = vmatmul.mubr.f32.gmra.mxu0 %v4569
        %v4571 = vpop.f32.mrf.mxu0
        %v4572 = vadd.f32 %v4211, %v4571
        %v4573 = vpop.f32.mrf.mxu0
        %v4574 = vadd.f32 %v4213, %v4573
        %v4575 = vand.u32 %v817, 4294901760
        %4576 = vmatprep.mubr.f32.mxu0 %v4575
        %v4577 = vand.u32 %v331, 4294901760
        %4578 = vmatmul.mubr.f32.gmra.mxu0 %v4577
        %v4579 = vpop.f32.mrf.mxu0
        %v4580 = vadd.f32 %v4223, %v4579
        %v4581 = vpop.f32.mrf.mxu0
        %v4582 = vadd.f32 %v4225, %v4581
        %v4583 = vand.u32 %v820, 4294901760
        %4584 = vmatprep.mubr.f32.mxu0 %v4583
        %v4585 = vand.u32 %v335, 4294901760
        %4586 = vmatmul.mubr.f32.gmra.mxu0 %v4585
        %v4587 = vpop.f32.mrf.mxu0
        %v4588 = vadd.f32 %v4235, %v4587
        %v4589 = vpop.f32.mrf.mxu0
        %v4590 = vadd.f32 %v4237, %v4589
        %v4591 = vand.u32 %v823, 4294901760
        %4592 = vmatprep.mubr.f32.mxu0 %v4591
        %v4593 = vand.u32 %v339, 4294901760
        %4594 = vmatmul.mubr.f32.gmra.mxu0 %v4593
        %v4595 = vpop.f32.mrf.mxu0
        %v4596 = vadd.f32 %v4247, %v4595
        %v4597 = vpop.f32.mrf.mxu0
        %v4598 = vadd.f32 %v4249, %v4597
        %v4599 = vand.u32 %v826, 4294901760
        %4600 = vmatprep.mubr.f32.mxu0 %v4599
        %v4601 = vand.u32 %v343, 4294901760
        %4602 = vmatmul.mubr.f32.gmra.mxu0 %v4601
        %v4603 = vpop.f32.mrf.mxu0
        %v4604 = vadd.f32 %v4259, %v4603
        %v4605 = vpop.f32.mrf.mxu0
        %v4606 = vadd.f32 %v4261, %v4605
        %v4607 = vand.u32 %v829, 4294901760
        %4608 = vmatprep.mubr.f32.mxu0 %v4607
        %v4609 = vand.u32 %v347, 4294901760
        %4610 = vmatmul.mubr.f32.gmra.mxu0 %v4609
        %v4611 = vpop.f32.mrf.mxu0
        %v4612 = vadd.f32 %v4271, %v4611
        %v4613 = vpop.f32.mrf.mxu0
        %v4614 = vadd.f32 %v4273, %v4613
        %v4615 = vand.u32 %v832, 4294901760
        %4616 = vmatprep.mubr.f32.mxu0 %v4615
        %v4617 = vand.u32 %v351, 4294901760
        %4618 = vmatmul.mubr.f32.gmra.mxu0 %v4617
        %v4619 = vpop.f32.mrf.mxu0
        %v4620 = vadd.f32 %v4283, %v4619
        %v4621 = vpop.f32.mrf.mxu0
        %v4622 = vadd.f32 %v4285, %v4621
        %v4623 = vand.u32 %v835, 4294901760
        %4624 = vmatprep.mubr.f32.mxu0 %v4623
        %v4625 = vand.u32 %v355, 4294901760
        %4626 = vmatmul.mubr.f32.gmra.mxu0 %v4625
        %v4627 = vpop.f32.mrf.mxu0
        %v4628 = vadd.f32 %v4295, %v4627
        %v4629 = vpop.f32.mrf.mxu0
        %v4630 = vadd.f32 %v4297, %v4629
        %v4631 = vand.u32 %v838, 4294901760
        %4632 = vmatprep.mubr.f32.mxu0 %v4631
        %v4633 = vand.u32 %v359, 4294901760
        %4634 = vmatmul.mubr.f32.gmra.mxu0 %v4633
        %v4635 = vpop.f32.mrf.mxu0
        %v4636 = vadd.f32 %v4307, %v4635
        %v4637 = vpop.f32.mrf.mxu0
        %v4638 = vadd.f32 %v4309, %v4637
        %v4639 = vand.u32 %v841, 4294901760
        %4640 = vmatprep.mubr.f32.mxu0 %v4639
        %v4641 = vand.u32 %v363, 4294901760
        %4642 = vmatmul.mubr.f32.gmra.mxu0 %v4641
        %v4643 = vpop.f32.mrf.mxu0
        %v4644 = vadd.f32 %v4319, %v4643
        %v4645 = vpop.f32.mrf.mxu0
        %v4646 = vadd.f32 %v4321, %v4645
        %v4647 = vand.u32 %v844, 4294901760
        %4648 = vmatprep.mubr.f32.mxu0 %v4647
        %v4649 = vand.u32 %v367, 4294901760
        %4650 = vmatmul.mubr.f32.gmra.mxu0 %v4649
        %v4651 = vpop.f32.mrf.mxu0
        %v4652 = vadd.f32 %v4331, %v4651
        %v4653 = vpop.f32.mrf.mxu0
        %v4654 = vadd.f32 %v4333, %v4653
        %v4655 = vand.u32 %v847, 4294901760
        %4656 = vmatprep.mubr.f32.mxu0 %v4655
        %v4657 = vand.u32 %v371, 4294901760
        %4658 = vmatmul.mubr.f32.gmra.mxu0 %v4657
        %v4659 = vpop.f32.mrf.mxu0
        %v4660 = vadd.f32 %v4343, %v4659
        %v4661 = vpop.f32.mrf.mxu0
        %v4662 = vadd.f32 %v4345, %v4661
        %v4663 = vand.u32 %v850, 4294901760
        %4664 = vmatprep.mubr.f32.mxu0 %v4663
        %v4665 = vand.u32 %v375, 4294901760
        %4666 = vmatmul.mubr.f32.gmra.mxu0 %v4665
        %v4667 = vpop.f32.mrf.mxu0
        %v4668 = vadd.f32 %v4355, %v4667
        %v4669 = vpop.f32.mrf.mxu0
        %v4670 = vadd.f32 %v4357, %v4669
        %v4671 = vand.u32 %v853, 4294901760
        %4672 = vmatprep.mubr.f32.mxu0 %v4671
        %v4673 = vand.u32 %v379, 4294901760
        %4674 = vmatmul.mubr.f32.gmra.mxu0 %v4673
        %v4675 = vpop.f32.mrf.mxu0
        %v4676 = vadd.f32 %v4367, %v4675
        %v4677 = vpop.f32.mrf.mxu0
        %v4678 = vadd.f32 %v4369, %v4677
        %v4679 = vand.u32 %v856, 4294901760
        %4680 = vmatprep.mubr.f32.mxu0 %v4679
        %v4681 = vand.u32 %v383, 4294901760
        %4682 = vmatmul.mubr.f32.gmra.mxu0 %v4681
        %v4683 = vpop.f32.mrf.mxu0
        %v4684 = vadd.f32 %v4379, %v4683
        %v4685 = vpop.f32.mrf.mxu0
        %v4686 = vadd.f32 %v4381, %v4685
        %v4687 = vand.u32 %v859, 4294901760
        %4688 = vmatprep.mubr.f32.mxu0 %v4687
        %v4689 = vand.u32 %v387, 4294901760
        %4690 = vmatmul.mubr.f32.gmra.mxu0 %v4689
        %v4691 = vpop.f32.mrf.mxu0
        %v4692 = vadd.f32 %v4391, %v4691
        %v4693 = vpop.f32.mrf.mxu0
        %v4694 = vadd.f32 %v4393, %v4693
        %4695 = vdwg.mxu0
        %v4696 = vand.u32 %v802, 4294901760
        %4697 = vmatprep.subr.mxu0 %v4696
        %v4698 = vand.u32 %v801, 4294901760
        %4699 = vmatpush1.msra.mxu0 %v4698
        %v4700 = vand.u32 %v798, 4294901760
        %4701 = vmatprep.subr.mxu0 %v4700
        %v4702 = vand.u32 %v797, 4294901760
        %4703 = vmatpush1.msra.mxu0 %v4702
        %v4704 = vand.u32 %v794, 4294901760
        %4705 = vmatprep.subr.mxu0 %v4704
        %v4706 = vand.u32 %v793, 4294901760
        %4707 = vmatpush1.msra.mxu0 %v4706
        %v4708 = vand.u32 %v790, 4294901760
        %4709 = vmatprep.subr.mxu0 %v4708
        %v4710 = vand.u32 %v789, 4294901760
        %4711 = vmatpush1.msra.mxu0 %v4710
        %v4712 = vand.u32 %v786, 4294901760
        %4713 = vmatprep.subr.mxu0 %v4712
        %v4714 = vand.u32 %v785, 4294901760
        %4715 = vmatpush1.msra.mxu0 %v4714
        %v4716 = vand.u32 %v782, 4294901760
        %4717 = vmatprep.subr.mxu0 %v4716
        %v4718 = vand.u32 %v781, 4294901760
        %4719 = vmatpush1.msra.mxu0 %v4718
        %v4720 = vand.u32 %v778, 4294901760
        %4721 = vmatprep.subr.mxu0 %v4720
        %v4722 = vand.u32 %v777, 4294901760
        %4723 = vmatpush1.msra.mxu0 %v4722
        %v4724 = vand.u32 %v774, 4294901760
        %4725 = vmatprep.subr.mxu0 %v4724
        %v4726 = vand.u32 %v773, 4294901760
        %4727 = vmatpush1.msra.mxu0 %v4726
        %v4728 = vand.u32 %v770, 4294901760
        %4729 = vmatprep.subr.mxu0 %v4728
        %v4730 = vand.u32 %v769, 4294901760
        %4731 = vmatpush1.msra.mxu0 %v4730
        %v4732 = vand.u32 %v766, 4294901760
        %4733 = vmatprep.subr.mxu0 %v4732
        %v4734 = vand.u32 %v765, 4294901760
        %4735 = vmatpush1.msra.mxu0 %v4734
        %v4736 = vand.u32 %v762, 4294901760
        %4737 = vmatprep.subr.mxu0 %v4736
        %v4738 = vand.u32 %v761, 4294901760
        %4739 = vmatpush1.msra.mxu0 %v4738
        %v4740 = vand.u32 %v758, 4294901760
        %4741 = vmatprep.subr.mxu0 %v4740
        %v4742 = vand.u32 %v757, 4294901760
        %4743 = vmatpush1.msra.mxu0 %v4742
        %v4744 = vand.u32 %v754, 4294901760
        %4745 = vmatprep.subr.mxu0 %v4744
        %v4746 = vand.u32 %v753, 4294901760
        %4747 = vmatpush1.msra.mxu0 %v4746
        %v4748 = vand.u32 %v750, 4294901760
        %4749 = vmatprep.subr.mxu0 %v4748
        %v4750 = vand.u32 %v749, 4294901760
        %4751 = vmatpush1.msra.mxu0 %v4750
        %v4752 = vand.u32 %v746, 4294901760
        %4753 = vmatprep.subr.mxu0 %v4752
        %v4754 = vand.u32 %v745, 4294901760
        %4755 = vmatpush1.msra.mxu0 %v4754
        %v4756 = vand.u32 %v742, 4294901760
        %4757 = vmatprep.subr.mxu0 %v4756
        %v4758 = vand.u32 %v741, 4294901760
        %4759 = vmatpush1.msra.mxu0 %v4758
        %4760 = vmatprep.subr.mxu0 0.0
        %4761 = vmatpush2.msra.mxu0 0.0
        %4762 = vmatprep.subr.mxu0 0.0
        %4763 = vmatpush2.msra.mxu0 0.0
        %4764 = vmatprep.subr.mxu0 0.0
        %4765 = vmatpush2.msra.mxu0 0.0
        %4766 = vmatprep.subr.mxu0 0.0
        %4767 = vmatpush2.msra.mxu0 0.0
        %4768 = vmatprep.subr.mxu0 0.0
        %4769 = vmatpush2.msra.mxu0 0.0
        %4770 = vmatprep.subr.mxu0 0.0
        %4771 = vmatpush2.msra.mxu0 0.0
        %4772 = vmatprep.subr.mxu0 0.0
        %4773 = vmatpush2.msra.mxu0 0.0
        %4774 = vmatprep.subr.mxu0 0.0
        %4775 = vmatpush2.msra.mxu0 0.0
        %4776 = vmatprep.subr.mxu0 0.0
        %4777 = vmatpush2.msra.mxu0 0.0
        %4778 = vmatprep.subr.mxu0 0.0
        %4779 = vmatpush2.msra.mxu0 0.0
        %4780 = vmatprep.subr.mxu0 0.0
        %4781 = vmatpush2.msra.mxu0 0.0
        %4782 = vmatprep.subr.mxu0 0.0
        %4783 = vmatpush2.msra.mxu0 0.0
        %4784 = vmatprep.subr.mxu0 0.0
        %4785 = vmatpush2.msra.mxu0 0.0
        %4786 = vmatprep.subr.mxu0 0.0
        %4787 = vmatpush2.msra.mxu0 0.0
        %v4788 = vand.u32 %v810, 4294901760
        %4789 = vmatprep.subr.mxu0 %v4788
        %v4790 = vand.u32 %v809, 4294901760
        %4791 = vmatpush2.msra.mxu0 %v4790
        %v4792 = vand.u32 %v806, 4294901760
        %4793 = vmatprep.subr.mxu0 %v4792
        %v4794 = vand.u32 %v805, 4294901760
        %4795 = vmatpush2.msra.mxu0 %v4794
        %v4796 = vand.u32 %v814, 4294901760
        %4797 = vmatprep.mubr.f32.mxu0 %v4796
        %v4798 = vand.u32 %v327, 4294901760
        %4799 = vmatmul.mubr.f32.gmra.mxu0 %v4798
        %v4800 = vpop.f32.mrf.mxu0
        %v4801 = vadd.f32 %v4572, %v4800
        %v4802 = vpop.f32.mrf.mxu0
        %v4803 = vadd.f32 %v4574, %v4802
        %v4804 = vand.u32 %v817, 4294901760
        %4805 = vmatprep.mubr.f32.mxu0 %v4804
        %v4806 = vand.u32 %v331, 4294901760
        %4807 = vmatmul.mubr.f32.gmra.mxu0 %v4806
        %v4808 = vpop.f32.mrf.mxu0
        %v4809 = vadd.f32 %v4580, %v4808
        %v4810 = vpop.f32.mrf.mxu0
        %v4811 = vadd.f32 %v4582, %v4810
        %v4812 = vand.u32 %v820, 4294901760
        %4813 = vmatprep.mubr.f32.mxu0 %v4812
        %v4814 = vand.u32 %v335, 4294901760
        %4815 = vmatmul.mubr.f32.gmra.mxu0 %v4814
        %v4816 = vpop.f32.mrf.mxu0
        %v4817 = vadd.f32 %v4588, %v4816
        %v4818 = vpop.f32.mrf.mxu0
        %v4819 = vadd.f32 %v4590, %v4818
        %v4820 = vand.u32 %v823, 4294901760
        %4821 = vmatprep.mubr.f32.mxu0 %v4820
        %v4822 = vand.u32 %v339, 4294901760
        %4823 = vmatmul.mubr.f32.gmra.mxu0 %v4822
        %v4824 = vpop.f32.mrf.mxu0
        %v4825 = vadd.f32 %v4596, %v4824
        %v4826 = vpop.f32.mrf.mxu0
        %v4827 = vadd.f32 %v4598, %v4826
        %v4828 = vand.u32 %v826, 4294901760
        %4829 = vmatprep.mubr.f32.mxu0 %v4828
        %v4830 = vand.u32 %v343, 4294901760
        %4831 = vmatmul.mubr.f32.gmra.mxu0 %v4830
        %v4832 = vpop.f32.mrf.mxu0
        %v4833 = vadd.f32 %v4604, %v4832
        %v4834 = vpop.f32.mrf.mxu0
        %v4835 = vadd.f32 %v4606, %v4834
        %v4836 = vand.u32 %v829, 4294901760
        %4837 = vmatprep.mubr.f32.mxu0 %v4836
        %v4838 = vand.u32 %v347, 4294901760
        %4839 = vmatmul.mubr.f32.gmra.mxu0 %v4838
        %v4840 = vpop.f32.mrf.mxu0
        %v4841 = vadd.f32 %v4612, %v4840
        %v4842 = vpop.f32.mrf.mxu0
        %v4843 = vadd.f32 %v4614, %v4842
        %v4844 = vand.u32 %v832, 4294901760
        %4845 = vmatprep.mubr.f32.mxu0 %v4844
        %v4846 = vand.u32 %v351, 4294901760
        %4847 = vmatmul.mubr.f32.gmra.mxu0 %v4846
        %v4848 = vpop.f32.mrf.mxu0
        %v4849 = vadd.f32 %v4620, %v4848
        %v4850 = vpop.f32.mrf.mxu0
        %v4851 = vadd.f32 %v4622, %v4850
        %v4852 = vand.u32 %v835, 4294901760
        %4853 = vmatprep.mubr.f32.mxu0 %v4852
        %v4854 = vand.u32 %v355, 4294901760
        %4855 = vmatmul.mubr.f32.gmra.mxu0 %v4854
        %v4856 = vpop.f32.mrf.mxu0
        %v4857 = vadd.f32 %v4628, %v4856
        %v4858 = vpop.f32.mrf.mxu0
        %v4859 = vadd.f32 %v4630, %v4858
        %v4860 = vand.u32 %v838, 4294901760
        %4861 = vmatprep.mubr.f32.mxu0 %v4860
        %v4862 = vand.u32 %v359, 4294901760
        %4863 = vmatmul.mubr.f32.gmra.mxu0 %v4862
        %v4864 = vpop.f32.mrf.mxu0
        %v4865 = vadd.f32 %v4636, %v4864
        %v4866 = vpop.f32.mrf.mxu0
        %v4867 = vadd.f32 %v4638, %v4866
        %v4868 = vand.u32 %v841, 4294901760
        %4869 = vmatprep.mubr.f32.mxu0 %v4868
        %v4870 = vand.u32 %v363, 4294901760
        %4871 = vmatmul.mubr.f32.gmra.mxu0 %v4870
        %v4872 = vpop.f32.mrf.mxu0
        %v4873 = vadd.f32 %v4644, %v4872
        %v4874 = vpop.f32.mrf.mxu0
        %v4875 = vadd.f32 %v4646, %v4874
        %v4876 = vand.u32 %v844, 4294901760
        %4877 = vmatprep.mubr.f32.mxu0 %v4876
        %v4878 = vand.u32 %v367, 4294901760
        %4879 = vmatmul.mubr.f32.gmra.mxu0 %v4878
        %v4880 = vpop.f32.mrf.mxu0
        %v4881 = vadd.f32 %v4652, %v4880
        %v4882 = vpop.f32.mrf.mxu0
        %v4883 = vadd.f32 %v4654, %v4882
        %v4884 = vand.u32 %v847, 4294901760
        %4885 = vmatprep.mubr.f32.mxu0 %v4884
        %v4886 = vand.u32 %v371, 4294901760
        %4887 = vmatmul.mubr.f32.gmra.mxu0 %v4886
        %v4888 = vpop.f32.mrf.mxu0
        %v4889 = vadd.f32 %v4660, %v4888
        %v4890 = vpop.f32.mrf.mxu0
        %v4891 = vadd.f32 %v4662, %v4890
        %v4892 = vand.u32 %v850, 4294901760
        %4893 = vmatprep.mubr.f32.mxu0 %v4892
        %v4894 = vand.u32 %v375, 4294901760
        %4895 = vmatmul.mubr.f32.gmra.mxu0 %v4894
        %v4896 = vpop.f32.mrf.mxu0
        %v4897 = vadd.f32 %v4668, %v4896
        %v4898 = vpop.f32.mrf.mxu0
        %v4899 = vadd.f32 %v4670, %v4898
        %v4900 = vand.u32 %v853, 4294901760
        %4901 = vmatprep.mubr.f32.mxu0 %v4900
        %v4902 = vand.u32 %v379, 4294901760
        %4903 = vmatmul.mubr.f32.gmra.mxu0 %v4902
        %v4904 = vpop.f32.mrf.mxu0
        %v4905 = vadd.f32 %v4676, %v4904
        %v4906 = vpop.f32.mrf.mxu0
        %v4907 = vadd.f32 %v4678, %v4906
        %v4908 = vand.u32 %v856, 4294901760
        %4909 = vmatprep.mubr.f32.mxu0 %v4908
        %v4910 = vand.u32 %v383, 4294901760
        %4911 = vmatmul.mubr.f32.gmra.mxu0 %v4910
        %v4912 = vpop.f32.mrf.mxu0
        %v4913 = vadd.f32 %v4684, %v4912
        %v4914 = vpop.f32.mrf.mxu0
        %v4915 = vadd.f32 %v4686, %v4914
        %v4916 = vand.u32 %v859, 4294901760
        %4917 = vmatprep.mubr.f32.mxu0 %v4916
        %v4918 = vand.u32 %v387, 4294901760
        %4919 = vmatmul.mubr.f32.gmra.mxu0 %v4918
        %v4920 = vpop.f32.mrf.mxu0
        %v4921 = vadd.f32 %v4692, %v4920
        %v4922 = vpop.f32.mrf.mxu0
        %v4923 = vadd.f32 %v4694, %v4922
        %4924 = vdwg.mxu0
        %v4925 = vand.u32 %v676, 4294901760
        %4926 = vmatprep.subr.mxu0 %v4925
        %v4927 = vand.u32 %v675, 4294901760
        %4928 = vmatpush1.msra.mxu0 %v4927
        %v4929 = vand.u32 %v672, 4294901760
        %4930 = vmatprep.subr.mxu0 %v4929
        %v4931 = vand.u32 %v671, 4294901760
        %4932 = vmatpush1.msra.mxu0 %v4931
        %v4933 = vand.u32 %v668, 4294901760
        %4934 = vmatprep.subr.mxu0 %v4933
        %v4935 = vand.u32 %v667, 4294901760
        %4936 = vmatpush1.msra.mxu0 %v4935
        %v4937 = vand.u32 %v664, 4294901760
        %4938 = vmatprep.subr.mxu0 %v4937
        %v4939 = vand.u32 %v663, 4294901760
        %4940 = vmatpush1.msra.mxu0 %v4939
        %v4941 = vand.u32 %v660, 4294901760
        %4942 = vmatprep.subr.mxu0 %v4941
        %v4943 = vand.u32 %v659, 4294901760
        %4944 = vmatpush1.msra.mxu0 %v4943
        %v4945 = vand.u32 %v656, 4294901760
        %4946 = vmatprep.subr.mxu0 %v4945
        %v4947 = vand.u32 %v655, 4294901760
        %4948 = vmatpush1.msra.mxu0 %v4947
        %v4949 = vand.u32 %v652, 4294901760
        %4950 = vmatprep.subr.mxu0 %v4949
        %v4951 = vand.u32 %v651, 4294901760
        %4952 = vmatpush1.msra.mxu0 %v4951
        %v4953 = vand.u32 %v648, 4294901760
        %4954 = vmatprep.subr.mxu0 %v4953
        %v4955 = vand.u32 %v647, 4294901760
        %4956 = vmatpush1.msra.mxu0 %v4955
        %v4957 = vand.u32 %v644, 4294901760
        %4958 = vmatprep.subr.mxu0 %v4957
        %v4959 = vand.u32 %v643, 4294901760
        %4960 = vmatpush1.msra.mxu0 %v4959
        %v4961 = vand.u32 %v640, 4294901760
        %4962 = vmatprep.subr.mxu0 %v4961
        %v4963 = vand.u32 %v639, 4294901760
        %4964 = vmatpush1.msra.mxu0 %v4963
        %v4965 = vand.u32 %v636, 4294901760
        %4966 = vmatprep.subr.mxu0 %v4965
        %v4967 = vand.u32 %v635, 4294901760
        %4968 = vmatpush1.msra.mxu0 %v4967
        %v4969 = vand.u32 %v632, 4294901760
        %4970 = vmatprep.subr.mxu0 %v4969
        %v4971 = vand.u32 %v631, 4294901760
        %4972 = vmatpush1.msra.mxu0 %v4971
        %v4973 = vand.u32 %v628, 4294901760
        %4974 = vmatprep.subr.mxu0 %v4973
        %v4975 = vand.u32 %v627, 4294901760
        %4976 = vmatpush1.msra.mxu0 %v4975
        %v4977 = vand.u32 %v624, 4294901760
        %4978 = vmatprep.subr.mxu0 %v4977
        %v4979 = vand.u32 %v623, 4294901760
        %4980 = vmatpush1.msra.mxu0 %v4979
        %v4981 = vand.u32 %v620, 4294901760
        %4982 = vmatprep.subr.mxu0 %v4981
        %v4983 = vand.u32 %v619, 4294901760
        %4984 = vmatpush1.msra.mxu0 %v4983
        %v4985 = vand.u32 %v616, 4294901760
        %4986 = vmatprep.subr.mxu0 %v4985
        %v4987 = vand.u32 %v615, 4294901760
        %4988 = vmatpush1.msra.mxu0 %v4987
        %v4989 = vand.u32 %v740, 4294901760
        %4990 = vmatprep.subr.mxu0 %v4989
        %v4991 = vand.u32 %v739, 4294901760
        %4992 = vmatpush2.msra.mxu0 %v4991
        %v4993 = vand.u32 %v736, 4294901760
        %4994 = vmatprep.subr.mxu0 %v4993
        %v4995 = vand.u32 %v735, 4294901760
        %4996 = vmatpush2.msra.mxu0 %v4995
        %v4997 = vand.u32 %v732, 4294901760
        %4998 = vmatprep.subr.mxu0 %v4997
        %v4999 = vand.u32 %v731, 4294901760
        %5000 = vmatpush2.msra.mxu0 %v4999
        %v5001 = vand.u32 %v728, 4294901760
        %5002 = vmatprep.subr.mxu0 %v5001
        %v5003 = vand.u32 %v727, 4294901760
        %5004 = vmatpush2.msra.mxu0 %v5003
        %v5005 = vand.u32 %v724, 4294901760
        %5006 = vmatprep.subr.mxu0 %v5005
        %v5007 = vand.u32 %v723, 4294901760
        %5008 = vmatpush2.msra.mxu0 %v5007
        %v5009 = vand.u32 %v720, 4294901760
        %5010 = vmatprep.subr.mxu0 %v5009
        %v5011 = vand.u32 %v719, 4294901760
        %5012 = vmatpush2.msra.mxu0 %v5011
        %v5013 = vand.u32 %v716, 4294901760
        %5014 = vmatprep.subr.mxu0 %v5013
        %v5015 = vand.u32 %v715, 4294901760
        %5016 = vmatpush2.msra.mxu0 %v5015
        %v5017 = vand.u32 %v712, 4294901760
        %5018 = vmatprep.subr.mxu0 %v5017
        %v5019 = vand.u32 %v711, 4294901760
        %5020 = vmatpush2.msra.mxu0 %v5019
        %v5021 = vand.u32 %v708, 4294901760
        %5022 = vmatprep.subr.mxu0 %v5021
        %v5023 = vand.u32 %v707, 4294901760
        %5024 = vmatpush2.msra.mxu0 %v5023
        %v5025 = vand.u32 %v704, 4294901760
        %5026 = vmatprep.subr.mxu0 %v5025
        %v5027 = vand.u32 %v703, 4294901760
        %5028 = vmatpush2.msra.mxu0 %v5027
        %v5029 = vand.u32 %v700, 4294901760
        %5030 = vmatprep.subr.mxu0 %v5029
        %v5031 = vand.u32 %v699, 4294901760
        %5032 = vmatpush2.msra.mxu0 %v5031
        %v5033 = vand.u32 %v696, 4294901760
        %5034 = vmatprep.subr.mxu0 %v5033
        %v5035 = vand.u32 %v695, 4294901760
        %5036 = vmatpush2.msra.mxu0 %v5035
        %v5037 = vand.u32 %v692, 4294901760
        %5038 = vmatprep.subr.mxu0 %v5037
        %v5039 = vand.u32 %v691, 4294901760
        %5040 = vmatpush2.msra.mxu0 %v5039
        %v5041 = vand.u32 %v688, 4294901760
        %5042 = vmatprep.subr.mxu0 %v5041
        %v5043 = vand.u32 %v687, 4294901760
        %5044 = vmatpush2.msra.mxu0 %v5043
        %v5045 = vand.u32 %v684, 4294901760
        %5046 = vmatprep.subr.mxu0 %v5045
        %v5047 = vand.u32 %v683, 4294901760
        %5048 = vmatpush2.msra.mxu0 %v5047
        %v5049 = vand.u32 %v680, 4294901760
        %5050 = vmatprep.subr.mxu0 %v5049
        %v5051 = vand.u32 %v679, 4294901760
        %5052 = vmatpush2.msra.mxu0 %v5051
        %v5053 = vand.u32 %v326, 4294901760
        %v5054 = vsub.f32 %v326, %v5053
        %v5055 = vand.u32 %v5054, 4294901760
        %v5056 = vsub.f32 %v5054, %v5055
        %v5057 = vand.u32 %v5056, 4294901760
        %5058 = vmatprep.mubr.f32.mxu0 %v5057
        %v5059 = vand.u32 %v325, 4294901760
        %v5060 = vsub.f32 %v325, %v5059
        %v5061 = vand.u32 %v5060, 4294901760
        %v5062 = vsub.f32 %v5060, %v5061
        %v5063 = vand.u32 %v5062, 4294901760
        %5064 = vmatmul.mubr.f32.gmra.mxu0 %v5063
        %v5065 = vpop.f32.mrf.mxu0
        %v5066 = vadd.f32 0.0, %v5065
        %v5067 = vpop.f32.mrf.mxu0
        %v5068 = vadd.f32 0.0, %v5067
        %v5069 = vand.u32 %v330, 4294901760
        %v5070 = vsub.f32 %v330, %v5069
        %v5071 = vand.u32 %v5070, 4294901760
        %v5072 = vsub.f32 %v5070, %v5071
        %v5073 = vand.u32 %v5072, 4294901760
        %5074 = vmatprep.mubr.f32.mxu0 %v5073
        %v5075 = vand.u32 %v329, 4294901760
        %v5076 = vsub.f32 %v329, %v5075
        %v5077 = vand.u32 %v5076, 4294901760
        %v5078 = vsub.f32 %v5076, %v5077
        %v5079 = vand.u32 %v5078, 4294901760
        %5080 = vmatmul.mubr.f32.gmra.mxu0 %v5079
        %v5081 = vpop.f32.mrf.mxu0
        %v5082 = vadd.f32 0.0, %v5081
        %v5083 = vpop.f32.mrf.mxu0
        %v5084 = vadd.f32 0.0, %v5083
        %v5085 = vand.u32 %v334, 4294901760
        %v5086 = vsub.f32 %v334, %v5085
        %v5087 = vand.u32 %v5086, 4294901760
        %v5088 = vsub.f32 %v5086, %v5087
        %v5089 = vand.u32 %v5088, 4294901760
        %5090 = vmatprep.mubr.f32.mxu0 %v5089
        %v5091 = vand.u32 %v333, 4294901760
        %v5092 = vsub.f32 %v333, %v5091
        %v5093 = vand.u32 %v5092, 4294901760
        %v5094 = vsub.f32 %v5092, %v5093
        %v5095 = vand.u32 %v5094, 4294901760
        %5096 = vmatmul.mubr.f32.gmra.mxu0 %v5095
        %v5097 = vpop.f32.mrf.mxu0
        %v5098 = vadd.f32 0.0, %v5097
        %v5099 = vpop.f32.mrf.mxu0
        %v5100 = vadd.f32 0.0, %v5099
        %v5101 = vand.u32 %v338, 4294901760
        %v5102 = vsub.f32 %v338, %v5101
        %v5103 = vand.u32 %v5102, 4294901760
        %v5104 = vsub.f32 %v5102, %v5103
        %v5105 = vand.u32 %v5104, 4294901760
        %5106 = vmatprep.mubr.f32.mxu0 %v5105
        %v5107 = vand.u32 %v337, 4294901760
        %v5108 = vsub.f32 %v337, %v5107
        %v5109 = vand.u32 %v5108, 4294901760
        %v5110 = vsub.f32 %v5108, %v5109
        %v5111 = vand.u32 %v5110, 4294901760
        %5112 = vmatmul.mubr.f32.gmra.mxu0 %v5111
        %v5113 = vpop.f32.mrf.mxu0
        %v5114 = vadd.f32 0.0, %v5113
        %v5115 = vpop.f32.mrf.mxu0
        %v5116 = vadd.f32 0.0, %v5115
        %v5117 = vand.u32 %v342, 4294901760
        %v5118 = vsub.f32 %v342, %v5117
        %v5119 = vand.u32 %v5118, 4294901760
        %v5120 = vsub.f32 %v5118, %v5119
        %v5121 = vand.u32 %v5120, 4294901760
        %5122 = vmatprep.mubr.f32.mxu0 %v5121
        %v5123 = vand.u32 %v341, 4294901760
        %v5124 = vsub.f32 %v341, %v5123
        %v5125 = vand.u32 %v5124, 4294901760
        %v5126 = vsub.f32 %v5124, %v5125
        %v5127 = vand.u32 %v5126, 4294901760
        %5128 = vmatmul.mubr.f32.gmra.mxu0 %v5127
        %v5129 = vpop.f32.mrf.mxu0
        %v5130 = vadd.f32 0.0, %v5129
        %v5131 = vpop.f32.mrf.mxu0
        %v5132 = vadd.f32 0.0, %v5131
        %v5133 = vand.u32 %v346, 4294901760
        %v5134 = vsub.f32 %v346, %v5133
        %v5135 = vand.u32 %v5134, 4294901760
        %v5136 = vsub.f32 %v5134, %v5135
        %v5137 = vand.u32 %v5136, 4294901760
        %5138 = vmatprep.mubr.f32.mxu0 %v5137
        %v5139 = vand.u32 %v345, 4294901760
        %v5140 = vsub.f32 %v345, %v5139
        %v5141 = vand.u32 %v5140, 4294901760
        %v5142 = vsub.f32 %v5140, %v5141
        %v5143 = vand.u32 %v5142, 4294901760
        %5144 = vmatmul.mubr.f32.gmra.mxu0 %v5143
        %v5145 = vpop.f32.mrf.mxu0
        %v5146 = vadd.f32 0.0, %v5145
        %v5147 = vpop.f32.mrf.mxu0
        %v5148 = vadd.f32 0.0, %v5147
        %v5149 = vand.u32 %v350, 4294901760
        %v5150 = vsub.f32 %v350, %v5149
        %v5151 = vand.u32 %v5150, 4294901760
        %v5152 = vsub.f32 %v5150, %v5151
        %v5153 = vand.u32 %v5152, 4294901760
        %5154 = vmatprep.mubr.f32.mxu0 %v5153
        %v5155 = vand.u32 %v349, 4294901760
        %v5156 = vsub.f32 %v349, %v5155
        %v5157 = vand.u32 %v5156, 4294901760
        %v5158 = vsub.f32 %v5156, %v5157
        %v5159 = vand.u32 %v5158, 4294901760
        %5160 = vmatmul.mubr.f32.gmra.mxu0 %v5159
        %v5161 = vpop.f32.mrf.mxu0
        %v5162 = vadd.f32 0.0, %v5161
        %v5163 = vpop.f32.mrf.mxu0
        %v5164 = vadd.f32 0.0, %v5163
        %v5165 = vand.u32 %v354, 4294901760
        %v5166 = vsub.f32 %v354, %v5165
        %v5167 = vand.u32 %v5166, 4294901760
        %v5168 = vsub.f32 %v5166, %v5167
        %v5169 = vand.u32 %v5168, 4294901760
        %5170 = vmatprep.mubr.f32.mxu0 %v5169
        %v5171 = vand.u32 %v353, 4294901760
        %v5172 = vsub.f32 %v353, %v5171
        %v5173 = vand.u32 %v5172, 4294901760
        %v5174 = vsub.f32 %v5172, %v5173
        %v5175 = vand.u32 %v5174, 4294901760
        %5176 = vmatmul.mubr.f32.gmra.mxu0 %v5175
        %v5177 = vpop.f32.mrf.mxu0
        %v5178 = vadd.f32 0.0, %v5177
        %v5179 = vpop.f32.mrf.mxu0
        %v5180 = vadd.f32 0.0, %v5179
        %v5181 = vand.u32 %v358, 4294901760
        %v5182 = vsub.f32 %v358, %v5181
        %v5183 = vand.u32 %v5182, 4294901760
        %v5184 = vsub.f32 %v5182, %v5183
        %v5185 = vand.u32 %v5184, 4294901760
        %5186 = vmatprep.mubr.f32.mxu0 %v5185
        %v5187 = vand.u32 %v357, 4294901760
        %v5188 = vsub.f32 %v357, %v5187
        %v5189 = vand.u32 %v5188, 4294901760
        %v5190 = vsub.f32 %v5188, %v5189
        %v5191 = vand.u32 %v5190, 4294901760
        %5192 = vmatmul.mubr.f32.gmra.mxu0 %v5191
        %v5193 = vpop.f32.mrf.mxu0
        %v5194 = vadd.f32 0.0, %v5193
        %v5195 = vpop.f32.mrf.mxu0
        %v5196 = vadd.f32 0.0, %v5195
        %v5197 = vand.u32 %v362, 4294901760
        %v5198 = vsub.f32 %v362, %v5197
        %v5199 = vand.u32 %v5198, 4294901760
        %v5200 = vsub.f32 %v5198, %v5199
        %v5201 = vand.u32 %v5200, 4294901760
        %5202 = vmatprep.mubr.f32.mxu0 %v5201
        %v5203 = vand.u32 %v361, 4294901760
        %v5204 = vsub.f32 %v361, %v5203
        %v5205 = vand.u32 %v5204, 4294901760
        %v5206 = vsub.f32 %v5204, %v5205
        %v5207 = vand.u32 %v5206, 4294901760
        %5208 = vmatmul.mubr.f32.gmra.mxu0 %v5207
        %v5209 = vpop.f32.mrf.mxu0
        %v5210 = vadd.f32 0.0, %v5209
        %v5211 = vpop.f32.mrf.mxu0
        %v5212 = vadd.f32 0.0, %v5211
        %v5213 = vand.u32 %v366, 4294901760
        %v5214 = vsub.f32 %v366, %v5213
        %v5215 = vand.u32 %v5214, 4294901760
        %v5216 = vsub.f32 %v5214, %v5215
        %v5217 = vand.u32 %v5216, 4294901760
        %5218 = vmatprep.mubr.f32.mxu0 %v5217
        %v5219 = vand.u32 %v365, 4294901760
        %v5220 = vsub.f32 %v365, %v5219
        %v5221 = vand.u32 %v5220, 4294901760
        %v5222 = vsub.f32 %v5220, %v5221
        %v5223 = vand.u32 %v5222, 4294901760
        %5224 = vmatmul.mubr.f32.gmra.mxu0 %v5223
        %v5225 = vpop.f32.mrf.mxu0
        %v5226 = vadd.f32 0.0, %v5225
        %v5227 = vpop.f32.mrf.mxu0
        %v5228 = vadd.f32 0.0, %v5227
        %v5229 = vand.u32 %v370, 4294901760
        %v5230 = vsub.f32 %v370, %v5229
        %v5231 = vand.u32 %v5230, 4294901760
        %v5232 = vsub.f32 %v5230, %v5231
        %v5233 = vand.u32 %v5232, 4294901760
        %5234 = vmatprep.mubr.f32.mxu0 %v5233
        %v5235 = vand.u32 %v369, 4294901760
        %v5236 = vsub.f32 %v369, %v5235
        %v5237 = vand.u32 %v5236, 4294901760
        %v5238 = vsub.f32 %v5236, %v5237
        %v5239 = vand.u32 %v5238, 4294901760
        %5240 = vmatmul.mubr.f32.gmra.mxu0 %v5239
        %v5241 = vpop.f32.mrf.mxu0
        %v5242 = vadd.f32 0.0, %v5241
        %v5243 = vpop.f32.mrf.mxu0
        %v5244 = vadd.f32 0.0, %v5243
        %v5245 = vand.u32 %v374, 4294901760
        %v5246 = vsub.f32 %v374, %v5245
        %v5247 = vand.u32 %v5246, 4294901760
        %v5248 = vsub.f32 %v5246, %v5247
        %v5249 = vand.u32 %v5248, 4294901760
        %5250 = vmatprep.mubr.f32.mxu0 %v5249
        %v5251 = vand.u32 %v373, 4294901760
        %v5252 = vsub.f32 %v373, %v5251
        %v5253 = vand.u32 %v5252, 4294901760
        %v5254 = vsub.f32 %v5252, %v5253
        %v5255 = vand.u32 %v5254, 4294901760
        %5256 = vmatmul.mubr.f32.gmra.mxu0 %v5255
        %v5257 = vpop.f32.mrf.mxu0
        %v5258 = vadd.f32 0.0, %v5257
        %v5259 = vpop.f32.mrf.mxu0
        %v5260 = vadd.f32 0.0, %v5259
        %v5261 = vand.u32 %v378, 4294901760
        %v5262 = vsub.f32 %v378, %v5261
        %v5263 = vand.u32 %v5262, 4294901760
        %v5264 = vsub.f32 %v5262, %v5263
        %v5265 = vand.u32 %v5264, 4294901760
        %5266 = vmatprep.mubr.f32.mxu0 %v5265
        %v5267 = vand.u32 %v377, 4294901760
        %v5268 = vsub.f32 %v377, %v5267
        %v5269 = vand.u32 %v5268, 4294901760
        %v5270 = vsub.f32 %v5268, %v5269
        %v5271 = vand.u32 %v5270, 4294901760
        %5272 = vmatmul.mubr.f32.gmra.mxu0 %v5271
        %v5273 = vpop.f32.mrf.mxu0
        %v5274 = vadd.f32 0.0, %v5273
        %v5275 = vpop.f32.mrf.mxu0
        %v5276 = vadd.f32 0.0, %v5275
        %v5277 = vand.u32 %v382, 4294901760
        %v5278 = vsub.f32 %v382, %v5277
        %v5279 = vand.u32 %v5278, 4294901760
        %v5280 = vsub.f32 %v5278, %v5279
        %v5281 = vand.u32 %v5280, 4294901760
        %5282 = vmatprep.mubr.f32.mxu0 %v5281
        %v5283 = vand.u32 %v381, 4294901760
        %v5284 = vsub.f32 %v381, %v5283
        %v5285 = vand.u32 %v5284, 4294901760
        %v5286 = vsub.f32 %v5284, %v5285
        %v5287 = vand.u32 %v5286, 4294901760
        %5288 = vmatmul.mubr.f32.gmra.mxu0 %v5287
        %v5289 = vpop.f32.mrf.mxu0
        %v5290 = vadd.f32 0.0, %v5289
        %v5291 = vpop.f32.mrf.mxu0
        %v5292 = vadd.f32 0.0, %v5291
        %v5293 = vand.u32 %v386, 4294901760
        %v5294 = vsub.f32 %v386, %v5293
        %v5295 = vand.u32 %v5294, 4294901760
        %v5296 = vsub.f32 %v5294, %v5295
        %v5297 = vand.u32 %v5296, 4294901760
        %5298 = vmatprep.mubr.f32.mxu0 %v5297
        %v5299 = vand.u32 %v385, 4294901760
        %v5300 = vsub.f32 %v385, %v5299
        %v5301 = vand.u32 %v5300, 4294901760
        %v5302 = vsub.f32 %v5300, %v5301
        %v5303 = vand.u32 %v5302, 4294901760
        %5304 = vmatmul.mubr.f32.gmra.mxu0 %v5303
        %v5305 = vpop.f32.mrf.mxu0
        %v5306 = vadd.f32 0.0, %v5305
        %v5307 = vpop.f32.mrf.mxu0
        %v5308 = vadd.f32 0.0, %v5307
        %5309 = vdwg.mxu0
        %v5310 = vand.u32 %v676, 4294901760
        %v5311 = vsub.f32 %v676, %v5310
        %v5312 = vand.u32 %v5311, 4294901760
        %v5313 = vsub.f32 %v5311, %v5312
        %v5314 = vand.u32 %v5313, 4294901760
        %5315 = vmatprep.subr.mxu0 %v5314
        %v5316 = vand.u32 %v675, 4294901760
        %v5317 = vsub.f32 %v675, %v5316
        %v5318 = vand.u32 %v5317, 4294901760
        %v5319 = vsub.f32 %v5317, %v5318
        %v5320 = vand.u32 %v5319, 4294901760
        %5321 = vmatpush1.msra.mxu0 %v5320
        %v5322 = vand.u32 %v672, 4294901760
        %v5323 = vsub.f32 %v672, %v5322
        %v5324 = vand.u32 %v5323, 4294901760
        %v5325 = vsub.f32 %v5323, %v5324
        %v5326 = vand.u32 %v5325, 4294901760
        %5327 = vmatprep.subr.mxu0 %v5326
        %v5328 = vand.u32 %v671, 4294901760
        %v5329 = vsub.f32 %v671, %v5328
        %v5330 = vand.u32 %v5329, 4294901760
        %v5331 = vsub.f32 %v5329, %v5330
        %v5332 = vand.u32 %v5331, 4294901760
        %5333 = vmatpush1.msra.mxu0 %v5332
        %v5334 = vand.u32 %v668, 4294901760
        %v5335 = vsub.f32 %v668, %v5334
        %v5336 = vand.u32 %v5335, 4294901760
        %v5337 = vsub.f32 %v5335, %v5336
        %v5338 = vand.u32 %v5337, 4294901760
        %5339 = vmatprep.subr.mxu0 %v5338
        %v5340 = vand.u32 %v667, 4294901760
        %v5341 = vsub.f32 %v667, %v5340
        %v5342 = vand.u32 %v5341, 4294901760
        %v5343 = vsub.f32 %v5341, %v5342
        %v5344 = vand.u32 %v5343, 4294901760
        %5345 = vmatpush1.msra.mxu0 %v5344
        %v5346 = vand.u32 %v664, 4294901760
        %v5347 = vsub.f32 %v664, %v5346
        %v5348 = vand.u32 %v5347, 4294901760
        %v5349 = vsub.f32 %v5347, %v5348
        %v5350 = vand.u32 %v5349, 4294901760
        %5351 = vmatprep.subr.mxu0 %v5350
        %v5352 = vand.u32 %v663, 4294901760
        %v5353 = vsub.f32 %v663, %v5352
        %v5354 = vand.u32 %v5353, 4294901760
        %v5355 = vsub.f32 %v5353, %v5354
        %v5356 = vand.u32 %v5355, 4294901760
        %5357 = vmatpush1.msra.mxu0 %v5356
        %v5358 = vand.u32 %v660, 4294901760
        %v5359 = vsub.f32 %v660, %v5358
        %v5360 = vand.u32 %v5359, 4294901760
        %v5361 = vsub.f32 %v5359, %v5360
        %v5362 = vand.u32 %v5361, 4294901760
        %5363 = vmatprep.subr.mxu0 %v5362
        %v5364 = vand.u32 %v659, 4294901760
        %v5365 = vsub.f32 %v659, %v5364
        %v5366 = vand.u32 %v5365, 4294901760
        %v5367 = vsub.f32 %v5365, %v5366
        %v5368 = vand.u32 %v5367, 4294901760
        %5369 = vmatpush1.msra.mxu0 %v5368
        %v5370 = vand.u32 %v656, 4294901760
        %v5371 = vsub.f32 %v656, %v5370
        %v5372 = vand.u32 %v5371, 4294901760
        %v5373 = vsub.f32 %v5371, %v5372
        %v5374 = vand.u32 %v5373, 4294901760
        %5375 = vmatprep.subr.mxu0 %v5374
        %v5376 = vand.u32 %v655, 4294901760
        %v5377 = vsub.f32 %v655, %v5376
        %v5378 = vand.u32 %v5377, 4294901760
        %v5379 = vsub.f32 %v5377, %v5378
        %v5380 = vand.u32 %v5379, 4294901760
        %5381 = vmatpush1.msra.mxu0 %v5380
        %v5382 = vand.u32 %v652, 4294901760
        %v5383 = vsub.f32 %v652, %v5382
        %v5384 = vand.u32 %v5383, 4294901760
        %v5385 = vsub.f32 %v5383, %v5384
        %v5386 = vand.u32 %v5385, 4294901760
        %5387 = vmatprep.subr.mxu0 %v5386
        %v5388 = vand.u32 %v651, 4294901760
        %v5389 = vsub.f32 %v651, %v5388
        %v5390 = vand.u32 %v5389, 4294901760
        %v5391 = vsub.f32 %v5389, %v5390
        %v5392 = vand.u32 %v5391, 4294901760
        %5393 = vmatpush1.msra.mxu0 %v5392
        %v5394 = vand.u32 %v648, 4294901760
        %v5395 = vsub.f32 %v648, %v5394
        %v5396 = vand.u32 %v5395, 4294901760
        %v5397 = vsub.f32 %v5395, %v5396
        %v5398 = vand.u32 %v5397, 4294901760
        %5399 = vmatprep.subr.mxu0 %v5398
        %v5400 = vand.u32 %v647, 4294901760
        %v5401 = vsub.f32 %v647, %v5400
        %v5402 = vand.u32 %v5401, 4294901760
        %v5403 = vsub.f32 %v5401, %v5402
        %v5404 = vand.u32 %v5403, 4294901760
        %5405 = vmatpush1.msra.mxu0 %v5404
        %v5406 = vand.u32 %v644, 4294901760
        %v5407 = vsub.f32 %v644, %v5406
        %v5408 = vand.u32 %v5407, 4294901760
        %v5409 = vsub.f32 %v5407, %v5408
        %v5410 = vand.u32 %v5409, 4294901760
        %5411 = vmatprep.subr.mxu0 %v5410
        %v5412 = vand.u32 %v643, 4294901760
        %v5413 = vsub.f32 %v643, %v5412
        %v5414 = vand.u32 %v5413, 4294901760
        %v5415 = vsub.f32 %v5413, %v5414
        %v5416 = vand.u32 %v5415, 4294901760
        %5417 = vmatpush1.msra.mxu0 %v5416
        %v5418 = vand.u32 %v640, 4294901760
        %v5419 = vsub.f32 %v640, %v5418
        %v5420 = vand.u32 %v5419, 4294901760
        %v5421 = vsub.f32 %v5419, %v5420
        %v5422 = vand.u32 %v5421, 4294901760
        %5423 = vmatprep.subr.mxu0 %v5422
        %v5424 = vand.u32 %v639, 4294901760
        %v5425 = vsub.f32 %v639, %v5424
        %v5426 = vand.u32 %v5425, 4294901760
        %v5427 = vsub.f32 %v5425, %v5426
        %v5428 = vand.u32 %v5427, 4294901760
        %5429 = vmatpush1.msra.mxu0 %v5428
        %v5430 = vand.u32 %v636, 4294901760
        %v5431 = vsub.f32 %v636, %v5430
        %v5432 = vand.u32 %v5431, 4294901760
        %v5433 = vsub.f32 %v5431, %v5432
        %v5434 = vand.u32 %v5433, 4294901760
        %5435 = vmatprep.subr.mxu0 %v5434
        %v5436 = vand.u32 %v635, 4294901760
        %v5437 = vsub.f32 %v635, %v5436
        %v5438 = vand.u32 %v5437, 4294901760
        %v5439 = vsub.f32 %v5437, %v5438
        %v5440 = vand.u32 %v5439, 4294901760
        %5441 = vmatpush1.msra.mxu0 %v5440
        %v5442 = vand.u32 %v632, 4294901760
        %v5443 = vsub.f32 %v632, %v5442
        %v5444 = vand.u32 %v5443, 4294901760
        %v5445 = vsub.f32 %v5443, %v5444
        %v5446 = vand.u32 %v5445, 4294901760
        %5447 = vmatprep.subr.mxu0 %v5446
        %v5448 = vand.u32 %v631, 4294901760
        %v5449 = vsub.f32 %v631, %v5448
        %v5450 = vand.u32 %v5449, 4294901760
        %v5451 = vsub.f32 %v5449, %v5450
        %v5452 = vand.u32 %v5451, 4294901760
        %5453 = vmatpush1.msra.mxu0 %v5452
        %v5454 = vand.u32 %v628, 4294901760
        %v5455 = vsub.f32 %v628, %v5454
        %v5456 = vand.u32 %v5455, 4294901760
        %v5457 = vsub.f32 %v5455, %v5456
        %v5458 = vand.u32 %v5457, 4294901760
        %5459 = vmatprep.subr.mxu0 %v5458
        %v5460 = vand.u32 %v627, 4294901760
        %v5461 = vsub.f32 %v627, %v5460
        %v5462 = vand.u32 %v5461, 4294901760
        %v5463 = vsub.f32 %v5461, %v5462
        %v5464 = vand.u32 %v5463, 4294901760
        %5465 = vmatpush1.msra.mxu0 %v5464
        %v5466 = vand.u32 %v624, 4294901760
        %v5467 = vsub.f32 %v624, %v5466
        %v5468 = vand.u32 %v5467, 4294901760
        %v5469 = vsub.f32 %v5467, %v5468
        %v5470 = vand.u32 %v5469, 4294901760
        %5471 = vmatprep.subr.mxu0 %v5470
        %v5472 = vand.u32 %v623, 4294901760
        %v5473 = vsub.f32 %v623, %v5472
        %v5474 = vand.u32 %v5473, 4294901760
        %v5475 = vsub.f32 %v5473, %v5474
        %v5476 = vand.u32 %v5475, 4294901760
        %5477 = vmatpush1.msra.mxu0 %v5476
        %v5478 = vand.u32 %v620, 4294901760
        %v5479 = vsub.f32 %v620, %v5478
        %v5480 = vand.u32 %v5479, 4294901760
        %v5481 = vsub.f32 %v5479, %v5480
        %v5482 = vand.u32 %v5481, 4294901760
        %5483 = vmatprep.subr.mxu0 %v5482
        %v5484 = vand.u32 %v619, 4294901760
        %v5485 = vsub.f32 %v619, %v5484
        %v5486 = vand.u32 %v5485, 4294901760
        %v5487 = vsub.f32 %v5485, %v5486
        %v5488 = vand.u32 %v5487, 4294901760
        %5489 = vmatpush1.msra.mxu0 %v5488
        %v5490 = vand.u32 %v616, 4294901760
        %v5491 = vsub.f32 %v616, %v5490
        %v5492 = vand.u32 %v5491, 4294901760
        %v5493 = vsub.f32 %v5491, %v5492
        %v5494 = vand.u32 %v5493, 4294901760
        %5495 = vmatprep.subr.mxu0 %v5494
        %v5496 = vand.u32 %v615, 4294901760
        %v5497 = vsub.f32 %v615, %v5496
        %v5498 = vand.u32 %v5497, 4294901760
        %v5499 = vsub.f32 %v5497, %v5498
        %v5500 = vand.u32 %v5499, 4294901760
        %5501 = vmatpush1.msra.mxu0 %v5500
        %v5502 = vand.u32 %v740, 4294901760
        %v5503 = vsub.f32 %v740, %v5502
        %v5504 = vand.u32 %v5503, 4294901760
        %v5505 = vsub.f32 %v5503, %v5504
        %v5506 = vand.u32 %v5505, 4294901760
        %5507 = vmatprep.subr.mxu0 %v5506
        %v5508 = vand.u32 %v739, 4294901760
        %v5509 = vsub.f32 %v739, %v5508
        %v5510 = vand.u32 %v5509, 4294901760
        %v5511 = vsub.f32 %v5509, %v5510
        %v5512 = vand.u32 %v5511, 4294901760
        %5513 = vmatpush2.msra.mxu0 %v5512
        %v5514 = vand.u32 %v736, 4294901760
        %v5515 = vsub.f32 %v736, %v5514
        %v5516 = vand.u32 %v5515, 4294901760
        %v5517 = vsub.f32 %v5515, %v5516
        %v5518 = vand.u32 %v5517, 4294901760
        %5519 = vmatprep.subr.mxu0 %v5518
        %v5520 = vand.u32 %v735, 4294901760
        %v5521 = vsub.f32 %v735, %v5520
        %v5522 = vand.u32 %v5521, 4294901760
        %v5523 = vsub.f32 %v5521, %v5522
        %v5524 = vand.u32 %v5523, 4294901760
        %5525 = vmatpush2.msra.mxu0 %v5524
        %v5526 = vand.u32 %v732, 4294901760
        %v5527 = vsub.f32 %v732, %v5526
        %v5528 = vand.u32 %v5527, 4294901760
        %v5529 = vsub.f32 %v5527, %v5528
        %v5530 = vand.u32 %v5529, 4294901760
        %5531 = vmatprep.subr.mxu0 %v5530
        %v5532 = vand.u32 %v731, 4294901760
        %v5533 = vsub.f32 %v731, %v5532
        %v5534 = vand.u32 %v5533, 4294901760
        %v5535 = vsub.f32 %v5533, %v5534
        %v5536 = vand.u32 %v5535, 4294901760
        %5537 = vmatpush2.msra.mxu0 %v5536
        %v5538 = vand.u32 %v728, 4294901760
        %v5539 = vsub.f32 %v728, %v5538
        %v5540 = vand.u32 %v5539, 4294901760
        %v5541 = vsub.f32 %v5539, %v5540
        %v5542 = vand.u32 %v5541, 4294901760
        %5543 = vmatprep.subr.mxu0 %v5542
        %v5544 = vand.u32 %v727, 4294901760
        %v5545 = vsub.f32 %v727, %v5544
        %v5546 = vand.u32 %v5545, 4294901760
        %v5547 = vsub.f32 %v5545, %v5546
        %v5548 = vand.u32 %v5547, 4294901760
        %5549 = vmatpush2.msra.mxu0 %v5548
        %v5550 = vand.u32 %v724, 4294901760
        %v5551 = vsub.f32 %v724, %v5550
        %v5552 = vand.u32 %v5551, 4294901760
        %v5553 = vsub.f32 %v5551, %v5552
        %v5554 = vand.u32 %v5553, 4294901760
        %5555 = vmatprep.subr.mxu0 %v5554
        %v5556 = vand.u32 %v723, 4294901760
        %v5557 = vsub.f32 %v723, %v5556
        %v5558 = vand.u32 %v5557, 4294901760
        %v5559 = vsub.f32 %v5557, %v5558
        %v5560 = vand.u32 %v5559, 4294901760
        %5561 = vmatpush2.msra.mxu0 %v5560
        %v5562 = vand.u32 %v720, 4294901760
        %v5563 = vsub.f32 %v720, %v5562
        %v5564 = vand.u32 %v5563, 4294901760
        %v5565 = vsub.f32 %v5563, %v5564
        %v5566 = vand.u32 %v5565, 4294901760
        %5567 = vmatprep.subr.mxu0 %v5566
        %v5568 = vand.u32 %v719, 4294901760
        %v5569 = vsub.f32 %v719, %v5568
        %v5570 = vand.u32 %v5569, 4294901760
        %v5571 = vsub.f32 %v5569, %v5570
        %v5572 = vand.u32 %v5571, 4294901760
        %5573 = vmatpush2.msra.mxu0 %v5572
        %v5574 = vand.u32 %v716, 4294901760
        %v5575 = vsub.f32 %v716, %v5574
        %v5576 = vand.u32 %v5575, 4294901760
        %v5577 = vsub.f32 %v5575, %v5576
        %v5578 = vand.u32 %v5577, 4294901760
        %5579 = vmatprep.subr.mxu0 %v5578
        %v5580 = vand.u32 %v715, 4294901760
        %v5581 = vsub.f32 %v715, %v5580
        %v5582 = vand.u32 %v5581, 4294901760
        %v5583 = vsub.f32 %v5581, %v5582
        %v5584 = vand.u32 %v5583, 4294901760
        %5585 = vmatpush2.msra.mxu0 %v5584
        %v5586 = vand.u32 %v712, 4294901760
        %v5587 = vsub.f32 %v712, %v5586
        %v5588 = vand.u32 %v5587, 4294901760
        %v5589 = vsub.f32 %v5587, %v5588
        %v5590 = vand.u32 %v5589, 4294901760
        %5591 = vmatprep.subr.mxu0 %v5590
        %v5592 = vand.u32 %v711, 4294901760
        %v5593 = vsub.f32 %v711, %v5592
        %v5594 = vand.u32 %v5593, 4294901760
        %v5595 = vsub.f32 %v5593, %v5594
        %v5596 = vand.u32 %v5595, 4294901760
        %5597 = vmatpush2.msra.mxu0 %v5596
        %v5598 = vand.u32 %v708, 4294901760
        %v5599 = vsub.f32 %v708, %v5598
        %v5600 = vand.u32 %v5599, 4294901760
        %v5601 = vsub.f32 %v5599, %v5600
        %v5602 = vand.u32 %v5601, 4294901760
        %5603 = vmatprep.subr.mxu0 %v5602
        %v5604 = vand.u32 %v707, 4294901760
        %v5605 = vsub.f32 %v707, %v5604
        %v5606 = vand.u32 %v5605, 4294901760
        %v5607 = vsub.f32 %v5605, %v5606
        %v5608 = vand.u32 %v5607, 4294901760
        %5609 = vmatpush2.msra.mxu0 %v5608
        %v5610 = vand.u32 %v704, 4294901760
        %v5611 = vsub.f32 %v704, %v5610
        %v5612 = vand.u32 %v5611, 4294901760
        %v5613 = vsub.f32 %v5611, %v5612
        %v5614 = vand.u32 %v5613, 4294901760
        %5615 = vmatprep.subr.mxu0 %v5614
        %v5616 = vand.u32 %v703, 4294901760
        %v5617 = vsub.f32 %v703, %v5616
        %v5618 = vand.u32 %v5617, 4294901760
        %v5619 = vsub.f32 %v5617, %v5618
        %v5620 = vand.u32 %v5619, 4294901760
        %5621 = vmatpush2.msra.mxu0 %v5620
        %v5622 = vand.u32 %v700, 4294901760
        %v5623 = vsub.f32 %v700, %v5622
        %v5624 = vand.u32 %v5623, 4294901760
        %v5625 = vsub.f32 %v5623, %v5624
        %v5626 = vand.u32 %v5625, 4294901760
        %5627 = vmatprep.subr.mxu0 %v5626
        %v5628 = vand.u32 %v699, 4294901760
        %v5629 = vsub.f32 %v699, %v5628
        %v5630 = vand.u32 %v5629, 4294901760
        %v5631 = vsub.f32 %v5629, %v5630
        %v5632 = vand.u32 %v5631, 4294901760
        %5633 = vmatpush2.msra.mxu0 %v5632
        %v5634 = vand.u32 %v696, 4294901760
        %v5635 = vsub.f32 %v696, %v5634
        %v5636 = vand.u32 %v5635, 4294901760
        %v5637 = vsub.f32 %v5635, %v5636
        %v5638 = vand.u32 %v5637, 4294901760
        %5639 = vmatprep.subr.mxu0 %v5638
        %v5640 = vand.u32 %v695, 4294901760
        %v5641 = vsub.f32 %v695, %v5640
        %v5642 = vand.u32 %v5641, 4294901760
        %v5643 = vsub.f32 %v5641, %v5642
        %v5644 = vand.u32 %v5643, 4294901760
        %5645 = vmatpush2.msra.mxu0 %v5644
        %v5646 = vand.u32 %v692, 4294901760
        %v5647 = vsub.f32 %v692, %v5646
        %v5648 = vand.u32 %v5647, 4294901760
        %v5649 = vsub.f32 %v5647, %v5648
        %v5650 = vand.u32 %v5649, 4294901760
        %5651 = vmatprep.subr.mxu0 %v5650
        %v5652 = vand.u32 %v691, 4294901760
        %v5653 = vsub.f32 %v691, %v5652
        %v5654 = vand.u32 %v5653, 4294901760
        %v5655 = vsub.f32 %v5653, %v5654
        %v5656 = vand.u32 %v5655, 4294901760
        %5657 = vmatpush2.msra.mxu0 %v5656
        %v5658 = vand.u32 %v688, 4294901760
        %v5659 = vsub.f32 %v688, %v5658
        %v5660 = vand.u32 %v5659, 4294901760
        %v5661 = vsub.f32 %v5659, %v5660
        %v5662 = vand.u32 %v5661, 4294901760
        %5663 = vmatprep.subr.mxu0 %v5662
        %v5664 = vand.u32 %v687, 4294901760
        %v5665 = vsub.f32 %v687, %v5664
        %v5666 = vand.u32 %v5665, 4294901760
        %v5667 = vsub.f32 %v5665, %v5666
        %v5668 = vand.u32 %v5667, 4294901760
        %5669 = vmatpush2.msra.mxu0 %v5668
        %v5670 = vand.u32 %v684, 4294901760
        %v5671 = vsub.f32 %v684, %v5670
        %v5672 = vand.u32 %v5671, 4294901760
        %v5673 = vsub.f32 %v5671, %v5672
        %v5674 = vand.u32 %v5673, 4294901760
        %5675 = vmatprep.subr.mxu0 %v5674
        %v5676 = vand.u32 %v683, 4294901760
        %v5677 = vsub.f32 %v683, %v5676
        %v5678 = vand.u32 %v5677, 4294901760
        %v5679 = vsub.f32 %v5677, %v5678
        %v5680 = vand.u32 %v5679, 4294901760
        %5681 = vmatpush2.msra.mxu0 %v5680
        %v5682 = vand.u32 %v680, 4294901760
        %v5683 = vsub.f32 %v680, %v5682
        %v5684 = vand.u32 %v5683, 4294901760
        %v5685 = vsub.f32 %v5683, %v5684
        %v5686 = vand.u32 %v5685, 4294901760
        %5687 = vmatprep.subr.mxu0 %v5686
        %v5688 = vand.u32 %v679, 4294901760
        %v5689 = vsub.f32 %v679, %v5688
        %v5690 = vand.u32 %v5689, 4294901760
        %v5691 = vsub.f32 %v5689, %v5690
        %v5692 = vand.u32 %v5691, 4294901760
        %5693 = vmatpush2.msra.mxu0 %v5692
        %v5694 = vand.u32 %v326, 4294901760
        %5695 = vmatprep.mubr.f32.mxu0 %v5694
        %v5696 = vand.u32 %v325, 4294901760
        %5697 = vmatmul.mubr.f32.gmra.mxu0 %v5696
        %v5698 = vpop.f32.mrf.mxu0
        %v5699 = vadd.f32 %v5066, %v5698
        %v5700 = vpop.f32.mrf.mxu0
        %v5701 = vadd.f32 %v5068, %v5700
        %v5702 = vand.u32 %v330, 4294901760
        %5703 = vmatprep.mubr.f32.mxu0 %v5702
        %v5704 = vand.u32 %v329, 4294901760
        %5705 = vmatmul.mubr.f32.gmra.mxu0 %v5704
        %v5706 = vpop.f32.mrf.mxu0
        %v5707 = vadd.f32 %v5082, %v5706
        %v5708 = vpop.f32.mrf.mxu0
        %v5709 = vadd.f32 %v5084, %v5708
        %v5710 = vand.u32 %v334, 4294901760
        %5711 = vmatprep.mubr.f32.mxu0 %v5710
        %v5712 = vand.u32 %v333, 4294901760
        %5713 = vmatmul.mubr.f32.gmra.mxu0 %v5712
        %v5714 = vpop.f32.mrf.mxu0
        %v5715 = vadd.f32 %v5098, %v5714
        %v5716 = vpop.f32.mrf.mxu0
        %v5717 = vadd.f32 %v5100, %v5716
        %v5718 = vand.u32 %v338, 4294901760
        %5719 = vmatprep.mubr.f32.mxu0 %v5718
        %v5720 = vand.u32 %v337, 4294901760
        %5721 = vmatmul.mubr.f32.gmra.mxu0 %v5720
        %v5722 = vpop.f32.mrf.mxu0
        %v5723 = vadd.f32 %v5114, %v5722
        %v5724 = vpop.f32.mrf.mxu0
        %v5725 = vadd.f32 %v5116, %v5724
        %v5726 = vand.u32 %v342, 4294901760
        %5727 = vmatprep.mubr.f32.mxu0 %v5726
        %v5728 = vand.u32 %v341, 4294901760
        %5729 = vmatmul.mubr.f32.gmra.mxu0 %v5728
        %v5730 = vpop.f32.mrf.mxu0
        %v5731 = vadd.f32 %v5130, %v5730
        %v5732 = vpop.f32.mrf.mxu0
        %v5733 = vadd.f32 %v5132, %v5732
        %v5734 = vand.u32 %v346, 4294901760
        %5735 = vmatprep.mubr.f32.mxu0 %v5734
        %v5736 = vand.u32 %v345, 4294901760
        %5737 = vmatmul.mubr.f32.gmra.mxu0 %v5736
        %v5738 = vpop.f32.mrf.mxu0
        %v5739 = vadd.f32 %v5146, %v5738
        %v5740 = vpop.f32.mrf.mxu0
        %v5741 = vadd.f32 %v5148, %v5740
        %v5742 = vand.u32 %v350, 4294901760
        %5743 = vmatprep.mubr.f32.mxu0 %v5742
        %v5744 = vand.u32 %v349, 4294901760
        %5745 = vmatmul.mubr.f32.gmra.mxu0 %v5744
        %v5746 = vpop.f32.mrf.mxu0
        %v5747 = vadd.f32 %v5162, %v5746
        %v5748 = vpop.f32.mrf.mxu0
        %v5749 = vadd.f32 %v5164, %v5748
        %v5750 = vand.u32 %v354, 4294901760
        %5751 = vmatprep.mubr.f32.mxu0 %v5750
        %v5752 = vand.u32 %v353, 4294901760
        %5753 = vmatmul.mubr.f32.gmra.mxu0 %v5752
        %v5754 = vpop.f32.mrf.mxu0
        %v5755 = vadd.f32 %v5178, %v5754
        %v5756 = vpop.f32.mrf.mxu0
        %v5757 = vadd.f32 %v5180, %v5756
        %v5758 = vand.u32 %v358, 4294901760
        %5759 = vmatprep.mubr.f32.mxu0 %v5758
        %v5760 = vand.u32 %v357, 4294901760
        %5761 = vmatmul.mubr.f32.gmra.mxu0 %v5760
        %v5762 = vpop.f32.mrf.mxu0
        %v5763 = vadd.f32 %v5194, %v5762
        %v5764 = vpop.f32.mrf.mxu0
        %v5765 = vadd.f32 %v5196, %v5764
        %v5766 = vand.u32 %v362, 4294901760
        %5767 = vmatprep.mubr.f32.mxu0 %v5766
        %v5768 = vand.u32 %v361, 4294901760
        %5769 = vmatmul.mubr.f32.gmra.mxu0 %v5768
        %v5770 = vpop.f32.mrf.mxu0
        %v5771 = vadd.f32 %v5210, %v5770
        %v5772 = vpop.f32.mrf.mxu0
        %v5773 = vadd.f32 %v5212, %v5772
        %v5774 = vand.u32 %v366, 4294901760
        %5775 = vmatprep.mubr.f32.mxu0 %v5774
        %v5776 = vand.u32 %v365, 4294901760
        %5777 = vmatmul.mubr.f32.gmra.mxu0 %v5776
        %v5778 = vpop.f32.mrf.mxu0
        %v5779 = vadd.f32 %v5226, %v5778
        %v5780 = vpop.f32.mrf.mxu0
        %v5781 = vadd.f32 %v5228, %v5780
        %v5782 = vand.u32 %v370, 4294901760
        %5783 = vmatprep.mubr.f32.mxu0 %v5782
        %v5784 = vand.u32 %v369, 4294901760
        %5785 = vmatmul.mubr.f32.gmra.mxu0 %v5784
        %v5786 = vpop.f32.mrf.mxu0
        %v5787 = vadd.f32 %v5242, %v5786
        %v5788 = vpop.f32.mrf.mxu0
        %v5789 = vadd.f32 %v5244, %v5788
        %v5790 = vand.u32 %v374, 4294901760
        %5791 = vmatprep.mubr.f32.mxu0 %v5790
        %v5792 = vand.u32 %v373, 4294901760
        %5793 = vmatmul.mubr.f32.gmra.mxu0 %v5792
        %v5794 = vpop.f32.mrf.mxu0
        %v5795 = vadd.f32 %v5258, %v5794
        %v5796 = vpop.f32.mrf.mxu0
        %v5797 = vadd.f32 %v5260, %v5796
        %v5798 = vand.u32 %v378, 4294901760
        %5799 = vmatprep.mubr.f32.mxu0 %v5798
        %v5800 = vand.u32 %v377, 4294901760
        %5801 = vmatmul.mubr.f32.gmra.mxu0 %v5800
        %v5802 = vpop.f32.mrf.mxu0
        %v5803 = vadd.f32 %v5274, %v5802
        %v5804 = vpop.f32.mrf.mxu0
        %v5805 = vadd.f32 %v5276, %v5804
        %v5806 = vand.u32 %v382, 4294901760
        %5807 = vmatprep.mubr.f32.mxu0 %v5806
        %v5808 = vand.u32 %v381, 4294901760
        %5809 = vmatmul.mubr.f32.gmra.mxu0 %v5808
        %v5810 = vpop.f32.mrf.mxu0
        %v5811 = vadd.f32 %v5290, %v5810
        %v5812 = vpop.f32.mrf.mxu0
        %v5813 = vadd.f32 %v5292, %v5812
        %v5814 = vand.u32 %v386, 4294901760
        %5815 = vmatprep.mubr.f32.mxu0 %v5814
        %v5816 = vand.u32 %v385, 4294901760
        %5817 = vmatmul.mubr.f32.gmra.mxu0 %v5816
        %v5818 = vpop.f32.mrf.mxu0
        %v5819 = vadd.f32 %v5306, %v5818
        %v5820 = vpop.f32.mrf.mxu0
        %v5821 = vadd.f32 %v5308, %v5820
        %5822 = vdwg.mxu0
        %v5823 = vand.u32 %v676, 4294901760
        %v5824 = vsub.f32 %v676, %v5823
        %5825 = vmatprep.subr.mxu0 %v5824
        %v5826 = vand.u32 %v675, 4294901760
        %v5827 = vsub.f32 %v675, %v5826
        %5828 = vmatpush1.msra.mxu0 %v5827
        %v5829 = vand.u32 %v672, 4294901760
        %v5830 = vsub.f32 %v672, %v5829
        %5831 = vmatprep.subr.mxu0 %v5830
        %v5832 = vand.u32 %v671, 4294901760
        %v5833 = vsub.f32 %v671, %v5832
        %5834 = vmatpush1.msra.mxu0 %v5833
        %v5835 = vand.u32 %v668, 4294901760
        %v5836 = vsub.f32 %v668, %v5835
        %5837 = vmatprep.subr.mxu0 %v5836
        %v5838 = vand.u32 %v667, 4294901760
        %v5839 = vsub.f32 %v667, %v5838
        %5840 = vmatpush1.msra.mxu0 %v5839
        %v5841 = vand.u32 %v664, 4294901760
        %v5842 = vsub.f32 %v664, %v5841
        %5843 = vmatprep.subr.mxu0 %v5842
        %v5844 = vand.u32 %v663, 4294901760
        %v5845 = vsub.f32 %v663, %v5844
        %5846 = vmatpush1.msra.mxu0 %v5845
        %v5847 = vand.u32 %v660, 4294901760
        %v5848 = vsub.f32 %v660, %v5847
        %5849 = vmatprep.subr.mxu0 %v5848
        %v5850 = vand.u32 %v659, 4294901760
        %v5851 = vsub.f32 %v659, %v5850
        %5852 = vmatpush1.msra.mxu0 %v5851
        %v5853 = vand.u32 %v656, 4294901760
        %v5854 = vsub.f32 %v656, %v5853
        %5855 = vmatprep.subr.mxu0 %v5854
        %v5856 = vand.u32 %v655, 4294901760
        %v5857 = vsub.f32 %v655, %v5856
        %5858 = vmatpush1.msra.mxu0 %v5857
        %v5859 = vand.u32 %v652, 4294901760
        %v5860 = vsub.f32 %v652, %v5859
        %5861 = vmatprep.subr.mxu0 %v5860
        %v5862 = vand.u32 %v651, 4294901760
        %v5863 = vsub.f32 %v651, %v5862
        %5864 = vmatpush1.msra.mxu0 %v5863
        %v5865 = vand.u32 %v648, 4294901760
        %v5866 = vsub.f32 %v648, %v5865
        %5867 = vmatprep.subr.mxu0 %v5866
        %v5868 = vand.u32 %v647, 4294901760
        %v5869 = vsub.f32 %v647, %v5868
        %5870 = vmatpush1.msra.mxu0 %v5869
        %v5871 = vand.u32 %v644, 4294901760
        %v5872 = vsub.f32 %v644, %v5871
        %5873 = vmatprep.subr.mxu0 %v5872
        %v5874 = vand.u32 %v643, 4294901760
        %v5875 = vsub.f32 %v643, %v5874
        %5876 = vmatpush1.msra.mxu0 %v5875
        %v5877 = vand.u32 %v640, 4294901760
        %v5878 = vsub.f32 %v640, %v5877
        %5879 = vmatprep.subr.mxu0 %v5878
        %v5880 = vand.u32 %v639, 4294901760
        %v5881 = vsub.f32 %v639, %v5880
        %5882 = vmatpush1.msra.mxu0 %v5881
        %v5883 = vand.u32 %v636, 4294901760
        %v5884 = vsub.f32 %v636, %v5883
        %5885 = vmatprep.subr.mxu0 %v5884
        %v5886 = vand.u32 %v635, 4294901760
        %v5887 = vsub.f32 %v635, %v5886
        %5888 = vmatpush1.msra.mxu0 %v5887
        %v5889 = vand.u32 %v632, 4294901760
        %v5890 = vsub.f32 %v632, %v5889
        %5891 = vmatprep.subr.mxu0 %v5890
        %v5892 = vand.u32 %v631, 4294901760
        %v5893 = vsub.f32 %v631, %v5892
        %5894 = vmatpush1.msra.mxu0 %v5893
        %v5895 = vand.u32 %v628, 4294901760
        %v5896 = vsub.f32 %v628, %v5895
        %5897 = vmatprep.subr.mxu0 %v5896
        %v5898 = vand.u32 %v627, 4294901760
        %v5899 = vsub.f32 %v627, %v5898
        %5900 = vmatpush1.msra.mxu0 %v5899
        %v5901 = vand.u32 %v624, 4294901760
        %v5902 = vsub.f32 %v624, %v5901
        %5903 = vmatprep.subr.mxu0 %v5902
        %v5904 = vand.u32 %v623, 4294901760
        %v5905 = vsub.f32 %v623, %v5904
        %5906 = vmatpush1.msra.mxu0 %v5905
        %v5907 = vand.u32 %v620, 4294901760
        %v5908 = vsub.f32 %v620, %v5907
        %5909 = vmatprep.subr.mxu0 %v5908
        %v5910 = vand.u32 %v619, 4294901760
        %v5911 = vsub.f32 %v619, %v5910
        %5912 = vmatpush1.msra.mxu0 %v5911
        %v5913 = vand.u32 %v616, 4294901760
        %v5914 = vsub.f32 %v616, %v5913
        %5915 = vmatprep.subr.mxu0 %v5914
        %v5916 = vand.u32 %v615, 4294901760
        %v5917 = vsub.f32 %v615, %v5916
        %5918 = vmatpush1.msra.mxu0 %v5917
        %v5919 = vand.u32 %v740, 4294901760
        %v5920 = vsub.f32 %v740, %v5919
        %5921 = vmatprep.subr.mxu0 %v5920
        %v5922 = vand.u32 %v739, 4294901760
        %v5923 = vsub.f32 %v739, %v5922
        %5924 = vmatpush2.msra.mxu0 %v5923
        %v5925 = vand.u32 %v736, 4294901760
        %v5926 = vsub.f32 %v736, %v5925
        %5927 = vmatprep.subr.mxu0 %v5926
        %v5928 = vand.u32 %v735, 4294901760
        %v5929 = vsub.f32 %v735, %v5928
        %5930 = vmatpush2.msra.mxu0 %v5929
        %v5931 = vand.u32 %v732, 4294901760
        %v5932 = vsub.f32 %v732, %v5931
        %5933 = vmatprep.subr.mxu0 %v5932
        %v5934 = vand.u32 %v731, 4294901760
        %v5935 = vsub.f32 %v731, %v5934
        %5936 = vmatpush2.msra.mxu0 %v5935
        %v5937 = vand.u32 %v728, 4294901760
        %v5938 = vsub.f32 %v728, %v5937
        %5939 = vmatprep.subr.mxu0 %v5938
        %v5940 = vand.u32 %v727, 4294901760
        %v5941 = vsub.f32 %v727, %v5940
        %5942 = vmatpush2.msra.mxu0 %v5941
        %v5943 = vand.u32 %v724, 4294901760
        %v5944 = vsub.f32 %v724, %v5943
        %5945 = vmatprep.subr.mxu0 %v5944
        %v5946 = vand.u32 %v723, 4294901760
        %v5947 = vsub.f32 %v723, %v5946
        %5948 = vmatpush2.msra.mxu0 %v5947
        %v5949 = vand.u32 %v720, 4294901760
        %v5950 = vsub.f32 %v720, %v5949
        %5951 = vmatprep.subr.mxu0 %v5950
        %v5952 = vand.u32 %v719, 4294901760
        %v5953 = vsub.f32 %v719, %v5952
        %5954 = vmatpush2.msra.mxu0 %v5953
        %v5955 = vand.u32 %v716, 4294901760
        %v5956 = vsub.f32 %v716, %v5955
        %5957 = vmatprep.subr.mxu0 %v5956
        %v5958 = vand.u32 %v715, 4294901760
        %v5959 = vsub.f32 %v715, %v5958
        %5960 = vmatpush2.msra.mxu0 %v5959
        %v5961 = vand.u32 %v712, 4294901760
        %v5962 = vsub.f32 %v712, %v5961
        %5963 = vmatprep.subr.mxu0 %v5962
        %v5964 = vand.u32 %v711, 4294901760
        %v5965 = vsub.f32 %v711, %v5964
        %5966 = vmatpush2.msra.mxu0 %v5965
        %v5967 = vand.u32 %v708, 4294901760
        %v5968 = vsub.f32 %v708, %v5967
        %5969 = vmatprep.subr.mxu0 %v5968
        %v5970 = vand.u32 %v707, 4294901760
        %v5971 = vsub.f32 %v707, %v5970
        %5972 = vmatpush2.msra.mxu0 %v5971
        %v5973 = vand.u32 %v704, 4294901760
        %v5974 = vsub.f32 %v704, %v5973
        %5975 = vmatprep.subr.mxu0 %v5974
        %v5976 = vand.u32 %v703, 4294901760
        %v5977 = vsub.f32 %v703, %v5976
        %5978 = vmatpush2.msra.mxu0 %v5977
        %v5979 = vand.u32 %v700, 4294901760
        %v5980 = vsub.f32 %v700, %v5979
        %5981 = vmatprep.subr.mxu0 %v5980
        %v5982 = vand.u32 %v699, 4294901760
        %v5983 = vsub.f32 %v699, %v5982
        %5984 = vmatpush2.msra.mxu0 %v5983
        %v5985 = vand.u32 %v696, 4294901760
        %v5986 = vsub.f32 %v696, %v5985
        %5987 = vmatprep.subr.mxu0 %v5986
        %v5988 = vand.u32 %v695, 4294901760
        %v5989 = vsub.f32 %v695, %v5988
        %5990 = vmatpush2.msra.mxu0 %v5989
        %v5991 = vand.u32 %v692, 4294901760
        %v5992 = vsub.f32 %v692, %v5991
        %5993 = vmatprep.subr.mxu0 %v5992
        %v5994 = vand.u32 %v691, 4294901760
        %v5995 = vsub.f32 %v691, %v5994
        %5996 = vmatpush2.msra.mxu0 %v5995
        %v5997 = vand.u32 %v688, 4294901760
        %v5998 = vsub.f32 %v688, %v5997
        %5999 = vmatprep.subr.mxu0 %v5998
        %v6000 = vand.u32 %v687, 4294901760
        %v6001 = vsub.f32 %v687, %v6000
        %6002 = vmatpush2.msra.mxu0 %v6001
        %v6003 = vand.u32 %v684, 4294901760
        %v6004 = vsub.f32 %v684, %v6003
        %6005 = vmatprep.subr.mxu0 %v6004
        %v6006 = vand.u32 %v683, 4294901760
        %v6007 = vsub.f32 %v683, %v6006
        %6008 = vmatpush2.msra.mxu0 %v6007
        %v6009 = vand.u32 %v680, 4294901760
        %v6010 = vsub.f32 %v680, %v6009
        %6011 = vmatprep.subr.mxu0 %v6010
        %v6012 = vand.u32 %v679, 4294901760
        %v6013 = vsub.f32 %v679, %v6012
        %6014 = vmatpush2.msra.mxu0 %v6013
        %v6015 = vand.u32 %v326, 4294901760
        %v6016 = vsub.f32 %v326, %v6015
        %6017 = vmatprep.mubr.f32.mxu0 %v6016
        %v6018 = vand.u32 %v325, 4294901760
        %v6019 = vsub.f32 %v325, %v6018
        %6020 = vmatmul.mubr.f32.gmra.mxu0 %v6019
        %v6021 = vpop.f32.mrf.mxu0
        %v6022 = vadd.f32 %v5699, %v6021
        %v6023 = vpop.f32.mrf.mxu0
        %v6024 = vadd.f32 %v5701, %v6023
        %v6025 = vand.u32 %v330, 4294901760
        %v6026 = vsub.f32 %v330, %v6025
        %6027 = vmatprep.mubr.f32.mxu0 %v6026
        %v6028 = vand.u32 %v329, 4294901760
        %v6029 = vsub.f32 %v329, %v6028
        %6030 = vmatmul.mubr.f32.gmra.mxu0 %v6029
        %v6031 = vpop.f32.mrf.mxu0
        %v6032 = vadd.f32 %v5707, %v6031
        %v6033 = vpop.f32.mrf.mxu0
        %v6034 = vadd.f32 %v5709, %v6033
        %v6035 = vand.u32 %v334, 4294901760
        %v6036 = vsub.f32 %v334, %v6035
        %6037 = vmatprep.mubr.f32.mxu0 %v6036
        %v6038 = vand.u32 %v333, 4294901760
        %v6039 = vsub.f32 %v333, %v6038
        %6040 = vmatmul.mubr.f32.gmra.mxu0 %v6039
        %v6041 = vpop.f32.mrf.mxu0
        %v6042 = vadd.f32 %v5715, %v6041
        %v6043 = vpop.f32.mrf.mxu0
        %v6044 = vadd.f32 %v5717, %v6043
        %v6045 = vand.u32 %v338, 4294901760
        %v6046 = vsub.f32 %v338, %v6045
        %6047 = vmatprep.mubr.f32.mxu0 %v6046
        %v6048 = vand.u32 %v337, 4294901760
        %v6049 = vsub.f32 %v337, %v6048
        %6050 = vmatmul.mubr.f32.gmra.mxu0 %v6049
        %v6051 = vpop.f32.mrf.mxu0
        %v6052 = vadd.f32 %v5723, %v6051
        %v6053 = vpop.f32.mrf.mxu0
        %v6054 = vadd.f32 %v5725, %v6053
        %v6055 = vand.u32 %v342, 4294901760
        %v6056 = vsub.f32 %v342, %v6055
        %6057 = vmatprep.mubr.f32.mxu0 %v6056
        %v6058 = vand.u32 %v341, 4294901760
        %v6059 = vsub.f32 %v341, %v6058
        %6060 = vmatmul.mubr.f32.gmra.mxu0 %v6059
        %v6061 = vpop.f32.mrf.mxu0
        %v6062 = vadd.f32 %v5731, %v6061
        %v6063 = vpop.f32.mrf.mxu0
        %v6064 = vadd.f32 %v5733, %v6063
        %v6065 = vand.u32 %v346, 4294901760
        %v6066 = vsub.f32 %v346, %v6065
        %6067 = vmatprep.mubr.f32.mxu0 %v6066
        %v6068 = vand.u32 %v345, 4294901760
        %v6069 = vsub.f32 %v345, %v6068
        %6070 = vmatmul.mubr.f32.gmra.mxu0 %v6069
        %v6071 = vpop.f32.mrf.mxu0
        %v6072 = vadd.f32 %v5739, %v6071
        %v6073 = vpop.f32.mrf.mxu0
        %v6074 = vadd.f32 %v5741, %v6073
        %v6075 = vand.u32 %v350, 4294901760
        %v6076 = vsub.f32 %v350, %v6075
        %6077 = vmatprep.mubr.f32.mxu0 %v6076
        %v6078 = vand.u32 %v349, 4294901760
        %v6079 = vsub.f32 %v349, %v6078
        %6080 = vmatmul.mubr.f32.gmra.mxu0 %v6079
        %v6081 = vpop.f32.mrf.mxu0
        %v6082 = vadd.f32 %v5747, %v6081
        %v6083 = vpop.f32.mrf.mxu0
        %v6084 = vadd.f32 %v5749, %v6083
        %v6085 = vand.u32 %v354, 4294901760
        %v6086 = vsub.f32 %v354, %v6085
        %6087 = vmatprep.mubr.f32.mxu0 %v6086
        %v6088 = vand.u32 %v353, 4294901760
        %v6089 = vsub.f32 %v353, %v6088
        %6090 = vmatmul.mubr.f32.gmra.mxu0 %v6089
        %v6091 = vpop.f32.mrf.mxu0
        %v6092 = vadd.f32 %v5755, %v6091
        %v6093 = vpop.f32.mrf.mxu0
        %v6094 = vadd.f32 %v5757, %v6093
        %v6095 = vand.u32 %v358, 4294901760
        %v6096 = vsub.f32 %v358, %v6095
        %6097 = vmatprep.mubr.f32.mxu0 %v6096
        %v6098 = vand.u32 %v357, 4294901760
        %v6099 = vsub.f32 %v357, %v6098
        %6100 = vmatmul.mubr.f32.gmra.mxu0 %v6099
        %v6101 = vpop.f32.mrf.mxu0
        %v6102 = vadd.f32 %v5763, %v6101
        %v6103 = vpop.f32.mrf.mxu0
        %v6104 = vadd.f32 %v5765, %v6103
        %v6105 = vand.u32 %v362, 4294901760
        %v6106 = vsub.f32 %v362, %v6105
        %6107 = vmatprep.mubr.f32.mxu0 %v6106
        %v6108 = vand.u32 %v361, 4294901760
        %v6109 = vsub.f32 %v361, %v6108
        %6110 = vmatmul.mubr.f32.gmra.mxu0 %v6109
        %v6111 = vpop.f32.mrf.mxu0
        %v6112 = vadd.f32 %v5771, %v6111
        %v6113 = vpop.f32.mrf.mxu0
        %v6114 = vadd.f32 %v5773, %v6113
        %v6115 = vand.u32 %v366, 4294901760
        %v6116 = vsub.f32 %v366, %v6115
        %6117 = vmatprep.mubr.f32.mxu0 %v6116
        %v6118 = vand.u32 %v365, 4294901760
        %v6119 = vsub.f32 %v365, %v6118
        %6120 = vmatmul.mubr.f32.gmra.mxu0 %v6119
        %v6121 = vpop.f32.mrf.mxu0
        %v6122 = vadd.f32 %v5779, %v6121
        %v6123 = vpop.f32.mrf.mxu0
        %v6124 = vadd.f32 %v5781, %v6123
        %v6125 = vand.u32 %v370, 4294901760
        %v6126 = vsub.f32 %v370, %v6125
        %6127 = vmatprep.mubr.f32.mxu0 %v6126
        %v6128 = vand.u32 %v369, 4294901760
        %v6129 = vsub.f32 %v369, %v6128
        %6130 = vmatmul.mubr.f32.gmra.mxu0 %v6129
        %v6131 = vpop.f32.mrf.mxu0
        %v6132 = vadd.f32 %v5787, %v6131
        %v6133 = vpop.f32.mrf.mxu0
        %v6134 = vadd.f32 %v5789, %v6133
        %v6135 = vand.u32 %v374, 4294901760
        %v6136 = vsub.f32 %v374, %v6135
        %6137 = vmatprep.mubr.f32.mxu0 %v6136
        %v6138 = vand.u32 %v373, 4294901760
        %v6139 = vsub.f32 %v373, %v6138
        %6140 = vmatmul.mubr.f32.gmra.mxu0 %v6139
        %v6141 = vpop.f32.mrf.mxu0
        %v6142 = vadd.f32 %v5795, %v6141
        %v6143 = vpop.f32.mrf.mxu0
        %v6144 = vadd.f32 %v5797, %v6143
        %v6145 = vand.u32 %v378, 4294901760
        %v6146 = vsub.f32 %v378, %v6145
        %6147 = vmatprep.mubr.f32.mxu0 %v6146
        %v6148 = vand.u32 %v377, 4294901760
        %v6149 = vsub.f32 %v377, %v6148
        %6150 = vmatmul.mubr.f32.gmra.mxu0 %v6149
        %v6151 = vpop.f32.mrf.mxu0
        %v6152 = vadd.f32 %v5803, %v6151
        %v6153 = vpop.f32.mrf.mxu0
        %v6154 = vadd.f32 %v5805, %v6153
        %v6155 = vand.u32 %v382, 4294901760
        %v6156 = vsub.f32 %v382, %v6155
        %6157 = vmatprep.mubr.f32.mxu0 %v6156
        %v6158 = vand.u32 %v381, 4294901760
        %v6159 = vsub.f32 %v381, %v6158
        %6160 = vmatmul.mubr.f32.gmra.mxu0 %v6159
        %v6161 = vpop.f32.mrf.mxu0
        %v6162 = vadd.f32 %v5811, %v6161
        %v6163 = vpop.f32.mrf.mxu0
        %v6164 = vadd.f32 %v5813, %v6163
        %v6165 = vand.u32 %v386, 4294901760
        %v6166 = vsub.f32 %v386, %v6165
        %6167 = vmatprep.mubr.f32.mxu0 %v6166
        %v6168 = vand.u32 %v385, 4294901760
        %v6169 = vsub.f32 %v385, %v6168
        %6170 = vmatmul.mubr.f32.gmra.mxu0 %v6169
        %v6171 = vpop.f32.mrf.mxu0
        %v6172 = vadd.f32 %v5819, %v6171
        %v6173 = vpop.f32.mrf.mxu0
        %v6174 = vadd.f32 %v5821, %v6173
        %6175 = vdwg.mxu0
        %v6176 = vand.u32 %v676, 4294901760
        %6177 = vmatprep.subr.mxu0 %v6176
        %v6178 = vand.u32 %v675, 4294901760
        %6179 = vmatpush1.msra.mxu0 %v6178
        %v6180 = vand.u32 %v672, 4294901760
        %6181 = vmatprep.subr.mxu0 %v6180
        %v6182 = vand.u32 %v671, 4294901760
        %6183 = vmatpush1.msra.mxu0 %v6182
        %v6184 = vand.u32 %v668, 4294901760
        %6185 = vmatprep.subr.mxu0 %v6184
        %v6186 = vand.u32 %v667, 4294901760
        %6187 = vmatpush1.msra.mxu0 %v6186
        %v6188 = vand.u32 %v664, 4294901760
        %6189 = vmatprep.subr.mxu0 %v6188
        %v6190 = vand.u32 %v663, 4294901760
        %6191 = vmatpush1.msra.mxu0 %v6190
        %v6192 = vand.u32 %v660, 4294901760
        %6193 = vmatprep.subr.mxu0 %v6192
        %v6194 = vand.u32 %v659, 4294901760
        %6195 = vmatpush1.msra.mxu0 %v6194
        %v6196 = vand.u32 %v656, 4294901760
        %6197 = vmatprep.subr.mxu0 %v6196
        %v6198 = vand.u32 %v655, 4294901760
        %6199 = vmatpush1.msra.mxu0 %v6198
        %v6200 = vand.u32 %v652, 4294901760
        %6201 = vmatprep.subr.mxu0 %v6200
        %v6202 = vand.u32 %v651, 4294901760
        %6203 = vmatpush1.msra.mxu0 %v6202
        %v6204 = vand.u32 %v648, 4294901760
        %6205 = vmatprep.subr.mxu0 %v6204
        %v6206 = vand.u32 %v647, 4294901760
        %6207 = vmatpush1.msra.mxu0 %v6206
        %v6208 = vand.u32 %v644, 4294901760
        %6209 = vmatprep.subr.mxu0 %v6208
        %v6210 = vand.u32 %v643, 4294901760
        %6211 = vmatpush1.msra.mxu0 %v6210
        %v6212 = vand.u32 %v640, 4294901760
        %6213 = vmatprep.subr.mxu0 %v6212
        %v6214 = vand.u32 %v639, 4294901760
        %6215 = vmatpush1.msra.mxu0 %v6214
        %v6216 = vand.u32 %v636, 4294901760
        %6217 = vmatprep.subr.mxu0 %v6216
        %v6218 = vand.u32 %v635, 4294901760
        %6219 = vmatpush1.msra.mxu0 %v6218
        %v6220 = vand.u32 %v632, 4294901760
        %6221 = vmatprep.subr.mxu0 %v6220
        %v6222 = vand.u32 %v631, 4294901760
        %6223 = vmatpush1.msra.mxu0 %v6222
        %v6224 = vand.u32 %v628, 4294901760
        %6225 = vmatprep.subr.mxu0 %v6224
        %v6226 = vand.u32 %v627, 4294901760
        %6227 = vmatpush1.msra.mxu0 %v6226
        %v6228 = vand.u32 %v624, 4294901760
        %6229 = vmatprep.subr.mxu0 %v6228
        %v6230 = vand.u32 %v623, 4294901760
        %6231 = vmatpush1.msra.mxu0 %v6230
        %v6232 = vand.u32 %v620, 4294901760
        %6233 = vmatprep.subr.mxu0 %v6232
        %v6234 = vand.u32 %v619, 4294901760
        %6235 = vmatpush1.msra.mxu0 %v6234
        %v6236 = vand.u32 %v616, 4294901760
        %6237 = vmatprep.subr.mxu0 %v6236
        %v6238 = vand.u32 %v615, 4294901760
        %6239 = vmatpush1.msra.mxu0 %v6238
        %v6240 = vand.u32 %v740, 4294901760
        %6241 = vmatprep.subr.mxu0 %v6240
        %v6242 = vand.u32 %v739, 4294901760
        %6243 = vmatpush2.msra.mxu0 %v6242
        %v6244 = vand.u32 %v736, 4294901760
        %6245 = vmatprep.subr.mxu0 %v6244
        %v6246 = vand.u32 %v735, 4294901760
        %6247 = vmatpush2.msra.mxu0 %v6246
        %v6248 = vand.u32 %v732, 4294901760
        %6249 = vmatprep.subr.mxu0 %v6248
        %v6250 = vand.u32 %v731, 4294901760
        %6251 = vmatpush2.msra.mxu0 %v6250
        %v6252 = vand.u32 %v728, 4294901760
        %6253 = vmatprep.subr.mxu0 %v6252
        %v6254 = vand.u32 %v727, 4294901760
        %6255 = vmatpush2.msra.mxu0 %v6254
        %v6256 = vand.u32 %v724, 4294901760
        %6257 = vmatprep.subr.mxu0 %v6256
        %v6258 = vand.u32 %v723, 4294901760
        %6259 = vmatpush2.msra.mxu0 %v6258
        %v6260 = vand.u32 %v720, 4294901760
        %6261 = vmatprep.subr.mxu0 %v6260
        %v6262 = vand.u32 %v719, 4294901760
        %6263 = vmatpush2.msra.mxu0 %v6262
        %v6264 = vand.u32 %v716, 4294901760
        %6265 = vmatprep.subr.mxu0 %v6264
        %v6266 = vand.u32 %v715, 4294901760
        %6267 = vmatpush2.msra.mxu0 %v6266
        %v6268 = vand.u32 %v712, 4294901760
        %6269 = vmatprep.subr.mxu0 %v6268
        %v6270 = vand.u32 %v711, 4294901760
        %6271 = vmatpush2.msra.mxu0 %v6270
        %v6272 = vand.u32 %v708, 4294901760
        %6273 = vmatprep.subr.mxu0 %v6272
        %v6274 = vand.u32 %v707, 4294901760
        %6275 = vmatpush2.msra.mxu0 %v6274
        %v6276 = vand.u32 %v704, 4294901760
        %6277 = vmatprep.subr.mxu0 %v6276
        %v6278 = vand.u32 %v703, 4294901760
        %6279 = vmatpush2.msra.mxu0 %v6278
        %v6280 = vand.u32 %v700, 4294901760
        %6281 = vmatprep.subr.mxu0 %v6280
        %v6282 = vand.u32 %v699, 4294901760
        %6283 = vmatpush2.msra.mxu0 %v6282
        %v6284 = vand.u32 %v696, 4294901760
        %6285 = vmatprep.subr.mxu0 %v6284
        %v6286 = vand.u32 %v695, 4294901760
        %6287 = vmatpush2.msra.mxu0 %v6286
        %v6288 = vand.u32 %v692, 4294901760
        %6289 = vmatprep.subr.mxu0 %v6288
        %v6290 = vand.u32 %v691, 4294901760
        %6291 = vmatpush2.msra.mxu0 %v6290
        %v6292 = vand.u32 %v688, 4294901760
        %6293 = vmatprep.subr.mxu0 %v6292
        %v6294 = vand.u32 %v687, 4294901760
        %6295 = vmatpush2.msra.mxu0 %v6294
        %v6296 = vand.u32 %v684, 4294901760
        %6297 = vmatprep.subr.mxu0 %v6296
        %v6298 = vand.u32 %v683, 4294901760
        %6299 = vmatpush2.msra.mxu0 %v6298
        %v6300 = vand.u32 %v680, 4294901760
        %6301 = vmatprep.subr.mxu0 %v6300
        %v6302 = vand.u32 %v679, 4294901760
        %6303 = vmatpush2.msra.mxu0 %v6302
        %v6304 = vand.u32 %v326, 4294901760
        %v6305 = vsub.f32 %v326, %v6304
        %v6306 = vand.u32 %v6305, 4294901760
        %6307 = vmatprep.mubr.f32.mxu0 %v6306
        %v6308 = vand.u32 %v325, 4294901760
        %v6309 = vsub.f32 %v325, %v6308
        %v6310 = vand.u32 %v6309, 4294901760
        %6311 = vmatmul.mubr.f32.gmra.mxu0 %v6310
        %v6312 = vpop.f32.mrf.mxu0
        %v6313 = vadd.f32 %v6022, %v6312
        %v6314 = vpop.f32.mrf.mxu0
        %v6315 = vadd.f32 %v6024, %v6314
        %v6316 = vand.u32 %v330, 4294901760
        %v6317 = vsub.f32 %v330, %v6316
        %v6318 = vand.u32 %v6317, 4294901760
        %6319 = vmatprep.mubr.f32.mxu0 %v6318
        %v6320 = vand.u32 %v329, 4294901760
        %v6321 = vsub.f32 %v329, %v6320
        %v6322 = vand.u32 %v6321, 4294901760
        %6323 = vmatmul.mubr.f32.gmra.mxu0 %v6322
        %v6324 = vpop.f32.mrf.mxu0
        %v6325 = vadd.f32 %v6032, %v6324
        %v6326 = vpop.f32.mrf.mxu0
        %v6327 = vadd.f32 %v6034, %v6326
        %v6328 = vand.u32 %v334, 4294901760
        %v6329 = vsub.f32 %v334, %v6328
        %v6330 = vand.u32 %v6329, 4294901760
        %6331 = vmatprep.mubr.f32.mxu0 %v6330
        %v6332 = vand.u32 %v333, 4294901760
        %v6333 = vsub.f32 %v333, %v6332
        %v6334 = vand.u32 %v6333, 4294901760
        %6335 = vmatmul.mubr.f32.gmra.mxu0 %v6334
        %v6336 = vpop.f32.mrf.mxu0
        %v6337 = vadd.f32 %v6042, %v6336
        %v6338 = vpop.f32.mrf.mxu0
        %v6339 = vadd.f32 %v6044, %v6338
        %v6340 = vand.u32 %v338, 4294901760
        %v6341 = vsub.f32 %v338, %v6340
        %v6342 = vand.u32 %v6341, 4294901760
        %6343 = vmatprep.mubr.f32.mxu0 %v6342
        %v6344 = vand.u32 %v337, 4294901760
        %v6345 = vsub.f32 %v337, %v6344
        %v6346 = vand.u32 %v6345, 4294901760
        %6347 = vmatmul.mubr.f32.gmra.mxu0 %v6346
        %v6348 = vpop.f32.mrf.mxu0
        %v6349 = vadd.f32 %v6052, %v6348
        %v6350 = vpop.f32.mrf.mxu0
        %v6351 = vadd.f32 %v6054, %v6350
        %v6352 = vand.u32 %v342, 4294901760
        %v6353 = vsub.f32 %v342, %v6352
        %v6354 = vand.u32 %v6353, 4294901760
        %6355 = vmatprep.mubr.f32.mxu0 %v6354
        %v6356 = vand.u32 %v341, 4294901760
        %v6357 = vsub.f32 %v341, %v6356
        %v6358 = vand.u32 %v6357, 4294901760
        %6359 = vmatmul.mubr.f32.gmra.mxu0 %v6358
        %v6360 = vpop.f32.mrf.mxu0
        %v6361 = vadd.f32 %v6062, %v6360
        %v6362 = vpop.f32.mrf.mxu0
        %v6363 = vadd.f32 %v6064, %v6362
        %v6364 = vand.u32 %v346, 4294901760
        %v6365 = vsub.f32 %v346, %v6364
        %v6366 = vand.u32 %v6365, 4294901760
        %6367 = vmatprep.mubr.f32.mxu0 %v6366
        %v6368 = vand.u32 %v345, 4294901760
        %v6369 = vsub.f32 %v345, %v6368
        %v6370 = vand.u32 %v6369, 4294901760
        %6371 = vmatmul.mubr.f32.gmra.mxu0 %v6370
        %v6372 = vpop.f32.mrf.mxu0
        %v6373 = vadd.f32 %v6072, %v6372
        %v6374 = vpop.f32.mrf.mxu0
        %v6375 = vadd.f32 %v6074, %v6374
        %v6376 = vand.u32 %v350, 4294901760
        %v6377 = vsub.f32 %v350, %v6376
        %v6378 = vand.u32 %v6377, 4294901760
        %6379 = vmatprep.mubr.f32.mxu0 %v6378
        %v6380 = vand.u32 %v349, 4294901760
        %v6381 = vsub.f32 %v349, %v6380
        %v6382 = vand.u32 %v6381, 4294901760
        %6383 = vmatmul.mubr.f32.gmra.mxu0 %v6382
        %v6384 = vpop.f32.mrf.mxu0
        %v6385 = vadd.f32 %v6082, %v6384
        %v6386 = vpop.f32.mrf.mxu0
        %v6387 = vadd.f32 %v6084, %v6386
        %v6388 = vand.u32 %v354, 4294901760
        %v6389 = vsub.f32 %v354, %v6388
        %v6390 = vand.u32 %v6389, 4294901760
        %6391 = vmatprep.mubr.f32.mxu0 %v6390
        %v6392 = vand.u32 %v353, 4294901760
        %v6393 = vsub.f32 %v353, %v6392
        %v6394 = vand.u32 %v6393, 4294901760
        %6395 = vmatmul.mubr.f32.gmra.mxu0 %v6394
        %v6396 = vpop.f32.mrf.mxu0
        %v6397 = vadd.f32 %v6092, %v6396
        %v6398 = vpop.f32.mrf.mxu0
        %v6399 = vadd.f32 %v6094, %v6398
        %v6400 = vand.u32 %v358, 4294901760
        %v6401 = vsub.f32 %v358, %v6400
        %v6402 = vand.u32 %v6401, 4294901760
        %6403 = vmatprep.mubr.f32.mxu0 %v6402
        %v6404 = vand.u32 %v357, 4294901760
        %v6405 = vsub.f32 %v357, %v6404
        %v6406 = vand.u32 %v6405, 4294901760
        %6407 = vmatmul.mubr.f32.gmra.mxu0 %v6406
        %v6408 = vpop.f32.mrf.mxu0
        %v6409 = vadd.f32 %v6102, %v6408
        %v6410 = vpop.f32.mrf.mxu0
        %v6411 = vadd.f32 %v6104, %v6410
        %v6412 = vand.u32 %v362, 4294901760
        %v6413 = vsub.f32 %v362, %v6412
        %v6414 = vand.u32 %v6413, 4294901760
        %6415 = vmatprep.mubr.f32.mxu0 %v6414
        %v6416 = vand.u32 %v361, 4294901760
        %v6417 = vsub.f32 %v361, %v6416
        %v6418 = vand.u32 %v6417, 4294901760
        %6419 = vmatmul.mubr.f32.gmra.mxu0 %v6418
        %v6420 = vpop.f32.mrf.mxu0
        %v6421 = vadd.f32 %v6112, %v6420
        %v6422 = vpop.f32.mrf.mxu0
        %v6423 = vadd.f32 %v6114, %v6422
        %v6424 = vand.u32 %v366, 4294901760
        %v6425 = vsub.f32 %v366, %v6424
        %v6426 = vand.u32 %v6425, 4294901760
        %6427 = vmatprep.mubr.f32.mxu0 %v6426
        %v6428 = vand.u32 %v365, 4294901760
        %v6429 = vsub.f32 %v365, %v6428
        %v6430 = vand.u32 %v6429, 4294901760
        %6431 = vmatmul.mubr.f32.gmra.mxu0 %v6430
        %v6432 = vpop.f32.mrf.mxu0
        %v6433 = vadd.f32 %v6122, %v6432
        %v6434 = vpop.f32.mrf.mxu0
        %v6435 = vadd.f32 %v6124, %v6434
        %v6436 = vand.u32 %v370, 4294901760
        %v6437 = vsub.f32 %v370, %v6436
        %v6438 = vand.u32 %v6437, 4294901760
        %6439 = vmatprep.mubr.f32.mxu0 %v6438
        %v6440 = vand.u32 %v369, 4294901760
        %v6441 = vsub.f32 %v369, %v6440
        %v6442 = vand.u32 %v6441, 4294901760
        %6443 = vmatmul.mubr.f32.gmra.mxu0 %v6442
        %v6444 = vpop.f32.mrf.mxu0
        %v6445 = vadd.f32 %v6132, %v6444
        %v6446 = vpop.f32.mrf.mxu0
        %v6447 = vadd.f32 %v6134, %v6446
        %v6448 = vand.u32 %v374, 4294901760
        %v6449 = vsub.f32 %v374, %v6448
        %v6450 = vand.u32 %v6449, 4294901760
        %6451 = vmatprep.mubr.f32.mxu0 %v6450
        %v6452 = vand.u32 %v373, 4294901760
        %v6453 = vsub.f32 %v373, %v6452
        %v6454 = vand.u32 %v6453, 4294901760
        %6455 = vmatmul.mubr.f32.gmra.mxu0 %v6454
        %v6456 = vpop.f32.mrf.mxu0
        %v6457 = vadd.f32 %v6142, %v6456
        %v6458 = vpop.f32.mrf.mxu0
        %v6459 = vadd.f32 %v6144, %v6458
        %v6460 = vand.u32 %v378, 4294901760
        %v6461 = vsub.f32 %v378, %v6460
        %v6462 = vand.u32 %v6461, 4294901760
        %6463 = vmatprep.mubr.f32.mxu0 %v6462
        %v6464 = vand.u32 %v377, 4294901760
        %v6465 = vsub.f32 %v377, %v6464
        %v6466 = vand.u32 %v6465, 4294901760
        %6467 = vmatmul.mubr.f32.gmra.mxu0 %v6466
        %v6468 = vpop.f32.mrf.mxu0
        %v6469 = vadd.f32 %v6152, %v6468
        %v6470 = vpop.f32.mrf.mxu0
        %v6471 = vadd.f32 %v6154, %v6470
        %v6472 = vand.u32 %v382, 4294901760
        %v6473 = vsub.f32 %v382, %v6472
        %v6474 = vand.u32 %v6473, 4294901760
        %6475 = vmatprep.mubr.f32.mxu0 %v6474
        %v6476 = vand.u32 %v381, 4294901760
        %v6477 = vsub.f32 %v381, %v6476
        %v6478 = vand.u32 %v6477, 4294901760
        %6479 = vmatmul.mubr.f32.gmra.mxu0 %v6478
        %v6480 = vpop.f32.mrf.mxu0
        %v6481 = vadd.f32 %v6162, %v6480
        %v6482 = vpop.f32.mrf.mxu0
        %v6483 = vadd.f32 %v6164, %v6482
        %v6484 = vand.u32 %v386, 4294901760
        %v6485 = vsub.f32 %v386, %v6484
        %v6486 = vand.u32 %v6485, 4294901760
        %6487 = vmatprep.mubr.f32.mxu0 %v6486
        %v6488 = vand.u32 %v385, 4294901760
        %v6489 = vsub.f32 %v385, %v6488
        %v6490 = vand.u32 %v6489, 4294901760
        %6491 = vmatmul.mubr.f32.gmra.mxu0 %v6490
        %v6492 = vpop.f32.mrf.mxu0
        %v6493 = vadd.f32 %v6172, %v6492
        %v6494 = vpop.f32.mrf.mxu0
        %v6495 = vadd.f32 %v6174, %v6494
        %6496 = vdwg.mxu0
        %v6497 = vand.u32 %v676, 4294901760
        %v6498 = vsub.f32 %v676, %v6497
        %v6499 = vand.u32 %v6498, 4294901760
        %6500 = vmatprep.subr.mxu0 %v6499
        %v6501 = vand.u32 %v675, 4294901760
        %v6502 = vsub.f32 %v675, %v6501
        %v6503 = vand.u32 %v6502, 4294901760
        %6504 = vmatpush1.msra.mxu0 %v6503
        %v6505 = vand.u32 %v672, 4294901760
        %v6506 = vsub.f32 %v672, %v6505
        %v6507 = vand.u32 %v6506, 4294901760
        %6508 = vmatprep.subr.mxu0 %v6507
        %v6509 = vand.u32 %v671, 4294901760
        %v6510 = vsub.f32 %v671, %v6509
        %v6511 = vand.u32 %v6510, 4294901760
        %6512 = vmatpush1.msra.mxu0 %v6511
        %v6513 = vand.u32 %v668, 4294901760
        %v6514 = vsub.f32 %v668, %v6513
        %v6515 = vand.u32 %v6514, 4294901760
        %6516 = vmatprep.subr.mxu0 %v6515
        %v6517 = vand.u32 %v667, 4294901760
        %v6518 = vsub.f32 %v667, %v6517
        %v6519 = vand.u32 %v6518, 4294901760
        %6520 = vmatpush1.msra.mxu0 %v6519
        %v6521 = vand.u32 %v664, 4294901760
        %v6522 = vsub.f32 %v664, %v6521
        %v6523 = vand.u32 %v6522, 4294901760
        %6524 = vmatprep.subr.mxu0 %v6523
        %v6525 = vand.u32 %v663, 4294901760
        %v6526 = vsub.f32 %v663, %v6525
        %v6527 = vand.u32 %v6526, 4294901760
        %6528 = vmatpush1.msra.mxu0 %v6527
        %v6529 = vand.u32 %v660, 4294901760
        %v6530 = vsub.f32 %v660, %v6529
        %v6531 = vand.u32 %v6530, 4294901760
        %6532 = vmatprep.subr.mxu0 %v6531
        %v6533 = vand.u32 %v659, 4294901760
        %v6534 = vsub.f32 %v659, %v6533
        %v6535 = vand.u32 %v6534, 4294901760
        %6536 = vmatpush1.msra.mxu0 %v6535
        %v6537 = vand.u32 %v656, 4294901760
        %v6538 = vsub.f32 %v656, %v6537
        %v6539 = vand.u32 %v6538, 4294901760
        %6540 = vmatprep.subr.mxu0 %v6539
        %v6541 = vand.u32 %v655, 4294901760
        %v6542 = vsub.f32 %v655, %v6541
        %v6543 = vand.u32 %v6542, 4294901760
        %6544 = vmatpush1.msra.mxu0 %v6543
        %v6545 = vand.u32 %v652, 4294901760
        %v6546 = vsub.f32 %v652, %v6545
        %v6547 = vand.u32 %v6546, 4294901760
        %6548 = vmatprep.subr.mxu0 %v6547
        %v6549 = vand.u32 %v651, 4294901760
        %v6550 = vsub.f32 %v651, %v6549
        %v6551 = vand.u32 %v6550, 4294901760
        %6552 = vmatpush1.msra.mxu0 %v6551
        %v6553 = vand.u32 %v648, 4294901760
        %v6554 = vsub.f32 %v648, %v6553
        %v6555 = vand.u32 %v6554, 4294901760
        %6556 = vmatprep.subr.mxu0 %v6555
        %v6557 = vand.u32 %v647, 4294901760
        %v6558 = vsub.f32 %v647, %v6557
        %v6559 = vand.u32 %v6558, 4294901760
        %6560 = vmatpush1.msra.mxu0 %v6559
        %v6561 = vand.u32 %v644, 4294901760
        %v6562 = vsub.f32 %v644, %v6561
        %v6563 = vand.u32 %v6562, 4294901760
        %6564 = vmatprep.subr.mxu0 %v6563
        %v6565 = vand.u32 %v643, 4294901760
        %v6566 = vsub.f32 %v643, %v6565
        %v6567 = vand.u32 %v6566, 4294901760
        %6568 = vmatpush1.msra.mxu0 %v6567
        %v6569 = vand.u32 %v640, 4294901760
        %v6570 = vsub.f32 %v640, %v6569
        %v6571 = vand.u32 %v6570, 4294901760
        %6572 = vmatprep.subr.mxu0 %v6571
        %v6573 = vand.u32 %v639, 4294901760
        %v6574 = vsub.f32 %v639, %v6573
        %v6575 = vand.u32 %v6574, 4294901760
        %6576 = vmatpush1.msra.mxu0 %v6575
        %v6577 = vand.u32 %v636, 4294901760
        %v6578 = vsub.f32 %v636, %v6577
        %v6579 = vand.u32 %v6578, 4294901760
        %6580 = vmatprep.subr.mxu0 %v6579
        %v6581 = vand.u32 %v635, 4294901760
        %v6582 = vsub.f32 %v635, %v6581
        %v6583 = vand.u32 %v6582, 4294901760
        %6584 = vmatpush1.msra.mxu0 %v6583
        %v6585 = vand.u32 %v632, 4294901760
        %v6586 = vsub.f32 %v632, %v6585
        %v6587 = vand.u32 %v6586, 4294901760
        %6588 = vmatprep.subr.mxu0 %v6587
        %v6589 = vand.u32 %v631, 4294901760
        %v6590 = vsub.f32 %v631, %v6589
        %v6591 = vand.u32 %v6590, 4294901760
        %6592 = vmatpush1.msra.mxu0 %v6591
        %v6593 = vand.u32 %v628, 4294901760
        %v6594 = vsub.f32 %v628, %v6593
        %v6595 = vand.u32 %v6594, 4294901760
        %6596 = vmatprep.subr.mxu0 %v6595
        %v6597 = vand.u32 %v627, 4294901760
        %v6598 = vsub.f32 %v627, %v6597
        %v6599 = vand.u32 %v6598, 4294901760
        %6600 = vmatpush1.msra.mxu0 %v6599
        %v6601 = vand.u32 %v624, 4294901760
        %v6602 = vsub.f32 %v624, %v6601
        %v6603 = vand.u32 %v6602, 4294901760
        %6604 = vmatprep.subr.mxu0 %v6603
        %v6605 = vand.u32 %v623, 4294901760
        %v6606 = vsub.f32 %v623, %v6605
        %v6607 = vand.u32 %v6606, 4294901760
        %6608 = vmatpush1.msra.mxu0 %v6607
        %v6609 = vand.u32 %v620, 4294901760
        %v6610 = vsub.f32 %v620, %v6609
        %v6611 = vand.u32 %v6610, 4294901760
        %6612 = vmatprep.subr.mxu0 %v6611
        %v6613 = vand.u32 %v619, 4294901760
        %v6614 = vsub.f32 %v619, %v6613
        %v6615 = vand.u32 %v6614, 4294901760
        %6616 = vmatpush1.msra.mxu0 %v6615
        %v6617 = vand.u32 %v616, 4294901760
        %v6618 = vsub.f32 %v616, %v6617
        %v6619 = vand.u32 %v6618, 4294901760
        %6620 = vmatprep.subr.mxu0 %v6619
        %v6621 = vand.u32 %v615, 4294901760
        %v6622 = vsub.f32 %v615, %v6621
        %v6623 = vand.u32 %v6622, 4294901760
        %6624 = vmatpush1.msra.mxu0 %v6623
        %v6625 = vand.u32 %v740, 4294901760
        %v6626 = vsub.f32 %v740, %v6625
        %v6627 = vand.u32 %v6626, 4294901760
        %6628 = vmatprep.subr.mxu0 %v6627
        %v6629 = vand.u32 %v739, 4294901760
        %v6630 = vsub.f32 %v739, %v6629
        %v6631 = vand.u32 %v6630, 4294901760
        %6632 = vmatpush2.msra.mxu0 %v6631
        %v6633 = vand.u32 %v736, 4294901760
        %v6634 = vsub.f32 %v736, %v6633
        %v6635 = vand.u32 %v6634, 4294901760
        %6636 = vmatprep.subr.mxu0 %v6635
        %v6637 = vand.u32 %v735, 4294901760
        %v6638 = vsub.f32 %v735, %v6637
        %v6639 = vand.u32 %v6638, 4294901760
        %6640 = vmatpush2.msra.mxu0 %v6639
        %v6641 = vand.u32 %v732, 4294901760
        %v6642 = vsub.f32 %v732, %v6641
        %v6643 = vand.u32 %v6642, 4294901760
        %6644 = vmatprep.subr.mxu0 %v6643
        %v6645 = vand.u32 %v731, 4294901760
        %v6646 = vsub.f32 %v731, %v6645
        %v6647 = vand.u32 %v6646, 4294901760
        %6648 = vmatpush2.msra.mxu0 %v6647
        %v6649 = vand.u32 %v728, 4294901760
        %v6650 = vsub.f32 %v728, %v6649
        %v6651 = vand.u32 %v6650, 4294901760
        %6652 = vmatprep.subr.mxu0 %v6651
        %v6653 = vand.u32 %v727, 4294901760
        %v6654 = vsub.f32 %v727, %v6653
        %v6655 = vand.u32 %v6654, 4294901760
        %6656 = vmatpush2.msra.mxu0 %v6655
        %v6657 = vand.u32 %v724, 4294901760
        %v6658 = vsub.f32 %v724, %v6657
        %v6659 = vand.u32 %v6658, 4294901760
        %6660 = vmatprep.subr.mxu0 %v6659
        %v6661 = vand.u32 %v723, 4294901760
        %v6662 = vsub.f32 %v723, %v6661
        %v6663 = vand.u32 %v6662, 4294901760
        %6664 = vmatpush2.msra.mxu0 %v6663
        %v6665 = vand.u32 %v720, 4294901760
        %v6666 = vsub.f32 %v720, %v6665
        %v6667 = vand.u32 %v6666, 4294901760
        %6668 = vmatprep.subr.mxu0 %v6667
        %v6669 = vand.u32 %v719, 4294901760
        %v6670 = vsub.f32 %v719, %v6669
        %v6671 = vand.u32 %v6670, 4294901760
        %6672 = vmatpush2.msra.mxu0 %v6671
        %v6673 = vand.u32 %v716, 4294901760
        %v6674 = vsub.f32 %v716, %v6673
        %v6675 = vand.u32 %v6674, 4294901760
        %6676 = vmatprep.subr.mxu0 %v6675
        %v6677 = vand.u32 %v715, 4294901760
        %v6678 = vsub.f32 %v715, %v6677
        %v6679 = vand.u32 %v6678, 4294901760
        %6680 = vmatpush2.msra.mxu0 %v6679
        %v6681 = vand.u32 %v712, 4294901760
        %v6682 = vsub.f32 %v712, %v6681
        %v6683 = vand.u32 %v6682, 4294901760
        %6684 = vmatprep.subr.mxu0 %v6683
        %v6685 = vand.u32 %v711, 4294901760
        %v6686 = vsub.f32 %v711, %v6685
        %v6687 = vand.u32 %v6686, 4294901760
        %6688 = vmatpush2.msra.mxu0 %v6687
        %v6689 = vand.u32 %v708, 4294901760
        %v6690 = vsub.f32 %v708, %v6689
        %v6691 = vand.u32 %v6690, 4294901760
        %6692 = vmatprep.subr.mxu0 %v6691
        %v6693 = vand.u32 %v707, 4294901760
        %v6694 = vsub.f32 %v707, %v6693
        %v6695 = vand.u32 %v6694, 4294901760
        %6696 = vmatpush2.msra.mxu0 %v6695
        %v6697 = vand.u32 %v704, 4294901760
        %v6698 = vsub.f32 %v704, %v6697
        %v6699 = vand.u32 %v6698, 4294901760
        %6700 = vmatprep.subr.mxu0 %v6699
        %v6701 = vand.u32 %v703, 4294901760
        %v6702 = vsub.f32 %v703, %v6701
        %v6703 = vand.u32 %v6702, 4294901760
        %6704 = vmatpush2.msra.mxu0 %v6703
        %v6705 = vand.u32 %v700, 4294901760
        %v6706 = vsub.f32 %v700, %v6705
        %v6707 = vand.u32 %v6706, 4294901760
        %6708 = vmatprep.subr.mxu0 %v6707
        %v6709 = vand.u32 %v699, 4294901760
        %v6710 = vsub.f32 %v699, %v6709
        %v6711 = vand.u32 %v6710, 4294901760
        %6712 = vmatpush2.msra.mxu0 %v6711
        %v6713 = vand.u32 %v696, 4294901760
        %v6714 = vsub.f32 %v696, %v6713
        %v6715 = vand.u32 %v6714, 4294901760
        %6716 = vmatprep.subr.mxu0 %v6715
        %v6717 = vand.u32 %v695, 4294901760
        %v6718 = vsub.f32 %v695, %v6717
        %v6719 = vand.u32 %v6718, 4294901760
        %6720 = vmatpush2.msra.mxu0 %v6719
        %v6721 = vand.u32 %v692, 4294901760
        %v6722 = vsub.f32 %v692, %v6721
        %v6723 = vand.u32 %v6722, 4294901760
        %6724 = vmatprep.subr.mxu0 %v6723
        %v6725 = vand.u32 %v691, 4294901760
        %v6726 = vsub.f32 %v691, %v6725
        %v6727 = vand.u32 %v6726, 4294901760
        %6728 = vmatpush2.msra.mxu0 %v6727
        %v6729 = vand.u32 %v688, 4294901760
        %v6730 = vsub.f32 %v688, %v6729
        %v6731 = vand.u32 %v6730, 4294901760
        %6732 = vmatprep.subr.mxu0 %v6731
        %v6733 = vand.u32 %v687, 4294901760
        %v6734 = vsub.f32 %v687, %v6733
        %v6735 = vand.u32 %v6734, 4294901760
        %6736 = vmatpush2.msra.mxu0 %v6735
        %v6737 = vand.u32 %v684, 4294901760
        %v6738 = vsub.f32 %v684, %v6737
        %v6739 = vand.u32 %v6738, 4294901760
        %6740 = vmatprep.subr.mxu0 %v6739
        %v6741 = vand.u32 %v683, 4294901760
        %v6742 = vsub.f32 %v683, %v6741
        %v6743 = vand.u32 %v6742, 4294901760
        %6744 = vmatpush2.msra.mxu0 %v6743
        %v6745 = vand.u32 %v680, 4294901760
        %v6746 = vsub.f32 %v680, %v6745
        %v6747 = vand.u32 %v6746, 4294901760
        %6748 = vmatprep.subr.mxu0 %v6747
        %v6749 = vand.u32 %v679, 4294901760
        %v6750 = vsub.f32 %v679, %v6749
        %v6751 = vand.u32 %v6750, 4294901760
        %6752 = vmatpush2.msra.mxu0 %v6751
        %v6753 = vand.u32 %v326, 4294901760
        %6754 = vmatprep.mubr.f32.mxu0 %v6753
        %v6755 = vand.u32 %v325, 4294901760
        %6756 = vmatmul.mubr.f32.gmra.mxu0 %v6755
        %v6757 = vpop.f32.mrf.mxu0
        %v6758 = vadd.f32 %v6313, %v6757
        %v6759 = vpop.f32.mrf.mxu0
        %v6760 = vadd.f32 %v6315, %v6759
        %v6761 = vand.u32 %v330, 4294901760
        %6762 = vmatprep.mubr.f32.mxu0 %v6761
        %v6763 = vand.u32 %v329, 4294901760
        %6764 = vmatmul.mubr.f32.gmra.mxu0 %v6763
        %v6765 = vpop.f32.mrf.mxu0
        %v6766 = vadd.f32 %v6325, %v6765
        %v6767 = vpop.f32.mrf.mxu0
        %v6768 = vadd.f32 %v6327, %v6767
        %v6769 = vand.u32 %v334, 4294901760
        %6770 = vmatprep.mubr.f32.mxu0 %v6769
        %v6771 = vand.u32 %v333, 4294901760
        %6772 = vmatmul.mubr.f32.gmra.mxu0 %v6771
        %v6773 = vpop.f32.mrf.mxu0
        %v6774 = vadd.f32 %v6337, %v6773
        %v6775 = vpop.f32.mrf.mxu0
        %v6776 = vadd.f32 %v6339, %v6775
        %v6777 = vand.u32 %v338, 4294901760
        %6778 = vmatprep.mubr.f32.mxu0 %v6777
        %v6779 = vand.u32 %v337, 4294901760
        %6780 = vmatmul.mubr.f32.gmra.mxu0 %v6779
        %v6781 = vpop.f32.mrf.mxu0
        %v6782 = vadd.f32 %v6349, %v6781
        %v6783 = vpop.f32.mrf.mxu0
        %v6784 = vadd.f32 %v6351, %v6783
        %v6785 = vand.u32 %v342, 4294901760
        %6786 = vmatprep.mubr.f32.mxu0 %v6785
        %v6787 = vand.u32 %v341, 4294901760
        %6788 = vmatmul.mubr.f32.gmra.mxu0 %v6787
        %v6789 = vpop.f32.mrf.mxu0
        %v6790 = vadd.f32 %v6361, %v6789
        %v6791 = vpop.f32.mrf.mxu0
        %v6792 = vadd.f32 %v6363, %v6791
        %v6793 = vand.u32 %v346, 4294901760
        %6794 = vmatprep.mubr.f32.mxu0 %v6793
        %v6795 = vand.u32 %v345, 4294901760
        %6796 = vmatmul.mubr.f32.gmra.mxu0 %v6795
        %v6797 = vpop.f32.mrf.mxu0
        %v6798 = vadd.f32 %v6373, %v6797
        %v6799 = vpop.f32.mrf.mxu0
        %v6800 = vadd.f32 %v6375, %v6799
        %v6801 = vand.u32 %v350, 4294901760
        %6802 = vmatprep.mubr.f32.mxu0 %v6801
        %v6803 = vand.u32 %v349, 4294901760
        %6804 = vmatmul.mubr.f32.gmra.mxu0 %v6803
        %v6805 = vpop.f32.mrf.mxu0
        %v6806 = vadd.f32 %v6385, %v6805
        %v6807 = vpop.f32.mrf.mxu0
        %v6808 = vadd.f32 %v6387, %v6807
        %v6809 = vand.u32 %v354, 4294901760
        %6810 = vmatprep.mubr.f32.mxu0 %v6809
        %v6811 = vand.u32 %v353, 4294901760
        %6812 = vmatmul.mubr.f32.gmra.mxu0 %v6811
        %v6813 = vpop.f32.mrf.mxu0
        %v6814 = vadd.f32 %v6397, %v6813
        %v6815 = vpop.f32.mrf.mxu0
        %v6816 = vadd.f32 %v6399, %v6815
        %v6817 = vand.u32 %v358, 4294901760
        %6818 = vmatprep.mubr.f32.mxu0 %v6817
        %v6819 = vand.u32 %v357, 4294901760
        %6820 = vmatmul.mubr.f32.gmra.mxu0 %v6819
        %v6821 = vpop.f32.mrf.mxu0
        %v6822 = vadd.f32 %v6409, %v6821
        %v6823 = vpop.f32.mrf.mxu0
        %v6824 = vadd.f32 %v6411, %v6823
        %v6825 = vand.u32 %v362, 4294901760
        %6826 = vmatprep.mubr.f32.mxu0 %v6825
        %v6827 = vand.u32 %v361, 4294901760
        %6828 = vmatmul.mubr.f32.gmra.mxu0 %v6827
        %v6829 = vpop.f32.mrf.mxu0
        %v6830 = vadd.f32 %v6421, %v6829
        %v6831 = vpop.f32.mrf.mxu0
        %v6832 = vadd.f32 %v6423, %v6831
        %v6833 = vand.u32 %v366, 4294901760
        %6834 = vmatprep.mubr.f32.mxu0 %v6833
        %v6835 = vand.u32 %v365, 4294901760
        %6836 = vmatmul.mubr.f32.gmra.mxu0 %v6835
        %v6837 = vpop.f32.mrf.mxu0
        %v6838 = vadd.f32 %v6433, %v6837
        %v6839 = vpop.f32.mrf.mxu0
        %v6840 = vadd.f32 %v6435, %v6839
        %v6841 = vand.u32 %v370, 4294901760
        %6842 = vmatprep.mubr.f32.mxu0 %v6841
        %v6843 = vand.u32 %v369, 4294901760
        %6844 = vmatmul.mubr.f32.gmra.mxu0 %v6843
        %v6845 = vpop.f32.mrf.mxu0
        %v6846 = vadd.f32 %v6445, %v6845
        %v6847 = vpop.f32.mrf.mxu0
        %v6848 = vadd.f32 %v6447, %v6847
        %v6849 = vand.u32 %v374, 4294901760
        %6850 = vmatprep.mubr.f32.mxu0 %v6849
        %v6851 = vand.u32 %v373, 4294901760
        %6852 = vmatmul.mubr.f32.gmra.mxu0 %v6851
        %v6853 = vpop.f32.mrf.mxu0
        %v6854 = vadd.f32 %v6457, %v6853
        %v6855 = vpop.f32.mrf.mxu0
        %v6856 = vadd.f32 %v6459, %v6855
        %v6857 = vand.u32 %v378, 4294901760
        %6858 = vmatprep.mubr.f32.mxu0 %v6857
        %v6859 = vand.u32 %v377, 4294901760
        %6860 = vmatmul.mubr.f32.gmra.mxu0 %v6859
        %v6861 = vpop.f32.mrf.mxu0
        %v6862 = vadd.f32 %v6469, %v6861
        %v6863 = vpop.f32.mrf.mxu0
        %v6864 = vadd.f32 %v6471, %v6863
        %v6865 = vand.u32 %v382, 4294901760
        %6866 = vmatprep.mubr.f32.mxu0 %v6865
        %v6867 = vand.u32 %v381, 4294901760
        %6868 = vmatmul.mubr.f32.gmra.mxu0 %v6867
        %v6869 = vpop.f32.mrf.mxu0
        %v6870 = vadd.f32 %v6481, %v6869
        %v6871 = vpop.f32.mrf.mxu0
        %v6872 = vadd.f32 %v6483, %v6871
        %v6873 = vand.u32 %v386, 4294901760
        %6874 = vmatprep.mubr.f32.mxu0 %v6873
        %v6875 = vand.u32 %v385, 4294901760
        %6876 = vmatmul.mubr.f32.gmra.mxu0 %v6875
        %v6877 = vpop.f32.mrf.mxu0
        %v6878 = vadd.f32 %v6493, %v6877
        %v6879 = vpop.f32.mrf.mxu0
        %v6880 = vadd.f32 %v6495, %v6879
        %6881 = vdwg.mxu0
        %v6882 = vand.u32 %v676, 4294901760
        %6883 = vmatprep.subr.mxu0 %v6882
        %v6884 = vand.u32 %v675, 4294901760
        %6885 = vmatpush1.msra.mxu0 %v6884
        %v6886 = vand.u32 %v672, 4294901760
        %6887 = vmatprep.subr.mxu0 %v6886
        %v6888 = vand.u32 %v671, 4294901760
        %6889 = vmatpush1.msra.mxu0 %v6888
        %v6890 = vand.u32 %v668, 4294901760
        %6891 = vmatprep.subr.mxu0 %v6890
        %v6892 = vand.u32 %v667, 4294901760
        %6893 = vmatpush1.msra.mxu0 %v6892
        %v6894 = vand.u32 %v664, 4294901760
        %6895 = vmatprep.subr.mxu0 %v6894
        %v6896 = vand.u32 %v663, 4294901760
        %6897 = vmatpush1.msra.mxu0 %v6896
        %v6898 = vand.u32 %v660, 4294901760
        %6899 = vmatprep.subr.mxu0 %v6898
        %v6900 = vand.u32 %v659, 4294901760
        %6901 = vmatpush1.msra.mxu0 %v6900
        %v6902 = vand.u32 %v656, 4294901760
        %6903 = vmatprep.subr.mxu0 %v6902
        %v6904 = vand.u32 %v655, 4294901760
        %6905 = vmatpush1.msra.mxu0 %v6904
        %v6906 = vand.u32 %v652, 4294901760
        %6907 = vmatprep.subr.mxu0 %v6906
        %v6908 = vand.u32 %v651, 4294901760
        %6909 = vmatpush1.msra.mxu0 %v6908
        %v6910 = vand.u32 %v648, 4294901760
        %6911 = vmatprep.subr.mxu0 %v6910
        %v6912 = vand.u32 %v647, 4294901760
        %6913 = vmatpush1.msra.mxu0 %v6912
        %v6914 = vand.u32 %v644, 4294901760
        %6915 = vmatprep.subr.mxu0 %v6914
        %v6916 = vand.u32 %v643, 4294901760
        %6917 = vmatpush1.msra.mxu0 %v6916
        %v6918 = vand.u32 %v640, 4294901760
        %6919 = vmatprep.subr.mxu0 %v6918
        %v6920 = vand.u32 %v639, 4294901760
        %6921 = vmatpush1.msra.mxu0 %v6920
        %v6922 = vand.u32 %v636, 4294901760
        %6923 = vmatprep.subr.mxu0 %v6922
        %v6924 = vand.u32 %v635, 4294901760
        %6925 = vmatpush1.msra.mxu0 %v6924
        %v6926 = vand.u32 %v632, 4294901760
        %6927 = vmatprep.subr.mxu0 %v6926
        %v6928 = vand.u32 %v631, 4294901760
        %6929 = vmatpush1.msra.mxu0 %v6928
        %v6930 = vand.u32 %v628, 4294901760
        %6931 = vmatprep.subr.mxu0 %v6930
        %v6932 = vand.u32 %v627, 4294901760
        %6933 = vmatpush1.msra.mxu0 %v6932
        %v6934 = vand.u32 %v624, 4294901760
        %6935 = vmatprep.subr.mxu0 %v6934
        %v6936 = vand.u32 %v623, 4294901760
        %6937 = vmatpush1.msra.mxu0 %v6936
        %v6938 = vand.u32 %v620, 4294901760
        %6939 = vmatprep.subr.mxu0 %v6938
        %v6940 = vand.u32 %v619, 4294901760
        %6941 = vmatpush1.msra.mxu0 %v6940
        %v6942 = vand.u32 %v616, 4294901760
        %6943 = vmatprep.subr.mxu0 %v6942
        %v6944 = vand.u32 %v615, 4294901760
        %6945 = vmatpush1.msra.mxu0 %v6944
        %v6946 = vand.u32 %v740, 4294901760
        %6947 = vmatprep.subr.mxu0 %v6946
        %v6948 = vand.u32 %v739, 4294901760
        %6949 = vmatpush2.msra.mxu0 %v6948
        %v6950 = vand.u32 %v736, 4294901760
        %6951 = vmatprep.subr.mxu0 %v6950
        %v6952 = vand.u32 %v735, 4294901760
        %6953 = vmatpush2.msra.mxu0 %v6952
        %v6954 = vand.u32 %v732, 4294901760
        %6955 = vmatprep.subr.mxu0 %v6954
        %v6956 = vand.u32 %v731, 4294901760
        %6957 = vmatpush2.msra.mxu0 %v6956
        %v6958 = vand.u32 %v728, 4294901760
        %6959 = vmatprep.subr.mxu0 %v6958
        %v6960 = vand.u32 %v727, 4294901760
        %6961 = vmatpush2.msra.mxu0 %v6960
        %v6962 = vand.u32 %v724, 4294901760
        %6963 = vmatprep.subr.mxu0 %v6962
        %v6964 = vand.u32 %v723, 4294901760
        %6965 = vmatpush2.msra.mxu0 %v6964
        %v6966 = vand.u32 %v720, 4294901760
        %6967 = vmatprep.subr.mxu0 %v6966
        %v6968 = vand.u32 %v719, 4294901760
        %6969 = vmatpush2.msra.mxu0 %v6968
        %v6970 = vand.u32 %v716, 4294901760
        %6971 = vmatprep.subr.mxu0 %v6970
        %v6972 = vand.u32 %v715, 4294901760
        %6973 = vmatpush2.msra.mxu0 %v6972
        %v6974 = vand.u32 %v712, 4294901760
        %6975 = vmatprep.subr.mxu0 %v6974
        %v6976 = vand.u32 %v711, 4294901760
        %6977 = vmatpush2.msra.mxu0 %v6976
        %v6978 = vand.u32 %v708, 4294901760
        %6979 = vmatprep.subr.mxu0 %v6978
        %v6980 = vand.u32 %v707, 4294901760
        %6981 = vmatpush2.msra.mxu0 %v6980
        %v6982 = vand.u32 %v704, 4294901760
        %6983 = vmatprep.subr.mxu0 %v6982
        %v6984 = vand.u32 %v703, 4294901760
        %6985 = vmatpush2.msra.mxu0 %v6984
        %v6986 = vand.u32 %v700, 4294901760
        %6987 = vmatprep.subr.mxu0 %v6986
        %v6988 = vand.u32 %v699, 4294901760
        %6989 = vmatpush2.msra.mxu0 %v6988
        %v6990 = vand.u32 %v696, 4294901760
        %6991 = vmatprep.subr.mxu0 %v6990
        %v6992 = vand.u32 %v695, 4294901760
        %6993 = vmatpush2.msra.mxu0 %v6992
        %v6994 = vand.u32 %v692, 4294901760
        %6995 = vmatprep.subr.mxu0 %v6994
        %v6996 = vand.u32 %v691, 4294901760
        %6997 = vmatpush2.msra.mxu0 %v6996
        %v6998 = vand.u32 %v688, 4294901760
        %6999 = vmatprep.subr.mxu0 %v6998
        %v7000 = vand.u32 %v687, 4294901760
        %7001 = vmatpush2.msra.mxu0 %v7000
        %v7002 = vand.u32 %v684, 4294901760
        %7003 = vmatprep.subr.mxu0 %v7002
        %v7004 = vand.u32 %v683, 4294901760
        %7005 = vmatpush2.msra.mxu0 %v7004
        %v7006 = vand.u32 %v680, 4294901760
        %7007 = vmatprep.subr.mxu0 %v7006
        %v7008 = vand.u32 %v679, 4294901760
        %7009 = vmatpush2.msra.mxu0 %v7008
        %v7010 = vand.u32 %v326, 4294901760
        %7011 = vmatprep.mubr.f32.mxu0 %v7010
        %v7012 = vand.u32 %v325, 4294901760
        %7013 = vmatmul.mubr.f32.gmra.mxu0 %v7012
        %v7014 = vpop.f32.mrf.mxu0
        %v7015 = vadd.f32 %v6758, %v7014
        %v7016 = vpop.f32.mrf.mxu0
        %v7017 = vadd.f32 %v6760, %v7016
        %v7018 = vand.u32 %v330, 4294901760
        %7019 = vmatprep.mubr.f32.mxu0 %v7018
        %v7020 = vand.u32 %v329, 4294901760
        %7021 = vmatmul.mubr.f32.gmra.mxu0 %v7020
        %v7022 = vpop.f32.mrf.mxu0
        %v7023 = vadd.f32 %v6766, %v7022
        %v7024 = vpop.f32.mrf.mxu0
        %v7025 = vadd.f32 %v6768, %v7024
        %v7026 = vand.u32 %v334, 4294901760
        %7027 = vmatprep.mubr.f32.mxu0 %v7026
        %v7028 = vand.u32 %v333, 4294901760
        %7029 = vmatmul.mubr.f32.gmra.mxu0 %v7028
        %v7030 = vpop.f32.mrf.mxu0
        %v7031 = vadd.f32 %v6774, %v7030
        %v7032 = vpop.f32.mrf.mxu0
        %v7033 = vadd.f32 %v6776, %v7032
        %v7034 = vand.u32 %v338, 4294901760
        %7035 = vmatprep.mubr.f32.mxu0 %v7034
        %v7036 = vand.u32 %v337, 4294901760
        %7037 = vmatmul.mubr.f32.gmra.mxu0 %v7036
        %v7038 = vpop.f32.mrf.mxu0
        %v7039 = vadd.f32 %v6782, %v7038
        %v7040 = vpop.f32.mrf.mxu0
        %v7041 = vadd.f32 %v6784, %v7040
        %v7042 = vand.u32 %v342, 4294901760
        %7043 = vmatprep.mubr.f32.mxu0 %v7042
        %v7044 = vand.u32 %v341, 4294901760
        %7045 = vmatmul.mubr.f32.gmra.mxu0 %v7044
        %v7046 = vpop.f32.mrf.mxu0
        %v7047 = vadd.f32 %v6790, %v7046
        %v7048 = vpop.f32.mrf.mxu0
        %v7049 = vadd.f32 %v6792, %v7048
        %v7050 = vand.u32 %v346, 4294901760
        %7051 = vmatprep.mubr.f32.mxu0 %v7050
        %v7052 = vand.u32 %v345, 4294901760
        %7053 = vmatmul.mubr.f32.gmra.mxu0 %v7052
        %v7054 = vpop.f32.mrf.mxu0
        %v7055 = vadd.f32 %v6798, %v7054
        %v7056 = vpop.f32.mrf.mxu0
        %v7057 = vadd.f32 %v6800, %v7056
        %v7058 = vand.u32 %v350, 4294901760
        %7059 = vmatprep.mubr.f32.mxu0 %v7058
        %v7060 = vand.u32 %v349, 4294901760
        %7061 = vmatmul.mubr.f32.gmra.mxu0 %v7060
        %v7062 = vpop.f32.mrf.mxu0
        %v7063 = vadd.f32 %v6806, %v7062
        %v7064 = vpop.f32.mrf.mxu0
        %v7065 = vadd.f32 %v6808, %v7064
        %v7066 = vand.u32 %v354, 4294901760
        %7067 = vmatprep.mubr.f32.mxu0 %v7066
        %v7068 = vand.u32 %v353, 4294901760
        %7069 = vmatmul.mubr.f32.gmra.mxu0 %v7068
        %v7070 = vpop.f32.mrf.mxu0
        %v7071 = vadd.f32 %v6814, %v7070
        %v7072 = vpop.f32.mrf.mxu0
        %v7073 = vadd.f32 %v6816, %v7072
        %v7074 = vand.u32 %v358, 4294901760
        %7075 = vmatprep.mubr.f32.mxu0 %v7074
        %v7076 = vand.u32 %v357, 4294901760
        %7077 = vmatmul.mubr.f32.gmra.mxu0 %v7076
        %v7078 = vpop.f32.mrf.mxu0
        %v7079 = vadd.f32 %v6822, %v7078
        %v7080 = vpop.f32.mrf.mxu0
        %v7081 = vadd.f32 %v6824, %v7080
        %v7082 = vand.u32 %v362, 4294901760
        %7083 = vmatprep.mubr.f32.mxu0 %v7082
        %v7084 = vand.u32 %v361, 4294901760
        %7085 = vmatmul.mubr.f32.gmra.mxu0 %v7084
        %v7086 = vpop.f32.mrf.mxu0
        %v7087 = vadd.f32 %v6830, %v7086
        %v7088 = vpop.f32.mrf.mxu0
        %v7089 = vadd.f32 %v6832, %v7088
        %v7090 = vand.u32 %v366, 4294901760
        %7091 = vmatprep.mubr.f32.mxu0 %v7090
        %v7092 = vand.u32 %v365, 4294901760
        %7093 = vmatmul.mubr.f32.gmra.mxu0 %v7092
        %v7094 = vpop.f32.mrf.mxu0
        %v7095 = vadd.f32 %v6838, %v7094
        %v7096 = vpop.f32.mrf.mxu0
        %v7097 = vadd.f32 %v6840, %v7096
        %v7098 = vand.u32 %v370, 4294901760
        %7099 = vmatprep.mubr.f32.mxu0 %v7098
        %v7100 = vand.u32 %v369, 4294901760
        %7101 = vmatmul.mubr.f32.gmra.mxu0 %v7100
        %v7102 = vpop.f32.mrf.mxu0
        %v7103 = vadd.f32 %v6846, %v7102
        %v7104 = vpop.f32.mrf.mxu0
        %v7105 = vadd.f32 %v6848, %v7104
        %v7106 = vand.u32 %v374, 4294901760
        %7107 = vmatprep.mubr.f32.mxu0 %v7106
        %v7108 = vand.u32 %v373, 4294901760
        %7109 = vmatmul.mubr.f32.gmra.mxu0 %v7108
        %v7110 = vpop.f32.mrf.mxu0
        %v7111 = vadd.f32 %v6854, %v7110
        %v7112 = vpop.f32.mrf.mxu0
        %v7113 = vadd.f32 %v6856, %v7112
        %v7114 = vand.u32 %v378, 4294901760
        %7115 = vmatprep.mubr.f32.mxu0 %v7114
        %v7116 = vand.u32 %v377, 4294901760
        %7117 = vmatmul.mubr.f32.gmra.mxu0 %v7116
        %v7118 = vpop.f32.mrf.mxu0
        %v7119 = vadd.f32 %v6862, %v7118
        %v7120 = vpop.f32.mrf.mxu0
        %v7121 = vadd.f32 %v6864, %v7120
        %v7122 = vand.u32 %v382, 4294901760
        %7123 = vmatprep.mubr.f32.mxu0 %v7122
        %v7124 = vand.u32 %v381, 4294901760
        %7125 = vmatmul.mubr.f32.gmra.mxu0 %v7124
        %v7126 = vpop.f32.mrf.mxu0
        %v7127 = vadd.f32 %v6870, %v7126
        %v7128 = vpop.f32.mrf.mxu0
        %v7129 = vadd.f32 %v6872, %v7128
        %v7130 = vand.u32 %v386, 4294901760
        %7131 = vmatprep.mubr.f32.mxu0 %v7130
        %v7132 = vand.u32 %v385, 4294901760
        %7133 = vmatmul.mubr.f32.gmra.mxu0 %v7132
        %v7134 = vpop.f32.mrf.mxu0
        %v7135 = vadd.f32 %v6878, %v7134
        %v7136 = vpop.f32.mrf.mxu0
        %v7137 = vadd.f32 %v6880, %v7136
        %7138 = vdwg.mxu0
        %v7139 = vand.u32 %v804, 4294901760
        %7140 = vmatprep.subr.mxu0 %v7139
        %v7141 = vand.u32 %v803, 4294901760
        %7142 = vmatpush1.msra.mxu0 %v7141
        %v7143 = vand.u32 %v800, 4294901760
        %7144 = vmatprep.subr.mxu0 %v7143
        %v7145 = vand.u32 %v799, 4294901760
        %7146 = vmatpush1.msra.mxu0 %v7145
        %v7147 = vand.u32 %v796, 4294901760
        %7148 = vmatprep.subr.mxu0 %v7147
        %v7149 = vand.u32 %v795, 4294901760
        %7150 = vmatpush1.msra.mxu0 %v7149
        %v7151 = vand.u32 %v792, 4294901760
        %7152 = vmatprep.subr.mxu0 %v7151
        %v7153 = vand.u32 %v791, 4294901760
        %7154 = vmatpush1.msra.mxu0 %v7153
        %v7155 = vand.u32 %v788, 4294901760
        %7156 = vmatprep.subr.mxu0 %v7155
        %v7157 = vand.u32 %v787, 4294901760
        %7158 = vmatpush1.msra.mxu0 %v7157
        %v7159 = vand.u32 %v784, 4294901760
        %7160 = vmatprep.subr.mxu0 %v7159
        %v7161 = vand.u32 %v783, 4294901760
        %7162 = vmatpush1.msra.mxu0 %v7161
        %v7163 = vand.u32 %v780, 4294901760
        %7164 = vmatprep.subr.mxu0 %v7163
        %v7165 = vand.u32 %v779, 4294901760
        %7166 = vmatpush1.msra.mxu0 %v7165
        %v7167 = vand.u32 %v776, 4294901760
        %7168 = vmatprep.subr.mxu0 %v7167
        %v7169 = vand.u32 %v775, 4294901760
        %7170 = vmatpush1.msra.mxu0 %v7169
        %v7171 = vand.u32 %v772, 4294901760
        %7172 = vmatprep.subr.mxu0 %v7171
        %v7173 = vand.u32 %v771, 4294901760
        %7174 = vmatpush1.msra.mxu0 %v7173
        %v7175 = vand.u32 %v768, 4294901760
        %7176 = vmatprep.subr.mxu0 %v7175
        %v7177 = vand.u32 %v767, 4294901760
        %7178 = vmatpush1.msra.mxu0 %v7177
        %v7179 = vand.u32 %v764, 4294901760
        %7180 = vmatprep.subr.mxu0 %v7179
        %v7181 = vand.u32 %v763, 4294901760
        %7182 = vmatpush1.msra.mxu0 %v7181
        %v7183 = vand.u32 %v760, 4294901760
        %7184 = vmatprep.subr.mxu0 %v7183
        %v7185 = vand.u32 %v759, 4294901760
        %7186 = vmatpush1.msra.mxu0 %v7185
        %v7187 = vand.u32 %v756, 4294901760
        %7188 = vmatprep.subr.mxu0 %v7187
        %v7189 = vand.u32 %v755, 4294901760
        %7190 = vmatpush1.msra.mxu0 %v7189
        %v7191 = vand.u32 %v752, 4294901760
        %7192 = vmatprep.subr.mxu0 %v7191
        %v7193 = vand.u32 %v751, 4294901760
        %7194 = vmatpush1.msra.mxu0 %v7193
        %v7195 = vand.u32 %v748, 4294901760
        %7196 = vmatprep.subr.mxu0 %v7195
        %v7197 = vand.u32 %v747, 4294901760
        %7198 = vmatpush1.msra.mxu0 %v7197
        %v7199 = vand.u32 %v744, 4294901760
        %7200 = vmatprep.subr.mxu0 %v7199
        %v7201 = vand.u32 %v743, 4294901760
        %7202 = vmatpush1.msra.mxu0 %v7201
        %7203 = vmatprep.subr.mxu0 0.0
        %7204 = vmatpush2.msra.mxu0 0.0
        %7205 = vmatprep.subr.mxu0 0.0
        %7206 = vmatpush2.msra.mxu0 0.0
        %7207 = vmatprep.subr.mxu0 0.0
        %7208 = vmatpush2.msra.mxu0 0.0
        %7209 = vmatprep.subr.mxu0 0.0
        %7210 = vmatpush2.msra.mxu0 0.0
        %7211 = vmatprep.subr.mxu0 0.0
        %7212 = vmatpush2.msra.mxu0 0.0
        %7213 = vmatprep.subr.mxu0 0.0
        %7214 = vmatpush2.msra.mxu0 0.0
        %7215 = vmatprep.subr.mxu0 0.0
        %7216 = vmatpush2.msra.mxu0 0.0
        %7217 = vmatprep.subr.mxu0 0.0
        %7218 = vmatpush2.msra.mxu0 0.0
        %7219 = vmatprep.subr.mxu0 0.0
        %7220 = vmatpush2.msra.mxu0 0.0
        %7221 = vmatprep.subr.mxu0 0.0
        %7222 = vmatpush2.msra.mxu0 0.0
        %7223 = vmatprep.subr.mxu0 0.0
        %7224 = vmatpush2.msra.mxu0 0.0
        %7225 = vmatprep.subr.mxu0 0.0
        %7226 = vmatpush2.msra.mxu0 0.0
        %7227 = vmatprep.subr.mxu0 0.0
        %7228 = vmatpush2.msra.mxu0 0.0
        %7229 = vmatprep.subr.mxu0 0.0
        %7230 = vmatpush2.msra.mxu0 0.0
        %v7231 = vand.u32 %v812, 4294901760
        %7232 = vmatprep.subr.mxu0 %v7231
        %v7233 = vand.u32 %v811, 4294901760
        %7234 = vmatpush2.msra.mxu0 %v7233
        %v7235 = vand.u32 %v808, 4294901760
        %7236 = vmatprep.subr.mxu0 %v7235
        %v7237 = vand.u32 %v807, 4294901760
        %7238 = vmatpush2.msra.mxu0 %v7237
        %v7239 = vand.u32 %v814, 4294901760
        %v7240 = vsub.f32 %v814, %v7239
        %v7241 = vand.u32 %v7240, 4294901760
        %v7242 = vsub.f32 %v7240, %v7241
        %v7243 = vand.u32 %v7242, 4294901760
        %7244 = vmatprep.mubr.f32.mxu0 %v7243
        %v7245 = vand.u32 %v327, 4294901760
        %v7246 = vsub.f32 %v327, %v7245
        %v7247 = vand.u32 %v7246, 4294901760
        %v7248 = vsub.f32 %v7246, %v7247
        %v7249 = vand.u32 %v7248, 4294901760
        %7250 = vmatmul.mubr.f32.gmra.mxu0 %v7249
        %v7251 = vpop.f32.mrf.mxu0
        %v7252 = vadd.f32 %v7015, %v7251
        %v7253 = vpop.f32.mrf.mxu0
        %v7254 = vadd.f32 %v7017, %v7253
        %v7255 = vand.u32 %v817, 4294901760
        %v7256 = vsub.f32 %v817, %v7255
        %v7257 = vand.u32 %v7256, 4294901760
        %v7258 = vsub.f32 %v7256, %v7257
        %v7259 = vand.u32 %v7258, 4294901760
        %7260 = vmatprep.mubr.f32.mxu0 %v7259
        %v7261 = vand.u32 %v331, 4294901760
        %v7262 = vsub.f32 %v331, %v7261
        %v7263 = vand.u32 %v7262, 4294901760
        %v7264 = vsub.f32 %v7262, %v7263
        %v7265 = vand.u32 %v7264, 4294901760
        %7266 = vmatmul.mubr.f32.gmra.mxu0 %v7265
        %v7267 = vpop.f32.mrf.mxu0
        %v7268 = vadd.f32 %v7023, %v7267
        %v7269 = vpop.f32.mrf.mxu0
        %v7270 = vadd.f32 %v7025, %v7269
        %v7271 = vand.u32 %v820, 4294901760
        %v7272 = vsub.f32 %v820, %v7271
        %v7273 = vand.u32 %v7272, 4294901760
        %v7274 = vsub.f32 %v7272, %v7273
        %v7275 = vand.u32 %v7274, 4294901760
        %7276 = vmatprep.mubr.f32.mxu0 %v7275
        %v7277 = vand.u32 %v335, 4294901760
        %v7278 = vsub.f32 %v335, %v7277
        %v7279 = vand.u32 %v7278, 4294901760
        %v7280 = vsub.f32 %v7278, %v7279
        %v7281 = vand.u32 %v7280, 4294901760
        %7282 = vmatmul.mubr.f32.gmra.mxu0 %v7281
        %v7283 = vpop.f32.mrf.mxu0
        %v7284 = vadd.f32 %v7031, %v7283
        %v7285 = vpop.f32.mrf.mxu0
        %v7286 = vadd.f32 %v7033, %v7285
        %v7287 = vand.u32 %v823, 4294901760
        %v7288 = vsub.f32 %v823, %v7287
        %v7289 = vand.u32 %v7288, 4294901760
        %v7290 = vsub.f32 %v7288, %v7289
        %v7291 = vand.u32 %v7290, 4294901760
        %7292 = vmatprep.mubr.f32.mxu0 %v7291
        %v7293 = vand.u32 %v339, 4294901760
        %v7294 = vsub.f32 %v339, %v7293
        %v7295 = vand.u32 %v7294, 4294901760
        %v7296 = vsub.f32 %v7294, %v7295
        %v7297 = vand.u32 %v7296, 4294901760
        %7298 = vmatmul.mubr.f32.gmra.mxu0 %v7297
        %v7299 = vpop.f32.mrf.mxu0
        %v7300 = vadd.f32 %v7039, %v7299
        %v7301 = vpop.f32.mrf.mxu0
        %v7302 = vadd.f32 %v7041, %v7301
        %v7303 = vand.u32 %v826, 4294901760
        %v7304 = vsub.f32 %v826, %v7303
        %v7305 = vand.u32 %v7304, 4294901760
        %v7306 = vsub.f32 %v7304, %v7305
        %v7307 = vand.u32 %v7306, 4294901760
        %7308 = vmatprep.mubr.f32.mxu0 %v7307
        %v7309 = vand.u32 %v343, 4294901760
        %v7310 = vsub.f32 %v343, %v7309
        %v7311 = vand.u32 %v7310, 4294901760
        %v7312 = vsub.f32 %v7310, %v7311
        %v7313 = vand.u32 %v7312, 4294901760
        %7314 = vmatmul.mubr.f32.gmra.mxu0 %v7313
        %v7315 = vpop.f32.mrf.mxu0
        %v7316 = vadd.f32 %v7047, %v7315
        %v7317 = vpop.f32.mrf.mxu0
        %v7318 = vadd.f32 %v7049, %v7317
        %v7319 = vand.u32 %v829, 4294901760
        %v7320 = vsub.f32 %v829, %v7319
        %v7321 = vand.u32 %v7320, 4294901760
        %v7322 = vsub.f32 %v7320, %v7321
        %v7323 = vand.u32 %v7322, 4294901760
        %7324 = vmatprep.mubr.f32.mxu0 %v7323
        %v7325 = vand.u32 %v347, 4294901760
        %v7326 = vsub.f32 %v347, %v7325
        %v7327 = vand.u32 %v7326, 4294901760
        %v7328 = vsub.f32 %v7326, %v7327
        %v7329 = vand.u32 %v7328, 4294901760
        %7330 = vmatmul.mubr.f32.gmra.mxu0 %v7329
        %v7331 = vpop.f32.mrf.mxu0
        %v7332 = vadd.f32 %v7055, %v7331
        %v7333 = vpop.f32.mrf.mxu0
        %v7334 = vadd.f32 %v7057, %v7333
        %v7335 = vand.u32 %v832, 4294901760
        %v7336 = vsub.f32 %v832, %v7335
        %v7337 = vand.u32 %v7336, 4294901760
        %v7338 = vsub.f32 %v7336, %v7337
        %v7339 = vand.u32 %v7338, 4294901760
        %7340 = vmatprep.mubr.f32.mxu0 %v7339
        %v7341 = vand.u32 %v351, 4294901760
        %v7342 = vsub.f32 %v351, %v7341
        %v7343 = vand.u32 %v7342, 4294901760
        %v7344 = vsub.f32 %v7342, %v7343
        %v7345 = vand.u32 %v7344, 4294901760
        %7346 = vmatmul.mubr.f32.gmra.mxu0 %v7345
        %v7347 = vpop.f32.mrf.mxu0
        %v7348 = vadd.f32 %v7063, %v7347
        %v7349 = vpop.f32.mrf.mxu0
        %v7350 = vadd.f32 %v7065, %v7349
        %v7351 = vand.u32 %v835, 4294901760
        %v7352 = vsub.f32 %v835, %v7351
        %v7353 = vand.u32 %v7352, 4294901760
        %v7354 = vsub.f32 %v7352, %v7353
        %v7355 = vand.u32 %v7354, 4294901760
        %7356 = vmatprep.mubr.f32.mxu0 %v7355
        %v7357 = vand.u32 %v355, 4294901760
        %v7358 = vsub.f32 %v355, %v7357
        %v7359 = vand.u32 %v7358, 4294901760
        %v7360 = vsub.f32 %v7358, %v7359
        %v7361 = vand.u32 %v7360, 4294901760
        %7362 = vmatmul.mubr.f32.gmra.mxu0 %v7361
        %v7363 = vpop.f32.mrf.mxu0
        %v7364 = vadd.f32 %v7071, %v7363
        %v7365 = vpop.f32.mrf.mxu0
        %v7366 = vadd.f32 %v7073, %v7365
        %v7367 = vand.u32 %v838, 4294901760
        %v7368 = vsub.f32 %v838, %v7367
        %v7369 = vand.u32 %v7368, 4294901760
        %v7370 = vsub.f32 %v7368, %v7369
        %v7371 = vand.u32 %v7370, 4294901760
        %7372 = vmatprep.mubr.f32.mxu0 %v7371
        %v7373 = vand.u32 %v359, 4294901760
        %v7374 = vsub.f32 %v359, %v7373
        %v7375 = vand.u32 %v7374, 4294901760
        %v7376 = vsub.f32 %v7374, %v7375
        %v7377 = vand.u32 %v7376, 4294901760
        %7378 = vmatmul.mubr.f32.gmra.mxu0 %v7377
        %v7379 = vpop.f32.mrf.mxu0
        %v7380 = vadd.f32 %v7079, %v7379
        %v7381 = vpop.f32.mrf.mxu0
        %v7382 = vadd.f32 %v7081, %v7381
        %v7383 = vand.u32 %v841, 4294901760
        %v7384 = vsub.f32 %v841, %v7383
        %v7385 = vand.u32 %v7384, 4294901760
        %v7386 = vsub.f32 %v7384, %v7385
        %v7387 = vand.u32 %v7386, 4294901760
        %7388 = vmatprep.mubr.f32.mxu0 %v7387
        %v7389 = vand.u32 %v363, 4294901760
        %v7390 = vsub.f32 %v363, %v7389
        %v7391 = vand.u32 %v7390, 4294901760
        %v7392 = vsub.f32 %v7390, %v7391
        %v7393 = vand.u32 %v7392, 4294901760
        %7394 = vmatmul.mubr.f32.gmra.mxu0 %v7393
        %v7395 = vpop.f32.mrf.mxu0
        %v7396 = vadd.f32 %v7087, %v7395
        %v7397 = vpop.f32.mrf.mxu0
        %v7398 = vadd.f32 %v7089, %v7397
        %v7399 = vand.u32 %v844, 4294901760
        %v7400 = vsub.f32 %v844, %v7399
        %v7401 = vand.u32 %v7400, 4294901760
        %v7402 = vsub.f32 %v7400, %v7401
        %v7403 = vand.u32 %v7402, 4294901760
        %7404 = vmatprep.mubr.f32.mxu0 %v7403
        %v7405 = vand.u32 %v367, 4294901760
        %v7406 = vsub.f32 %v367, %v7405
        %v7407 = vand.u32 %v7406, 4294901760
        %v7408 = vsub.f32 %v7406, %v7407
        %v7409 = vand.u32 %v7408, 4294901760
        %7410 = vmatmul.mubr.f32.gmra.mxu0 %v7409
        %v7411 = vpop.f32.mrf.mxu0
        %v7412 = vadd.f32 %v7095, %v7411
        %v7413 = vpop.f32.mrf.mxu0
        %v7414 = vadd.f32 %v7097, %v7413
        %v7415 = vand.u32 %v847, 4294901760
        %v7416 = vsub.f32 %v847, %v7415
        %v7417 = vand.u32 %v7416, 4294901760
        %v7418 = vsub.f32 %v7416, %v7417
        %v7419 = vand.u32 %v7418, 4294901760
        %7420 = vmatprep.mubr.f32.mxu0 %v7419
        %v7421 = vand.u32 %v371, 4294901760
        %v7422 = vsub.f32 %v371, %v7421
        %v7423 = vand.u32 %v7422, 4294901760
        %v7424 = vsub.f32 %v7422, %v7423
        %v7425 = vand.u32 %v7424, 4294901760
        %7426 = vmatmul.mubr.f32.gmra.mxu0 %v7425
        %v7427 = vpop.f32.mrf.mxu0
        %v7428 = vadd.f32 %v7103, %v7427
        %v7429 = vpop.f32.mrf.mxu0
        %v7430 = vadd.f32 %v7105, %v7429
        %v7431 = vand.u32 %v850, 4294901760
        %v7432 = vsub.f32 %v850, %v7431
        %v7433 = vand.u32 %v7432, 4294901760
        %v7434 = vsub.f32 %v7432, %v7433
        %v7435 = vand.u32 %v7434, 4294901760
        %7436 = vmatprep.mubr.f32.mxu0 %v7435
        %v7437 = vand.u32 %v375, 4294901760
        %v7438 = vsub.f32 %v375, %v7437
        %v7439 = vand.u32 %v7438, 4294901760
        %v7440 = vsub.f32 %v7438, %v7439
        %v7441 = vand.u32 %v7440, 4294901760
        %7442 = vmatmul.mubr.f32.gmra.mxu0 %v7441
        %v7443 = vpop.f32.mrf.mxu0
        %v7444 = vadd.f32 %v7111, %v7443
        %v7445 = vpop.f32.mrf.mxu0
        %v7446 = vadd.f32 %v7113, %v7445
        %v7447 = vand.u32 %v853, 4294901760
        %v7448 = vsub.f32 %v853, %v7447
        %v7449 = vand.u32 %v7448, 4294901760
        %v7450 = vsub.f32 %v7448, %v7449
        %v7451 = vand.u32 %v7450, 4294901760
        %7452 = vmatprep.mubr.f32.mxu0 %v7451
        %v7453 = vand.u32 %v379, 4294901760
        %v7454 = vsub.f32 %v379, %v7453
        %v7455 = vand.u32 %v7454, 4294901760
        %v7456 = vsub.f32 %v7454, %v7455
        %v7457 = vand.u32 %v7456, 4294901760
        %7458 = vmatmul.mubr.f32.gmra.mxu0 %v7457
        %v7459 = vpop.f32.mrf.mxu0
        %v7460 = vadd.f32 %v7119, %v7459
        %v7461 = vpop.f32.mrf.mxu0
        %v7462 = vadd.f32 %v7121, %v7461
        %v7463 = vand.u32 %v856, 4294901760
        %v7464 = vsub.f32 %v856, %v7463
        %v7465 = vand.u32 %v7464, 4294901760
        %v7466 = vsub.f32 %v7464, %v7465
        %v7467 = vand.u32 %v7466, 4294901760
        %7468 = vmatprep.mubr.f32.mxu0 %v7467
        %v7469 = vand.u32 %v383, 4294901760
        %v7470 = vsub.f32 %v383, %v7469
        %v7471 = vand.u32 %v7470, 4294901760
        %v7472 = vsub.f32 %v7470, %v7471
        %v7473 = vand.u32 %v7472, 4294901760
        %7474 = vmatmul.mubr.f32.gmra.mxu0 %v7473
        %v7475 = vpop.f32.mrf.mxu0
        %v7476 = vadd.f32 %v7127, %v7475
        %v7477 = vpop.f32.mrf.mxu0
        %v7478 = vadd.f32 %v7129, %v7477
        %v7479 = vand.u32 %v859, 4294901760
        %v7480 = vsub.f32 %v859, %v7479
        %v7481 = vand.u32 %v7480, 4294901760
        %v7482 = vsub.f32 %v7480, %v7481
        %v7483 = vand.u32 %v7482, 4294901760
        %7484 = vmatprep.mubr.f32.mxu0 %v7483
        %v7485 = vand.u32 %v387, 4294901760
        %v7486 = vsub.f32 %v387, %v7485
        %v7487 = vand.u32 %v7486, 4294901760
        %v7488 = vsub.f32 %v7486, %v7487
        %v7489 = vand.u32 %v7488, 4294901760
        %7490 = vmatmul.mubr.f32.gmra.mxu0 %v7489
        %v7491 = vpop.f32.mrf.mxu0
        %v7492 = vadd.f32 %v7135, %v7491
        %v7493 = vpop.f32.mrf.mxu0
        %v7494 = vadd.f32 %v7137, %v7493
        %7495 = vdwg.mxu0
        %v7496 = vand.u32 %v804, 4294901760
        %v7497 = vsub.f32 %v804, %v7496
        %v7498 = vand.u32 %v7497, 4294901760
        %v7499 = vsub.f32 %v7497, %v7498
        %v7500 = vand.u32 %v7499, 4294901760
        %7501 = vmatprep.subr.mxu0 %v7500
        %v7502 = vand.u32 %v803, 4294901760
        %v7503 = vsub.f32 %v803, %v7502
        %v7504 = vand.u32 %v7503, 4294901760
        %v7505 = vsub.f32 %v7503, %v7504
        %v7506 = vand.u32 %v7505, 4294901760
        %7507 = vmatpush1.msra.mxu0 %v7506
        %v7508 = vand.u32 %v800, 4294901760
        %v7509 = vsub.f32 %v800, %v7508
        %v7510 = vand.u32 %v7509, 4294901760
        %v7511 = vsub.f32 %v7509, %v7510
        %v7512 = vand.u32 %v7511, 4294901760
        %7513 = vmatprep.subr.mxu0 %v7512
        %v7514 = vand.u32 %v799, 4294901760
        %v7515 = vsub.f32 %v799, %v7514
        %v7516 = vand.u32 %v7515, 4294901760
        %v7517 = vsub.f32 %v7515, %v7516
        %v7518 = vand.u32 %v7517, 4294901760
        %7519 = vmatpush1.msra.mxu0 %v7518
        %v7520 = vand.u32 %v796, 4294901760
        %v7521 = vsub.f32 %v796, %v7520
        %v7522 = vand.u32 %v7521, 4294901760
        %v7523 = vsub.f32 %v7521, %v7522
        %v7524 = vand.u32 %v7523, 4294901760
        %7525 = vmatprep.subr.mxu0 %v7524
        %v7526 = vand.u32 %v795, 4294901760
        %v7527 = vsub.f32 %v795, %v7526
        %v7528 = vand.u32 %v7527, 4294901760
        %v7529 = vsub.f32 %v7527, %v7528
        %v7530 = vand.u32 %v7529, 4294901760
        %7531 = vmatpush1.msra.mxu0 %v7530
        %v7532 = vand.u32 %v792, 4294901760
        %v7533 = vsub.f32 %v792, %v7532
        %v7534 = vand.u32 %v7533, 4294901760
        %v7535 = vsub.f32 %v7533, %v7534
        %v7536 = vand.u32 %v7535, 4294901760
        %7537 = vmatprep.subr.mxu0 %v7536
        %v7538 = vand.u32 %v791, 4294901760
        %v7539 = vsub.f32 %v791, %v7538
        %v7540 = vand.u32 %v7539, 4294901760
        %v7541 = vsub.f32 %v7539, %v7540
        %v7542 = vand.u32 %v7541, 4294901760
        %7543 = vmatpush1.msra.mxu0 %v7542
        %v7544 = vand.u32 %v788, 4294901760
        %v7545 = vsub.f32 %v788, %v7544
        %v7546 = vand.u32 %v7545, 4294901760
        %v7547 = vsub.f32 %v7545, %v7546
        %v7548 = vand.u32 %v7547, 4294901760
        %7549 = vmatprep.subr.mxu0 %v7548
        %v7550 = vand.u32 %v787, 4294901760
        %v7551 = vsub.f32 %v787, %v7550
        %v7552 = vand.u32 %v7551, 4294901760
        %v7553 = vsub.f32 %v7551, %v7552
        %v7554 = vand.u32 %v7553, 4294901760
        %7555 = vmatpush1.msra.mxu0 %v7554
        %v7556 = vand.u32 %v784, 4294901760
        %v7557 = vsub.f32 %v784, %v7556
        %v7558 = vand.u32 %v7557, 4294901760
        %v7559 = vsub.f32 %v7557, %v7558
        %v7560 = vand.u32 %v7559, 4294901760
        %7561 = vmatprep.subr.mxu0 %v7560
        %v7562 = vand.u32 %v783, 4294901760
        %v7563 = vsub.f32 %v783, %v7562
        %v7564 = vand.u32 %v7563, 4294901760
        %v7565 = vsub.f32 %v7563, %v7564
        %v7566 = vand.u32 %v7565, 4294901760
        %7567 = vmatpush1.msra.mxu0 %v7566
        %v7568 = vand.u32 %v780, 4294901760
        %v7569 = vsub.f32 %v780, %v7568
        %v7570 = vand.u32 %v7569, 4294901760
        %v7571 = vsub.f32 %v7569, %v7570
        %v7572 = vand.u32 %v7571, 4294901760
        %7573 = vmatprep.subr.mxu0 %v7572
        %v7574 = vand.u32 %v779, 4294901760
        %v7575 = vsub.f32 %v779, %v7574
        %v7576 = vand.u32 %v7575, 4294901760
        %v7577 = vsub.f32 %v7575, %v7576
        %v7578 = vand.u32 %v7577, 4294901760
        %7579 = vmatpush1.msra.mxu0 %v7578
        %v7580 = vand.u32 %v776, 4294901760
        %v7581 = vsub.f32 %v776, %v7580
        %v7582 = vand.u32 %v7581, 4294901760
        %v7583 = vsub.f32 %v7581, %v7582
        %v7584 = vand.u32 %v7583, 4294901760
        %7585 = vmatprep.subr.mxu0 %v7584
        %v7586 = vand.u32 %v775, 4294901760
        %v7587 = vsub.f32 %v775, %v7586
        %v7588 = vand.u32 %v7587, 4294901760
        %v7589 = vsub.f32 %v7587, %v7588
        %v7590 = vand.u32 %v7589, 4294901760
        %7591 = vmatpush1.msra.mxu0 %v7590
        %v7592 = vand.u32 %v772, 4294901760
        %v7593 = vsub.f32 %v772, %v7592
        %v7594 = vand.u32 %v7593, 4294901760
        %v7595 = vsub.f32 %v7593, %v7594
        %v7596 = vand.u32 %v7595, 4294901760
        %7597 = vmatprep.subr.mxu0 %v7596
        %v7598 = vand.u32 %v771, 4294901760
        %v7599 = vsub.f32 %v771, %v7598
        %v7600 = vand.u32 %v7599, 4294901760
        %v7601 = vsub.f32 %v7599, %v7600
        %v7602 = vand.u32 %v7601, 4294901760
        %7603 = vmatpush1.msra.mxu0 %v7602
        %v7604 = vand.u32 %v768, 4294901760
        %v7605 = vsub.f32 %v768, %v7604
        %v7606 = vand.u32 %v7605, 4294901760
        %v7607 = vsub.f32 %v7605, %v7606
        %v7608 = vand.u32 %v7607, 4294901760
        %7609 = vmatprep.subr.mxu0 %v7608
        %v7610 = vand.u32 %v767, 4294901760
        %v7611 = vsub.f32 %v767, %v7610
        %v7612 = vand.u32 %v7611, 4294901760
        %v7613 = vsub.f32 %v7611, %v7612
        %v7614 = vand.u32 %v7613, 4294901760
        %7615 = vmatpush1.msra.mxu0 %v7614
        %v7616 = vand.u32 %v764, 4294901760
        %v7617 = vsub.f32 %v764, %v7616
        %v7618 = vand.u32 %v7617, 4294901760
        %v7619 = vsub.f32 %v7617, %v7618
        %v7620 = vand.u32 %v7619, 4294901760
        %7621 = vmatprep.subr.mxu0 %v7620
        %v7622 = vand.u32 %v763, 4294901760
        %v7623 = vsub.f32 %v763, %v7622
        %v7624 = vand.u32 %v7623, 4294901760
        %v7625 = vsub.f32 %v7623, %v7624
        %v7626 = vand.u32 %v7625, 4294901760
        %7627 = vmatpush1.msra.mxu0 %v7626
        %v7628 = vand.u32 %v760, 4294901760
        %v7629 = vsub.f32 %v760, %v7628
        %v7630 = vand.u32 %v7629, 4294901760
        %v7631 = vsub.f32 %v7629, %v7630
        %v7632 = vand.u32 %v7631, 4294901760
        %7633 = vmatprep.subr.mxu0 %v7632
        %v7634 = vand.u32 %v759, 4294901760
        %v7635 = vsub.f32 %v759, %v7634
        %v7636 = vand.u32 %v7635, 4294901760
        %v7637 = vsub.f32 %v7635, %v7636
        %v7638 = vand.u32 %v7637, 4294901760
        %7639 = vmatpush1.msra.mxu0 %v7638
        %v7640 = vand.u32 %v756, 4294901760
        %v7641 = vsub.f32 %v756, %v7640
        %v7642 = vand.u32 %v7641, 4294901760
        %v7643 = vsub.f32 %v7641, %v7642
        %v7644 = vand.u32 %v7643, 4294901760
        %7645 = vmatprep.subr.mxu0 %v7644
        %v7646 = vand.u32 %v755, 4294901760
        %v7647 = vsub.f32 %v755, %v7646
        %v7648 = vand.u32 %v7647, 4294901760
        %v7649 = vsub.f32 %v7647, %v7648
        %v7650 = vand.u32 %v7649, 4294901760
        %7651 = vmatpush1.msra.mxu0 %v7650
        %v7652 = vand.u32 %v752, 4294901760
        %v7653 = vsub.f32 %v752, %v7652
        %v7654 = vand.u32 %v7653, 4294901760
        %v7655 = vsub.f32 %v7653, %v7654
        %v7656 = vand.u32 %v7655, 4294901760
        %7657 = vmatprep.subr.mxu0 %v7656
        %v7658 = vand.u32 %v751, 4294901760
        %v7659 = vsub.f32 %v751, %v7658
        %v7660 = vand.u32 %v7659, 4294901760
        %v7661 = vsub.f32 %v7659, %v7660
        %v7662 = vand.u32 %v7661, 4294901760
        %7663 = vmatpush1.msra.mxu0 %v7662
        %v7664 = vand.u32 %v748, 4294901760
        %v7665 = vsub.f32 %v748, %v7664
        %v7666 = vand.u32 %v7665, 4294901760
        %v7667 = vsub.f32 %v7665, %v7666
        %v7668 = vand.u32 %v7667, 4294901760
        %7669 = vmatprep.subr.mxu0 %v7668
        %v7670 = vand.u32 %v747, 4294901760
        %v7671 = vsub.f32 %v747, %v7670
        %v7672 = vand.u32 %v7671, 4294901760
        %v7673 = vsub.f32 %v7671, %v7672
        %v7674 = vand.u32 %v7673, 4294901760
        %7675 = vmatpush1.msra.mxu0 %v7674
        %v7676 = vand.u32 %v744, 4294901760
        %v7677 = vsub.f32 %v744, %v7676
        %v7678 = vand.u32 %v7677, 4294901760
        %v7679 = vsub.f32 %v7677, %v7678
        %v7680 = vand.u32 %v7679, 4294901760
        %7681 = vmatprep.subr.mxu0 %v7680
        %v7682 = vand.u32 %v743, 4294901760
        %v7683 = vsub.f32 %v743, %v7682
        %v7684 = vand.u32 %v7683, 4294901760
        %v7685 = vsub.f32 %v7683, %v7684
        %v7686 = vand.u32 %v7685, 4294901760
        %7687 = vmatpush1.msra.mxu0 %v7686
        %7688 = vmatprep.subr.mxu0 0.0
        %7689 = vmatpush2.msra.mxu0 0.0
        %7690 = vmatprep.subr.mxu0 0.0
        %7691 = vmatpush2.msra.mxu0 0.0
        %7692 = vmatprep.subr.mxu0 0.0
        %7693 = vmatpush2.msra.mxu0 0.0
        %7694 = vmatprep.subr.mxu0 0.0
        %7695 = vmatpush2.msra.mxu0 0.0
        %7696 = vmatprep.subr.mxu0 0.0
        %7697 = vmatpush2.msra.mxu0 0.0
        %7698 = vmatprep.subr.mxu0 0.0
        %7699 = vmatpush2.msra.mxu0 0.0
        %7700 = vmatprep.subr.mxu0 0.0
        %7701 = vmatpush2.msra.mxu0 0.0
        %7702 = vmatprep.subr.mxu0 0.0
        %7703 = vmatpush2.msra.mxu0 0.0
        %7704 = vmatprep.subr.mxu0 0.0
        %7705 = vmatpush2.msra.mxu0 0.0
        %7706 = vmatprep.subr.mxu0 0.0
        %7707 = vmatpush2.msra.mxu0 0.0
        %7708 = vmatprep.subr.mxu0 0.0
        %7709 = vmatpush2.msra.mxu0 0.0
        %7710 = vmatprep.subr.mxu0 0.0
        %7711 = vmatpush2.msra.mxu0 0.0
        %7712 = vmatprep.subr.mxu0 0.0
        %7713 = vmatpush2.msra.mxu0 0.0
        %7714 = vmatprep.subr.mxu0 0.0
        %7715 = vmatpush2.msra.mxu0 0.0
        %v7716 = vand.u32 %v812, 4294901760
        %v7717 = vsub.f32 %v812, %v7716
        %v7718 = vand.u32 %v7717, 4294901760
        %v7719 = vsub.f32 %v7717, %v7718
        %v7720 = vand.u32 %v7719, 4294901760
        %7721 = vmatprep.subr.mxu0 %v7720
        %v7722 = vand.u32 %v811, 4294901760
        %v7723 = vsub.f32 %v811, %v7722
        %v7724 = vand.u32 %v7723, 4294901760
        %v7725 = vsub.f32 %v7723, %v7724
        %v7726 = vand.u32 %v7725, 4294901760
        %7727 = vmatpush2.msra.mxu0 %v7726
        %v7728 = vand.u32 %v808, 4294901760
        %v7729 = vsub.f32 %v808, %v7728
        %v7730 = vand.u32 %v7729, 4294901760
        %v7731 = vsub.f32 %v7729, %v7730
        %v7732 = vand.u32 %v7731, 4294901760
        %7733 = vmatprep.subr.mxu0 %v7732
        %v7734 = vand.u32 %v807, 4294901760
        %v7735 = vsub.f32 %v807, %v7734
        %v7736 = vand.u32 %v7735, 4294901760
        %v7737 = vsub.f32 %v7735, %v7736
        %v7738 = vand.u32 %v7737, 4294901760
        %7739 = vmatpush2.msra.mxu0 %v7738
        %v7740 = vand.u32 %v814, 4294901760
        %7741 = vmatprep.mubr.f32.mxu0 %v7740
        %v7742 = vand.u32 %v327, 4294901760
        %7743 = vmatmul.mubr.f32.gmra.mxu0 %v7742
        %v7744 = vpop.f32.mrf.mxu0
        %v7745 = vadd.f32 %v7252, %v7744
        %v7746 = vpop.f32.mrf.mxu0
        %v7747 = vadd.f32 %v7254, %v7746
        %v7748 = vand.u32 %v817, 4294901760
        %7749 = vmatprep.mubr.f32.mxu0 %v7748
        %v7750 = vand.u32 %v331, 4294901760
        %7751 = vmatmul.mubr.f32.gmra.mxu0 %v7750
        %v7752 = vpop.f32.mrf.mxu0
        %v7753 = vadd.f32 %v7268, %v7752
        %v7754 = vpop.f32.mrf.mxu0
        %v7755 = vadd.f32 %v7270, %v7754
        %v7756 = vand.u32 %v820, 4294901760
        %7757 = vmatprep.mubr.f32.mxu0 %v7756
        %v7758 = vand.u32 %v335, 4294901760
        %7759 = vmatmul.mubr.f32.gmra.mxu0 %v7758
        %v7760 = vpop.f32.mrf.mxu0
        %v7761 = vadd.f32 %v7284, %v7760
        %v7762 = vpop.f32.mrf.mxu0
        %v7763 = vadd.f32 %v7286, %v7762
        %v7764 = vand.u32 %v823, 4294901760
        %7765 = vmatprep.mubr.f32.mxu0 %v7764
        %v7766 = vand.u32 %v339, 4294901760
        %7767 = vmatmul.mubr.f32.gmra.mxu0 %v7766
        %v7768 = vpop.f32.mrf.mxu0
        %v7769 = vadd.f32 %v7300, %v7768
        %v7770 = vpop.f32.mrf.mxu0
        %v7771 = vadd.f32 %v7302, %v7770
        %v7772 = vand.u32 %v826, 4294901760
        %7773 = vmatprep.mubr.f32.mxu0 %v7772
        %v7774 = vand.u32 %v343, 4294901760
        %7775 = vmatmul.mubr.f32.gmra.mxu0 %v7774
        %v7776 = vpop.f32.mrf.mxu0
        %v7777 = vadd.f32 %v7316, %v7776
        %v7778 = vpop.f32.mrf.mxu0
        %v7779 = vadd.f32 %v7318, %v7778
        %v7780 = vand.u32 %v829, 4294901760
        %7781 = vmatprep.mubr.f32.mxu0 %v7780
        %v7782 = vand.u32 %v347, 4294901760
        %7783 = vmatmul.mubr.f32.gmra.mxu0 %v7782
        %v7784 = vpop.f32.mrf.mxu0
        %v7785 = vadd.f32 %v7332, %v7784
        %v7786 = vpop.f32.mrf.mxu0
        %v7787 = vadd.f32 %v7334, %v7786
        %v7788 = vand.u32 %v832, 4294901760
        %7789 = vmatprep.mubr.f32.mxu0 %v7788
        %v7790 = vand.u32 %v351, 4294901760
        %7791 = vmatmul.mubr.f32.gmra.mxu0 %v7790
        %v7792 = vpop.f32.mrf.mxu0
        %v7793 = vadd.f32 %v7348, %v7792
        %v7794 = vpop.f32.mrf.mxu0
        %v7795 = vadd.f32 %v7350, %v7794
        %v7796 = vand.u32 %v835, 4294901760
        %7797 = vmatprep.mubr.f32.mxu0 %v7796
        %v7798 = vand.u32 %v355, 4294901760
        %7799 = vmatmul.mubr.f32.gmra.mxu0 %v7798
        %v7800 = vpop.f32.mrf.mxu0
        %v7801 = vadd.f32 %v7364, %v7800
        %v7802 = vpop.f32.mrf.mxu0
        %v7803 = vadd.f32 %v7366, %v7802
        %v7804 = vand.u32 %v838, 4294901760
        %7805 = vmatprep.mubr.f32.mxu0 %v7804
        %v7806 = vand.u32 %v359, 4294901760
        %7807 = vmatmul.mubr.f32.gmra.mxu0 %v7806
        %v7808 = vpop.f32.mrf.mxu0
        %v7809 = vadd.f32 %v7380, %v7808
        %v7810 = vpop.f32.mrf.mxu0
        %v7811 = vadd.f32 %v7382, %v7810
        %v7812 = vand.u32 %v841, 4294901760
        %7813 = vmatprep.mubr.f32.mxu0 %v7812
        %v7814 = vand.u32 %v363, 4294901760
        %7815 = vmatmul.mubr.f32.gmra.mxu0 %v7814
        %v7816 = vpop.f32.mrf.mxu0
        %v7817 = vadd.f32 %v7396, %v7816
        %v7818 = vpop.f32.mrf.mxu0
        %v7819 = vadd.f32 %v7398, %v7818
        %v7820 = vand.u32 %v844, 4294901760
        %7821 = vmatprep.mubr.f32.mxu0 %v7820
        %v7822 = vand.u32 %v367, 4294901760
        %7823 = vmatmul.mubr.f32.gmra.mxu0 %v7822
        %v7824 = vpop.f32.mrf.mxu0
        %v7825 = vadd.f32 %v7412, %v7824
        %v7826 = vpop.f32.mrf.mxu0
        %v7827 = vadd.f32 %v7414, %v7826
        %v7828 = vand.u32 %v847, 4294901760
        %7829 = vmatprep.mubr.f32.mxu0 %v7828
        %v7830 = vand.u32 %v371, 4294901760
        %7831 = vmatmul.mubr.f32.gmra.mxu0 %v7830
        %v7832 = vpop.f32.mrf.mxu0
        %v7833 = vadd.f32 %v7428, %v7832
        %v7834 = vpop.f32.mrf.mxu0
        %v7835 = vadd.f32 %v7430, %v7834
        %v7836 = vand.u32 %v850, 4294901760
        %7837 = vmatprep.mubr.f32.mxu0 %v7836
        %v7838 = vand.u32 %v375, 4294901760
        %7839 = vmatmul.mubr.f32.gmra.mxu0 %v7838
        %v7840 = vpop.f32.mrf.mxu0
        %v7841 = vadd.f32 %v7444, %v7840
        %v7842 = vpop.f32.mrf.mxu0
        %v7843 = vadd.f32 %v7446, %v7842
        %v7844 = vand.u32 %v853, 4294901760
        %7845 = vmatprep.mubr.f32.mxu0 %v7844
        %v7846 = vand.u32 %v379, 4294901760
        %7847 = vmatmul.mubr.f32.gmra.mxu0 %v7846
        %v7848 = vpop.f32.mrf.mxu0
        %v7849 = vadd.f32 %v7460, %v7848
        %v7850 = vpop.f32.mrf.mxu0
        %v7851 = vadd.f32 %v7462, %v7850
        %v7852 = vand.u32 %v856, 4294901760
        %7853 = vmatprep.mubr.f32.mxu0 %v7852
        %v7854 = vand.u32 %v383, 4294901760
        %7855 = vmatmul.mubr.f32.gmra.mxu0 %v7854
        %v7856 = vpop.f32.mrf.mxu0
        %v7857 = vadd.f32 %v7476, %v7856
        %v7858 = vpop.f32.mrf.mxu0
        %v7859 = vadd.f32 %v7478, %v7858
        %v7860 = vand.u32 %v859, 4294901760
        %7861 = vmatprep.mubr.f32.mxu0 %v7860
        %v7862 = vand.u32 %v387, 4294901760
        %7863 = vmatmul.mubr.f32.gmra.mxu0 %v7862
        %v7864 = vpop.f32.mrf.mxu0
        %v7865 = vadd.f32 %v7492, %v7864
        %v7866 = vpop.f32.mrf.mxu0
        %v7867 = vadd.f32 %v7494, %v7866
        %7868 = vdwg.mxu0
        %v7869 = vand.u32 %v804, 4294901760
        %v7870 = vsub.f32 %v804, %v7869
        %7871 = vmatprep.subr.mxu0 %v7870
        %v7872 = vand.u32 %v803, 4294901760
        %v7873 = vsub.f32 %v803, %v7872
        %7874 = vmatpush1.msra.mxu0 %v7873
        %v7875 = vand.u32 %v800, 4294901760
        %v7876 = vsub.f32 %v800, %v7875
        %7877 = vmatprep.subr.mxu0 %v7876
        %v7878 = vand.u32 %v799, 4294901760
        %v7879 = vsub.f32 %v799, %v7878
        %7880 = vmatpush1.msra.mxu0 %v7879
        %v7881 = vand.u32 %v796, 4294901760
        %v7882 = vsub.f32 %v796, %v7881
        %7883 = vmatprep.subr.mxu0 %v7882
        %v7884 = vand.u32 %v795, 4294901760
        %v7885 = vsub.f32 %v795, %v7884
        %7886 = vmatpush1.msra.mxu0 %v7885
        %v7887 = vand.u32 %v792, 4294901760
        %v7888 = vsub.f32 %v792, %v7887
        %7889 = vmatprep.subr.mxu0 %v7888
        %v7890 = vand.u32 %v791, 4294901760
        %v7891 = vsub.f32 %v791, %v7890
        %7892 = vmatpush1.msra.mxu0 %v7891
        %v7893 = vand.u32 %v788, 4294901760
        %v7894 = vsub.f32 %v788, %v7893
        %7895 = vmatprep.subr.mxu0 %v7894
        %v7896 = vand.u32 %v787, 4294901760
        %v7897 = vsub.f32 %v787, %v7896
        %7898 = vmatpush1.msra.mxu0 %v7897
        %v7899 = vand.u32 %v784, 4294901760
        %v7900 = vsub.f32 %v784, %v7899
        %7901 = vmatprep.subr.mxu0 %v7900
        %v7902 = vand.u32 %v783, 4294901760
        %v7903 = vsub.f32 %v783, %v7902
        %7904 = vmatpush1.msra.mxu0 %v7903
        %v7905 = vand.u32 %v780, 4294901760
        %v7906 = vsub.f32 %v780, %v7905
        %7907 = vmatprep.subr.mxu0 %v7906
        %v7908 = vand.u32 %v779, 4294901760
        %v7909 = vsub.f32 %v779, %v7908
        %7910 = vmatpush1.msra.mxu0 %v7909
        %v7911 = vand.u32 %v776, 4294901760
        %v7912 = vsub.f32 %v776, %v7911
        %7913 = vmatprep.subr.mxu0 %v7912
        %v7914 = vand.u32 %v775, 4294901760
        %v7915 = vsub.f32 %v775, %v7914
        %7916 = vmatpush1.msra.mxu0 %v7915
        %v7917 = vand.u32 %v772, 4294901760
        %v7918 = vsub.f32 %v772, %v7917
        %7919 = vmatprep.subr.mxu0 %v7918
        %v7920 = vand.u32 %v771, 4294901760
        %v7921 = vsub.f32 %v771, %v7920
        %7922 = vmatpush1.msra.mxu0 %v7921
        %v7923 = vand.u32 %v768, 4294901760
        %v7924 = vsub.f32 %v768, %v7923
        %7925 = vmatprep.subr.mxu0 %v7924
        %v7926 = vand.u32 %v767, 4294901760
        %v7927 = vsub.f32 %v767, %v7926
        %7928 = vmatpush1.msra.mxu0 %v7927
        %v7929 = vand.u32 %v764, 4294901760
        %v7930 = vsub.f32 %v764, %v7929
        %7931 = vmatprep.subr.mxu0 %v7930
        %v7932 = vand.u32 %v763, 4294901760
        %v7933 = vsub.f32 %v763, %v7932
        %7934 = vmatpush1.msra.mxu0 %v7933
        %v7935 = vand.u32 %v760, 4294901760
        %v7936 = vsub.f32 %v760, %v7935
        %7937 = vmatprep.subr.mxu0 %v7936
        %v7938 = vand.u32 %v759, 4294901760
        %v7939 = vsub.f32 %v759, %v7938
        %7940 = vmatpush1.msra.mxu0 %v7939
        %v7941 = vand.u32 %v756, 4294901760
        %v7942 = vsub.f32 %v756, %v7941
        %7943 = vmatprep.subr.mxu0 %v7942
        %v7944 = vand.u32 %v755, 4294901760
        %v7945 = vsub.f32 %v755, %v7944
        %7946 = vmatpush1.msra.mxu0 %v7945
        %v7947 = vand.u32 %v752, 4294901760
        %v7948 = vsub.f32 %v752, %v7947
        %7949 = vmatprep.subr.mxu0 %v7948
        %v7950 = vand.u32 %v751, 4294901760
        %v7951 = vsub.f32 %v751, %v7950
        %7952 = vmatpush1.msra.mxu0 %v7951
        %v7953 = vand.u32 %v748, 4294901760
        %v7954 = vsub.f32 %v748, %v7953
        %7955 = vmatprep.subr.mxu0 %v7954
        %v7956 = vand.u32 %v747, 4294901760
        %v7957 = vsub.f32 %v747, %v7956
        %7958 = vmatpush1.msra.mxu0 %v7957
        %v7959 = vand.u32 %v744, 4294901760
        %v7960 = vsub.f32 %v744, %v7959
        %7961 = vmatprep.subr.mxu0 %v7960
        %v7962 = vand.u32 %v743, 4294901760
        %v7963 = vsub.f32 %v743, %v7962
        %7964 = vmatpush1.msra.mxu0 %v7963
        %7965 = vmatprep.subr.mxu0 0.0
        %7966 = vmatpush2.msra.mxu0 0.0
        %7967 = vmatprep.subr.mxu0 0.0
        %7968 = vmatpush2.msra.mxu0 0.0
        %7969 = vmatprep.subr.mxu0 0.0
        %7970 = vmatpush2.msra.mxu0 0.0
        %7971 = vmatprep.subr.mxu0 0.0
        %7972 = vmatpush2.msra.mxu0 0.0
        %7973 = vmatprep.subr.mxu0 0.0
        %7974 = vmatpush2.msra.mxu0 0.0
        %7975 = vmatprep.subr.mxu0 0.0
        %7976 = vmatpush2.msra.mxu0 0.0
        %7977 = vmatprep.subr.mxu0 0.0
        %7978 = vmatpush2.msra.mxu0 0.0
        %7979 = vmatprep.subr.mxu0 0.0
        %7980 = vmatpush2.msra.mxu0 0.0
        %7981 = vmatprep.subr.mxu0 0.0
        %7982 = vmatpush2.msra.mxu0 0.0
        %7983 = vmatprep.subr.mxu0 0.0
        %7984 = vmatpush2.msra.mxu0 0.0
        %7985 = vmatprep.subr.mxu0 0.0
        %7986 = vmatpush2.msra.mxu0 0.0
        %7987 = vmatprep.subr.mxu0 0.0
        %7988 = vmatpush2.msra.mxu0 0.0
        %7989 = vmatprep.subr.mxu0 0.0
        %7990 = vmatpush2.msra.mxu0 0.0
        %7991 = vmatprep.subr.mxu0 0.0
        %7992 = vmatpush2.msra.mxu0 0.0
        %v7993 = vand.u32 %v812, 4294901760
        %v7994 = vsub.f32 %v812, %v7993
        %7995 = vmatprep.subr.mxu0 %v7994
        %v7996 = vand.u32 %v811, 4294901760
        %v7997 = vsub.f32 %v811, %v7996
        %7998 = vmatpush2.msra.mxu0 %v7997
        %v7999 = vand.u32 %v808, 4294901760
        %v8000 = vsub.f32 %v808, %v7999
        %8001 = vmatprep.subr.mxu0 %v8000
        %v8002 = vand.u32 %v807, 4294901760
        %v8003 = vsub.f32 %v807, %v8002
        %8004 = vmatpush2.msra.mxu0 %v8003
        %v8005 = vand.u32 %v814, 4294901760
        %v8006 = vsub.f32 %v814, %v8005
        %8007 = vmatprep.mubr.f32.mxu0 %v8006
        %v8008 = vand.u32 %v327, 4294901760
        %v8009 = vsub.f32 %v327, %v8008
        %8010 = vmatmul.mubr.f32.gmra.mxu0 %v8009
        %v8011 = vpop.f32.mrf.mxu0
        %v8012 = vadd.f32 %v7745, %v8011
        %v8013 = vpop.f32.mrf.mxu0
        %v8014 = vadd.f32 %v7747, %v8013
        %v8015 = vand.u32 %v817, 4294901760
        %v8016 = vsub.f32 %v817, %v8015
        %8017 = vmatprep.mubr.f32.mxu0 %v8016
        %v8018 = vand.u32 %v331, 4294901760
        %v8019 = vsub.f32 %v331, %v8018
        %8020 = vmatmul.mubr.f32.gmra.mxu0 %v8019
        %v8021 = vpop.f32.mrf.mxu0
        %v8022 = vadd.f32 %v7753, %v8021
        %v8023 = vpop.f32.mrf.mxu0
        %v8024 = vadd.f32 %v7755, %v8023
        %v8025 = vand.u32 %v820, 4294901760
        %v8026 = vsub.f32 %v820, %v8025
        %8027 = vmatprep.mubr.f32.mxu0 %v8026
        %v8028 = vand.u32 %v335, 4294901760
        %v8029 = vsub.f32 %v335, %v8028
        %8030 = vmatmul.mubr.f32.gmra.mxu0 %v8029
        %v8031 = vpop.f32.mrf.mxu0
        %v8032 = vadd.f32 %v7761, %v8031
        %v8033 = vpop.f32.mrf.mxu0
        %v8034 = vadd.f32 %v7763, %v8033
        %v8035 = vand.u32 %v823, 4294901760
        %v8036 = vsub.f32 %v823, %v8035
        %8037 = vmatprep.mubr.f32.mxu0 %v8036
        %v8038 = vand.u32 %v339, 4294901760
        %v8039 = vsub.f32 %v339, %v8038
        %8040 = vmatmul.mubr.f32.gmra.mxu0 %v8039
        %v8041 = vpop.f32.mrf.mxu0
        %v8042 = vadd.f32 %v7769, %v8041
        %v8043 = vpop.f32.mrf.mxu0
        %v8044 = vadd.f32 %v7771, %v8043
        %v8045 = vand.u32 %v826, 4294901760
        %v8046 = vsub.f32 %v826, %v8045
        %8047 = vmatprep.mubr.f32.mxu0 %v8046
        %v8048 = vand.u32 %v343, 4294901760
        %v8049 = vsub.f32 %v343, %v8048
        %8050 = vmatmul.mubr.f32.gmra.mxu0 %v8049
        %v8051 = vpop.f32.mrf.mxu0
        %v8052 = vadd.f32 %v7777, %v8051
        %v8053 = vpop.f32.mrf.mxu0
        %v8054 = vadd.f32 %v7779, %v8053
        %v8055 = vand.u32 %v829, 4294901760
        %v8056 = vsub.f32 %v829, %v8055
        %8057 = vmatprep.mubr.f32.mxu0 %v8056
        %v8058 = vand.u32 %v347, 4294901760
        %v8059 = vsub.f32 %v347, %v8058
        %8060 = vmatmul.mubr.f32.gmra.mxu0 %v8059
        %v8061 = vpop.f32.mrf.mxu0
        %v8062 = vadd.f32 %v7785, %v8061
        %v8063 = vpop.f32.mrf.mxu0
        %v8064 = vadd.f32 %v7787, %v8063
        %v8065 = vand.u32 %v832, 4294901760
        %v8066 = vsub.f32 %v832, %v8065
        %8067 = vmatprep.mubr.f32.mxu0 %v8066
        %v8068 = vand.u32 %v351, 4294901760
        %v8069 = vsub.f32 %v351, %v8068
        %8070 = vmatmul.mubr.f32.gmra.mxu0 %v8069
        %v8071 = vpop.f32.mrf.mxu0
        %v8072 = vadd.f32 %v7793, %v8071
        %v8073 = vpop.f32.mrf.mxu0
        %v8074 = vadd.f32 %v7795, %v8073
        %v8075 = vand.u32 %v835, 4294901760
        %v8076 = vsub.f32 %v835, %v8075
        %8077 = vmatprep.mubr.f32.mxu0 %v8076
        %v8078 = vand.u32 %v355, 4294901760
        %v8079 = vsub.f32 %v355, %v8078
        %8080 = vmatmul.mubr.f32.gmra.mxu0 %v8079
        %v8081 = vpop.f32.mrf.mxu0
        %v8082 = vadd.f32 %v7801, %v8081
        %v8083 = vpop.f32.mrf.mxu0
        %v8084 = vadd.f32 %v7803, %v8083
        %v8085 = vand.u32 %v838, 4294901760
        %v8086 = vsub.f32 %v838, %v8085
        %8087 = vmatprep.mubr.f32.mxu0 %v8086
        %v8088 = vand.u32 %v359, 4294901760
        %v8089 = vsub.f32 %v359, %v8088
        %8090 = vmatmul.mubr.f32.gmra.mxu0 %v8089
        %v8091 = vpop.f32.mrf.mxu0
        %v8092 = vadd.f32 %v7809, %v8091
        %v8093 = vpop.f32.mrf.mxu0
        %v8094 = vadd.f32 %v7811, %v8093
        %v8095 = vand.u32 %v841, 4294901760
        %v8096 = vsub.f32 %v841, %v8095
        %8097 = vmatprep.mubr.f32.mxu0 %v8096
        %v8098 = vand.u32 %v363, 4294901760
        %v8099 = vsub.f32 %v363, %v8098
        %8100 = vmatmul.mubr.f32.gmra.mxu0 %v8099
        %v8101 = vpop.f32.mrf.mxu0
        %v8102 = vadd.f32 %v7817, %v8101
        %v8103 = vpop.f32.mrf.mxu0
        %v8104 = vadd.f32 %v7819, %v8103
        %v8105 = vand.u32 %v844, 4294901760
        %v8106 = vsub.f32 %v844, %v8105
        %8107 = vmatprep.mubr.f32.mxu0 %v8106
        %v8108 = vand.u32 %v367, 4294901760
        %v8109 = vsub.f32 %v367, %v8108
        %8110 = vmatmul.mubr.f32.gmra.mxu0 %v8109
        %v8111 = vpop.f32.mrf.mxu0
        %v8112 = vadd.f32 %v7825, %v8111
        %v8113 = vpop.f32.mrf.mxu0
        %v8114 = vadd.f32 %v7827, %v8113
        %v8115 = vand.u32 %v847, 4294901760
        %v8116 = vsub.f32 %v847, %v8115
        %8117 = vmatprep.mubr.f32.mxu0 %v8116
        %v8118 = vand.u32 %v371, 4294901760
        %v8119 = vsub.f32 %v371, %v8118
        %8120 = vmatmul.mubr.f32.gmra.mxu0 %v8119
        %v8121 = vpop.f32.mrf.mxu0
        %v8122 = vadd.f32 %v7833, %v8121
        %v8123 = vpop.f32.mrf.mxu0
        %v8124 = vadd.f32 %v7835, %v8123
        %v8125 = vand.u32 %v850, 4294901760
        %v8126 = vsub.f32 %v850, %v8125
        %8127 = vmatprep.mubr.f32.mxu0 %v8126
        %v8128 = vand.u32 %v375, 4294901760
        %v8129 = vsub.f32 %v375, %v8128
        %8130 = vmatmul.mubr.f32.gmra.mxu0 %v8129
        %v8131 = vpop.f32.mrf.mxu0
        %v8132 = vadd.f32 %v7841, %v8131
        %v8133 = vpop.f32.mrf.mxu0
        %v8134 = vadd.f32 %v7843, %v8133
        %v8135 = vand.u32 %v853, 4294901760
        %v8136 = vsub.f32 %v853, %v8135
        %8137 = vmatprep.mubr.f32.mxu0 %v8136
        %v8138 = vand.u32 %v379, 4294901760
        %v8139 = vsub.f32 %v379, %v8138
        %8140 = vmatmul.mubr.f32.gmra.mxu0 %v8139
        %v8141 = vpop.f32.mrf.mxu0
        %v8142 = vadd.f32 %v7849, %v8141
        %v8143 = vpop.f32.mrf.mxu0
        %v8144 = vadd.f32 %v7851, %v8143
        %v8145 = vand.u32 %v856, 4294901760
        %v8146 = vsub.f32 %v856, %v8145
        %8147 = vmatprep.mubr.f32.mxu0 %v8146
        %v8148 = vand.u32 %v383, 4294901760
        %v8149 = vsub.f32 %v383, %v8148
        %8150 = vmatmul.mubr.f32.gmra.mxu0 %v8149
        %v8151 = vpop.f32.mrf.mxu0
        %v8152 = vadd.f32 %v7857, %v8151
        %v8153 = vpop.f32.mrf.mxu0
        %v8154 = vadd.f32 %v7859, %v8153
        %v8155 = vand.u32 %v859, 4294901760
        %v8156 = vsub.f32 %v859, %v8155
        %8157 = vmatprep.mubr.f32.mxu0 %v8156
        %v8158 = vand.u32 %v387, 4294901760
        %v8159 = vsub.f32 %v387, %v8158
        %8160 = vmatmul.mubr.f32.gmra.mxu0 %v8159
        %v8161 = vpop.f32.mrf.mxu0
        %v8162 = vadd.f32 %v7865, %v8161
        %v8163 = vpop.f32.mrf.mxu0
        %v8164 = vadd.f32 %v7867, %v8163
        %8165 = vdwg.mxu0
        %v8166 = vand.u32 %v804, 4294901760
        %8167 = vmatprep.subr.mxu0 %v8166
        %v8168 = vand.u32 %v803, 4294901760
        %8169 = vmatpush1.msra.mxu0 %v8168
        %v8170 = vand.u32 %v800, 4294901760
        %8171 = vmatprep.subr.mxu0 %v8170
        %v8172 = vand.u32 %v799, 4294901760
        %8173 = vmatpush1.msra.mxu0 %v8172
        %v8174 = vand.u32 %v796, 4294901760
        %8175 = vmatprep.subr.mxu0 %v8174
        %v8176 = vand.u32 %v795, 4294901760
        %8177 = vmatpush1.msra.mxu0 %v8176
        %v8178 = vand.u32 %v792, 4294901760
        %8179 = vmatprep.subr.mxu0 %v8178
        %v8180 = vand.u32 %v791, 4294901760
        %8181 = vmatpush1.msra.mxu0 %v8180
        %v8182 = vand.u32 %v788, 4294901760
        %8183 = vmatprep.subr.mxu0 %v8182
        %v8184 = vand.u32 %v787, 4294901760
        %8185 = vmatpush1.msra.mxu0 %v8184
        %v8186 = vand.u32 %v784, 4294901760
        %8187 = vmatprep.subr.mxu0 %v8186
        %v8188 = vand.u32 %v783, 4294901760
        %8189 = vmatpush1.msra.mxu0 %v8188
        %v8190 = vand.u32 %v780, 4294901760
        %8191 = vmatprep.subr.mxu0 %v8190
        %v8192 = vand.u32 %v779, 4294901760
        %8193 = vmatpush1.msra.mxu0 %v8192
        %v8194 = vand.u32 %v776, 4294901760
        %8195 = vmatprep.subr.mxu0 %v8194
        %v8196 = vand.u32 %v775, 4294901760
        %8197 = vmatpush1.msra.mxu0 %v8196
        %v8198 = vand.u32 %v772, 4294901760
        %8199 = vmatprep.subr.mxu0 %v8198
        %v8200 = vand.u32 %v771, 4294901760
        %8201 = vmatpush1.msra.mxu0 %v8200
        %v8202 = vand.u32 %v768, 4294901760
        %8203 = vmatprep.subr.mxu0 %v8202
        %v8204 = vand.u32 %v767, 4294901760
        %8205 = vmatpush1.msra.mxu0 %v8204
        %v8206 = vand.u32 %v764, 4294901760
        %8207 = vmatprep.subr.mxu0 %v8206
        %v8208 = vand.u32 %v763, 4294901760
        %8209 = vmatpush1.msra.mxu0 %v8208
        %v8210 = vand.u32 %v760, 4294901760
        %8211 = vmatprep.subr.mxu0 %v8210
        %v8212 = vand.u32 %v759, 4294901760
        %8213 = vmatpush1.msra.mxu0 %v8212
        %v8214 = vand.u32 %v756, 4294901760
        %8215 = vmatprep.subr.mxu0 %v8214
        %v8216 = vand.u32 %v755, 4294901760
        %8217 = vmatpush1.msra.mxu0 %v8216
        %v8218 = vand.u32 %v752, 4294901760
        %8219 = vmatprep.subr.mxu0 %v8218
        %v8220 = vand.u32 %v751, 4294901760
        %8221 = vmatpush1.msra.mxu0 %v8220
        %v8222 = vand.u32 %v748, 4294901760
        %8223 = vmatprep.subr.mxu0 %v8222
        %v8224 = vand.u32 %v747, 4294901760
        %8225 = vmatpush1.msra.mxu0 %v8224
        %v8226 = vand.u32 %v744, 4294901760
        %8227 = vmatprep.subr.mxu0 %v8226
        %v8228 = vand.u32 %v743, 4294901760
        %8229 = vmatpush1.msra.mxu0 %v8228
        %8230 = vmatprep.subr.mxu0 0.0
        %8231 = vmatpush2.msra.mxu0 0.0
        %8232 = vmatprep.subr.mxu0 0.0
        %8233 = vmatpush2.msra.mxu0 0.0
        %8234 = vmatprep.subr.mxu0 0.0
        %8235 = vmatpush2.msra.mxu0 0.0
        %8236 = vmatprep.subr.mxu0 0.0
        %8237 = vmatpush2.msra.mxu0 0.0
        %8238 = vmatprep.subr.mxu0 0.0
        %8239 = vmatpush2.msra.mxu0 0.0
        %8240 = vmatprep.subr.mxu0 0.0
        %8241 = vmatpush2.msra.mxu0 0.0
        %8242 = vmatprep.subr.mxu0 0.0
        %8243 = vmatpush2.msra.mxu0 0.0
        %8244 = vmatprep.subr.mxu0 0.0
        %8245 = vmatpush2.msra.mxu0 0.0
        %8246 = vmatprep.subr.mxu0 0.0
        %8247 = vmatpush2.msra.mxu0 0.0
        %8248 = vmatprep.subr.mxu0 0.0
        %8249 = vmatpush2.msra.mxu0 0.0
        %8250 = vmatprep.subr.mxu0 0.0
        %8251 = vmatpush2.msra.mxu0 0.0
        %8252 = vmatprep.subr.mxu0 0.0
        %8253 = vmatpush2.msra.mxu0 0.0
        %8254 = vmatprep.subr.mxu0 0.0
        %8255 = vmatpush2.msra.mxu0 0.0
        %8256 = vmatprep.subr.mxu0 0.0
        %8257 = vmatpush2.msra.mxu0 0.0
        %v8258 = vand.u32 %v812, 4294901760
        %8259 = vmatprep.subr.mxu0 %v8258
        %v8260 = vand.u32 %v811, 4294901760
        %8261 = vmatpush2.msra.mxu0 %v8260
        %v8262 = vand.u32 %v808, 4294901760
        %8263 = vmatprep.subr.mxu0 %v8262
        %v8264 = vand.u32 %v807, 4294901760
        %8265 = vmatpush2.msra.mxu0 %v8264
        %v8266 = vand.u32 %v814, 4294901760
        %v8267 = vsub.f32 %v814, %v8266
        %v8268 = vand.u32 %v8267, 4294901760
        %8269 = vmatprep.mubr.f32.mxu0 %v8268
        %v8270 = vand.u32 %v327, 4294901760
        %v8271 = vsub.f32 %v327, %v8270
        %v8272 = vand.u32 %v8271, 4294901760
        %8273 = vmatmul.mubr.f32.gmra.mxu0 %v8272
        %v8274 = vpop.f32.mrf.mxu0
        %v8275 = vadd.f32 %v8012, %v8274
        %v8276 = vpop.f32.mrf.mxu0
        %v8277 = vadd.f32 %v8014, %v8276
        %v8278 = vand.u32 %v817, 4294901760
        %v8279 = vsub.f32 %v817, %v8278
        %v8280 = vand.u32 %v8279, 4294901760
        %8281 = vmatprep.mubr.f32.mxu0 %v8280
        %v8282 = vand.u32 %v331, 4294901760
        %v8283 = vsub.f32 %v331, %v8282
        %v8284 = vand.u32 %v8283, 4294901760
        %8285 = vmatmul.mubr.f32.gmra.mxu0 %v8284
        %v8286 = vpop.f32.mrf.mxu0
        %v8287 = vadd.f32 %v8022, %v8286
        %v8288 = vpop.f32.mrf.mxu0
        %v8289 = vadd.f32 %v8024, %v8288
        %v8290 = vand.u32 %v820, 4294901760
        %v8291 = vsub.f32 %v820, %v8290
        %v8292 = vand.u32 %v8291, 4294901760
        %8293 = vmatprep.mubr.f32.mxu0 %v8292
        %v8294 = vand.u32 %v335, 4294901760
        %v8295 = vsub.f32 %v335, %v8294
        %v8296 = vand.u32 %v8295, 4294901760
        %8297 = vmatmul.mubr.f32.gmra.mxu0 %v8296
        %v8298 = vpop.f32.mrf.mxu0
        %v8299 = vadd.f32 %v8032, %v8298
        %v8300 = vpop.f32.mrf.mxu0
        %v8301 = vadd.f32 %v8034, %v8300
        %v8302 = vand.u32 %v823, 4294901760
        %v8303 = vsub.f32 %v823, %v8302
        %v8304 = vand.u32 %v8303, 4294901760
        %8305 = vmatprep.mubr.f32.mxu0 %v8304
        %v8306 = vand.u32 %v339, 4294901760
        %v8307 = vsub.f32 %v339, %v8306
        %v8308 = vand.u32 %v8307, 4294901760
        %8309 = vmatmul.mubr.f32.gmra.mxu0 %v8308
        %v8310 = vpop.f32.mrf.mxu0
        %v8311 = vadd.f32 %v8042, %v8310
        %v8312 = vpop.f32.mrf.mxu0
        %v8313 = vadd.f32 %v8044, %v8312
        %v8314 = vand.u32 %v826, 4294901760
        %v8315 = vsub.f32 %v826, %v8314
        %v8316 = vand.u32 %v8315, 4294901760
        %8317 = vmatprep.mubr.f32.mxu0 %v8316
        %v8318 = vand.u32 %v343, 4294901760
        %v8319 = vsub.f32 %v343, %v8318
        %v8320 = vand.u32 %v8319, 4294901760
        %8321 = vmatmul.mubr.f32.gmra.mxu0 %v8320
        %v8322 = vpop.f32.mrf.mxu0
        %v8323 = vadd.f32 %v8052, %v8322
        %v8324 = vpop.f32.mrf.mxu0
        %v8325 = vadd.f32 %v8054, %v8324
        %v8326 = vand.u32 %v829, 4294901760
        %v8327 = vsub.f32 %v829, %v8326
        %v8328 = vand.u32 %v8327, 4294901760
        %8329 = vmatprep.mubr.f32.mxu0 %v8328
        %v8330 = vand.u32 %v347, 4294901760
        %v8331 = vsub.f32 %v347, %v8330
        %v8332 = vand.u32 %v8331, 4294901760
        %8333 = vmatmul.mubr.f32.gmra.mxu0 %v8332
        %v8334 = vpop.f32.mrf.mxu0
        %v8335 = vadd.f32 %v8062, %v8334
        %v8336 = vpop.f32.mrf.mxu0
        %v8337 = vadd.f32 %v8064, %v8336
        %v8338 = vand.u32 %v832, 4294901760
        %v8339 = vsub.f32 %v832, %v8338
        %v8340 = vand.u32 %v8339, 4294901760
        %8341 = vmatprep.mubr.f32.mxu0 %v8340
        %v8342 = vand.u32 %v351, 4294901760
        %v8343 = vsub.f32 %v351, %v8342
        %v8344 = vand.u32 %v8343, 4294901760
        %8345 = vmatmul.mubr.f32.gmra.mxu0 %v8344
        %v8346 = vpop.f32.mrf.mxu0
        %v8347 = vadd.f32 %v8072, %v8346
        %v8348 = vpop.f32.mrf.mxu0
        %v8349 = vadd.f32 %v8074, %v8348
        %v8350 = vand.u32 %v835, 4294901760
        %v8351 = vsub.f32 %v835, %v8350
        %v8352 = vand.u32 %v8351, 4294901760
        %8353 = vmatprep.mubr.f32.mxu0 %v8352
        %v8354 = vand.u32 %v355, 4294901760
        %v8355 = vsub.f32 %v355, %v8354
        %v8356 = vand.u32 %v8355, 4294901760
        %8357 = vmatmul.mubr.f32.gmra.mxu0 %v8356
        %v8358 = vpop.f32.mrf.mxu0
        %v8359 = vadd.f32 %v8082, %v8358
        %v8360 = vpop.f32.mrf.mxu0
        %v8361 = vadd.f32 %v8084, %v8360
        %v8362 = vand.u32 %v838, 4294901760
        %v8363 = vsub.f32 %v838, %v8362
        %v8364 = vand.u32 %v8363, 4294901760
        %8365 = vmatprep.mubr.f32.mxu0 %v8364
        %v8366 = vand.u32 %v359, 4294901760
        %v8367 = vsub.f32 %v359, %v8366
        %v8368 = vand.u32 %v8367, 4294901760
        %8369 = vmatmul.mubr.f32.gmra.mxu0 %v8368
        %v8370 = vpop.f32.mrf.mxu0
        %v8371 = vadd.f32 %v8092, %v8370
        %v8372 = vpop.f32.mrf.mxu0
        %v8373 = vadd.f32 %v8094, %v8372
        %v8374 = vand.u32 %v841, 4294901760
        %v8375 = vsub.f32 %v841, %v8374
        %v8376 = vand.u32 %v8375, 4294901760
        %8377 = vmatprep.mubr.f32.mxu0 %v8376
        %v8378 = vand.u32 %v363, 4294901760
        %v8379 = vsub.f32 %v363, %v8378
        %v8380 = vand.u32 %v8379, 4294901760
        %8381 = vmatmul.mubr.f32.gmra.mxu0 %v8380
        %v8382 = vpop.f32.mrf.mxu0
        %v8383 = vadd.f32 %v8102, %v8382
        %v8384 = vpop.f32.mrf.mxu0
        %v8385 = vadd.f32 %v8104, %v8384
        %v8386 = vand.u32 %v844, 4294901760
        %v8387 = vsub.f32 %v844, %v8386
        %v8388 = vand.u32 %v8387, 4294901760
        %8389 = vmatprep.mubr.f32.mxu0 %v8388
        %v8390 = vand.u32 %v367, 4294901760
        %v8391 = vsub.f32 %v367, %v8390
        %v8392 = vand.u32 %v8391, 4294901760
        %8393 = vmatmul.mubr.f32.gmra.mxu0 %v8392
        %v8394 = vpop.f32.mrf.mxu0
        %v8395 = vadd.f32 %v8112, %v8394
        %v8396 = vpop.f32.mrf.mxu0
        %v8397 = vadd.f32 %v8114, %v8396
        %v8398 = vand.u32 %v847, 4294901760
        %v8399 = vsub.f32 %v847, %v8398
        %v8400 = vand.u32 %v8399, 4294901760
        %8401 = vmatprep.mubr.f32.mxu0 %v8400
        %v8402 = vand.u32 %v371, 4294901760
        %v8403 = vsub.f32 %v371, %v8402
        %v8404 = vand.u32 %v8403, 4294901760
        %8405 = vmatmul.mubr.f32.gmra.mxu0 %v8404
        %v8406 = vpop.f32.mrf.mxu0
        %v8407 = vadd.f32 %v8122, %v8406
        %v8408 = vpop.f32.mrf.mxu0
        %v8409 = vadd.f32 %v8124, %v8408
        %v8410 = vand.u32 %v850, 4294901760
        %v8411 = vsub.f32 %v850, %v8410
        %v8412 = vand.u32 %v8411, 4294901760
        %8413 = vmatprep.mubr.f32.mxu0 %v8412
        %v8414 = vand.u32 %v375, 4294901760
        %v8415 = vsub.f32 %v375, %v8414
        %v8416 = vand.u32 %v8415, 4294901760
        %8417 = vmatmul.mubr.f32.gmra.mxu0 %v8416
        %v8418 = vpop.f32.mrf.mxu0
        %v8419 = vadd.f32 %v8132, %v8418
        %v8420 = vpop.f32.mrf.mxu0
        %v8421 = vadd.f32 %v8134, %v8420
        %v8422 = vand.u32 %v853, 4294901760
        %v8423 = vsub.f32 %v853, %v8422
        %v8424 = vand.u32 %v8423, 4294901760
        %8425 = vmatprep.mubr.f32.mxu0 %v8424
        %v8426 = vand.u32 %v379, 4294901760
        %v8427 = vsub.f32 %v379, %v8426
        %v8428 = vand.u32 %v8427, 4294901760
        %8429 = vmatmul.mubr.f32.gmra.mxu0 %v8428
        %v8430 = vpop.f32.mrf.mxu0
        %v8431 = vadd.f32 %v8142, %v8430
        %v8432 = vpop.f32.mrf.mxu0
        %v8433 = vadd.f32 %v8144, %v8432
        %v8434 = vand.u32 %v856, 4294901760
        %v8435 = vsub.f32 %v856, %v8434
        %v8436 = vand.u32 %v8435, 4294901760
        %8437 = vmatprep.mubr.f32.mxu0 %v8436
        %v8438 = vand.u32 %v383, 4294901760
        %v8439 = vsub.f32 %v383, %v8438
        %v8440 = vand.u32 %v8439, 4294901760
        %8441 = vmatmul.mubr.f32.gmra.mxu0 %v8440
        %v8442 = vpop.f32.mrf.mxu0
        %v8443 = vadd.f32 %v8152, %v8442
        %v8444 = vpop.f32.mrf.mxu0
        %v8445 = vadd.f32 %v8154, %v8444
        %v8446 = vand.u32 %v859, 4294901760
        %v8447 = vsub.f32 %v859, %v8446
        %v8448 = vand.u32 %v8447, 4294901760
        %8449 = vmatprep.mubr.f32.mxu0 %v8448
        %v8450 = vand.u32 %v387, 4294901760
        %v8451 = vsub.f32 %v387, %v8450
        %v8452 = vand.u32 %v8451, 4294901760
        %8453 = vmatmul.mubr.f32.gmra.mxu0 %v8452
        %v8454 = vpop.f32.mrf.mxu0
        %v8455 = vadd.f32 %v8162, %v8454
        %v8456 = vpop.f32.mrf.mxu0
        %v8457 = vadd.f32 %v8164, %v8456
        %8458 = vdwg.mxu0
        %v8459 = vand.u32 %v804, 4294901760
        %v8460 = vsub.f32 %v804, %v8459
        %v8461 = vand.u32 %v8460, 4294901760
        %8462 = vmatprep.subr.mxu0 %v8461
        %v8463 = vand.u32 %v803, 4294901760
        %v8464 = vsub.f32 %v803, %v8463
        %v8465 = vand.u32 %v8464, 4294901760
        %8466 = vmatpush1.msra.mxu0 %v8465
        %v8467 = vand.u32 %v800, 4294901760
        %v8468 = vsub.f32 %v800, %v8467
        %v8469 = vand.u32 %v8468, 4294901760
        %8470 = vmatprep.subr.mxu0 %v8469
        %v8471 = vand.u32 %v799, 4294901760
        %v8472 = vsub.f32 %v799, %v8471
        %v8473 = vand.u32 %v8472, 4294901760
        %8474 = vmatpush1.msra.mxu0 %v8473
        %v8475 = vand.u32 %v796, 4294901760
        %v8476 = vsub.f32 %v796, %v8475
        %v8477 = vand.u32 %v8476, 4294901760
        %8478 = vmatprep.subr.mxu0 %v8477
        %v8479 = vand.u32 %v795, 4294901760
        %v8480 = vsub.f32 %v795, %v8479
        %v8481 = vand.u32 %v8480, 4294901760
        %8482 = vmatpush1.msra.mxu0 %v8481
        %v8483 = vand.u32 %v792, 4294901760
        %v8484 = vsub.f32 %v792, %v8483
        %v8485 = vand.u32 %v8484, 4294901760
        %8486 = vmatprep.subr.mxu0 %v8485
        %v8487 = vand.u32 %v791, 4294901760
        %v8488 = vsub.f32 %v791, %v8487
        %v8489 = vand.u32 %v8488, 4294901760
        %8490 = vmatpush1.msra.mxu0 %v8489
        %v8491 = vand.u32 %v788, 4294901760
        %v8492 = vsub.f32 %v788, %v8491
        %v8493 = vand.u32 %v8492, 4294901760
        %8494 = vmatprep.subr.mxu0 %v8493
        %v8495 = vand.u32 %v787, 4294901760
        %v8496 = vsub.f32 %v787, %v8495
        %v8497 = vand.u32 %v8496, 4294901760
        %8498 = vmatpush1.msra.mxu0 %v8497
        %v8499 = vand.u32 %v784, 4294901760
        %v8500 = vsub.f32 %v784, %v8499
        %v8501 = vand.u32 %v8500, 4294901760
        %8502 = vmatprep.subr.mxu0 %v8501
        %v8503 = vand.u32 %v783, 4294901760
        %v8504 = vsub.f32 %v783, %v8503
        %v8505 = vand.u32 %v8504, 4294901760
        %8506 = vmatpush1.msra.mxu0 %v8505
        %v8507 = vand.u32 %v780, 4294901760
        %v8508 = vsub.f32 %v780, %v8507
        %v8509 = vand.u32 %v8508, 4294901760
        %8510 = vmatprep.subr.mxu0 %v8509
        %v8511 = vand.u32 %v779, 4294901760
        %v8512 = vsub.f32 %v779, %v8511
        %v8513 = vand.u32 %v8512, 4294901760
        %8514 = vmatpush1.msra.mxu0 %v8513
        %v8515 = vand.u32 %v776, 4294901760
        %v8516 = vsub.f32 %v776, %v8515
        %v8517 = vand.u32 %v8516, 4294901760
        %8518 = vmatprep.subr.mxu0 %v8517
        %v8519 = vand.u32 %v775, 4294901760
        %v8520 = vsub.f32 %v775, %v8519
        %v8521 = vand.u32 %v8520, 4294901760
        %8522 = vmatpush1.msra.mxu0 %v8521
        %v8523 = vand.u32 %v772, 4294901760
        %v8524 = vsub.f32 %v772, %v8523
        %v8525 = vand.u32 %v8524, 4294901760
        %8526 = vmatprep.subr.mxu0 %v8525
        %v8527 = vand.u32 %v771, 4294901760
        %v8528 = vsub.f32 %v771, %v8527
        %v8529 = vand.u32 %v8528, 4294901760
        %8530 = vmatpush1.msra.mxu0 %v8529
        %v8531 = vand.u32 %v768, 4294901760
        %v8532 = vsub.f32 %v768, %v8531
        %v8533 = vand.u32 %v8532, 4294901760
        %8534 = vmatprep.subr.mxu0 %v8533
        %v8535 = vand.u32 %v767, 4294901760
        %v8536 = vsub.f32 %v767, %v8535
        %v8537 = vand.u32 %v8536, 4294901760
        %8538 = vmatpush1.msra.mxu0 %v8537
        %v8539 = vand.u32 %v764, 4294901760
        %v8540 = vsub.f32 %v764, %v8539
        %v8541 = vand.u32 %v8540, 4294901760
        %8542 = vmatprep.subr.mxu0 %v8541
        %v8543 = vand.u32 %v763, 4294901760
        %v8544 = vsub.f32 %v763, %v8543
        %v8545 = vand.u32 %v8544, 4294901760
        %8546 = vmatpush1.msra.mxu0 %v8545
        %v8547 = vand.u32 %v760, 4294901760
        %v8548 = vsub.f32 %v760, %v8547
        %v8549 = vand.u32 %v8548, 4294901760
        %8550 = vmatprep.subr.mxu0 %v8549
        %v8551 = vand.u32 %v759, 4294901760
        %v8552 = vsub.f32 %v759, %v8551
        %v8553 = vand.u32 %v8552, 4294901760
        %8554 = vmatpush1.msra.mxu0 %v8553
        %v8555 = vand.u32 %v756, 4294901760
        %v8556 = vsub.f32 %v756, %v8555
        %v8557 = vand.u32 %v8556, 4294901760
        %8558 = vmatprep.subr.mxu0 %v8557
        %v8559 = vand.u32 %v755, 4294901760
        %v8560 = vsub.f32 %v755, %v8559
        %v8561 = vand.u32 %v8560, 4294901760
        %8562 = vmatpush1.msra.mxu0 %v8561
        %v8563 = vand.u32 %v752, 4294901760
        %v8564 = vsub.f32 %v752, %v8563
        %v8565 = vand.u32 %v8564, 4294901760
        %8566 = vmatprep.subr.mxu0 %v8565
        %v8567 = vand.u32 %v751, 4294901760
        %v8568 = vsub.f32 %v751, %v8567
        %v8569 = vand.u32 %v8568, 4294901760
        %8570 = vmatpush1.msra.mxu0 %v8569
        %v8571 = vand.u32 %v748, 4294901760
        %v8572 = vsub.f32 %v748, %v8571
        %v8573 = vand.u32 %v8572, 4294901760
        %8574 = vmatprep.subr.mxu0 %v8573
        %v8575 = vand.u32 %v747, 4294901760
        %v8576 = vsub.f32 %v747, %v8575
        %v8577 = vand.u32 %v8576, 4294901760
        %8578 = vmatpush1.msra.mxu0 %v8577
        %v8579 = vand.u32 %v744, 4294901760
        %v8580 = vsub.f32 %v744, %v8579
        %v8581 = vand.u32 %v8580, 4294901760
        %8582 = vmatprep.subr.mxu0 %v8581
        %v8583 = vand.u32 %v743, 4294901760
        %v8584 = vsub.f32 %v743, %v8583
        %v8585 = vand.u32 %v8584, 4294901760
        %8586 = vmatpush1.msra.mxu0 %v8585
        %8587 = vmatprep.subr.mxu0 0.0
        %8588 = vmatpush2.msra.mxu0 0.0
        %8589 = vmatprep.subr.mxu0 0.0
        %8590 = vmatpush2.msra.mxu0 0.0
        %8591 = vmatprep.subr.mxu0 0.0
        %8592 = vmatpush2.msra.mxu0 0.0
        %8593 = vmatprep.subr.mxu0 0.0
        %8594 = vmatpush2.msra.mxu0 0.0
        %8595 = vmatprep.subr.mxu0 0.0
        %8596 = vmatpush2.msra.mxu0 0.0
        %8597 = vmatprep.subr.mxu0 0.0
        %8598 = vmatpush2.msra.mxu0 0.0
        %8599 = vmatprep.subr.mxu0 0.0
        %8600 = vmatpush2.msra.mxu0 0.0
        %8601 = vmatprep.subr.mxu0 0.0
        %8602 = vmatpush2.msra.mxu0 0.0
        %8603 = vmatprep.subr.mxu0 0.0
        %8604 = vmatpush2.msra.mxu0 0.0
        %8605 = vmatprep.subr.mxu0 0.0
        %8606 = vmatpush2.msra.mxu0 0.0
        %8607 = vmatprep.subr.mxu0 0.0
        %8608 = vmatpush2.msra.mxu0 0.0
        %8609 = vmatprep.subr.mxu0 0.0
        %8610 = vmatpush2.msra.mxu0 0.0
        %8611 = vmatprep.subr.mxu0 0.0
        %8612 = vmatpush2.msra.mxu0 0.0
        %8613 = vmatprep.subr.mxu0 0.0
        %8614 = vmatpush2.msra.mxu0 0.0
        %v8615 = vand.u32 %v812, 4294901760
        %v8616 = vsub.f32 %v812, %v8615
        %v8617 = vand.u32 %v8616, 4294901760
        %8618 = vmatprep.subr.mxu0 %v8617
        %v8619 = vand.u32 %v811, 4294901760
        %v8620 = vsub.f32 %v811, %v8619
        %v8621 = vand.u32 %v8620, 4294901760
        %8622 = vmatpush2.msra.mxu0 %v8621
        %v8623 = vand.u32 %v808, 4294901760
        %v8624 = vsub.f32 %v808, %v8623
        %v8625 = vand.u32 %v8624, 4294901760
        %8626 = vmatprep.subr.mxu0 %v8625
        %v8627 = vand.u32 %v807, 4294901760
        %v8628 = vsub.f32 %v807, %v8627
        %v8629 = vand.u32 %v8628, 4294901760
        %8630 = vmatpush2.msra.mxu0 %v8629
        %v8631 = vand.u32 %v814, 4294901760
        %8632 = vmatprep.mubr.f32.mxu0 %v8631
        %v8633 = vand.u32 %v327, 4294901760
        %8634 = vmatmul.mubr.f32.gmra.mxu0 %v8633
        %v8635 = vpop.f32.mrf.mxu0
        %v8636 = vadd.f32 %v8275, %v8635
        %v8637 = vpop.f32.mrf.mxu0
        %v8638 = vadd.f32 %v8277, %v8637
        %v8639 = vand.u32 %v817, 4294901760
        %8640 = vmatprep.mubr.f32.mxu0 %v8639
        %v8641 = vand.u32 %v331, 4294901760
        %8642 = vmatmul.mubr.f32.gmra.mxu0 %v8641
        %v8643 = vpop.f32.mrf.mxu0
        %v8644 = vadd.f32 %v8287, %v8643
        %v8645 = vpop.f32.mrf.mxu0
        %v8646 = vadd.f32 %v8289, %v8645
        %v8647 = vand.u32 %v820, 4294901760
        %8648 = vmatprep.mubr.f32.mxu0 %v8647
        %v8649 = vand.u32 %v335, 4294901760
        %8650 = vmatmul.mubr.f32.gmra.mxu0 %v8649
        %v8651 = vpop.f32.mrf.mxu0
        %v8652 = vadd.f32 %v8299, %v8651
        %v8653 = vpop.f32.mrf.mxu0
        %v8654 = vadd.f32 %v8301, %v8653
        %v8655 = vand.u32 %v823, 4294901760
        %8656 = vmatprep.mubr.f32.mxu0 %v8655
        %v8657 = vand.u32 %v339, 4294901760
        %8658 = vmatmul.mubr.f32.gmra.mxu0 %v8657
        %v8659 = vpop.f32.mrf.mxu0
        %v8660 = vadd.f32 %v8311, %v8659
        %v8661 = vpop.f32.mrf.mxu0
        %v8662 = vadd.f32 %v8313, %v8661
        %v8663 = vand.u32 %v826, 4294901760
        %8664 = vmatprep.mubr.f32.mxu0 %v8663
        %v8665 = vand.u32 %v343, 4294901760
        %8666 = vmatmul.mubr.f32.gmra.mxu0 %v8665
        %v8667 = vpop.f32.mrf.mxu0
        %v8668 = vadd.f32 %v8323, %v8667
        %v8669 = vpop.f32.mrf.mxu0
        %v8670 = vadd.f32 %v8325, %v8669
        %v8671 = vand.u32 %v829, 4294901760
        %8672 = vmatprep.mubr.f32.mxu0 %v8671
        %v8673 = vand.u32 %v347, 4294901760
        %8674 = vmatmul.mubr.f32.gmra.mxu0 %v8673
        %v8675 = vpop.f32.mrf.mxu0
        %v8676 = vadd.f32 %v8335, %v8675
        %v8677 = vpop.f32.mrf.mxu0
        %v8678 = vadd.f32 %v8337, %v8677
        %v8679 = vand.u32 %v832, 4294901760
        %8680 = vmatprep.mubr.f32.mxu0 %v8679
        %v8681 = vand.u32 %v351, 4294901760
        %8682 = vmatmul.mubr.f32.gmra.mxu0 %v8681
        %v8683 = vpop.f32.mrf.mxu0
        %v8684 = vadd.f32 %v8347, %v8683
        %v8685 = vpop.f32.mrf.mxu0
        %v8686 = vadd.f32 %v8349, %v8685
        %v8687 = vand.u32 %v835, 4294901760
        %8688 = vmatprep.mubr.f32.mxu0 %v8687
        %v8689 = vand.u32 %v355, 4294901760
        %8690 = vmatmul.mubr.f32.gmra.mxu0 %v8689
        %v8691 = vpop.f32.mrf.mxu0
        %v8692 = vadd.f32 %v8359, %v8691
        %v8693 = vpop.f32.mrf.mxu0
        %v8694 = vadd.f32 %v8361, %v8693
        %v8695 = vand.u32 %v838, 4294901760
        %8696 = vmatprep.mubr.f32.mxu0 %v8695
        %v8697 = vand.u32 %v359, 4294901760
        %8698 = vmatmul.mubr.f32.gmra.mxu0 %v8697
        %v8699 = vpop.f32.mrf.mxu0
        %v8700 = vadd.f32 %v8371, %v8699
        %v8701 = vpop.f32.mrf.mxu0
        %v8702 = vadd.f32 %v8373, %v8701
        %v8703 = vand.u32 %v841, 4294901760
        %8704 = vmatprep.mubr.f32.mxu0 %v8703
        %v8705 = vand.u32 %v363, 4294901760
        %8706 = vmatmul.mubr.f32.gmra.mxu0 %v8705
        %v8707 = vpop.f32.mrf.mxu0
        %v8708 = vadd.f32 %v8383, %v8707
        %v8709 = vpop.f32.mrf.mxu0
        %v8710 = vadd.f32 %v8385, %v8709
        %v8711 = vand.u32 %v844, 4294901760
        %8712 = vmatprep.mubr.f32.mxu0 %v8711
        %v8713 = vand.u32 %v367, 4294901760
        %8714 = vmatmul.mubr.f32.gmra.mxu0 %v8713
        %v8715 = vpop.f32.mrf.mxu0
        %v8716 = vadd.f32 %v8395, %v8715
        %v8717 = vpop.f32.mrf.mxu0
        %v8718 = vadd.f32 %v8397, %v8717
        %v8719 = vand.u32 %v847, 4294901760
        %8720 = vmatprep.mubr.f32.mxu0 %v8719
        %v8721 = vand.u32 %v371, 4294901760
        %8722 = vmatmul.mubr.f32.gmra.mxu0 %v8721
        %v8723 = vpop.f32.mrf.mxu0
        %v8724 = vadd.f32 %v8407, %v8723
        %v8725 = vpop.f32.mrf.mxu0
        %v8726 = vadd.f32 %v8409, %v8725
        %v8727 = vand.u32 %v850, 4294901760
        %8728 = vmatprep.mubr.f32.mxu0 %v8727
        %v8729 = vand.u32 %v375, 4294901760
        %8730 = vmatmul.mubr.f32.gmra.mxu0 %v8729
        %v8731 = vpop.f32.mrf.mxu0
        %v8732 = vadd.f32 %v8419, %v8731
        %v8733 = vpop.f32.mrf.mxu0
        %v8734 = vadd.f32 %v8421, %v8733
        %v8735 = vand.u32 %v853, 4294901760
        %8736 = vmatprep.mubr.f32.mxu0 %v8735
        %v8737 = vand.u32 %v379, 4294901760
        %8738 = vmatmul.mubr.f32.gmra.mxu0 %v8737
        %v8739 = vpop.f32.mrf.mxu0
        %v8740 = vadd.f32 %v8431, %v8739
        %v8741 = vpop.f32.mrf.mxu0
        %v8742 = vadd.f32 %v8433, %v8741
        %v8743 = vand.u32 %v856, 4294901760
        %8744 = vmatprep.mubr.f32.mxu0 %v8743
        %v8745 = vand.u32 %v383, 4294901760
        %8746 = vmatmul.mubr.f32.gmra.mxu0 %v8745
        %v8747 = vpop.f32.mrf.mxu0
        %v8748 = vadd.f32 %v8443, %v8747
        %v8749 = vpop.f32.mrf.mxu0
        %v8750 = vadd.f32 %v8445, %v8749
        %v8751 = vand.u32 %v859, 4294901760
        %8752 = vmatprep.mubr.f32.mxu0 %v8751
        %v8753 = vand.u32 %v387, 4294901760
        %8754 = vmatmul.mubr.f32.gmra.mxu0 %v8753
        %v8755 = vpop.f32.mrf.mxu0
        %v8756 = vadd.f32 %v8455, %v8755
        %v8757 = vpop.f32.mrf.mxu0
        %v8758 = vadd.f32 %v8457, %v8757
        %8759 = vdwg.mxu0
        %v8760 = vand.u32 %v804, 4294901760
        %8761 = vmatprep.subr.mxu0 %v8760
        %v8762 = vand.u32 %v803, 4294901760
        %8763 = vmatpush1.msra.mxu0 %v8762
        %v8764 = vand.u32 %v800, 4294901760
        %8765 = vmatprep.subr.mxu0 %v8764
        %v8766 = vand.u32 %v799, 4294901760
        %8767 = vmatpush1.msra.mxu0 %v8766
        %v8768 = vand.u32 %v796, 4294901760
        %8769 = vmatprep.subr.mxu0 %v8768
        %v8770 = vand.u32 %v795, 4294901760
        %8771 = vmatpush1.msra.mxu0 %v8770
        %v8772 = vand.u32 %v792, 4294901760
        %8773 = vmatprep.subr.mxu0 %v8772
        %v8774 = vand.u32 %v791, 4294901760
        %8775 = vmatpush1.msra.mxu0 %v8774
        %v8776 = vand.u32 %v788, 4294901760
        %8777 = vmatprep.subr.mxu0 %v8776
        %v8778 = vand.u32 %v787, 4294901760
        %8779 = vmatpush1.msra.mxu0 %v8778
        %v8780 = vand.u32 %v784, 4294901760
        %8781 = vmatprep.subr.mxu0 %v8780
        %v8782 = vand.u32 %v783, 4294901760
        %8783 = vmatpush1.msra.mxu0 %v8782
        %v8784 = vand.u32 %v780, 4294901760
        %8785 = vmatprep.subr.mxu0 %v8784
        %v8786 = vand.u32 %v779, 4294901760
        %8787 = vmatpush1.msra.mxu0 %v8786
        %v8788 = vand.u32 %v776, 4294901760
        %8789 = vmatprep.subr.mxu0 %v8788
        %v8790 = vand.u32 %v775, 4294901760
        %8791 = vmatpush1.msra.mxu0 %v8790
        %v8792 = vand.u32 %v772, 4294901760
        %8793 = vmatprep.subr.mxu0 %v8792
        %v8794 = vand.u32 %v771, 4294901760
        %8795 = vmatpush1.msra.mxu0 %v8794
        %v8796 = vand.u32 %v768, 4294901760
        %8797 = vmatprep.subr.mxu0 %v8796
        %v8798 = vand.u32 %v767, 4294901760
        %8799 = vmatpush1.msra.mxu0 %v8798
        %v8800 = vand.u32 %v764, 4294901760
        %8801 = vmatprep.subr.mxu0 %v8800
        %v8802 = vand.u32 %v763, 4294901760
        %8803 = vmatpush1.msra.mxu0 %v8802
        %v8804 = vand.u32 %v760, 4294901760
        %8805 = vmatprep.subr.mxu0 %v8804
        %v8806 = vand.u32 %v759, 4294901760
        %8807 = vmatpush1.msra.mxu0 %v8806
        %v8808 = vand.u32 %v756, 4294901760
        %8809 = vmatprep.subr.mxu0 %v8808
        %v8810 = vand.u32 %v755, 4294901760
        %8811 = vmatpush1.msra.mxu0 %v8810
        %v8812 = vand.u32 %v752, 4294901760
        %8813 = vmatprep.subr.mxu0 %v8812
        %v8814 = vand.u32 %v751, 4294901760
        %8815 = vmatpush1.msra.mxu0 %v8814
        %v8816 = vand.u32 %v748, 4294901760
        %8817 = vmatprep.subr.mxu0 %v8816
        %v8818 = vand.u32 %v747, 4294901760
        %8819 = vmatpush1.msra.mxu0 %v8818
        %v8820 = vand.u32 %v744, 4294901760
        %8821 = vmatprep.subr.mxu0 %v8820
        %v8822 = vand.u32 %v743, 4294901760
        %8823 = vmatpush1.msra.mxu0 %v8822
        %8824 = vmatprep.subr.mxu0 0.0
        %8825 = vmatpush2.msra.mxu0 0.0
        %8826 = vmatprep.subr.mxu0 0.0
        %8827 = vmatpush2.msra.mxu0 0.0
        %8828 = vmatprep.subr.mxu0 0.0
        %8829 = vmatpush2.msra.mxu0 0.0
        %8830 = vmatprep.subr.mxu0 0.0
        %8831 = vmatpush2.msra.mxu0 0.0
        %8832 = vmatprep.subr.mxu0 0.0
        %8833 = vmatpush2.msra.mxu0 0.0
        %8834 = vmatprep.subr.mxu0 0.0
        %8835 = vmatpush2.msra.mxu0 0.0
        %8836 = vmatprep.subr.mxu0 0.0
        %8837 = vmatpush2.msra.mxu0 0.0
        %8838 = vmatprep.subr.mxu0 0.0
        %8839 = vmatpush2.msra.mxu0 0.0
        %8840 = vmatprep.subr.mxu0 0.0
        %8841 = vmatpush2.msra.mxu0 0.0
        %8842 = vmatprep.subr.mxu0 0.0
        %8843 = vmatpush2.msra.mxu0 0.0
        %8844 = vmatprep.subr.mxu0 0.0
        %8845 = vmatpush2.msra.mxu0 0.0
        %8846 = vmatprep.subr.mxu0 0.0
        %8847 = vmatpush2.msra.mxu0 0.0
        %8848 = vmatprep.subr.mxu0 0.0
        %8849 = vmatpush2.msra.mxu0 0.0
        %8850 = vmatprep.subr.mxu0 0.0
        %8851 = vmatpush2.msra.mxu0 0.0
        %v8852 = vand.u32 %v812, 4294901760
        %8853 = vmatprep.subr.mxu0 %v8852
        %v8854 = vand.u32 %v811, 4294901760
        %8855 = vmatpush2.msra.mxu0 %v8854
        %v8856 = vand.u32 %v808, 4294901760
        %8857 = vmatprep.subr.mxu0 %v8856
        %v8858 = vand.u32 %v807, 4294901760
        %8859 = vmatpush2.msra.mxu0 %v8858
        %v8860 = vand.u32 %v814, 4294901760
        %8861 = vmatprep.mubr.f32.mxu0 %v8860
        %v8862 = vand.u32 %v327, 4294901760
        %8863 = vmatmul.mubr.f32.gmra.mxu0 %v8862
        %v8864 = vpop.f32.mrf.mxu0
        %v8865 = vadd.f32 %v8636, %v8864
        %v8866 = vpop.f32.mrf.mxu0
        %v8867 = vadd.f32 %v8638, %v8866
        %v8868 = vand.u32 %v817, 4294901760
        %8869 = vmatprep.mubr.f32.mxu0 %v8868
        %v8870 = vand.u32 %v331, 4294901760
        %8871 = vmatmul.mubr.f32.gmra.mxu0 %v8870
        %v8872 = vpop.f32.mrf.mxu0
        %v8873 = vadd.f32 %v8644, %v8872
        %v8874 = vpop.f32.mrf.mxu0
        %v8875 = vadd.f32 %v8646, %v8874
        %v8876 = vand.u32 %v820, 4294901760
        %8877 = vmatprep.mubr.f32.mxu0 %v8876
        %v8878 = vand.u32 %v335, 4294901760
        %8879 = vmatmul.mubr.f32.gmra.mxu0 %v8878
        %v8880 = vpop.f32.mrf.mxu0
        %v8881 = vadd.f32 %v8652, %v8880
        %v8882 = vpop.f32.mrf.mxu0
        %v8883 = vadd.f32 %v8654, %v8882
        %v8884 = vand.u32 %v823, 4294901760
        %8885 = vmatprep.mubr.f32.mxu0 %v8884
        %v8886 = vand.u32 %v339, 4294901760
        %8887 = vmatmul.mubr.f32.gmra.mxu0 %v8886
        %v8888 = vpop.f32.mrf.mxu0
        %v8889 = vadd.f32 %v8660, %v8888
        %v8890 = vpop.f32.mrf.mxu0
        %v8891 = vadd.f32 %v8662, %v8890
        %v8892 = vand.u32 %v826, 4294901760
        %8893 = vmatprep.mubr.f32.mxu0 %v8892
        %v8894 = vand.u32 %v343, 4294901760
        %8895 = vmatmul.mubr.f32.gmra.mxu0 %v8894
        %v8896 = vpop.f32.mrf.mxu0
        %v8897 = vadd.f32 %v8668, %v8896
        %v8898 = vpop.f32.mrf.mxu0
        %v8899 = vadd.f32 %v8670, %v8898
        %v8900 = vand.u32 %v829, 4294901760
        %8901 = vmatprep.mubr.f32.mxu0 %v8900
        %v8902 = vand.u32 %v347, 4294901760
        %8903 = vmatmul.mubr.f32.gmra.mxu0 %v8902
        %v8904 = vpop.f32.mrf.mxu0
        %v8905 = vadd.f32 %v8676, %v8904
        %v8906 = vpop.f32.mrf.mxu0
        %v8907 = vadd.f32 %v8678, %v8906
        %v8908 = vand.u32 %v832, 4294901760
        %8909 = vmatprep.mubr.f32.mxu0 %v8908
        %v8910 = vand.u32 %v351, 4294901760
        %8911 = vmatmul.mubr.f32.gmra.mxu0 %v8910
        %v8912 = vpop.f32.mrf.mxu0
        %v8913 = vadd.f32 %v8684, %v8912
        %v8914 = vpop.f32.mrf.mxu0
        %v8915 = vadd.f32 %v8686, %v8914
        %v8916 = vand.u32 %v835, 4294901760
        %8917 = vmatprep.mubr.f32.mxu0 %v8916
        %v8918 = vand.u32 %v355, 4294901760
        %8919 = vmatmul.mubr.f32.gmra.mxu0 %v8918
        %v8920 = vpop.f32.mrf.mxu0
        %v8921 = vadd.f32 %v8692, %v8920
        %v8922 = vpop.f32.mrf.mxu0
        %v8923 = vadd.f32 %v8694, %v8922
        %v8924 = vand.u32 %v838, 4294901760
        %8925 = vmatprep.mubr.f32.mxu0 %v8924
        %v8926 = vand.u32 %v359, 4294901760
        %8927 = vmatmul.mubr.f32.gmra.mxu0 %v8926
        %v8928 = vpop.f32.mrf.mxu0
        %v8929 = vadd.f32 %v8700, %v8928
        %v8930 = vpop.f32.mrf.mxu0
        %v8931 = vadd.f32 %v8702, %v8930
        %v8932 = vand.u32 %v841, 4294901760
        %8933 = vmatprep.mubr.f32.mxu0 %v8932
        %v8934 = vand.u32 %v363, 4294901760
        %8935 = vmatmul.mubr.f32.gmra.mxu0 %v8934
        %v8936 = vpop.f32.mrf.mxu0
        %v8937 = vadd.f32 %v8708, %v8936
        %v8938 = vpop.f32.mrf.mxu0
        %v8939 = vadd.f32 %v8710, %v8938
        %v8940 = vand.u32 %v844, 4294901760
        %8941 = vmatprep.mubr.f32.mxu0 %v8940
        %v8942 = vand.u32 %v367, 4294901760
        %8943 = vmatmul.mubr.f32.gmra.mxu0 %v8942
        %v8944 = vpop.f32.mrf.mxu0
        %v8945 = vadd.f32 %v8716, %v8944
        %v8946 = vpop.f32.mrf.mxu0
        %v8947 = vadd.f32 %v8718, %v8946
        %v8948 = vand.u32 %v847, 4294901760
        %8949 = vmatprep.mubr.f32.mxu0 %v8948
        %v8950 = vand.u32 %v371, 4294901760
        %8951 = vmatmul.mubr.f32.gmra.mxu0 %v8950
        %v8952 = vpop.f32.mrf.mxu0
        %v8953 = vadd.f32 %v8724, %v8952
        %v8954 = vpop.f32.mrf.mxu0
        %v8955 = vadd.f32 %v8726, %v8954
        %v8956 = vand.u32 %v850, 4294901760
        %8957 = vmatprep.mubr.f32.mxu0 %v8956
        %v8958 = vand.u32 %v375, 4294901760
        %8959 = vmatmul.mubr.f32.gmra.mxu0 %v8958
        %v8960 = vpop.f32.mrf.mxu0
        %v8961 = vadd.f32 %v8732, %v8960
        %v8962 = vpop.f32.mrf.mxu0
        %v8963 = vadd.f32 %v8734, %v8962
        %v8964 = vand.u32 %v853, 4294901760
        %8965 = vmatprep.mubr.f32.mxu0 %v8964
        %v8966 = vand.u32 %v379, 4294901760
        %8967 = vmatmul.mubr.f32.gmra.mxu0 %v8966
        %v8968 = vpop.f32.mrf.mxu0
        %v8969 = vadd.f32 %v8740, %v8968
        %v8970 = vpop.f32.mrf.mxu0
        %v8971 = vadd.f32 %v8742, %v8970
        %v8972 = vand.u32 %v856, 4294901760
        %8973 = vmatprep.mubr.f32.mxu0 %v8972
        %v8974 = vand.u32 %v383, 4294901760
        %8975 = vmatmul.mubr.f32.gmra.mxu0 %v8974
        %v8976 = vpop.f32.mrf.mxu0
        %v8977 = vadd.f32 %v8748, %v8976
        %v8978 = vpop.f32.mrf.mxu0
        %v8979 = vadd.f32 %v8750, %v8978
        %v8980 = vand.u32 %v859, 4294901760
        %8981 = vmatprep.mubr.f32.mxu0 %v8980
        %v8982 = vand.u32 %v387, 4294901760
        %8983 = vmatmul.mubr.f32.gmra.mxu0 %v8982
        %v8984 = vpop.f32.mrf.mxu0
        %v8985 = vadd.f32 %v8756, %v8984
        %v8986 = vpop.f32.mrf.mxu0
        %v8987 = vadd.f32 %v8758, %v8986
        %8988 = vdwg.mxu0
        %v8989 = vmul.f32 %v4801, %v4801
        %v8990 = vmul.f32 %v4803, %v4803
        %v8991 = vmul.f32 %v4809, %v4809
        %v8992 = vmul.f32 %v4811, %v4811
        %v8993 = vmul.f32 %v4817, %v4817
        %v8994 = vmul.f32 %v4819, %v4819
        %v8995 = vmul.f32 %v4825, %v4825
        %v8996 = vmul.f32 %v4827, %v4827
        %v8997 = vmul.f32 %v4833, %v4833
        %v8998 = vmul.f32 %v4835, %v4835
        %v8999 = vmul.f32 %v4841, %v4841
        %v9000 = vmul.f32 %v4843, %v4843
        %v9001 = vmul.f32 %v4849, %v4849
        %v9002 = vmul.f32 %v4851, %v4851
        %v9003 = vmul.f32 %v4857, %v4857
        %v9004 = vmul.f32 %v4859, %v4859
        %v9005 = vmul.f32 %v4865, %v4865
        %v9006 = vmul.f32 %v4867, %v4867
        %v9007 = vmul.f32 %v4873, %v4873
        %v9008 = vmul.f32 %v4875, %v4875
        %v9009 = vmul.f32 %v4881, %v4881
        %v9010 = vmul.f32 %v4883, %v4883
        %v9011 = vmul.f32 %v4889, %v4889
        %v9012 = vmul.f32 %v4891, %v4891
        %v9013 = vmul.f32 %v4897, %v4897
        %v9014 = vmul.f32 %v4899, %v4899
        %v9015 = vmul.f32 %v4905, %v4905
        %v9016 = vmul.f32 %v4907, %v4907
        %v9017 = vmul.f32 %v4913, %v4913
        %v9018 = vmul.f32 %v4915, %v4915
        %v9019 = vmul.f32 %v4921, %v4921
        %v9020 = vmul.f32 %v4923, %v4923
        %v9021 = vmul.f32 %v8865, %v8865
        %v9022 = vmul.f32 %v8867, %v8867
        %v9023 = vmul.f32 %v8873, %v8873
        %v9024 = vmul.f32 %v8875, %v8875
        %v9025 = vmul.f32 %v8881, %v8881
        %v9026 = vmul.f32 %v8883, %v8883
        %v9027 = vmul.f32 %v8889, %v8889
        %v9028 = vmul.f32 %v8891, %v8891
        %v9029 = vmul.f32 %v8897, %v8897
        %v9030 = vmul.f32 %v8899, %v8899
        %v9031 = vmul.f32 %v8905, %v8905
        %v9032 = vmul.f32 %v8907, %v8907
        %v9033 = vmul.f32 %v8913, %v8913
        %v9034 = vmul.f32 %v8915, %v8915
        %v9035 = vmul.f32 %v8921, %v8921
        %v9036 = vmul.f32 %v8923, %v8923
        %v9037 = vmul.f32 %v8929, %v8929
        %v9038 = vmul.f32 %v8931, %v8931
        %v9039 = vmul.f32 %v8937, %v8937
        %v9040 = vmul.f32 %v8939, %v8939
        %v9041 = vmul.f32 %v8945, %v8945
        %v9042 = vmul.f32 %v8947, %v8947
        %v9043 = vmul.f32 %v8953, %v8953
        %v9044 = vmul.f32 %v8955, %v8955
        %v9045 = vmul.f32 %v8961, %v8961
        %v9046 = vmul.f32 %v8963, %v8963
        %v9047 = vmul.f32 %v8969, %v8969
        %v9048 = vmul.f32 %v8971, %v8971
        %v9049 = vmul.f32 %v8977, %v8977
        %v9050 = vmul.f32 %v8979, %v8979
        %v9051 = vmul.f32 %v8985, %v8985
        %v9052 = vmul.f32 %v8987, %v8987
        %v9053 = vadd.f32 %v8989, %v9021
        %v9054 = vadd.f32 %v8990, %v9022
        %v9055 = vadd.f32 %v8991, %v9023
        %v9056 = vadd.f32 %v8992, %v9024
        %v9057 = vadd.f32 %v8993, %v9025
        %v9058 = vadd.f32 %v8994, %v9026
        %v9059 = vadd.f32 %v8995, %v9027
        %v9060 = vadd.f32 %v8996, %v9028
        %v9061 = vadd.f32 %v8997, %v9029
        %v9062 = vadd.f32 %v8998, %v9030
        %v9063 = vadd.f32 %v8999, %v9031
        %v9064 = vadd.f32 %v9000, %v9032
        %v9065 = vadd.f32 %v9001, %v9033
        %v9066 = vadd.f32 %v9002, %v9034
        %v9067 = vadd.f32 %v9003, %v9035
        %v9068 = vadd.f32 %v9004, %v9036
        %v9069 = vadd.f32 %v9005, %v9037
        %v9070 = vadd.f32 %v9006, %v9038
        %v9071 = vadd.f32 %v9007, %v9039
        %v9072 = vadd.f32 %v9008, %v9040
        %v9073 = vadd.f32 %v9009, %v9041
        %v9074 = vadd.f32 %v9010, %v9042
        %v9075 = vadd.f32 %v9011, %v9043
        %v9076 = vadd.f32 %v9012, %v9044
        %v9077 = vadd.f32 %v9013, %v9045
        %v9078 = vadd.f32 %v9014, %v9046
        %v9079 = vadd.f32 %v9015, %v9047
        %v9080 = vadd.f32 %v9016, %v9048
        %v9081 = vadd.f32 %v9017, %v9049
        %v9082 = vadd.f32 %v9018, %v9050
        %v9083 = vadd.f32 %v9019, %v9051
        %v9084 = vadd.f32 %v9020, %v9052
        %v9085 = vmax.f32 %v9053, 1.1920929e-07
        %v9086 = vmax.f32 %v9054, 1.1920929e-07
        %v9087 = vmax.f32 %v9055, 1.1920929e-07
        %v9088 = vmax.f32 %v9056, 1.1920929e-07
        %v9089 = vmax.f32 %v9057, 1.1920929e-07
        %v9090 = vmax.f32 %v9058, 1.1920929e-07
        %v9091 = vmax.f32 %v9059, 1.1920929e-07
        %v9092 = vmax.f32 %v9060, 1.1920929e-07
        %v9093 = vmax.f32 %v9061, 1.1920929e-07
        %v9094 = vmax.f32 %v9062, 1.1920929e-07
        %v9095 = vmax.f32 %v9063, 1.1920929e-07
        %v9096 = vmax.f32 %v9064, 1.1920929e-07
        %v9097 = vmax.f32 %v9065, 1.1920929e-07
        %v9098 = vmax.f32 %v9066, 1.1920929e-07
        %v9099 = vmax.f32 %v9067, 1.1920929e-07
        %v9100 = vmax.f32 %v9068, 1.1920929e-07
        %v9101 = vmax.f32 %v9069, 1.1920929e-07
        %v9102 = vmax.f32 %v9070, 1.1920929e-07
        %v9103 = vmax.f32 %v9071, 1.1920929e-07
        %v9104 = vmax.f32 %v9072, 1.1920929e-07
        %v9105 = vmax.f32 %v9073, 1.1920929e-07
        %v9106 = vmax.f32 %v9074, 1.1920929e-07
        %v9107 = vmax.f32 %v9075, 1.1920929e-07
        %v9108 = vmax.f32 %v9076, 1.1920929e-07
        %v9109 = vmax.f32 %v9077, 1.1920929e-07
        %v9110 = vmax.f32 %v9078, 1.1920929e-07
        %v9111 = vmax.f32 %v9079, 1.1920929e-07
        %v9112 = vmax.f32 %v9080, 1.1920929e-07
        %v9113 = vmax.f32 %v9081, 1.1920929e-07
        %v9114 = vmax.f32 %v9082, 1.1920929e-07
        %v9115 = vmax.f32 %v9083, 1.1920929e-07
        %v9116 = vmax.f32 %v9084, 1.1920929e-07
        %v9117 = vlog2.pop %v9085
        %v9118 = vmul.f32 %v9117, 0.6931472
        %v9119 = vlog2.pop %v9086
        %v9120 = vmul.f32 %v9119, 0.6931472
        %v9121 = vlog2.pop %v9087
        %v9122 = vmul.f32 %v9121, 0.6931472
        %v9123 = vlog2.pop %v9088
        %v9124 = vmul.f32 %v9123, 0.6931472
        %v9125 = vlog2.pop %v9089
        %v9126 = vmul.f32 %v9125, 0.6931472
        %v9127 = vlog2.pop %v9090
        %v9128 = vmul.f32 %v9127, 0.6931472
        %v9129 = vlog2.pop %v9091
        %v9130 = vmul.f32 %v9129, 0.6931472
        %v9131 = vlog2.pop %v9092
        %v9132 = vmul.f32 %v9131, 0.6931472
        %v9133 = vlog2.pop %v9093
        %v9134 = vmul.f32 %v9133, 0.6931472
        %v9135 = vlog2.pop %v9094
        %v9136 = vmul.f32 %v9135, 0.6931472
        %v9137 = vlog2.pop %v9095
        %v9138 = vmul.f32 %v9137, 0.6931472
        %v9139 = vlog2.pop %v9096
        %v9140 = vmul.f32 %v9139, 0.6931472
        %v9141 = vlog2.pop %v9097
        %v9142 = vmul.f32 %v9141, 0.6931472
        %v9143 = vlog2.pop %v9098
        %v9144 = vmul.f32 %v9143, 0.6931472
        %v9145 = vlog2.pop %v9099
        %v9146 = vmul.f32 %v9145, 0.6931472
        %v9147 = vlog2.pop %v9100
        %v9148 = vmul.f32 %v9147, 0.6931472
        %v9149 = vlog2.pop %v9101
        %v9150 = vmul.f32 %v9149, 0.6931472
        %v9151 = vlog2.pop %v9102
        %v9152 = vmul.f32 %v9151, 0.6931472
        %v9153 = vlog2.pop %v9103
        %v9154 = vmul.f32 %v9153, 0.6931472
        %v9155 = vlog2.pop %v9104
        %v9156 = vmul.f32 %v9155, 0.6931472
        %v9157 = vlog2.pop %v9105
        %v9158 = vmul.f32 %v9157, 0.6931472
        %v9159 = vlog2.pop %v9106
        %v9160 = vmul.f32 %v9159, 0.6931472
        %v9161 = vlog2.pop %v9107
        %v9162 = vmul.f32 %v9161, 0.6931472
        %v9163 = vlog2.pop %v9108
        %v9164 = vmul.f32 %v9163, 0.6931472
        %v9165 = vlog2.pop %v9109
        %v9166 = vmul.f32 %v9165, 0.6931472
        %v9167 = vlog2.pop %v9110
        %v9168 = vmul.f32 %v9167, 0.6931472
        %v9169 = vlog2.pop %v9111
        %v9170 = vmul.f32 %v9169, 0.6931472
        %v9171 = vlog2.pop %v9112
        %v9172 = vmul.f32 %v9171, 0.6931472
        %v9173 = vlog2.pop %v9113
        %v9174 = vmul.f32 %v9173, 0.6931472
        %v9175 = vlog2.pop %v9114
        %v9176 = vmul.f32 %v9175, 0.6931472
        %v9177 = vlog2.pop %v9115
        %v9178 = vmul.f32 %v9177, 0.6931472
        %v9179 = vlog2.pop %v9116
        %v9180 = vmul.f32 %v9179, 0.6931472
        %9181 = vst [vmem:[%s139] sm:$0xff] %v597
        %9182 = vst [vmem:[%s139 + $0x18] sm:$0xff] %v598
        %9183 = vst [vmem:[%s139 + $0x30] sm:$0xff] %v599
        %9184 = vst [vmem:[%s139 + $0x48] sm:$0xff] %v600
        %9185 = vst [vmem:[%s139 + $0x60] sm:$0xff] %v601
        %9186 = vst [vmem:[%s139 + $0x78] sm:$0xff] %v602
        %9187 = vst [vmem:[%s139 + $0x90] sm:$0xff] %v603
        %9188 = vst [vmem:[%s139 + $0xa8] sm:$0xff] %v604
        %9189 = vst [vmem:[%s139 + $0xc0] sm:$0xff] %v605
        %9190 = vst [vmem:[%s139 + $0xd8] sm:$0xff] %v606
        %9191 = vst [vmem:[%s139 + $0xf0] sm:$0xff] %v607
        %9192 = vst [vmem:[%s139 + $0x108] sm:$0xff] %v608
        %9193 = vst [vmem:[%s139 + $0x120] sm:$0xff] %v609
        %9194 = vst [vmem:[%s139 + $0x138] sm:$0xff] %v610
        %9195 = vst [vmem:[%s139 + $0x150] sm:$0xff] %v611
        %9196 = vst [vmem:[%s139 + $0x168] sm:$0xff] %v612
        %9197 = vst [vmem:[%s139 + $0x8] sm:$0xff] %v9118
        %9198 = vst [vmem:[%s139 + $0x10] sm:$0xff] %v9120
        %9199 = vst [vmem:[%s139 + $0x20] sm:$0xff] %v9122
        %9200 = vst [vmem:[%s139 + $0x28] sm:$0xff] %v9124
        %9201 = vst [vmem:[%s139 + $0x38] sm:$0xff] %v9126
        %9202 = vst [vmem:[%s139 + $0x40] sm:$0xff] %v9128
        %9203 = vst [vmem:[%s139 + $0x50] sm:$0xff] %v9130
        %9204 = vst [vmem:[%s139 + $0x58] sm:$0xff] %v9132
        %9205 = vst [vmem:[%s139 + $0x68] sm:$0xff] %v9134
        %9206 = vst [vmem:[%s139 + $0x70] sm:$0xff] %v9136
        %9207 = vst [vmem:[%s139 + $0x80] sm:$0xff] %v9138
        %9208 = vst [vmem:[%s139 + $0x88] sm:$0xff] %v9140
        %9209 = vst [vmem:[%s139 + $0x98] sm:$0xff] %v9142
        %9210 = vst [vmem:[%s139 + $0xa0] sm:$0xff] %v9144
        %9211 = vst [vmem:[%s139 + $0xb0] sm:$0xff] %v9146
        %9212 = vst [vmem:[%s139 + $0xb8] sm:$0xff] %v9148
        %9213 = vst [vmem:[%s139 + $0xc8] sm:$0xff] %v9150
        %9214 = vst [vmem:[%s139 + $0xd0] sm:$0xff] %v9152
        %9215 = vst [vmem:[%s139 + $0xe0] sm:$0xff] %v9154
        %9216 = vst [vmem:[%s139 + $0xe8] sm:$0xff] %v9156
        %9217 = vst [vmem:[%s139 + $0xf8] sm:$0xff] %v9158
        %9218 = vst [vmem:[%s139 + $0x100] sm:$0xff] %v9160
        %9219 = vst [vmem:[%s139 + $0x110] sm:$0xff] %v9162
        %9220 = vst [vmem:[%s139 + $0x118] sm:$0xff] %v9164
        %9221 = vst [vmem:[%s139 + $0x128] sm:$0xff] %v9166
        %9222 = vst [vmem:[%s139 + $0x130] sm:$0xff] %v9168
        %9223 = vst [vmem:[%s139 + $0x140] sm:$0xff] %v9170
        %9224 = vst [vmem:[%s139 + $0x148] sm:$0xff] %v9172
        %9225 = vst [vmem:[%s139 + $0x158] sm:$0xff] %v9174
        %9226 = vst [vmem:[%s139 + $0x160] sm:$0xff] %v9176
        %9227 = vst [vmem:[%s139 + $0x170] sm:$0xff] %v9178
        %9228 = vst [vmem:[%s139 + $0x178] sm:$0xff] %v9180
        %s9229 = sand.u32 %s71, 1
        %s9230 = scalar_lea.sflag [#allocation3], %s9229
        %s9231 = sand.u32 %s71, 1
        %s9232 = smul.addr %s9231, 384
        %s9233 = scalar_lea.vmem [#allocation2], %s9232
        // Predicated region
        $region29: #{tpu_custom_call.1} parent=27 // pred_check
          %p9234 = pneg %p81
        $region30: #{tpu_custom_call.1} parent=27 // pred_check_branch
          %9236 = sbr.rel (%p9234) target = $region32
        $region31: #{tpu_custom_call.1} parent=27 // pred_region
          %s9237 = smul.u32 16, %s16
          %s9239 = ssub.s32 6144, 6144
          %9240 = vsyncadd %s9230, %s9239
          %s9241 = smul.addr %s9237, 3
          %s9242 = smul.addr %s9241, 128
          %s9243 = scalar_lea.hbm %s2, %s9242
          %s9244 = sshll.u32 %s9233, 4
          %s9245 = int_to_ptr.vmem [resolvable:$true] %s9244
          %9250 = dma.vmem_to_hbm [thread:$0]  %s9245, 6144, %s9243, %s9230, 384, 384, 24
        $region32: #{tpu_custom_call.1} parent=27 // pred_fallthru
          _
      $region28: #{tpu_custom_call.1} parent=5 // pred_fallthru
        _
      %p9251 = scmp.le.s32.totalorder 2, %s11
      // Predicated region
      $region33: #{tpu_custom_call.1} parent=5 // pred_check
        %p9252 = pneg %p9251
      $region34: #{tpu_custom_call.1} parent=5 // pred_check_branch
        %9254 = sbr.rel (%p9252) target = $region36
      $region35: #{tpu_custom_call.1} parent=5 // pred_region
        %s9255 = ssub.s32 %s11, 2
        // Predicated region
        $region37: #{tpu_custom_call.1} parent=35 // pred_check
          %p9256 = pneg %p87
        $region38: #{tpu_custom_call.1} parent=35 // pred_check_branch
          %9258 = sbr.rel (%p9256) target = $region40
        $region39: #{tpu_custom_call.1} parent=35 // pred_region
          %s9259 = sand.u32 %s72, 1
          %s9260 = scalar_lea.sflag [#allocation3], %s9259
          %s9261 = sand.u32 %s72, 1
          %s9262 = smul.addr %s9261, 384
          %s9263 = scalar_lea.vmem [#allocation2], %s9262
          %9264 = dma.done %s9260, 6144
        $region40: #{tpu_custom_call.1} parent=35 // pred_fallthru
          _
      $region36: #{tpu_custom_call.1} parent=5 // pred_fallthru
        _
    $region6: #{tpu_custom_call.1} parent=1 // loop_footer
      %s15 = sadd.s32 1, %s11
    $region7: #{tpu_custom_call.1} parent=1 // loop_footer_branch
      %10 = sbr.rel target = $region3
    $region8: #{tpu_custom_call.1} parent=1 // loop_exit
      _
    %9265 = vsyncpa [#allocation3], 1
    %s9266 = scalar_lea.sflag [#allocation3], 1
    %9267 = vsyncpa %s9266, 1

</llo_original>
